<compile_context>
chip_gen: v5e
topology: v5e:2x2
jax: 0.10.0
libtpu: 0.0.40
codegen_flags: <defaults>
</compile_context>

<pallas_src>
import functools

import jax
import jax.numpy as jnp
from jax import lax
from jax.experimental import pallas as pl
from jax.experimental.pallas import tpu as pltpu

_LEFT_PAD = 8  # interior column offset inside the padded W axis (sublane-aligned)


def _basic_block_kernel(xp_ref, w1_ref, w2_ref, s1_ref, b1_ref, s2_ref, b2_ref,
                        out_ref, mpad, *, H, W, Cp, th):
    """One batch element.

    xp_ref : (H+2, Wp, Cp) bf16  spatially pre-padded input (zero halo);
                                  interior at rows [1, H+1), cols [off, off+W)
    w*_ref : (9, Cp, Cp)    bf16  conv taps, tap index = ky*3 + kx
    s*/b*  : (1, Cp)        f32   folded BN scale / bias
    out_ref: (H, W, Cp)     bf16
    mpad   : VMEM (H+2, Wp, Cp) bf16  padded conv1->bn1->relu intermediate
    """
    off = _LEFT_PAD
    Wp = mpad.shape[1]
    n_chunks = H // th

    # Zero only the halo of the persistent intermediate scratch, and do it on
    # every grid step (scratch persists per-core; gating on program_id==0 would
    # leave the other TensorCore's halo uninitialized under megacore split).
    mpad[0, :, :] = jnp.zeros((Wp, Cp), jnp.bfloat16)
    mpad[H + 1, :, :] = jnp.zeros((Wp, Cp), jnp.bfloat16)
    mpad[:, 0:off, :] = jnp.zeros((H + 2, off, Cp), jnp.bfloat16)
    mpad[:, off + W:Wp, :] = jnp.zeros((H + 2, Wp - off - W, Cp), jnp.bfloat16)

    # Hoist BN parameter reads out of the row loops.
    s1 = s1_ref[...]
    b1 = b1_ref[...]
    s2 = s2_ref[...]
    b2 = b2_ref[...]

    def conv_chunk(src, w_ref, row):
        """3x3 conv (stride 1, pad 1) on output rows [row, row+th).

        9 accumulating MXU dots, each contracting the full Cp channels; the
        taps are shifted windows of the padded source, so no im2col patch is
        materialized and no masking is needed for the borders.
        """
        acc = jnp.zeros((th * W, Cp), jnp.float32)
        for ky in range(3):
            for kx in range(3):
                tap = src[pl.ds(row + ky, th), pl.ds(off - 1 + kx, W), :]
                acc += jnp.dot(tap.reshape(th * W, Cp), w_ref[ky * 3 + kx],
                               preferred_element_type=jnp.float32)
        return acc

    # ---- pass 1: conv1 -> bn1 -> relu, into the padded intermediate ----
    def body1(r, carry):
        row = pl.multiple_of(r * th, th)
        acc = conv_chunk(xp_ref, w1_ref, row)
        y1 = jnp.maximum(acc * s1 + b1, 0.0)
        mpad[pl.ds(row + 1, th), pl.ds(off, W), :] = (
            y1.reshape(th, W, Cp).astype(jnp.bfloat16))
        return carry

    lax.fori_loop(0, n_chunks, body1, 0)

    # ---- pass 2: conv2 -> bn2 -> (+ residual) -> relu ----
    def body2(r, carry):
        row = pl.multiple_of(r * th, th)
        acc = conv_chunk(mpad, w2_ref, row)
        res = xp_ref[pl.ds(row + 1, th), pl.ds(off, W), :]
        res = res.astype(jnp.float32).reshape(th * W, Cp)
        y2 = jnp.maximum(acc * s2 + b2 + res, 0.0)
        out_ref[pl.ds(row, th), :, :] = (
            y2.reshape(th, W, Cp).astype(jnp.bfloat16))
        return carry

    lax.fori_loop(0, n_chunks, body2, 0)


def _pick_row_tile(H, W, max_pixels):
    """Largest divisor of H with th*W <= max_pixels output pixels per conv dot.
    Falls back to th=1 (chunk of W pixels) when a single row already exceeds
    the cap, e.g. very wide feature maps."""
    best = 1
    for th in range(1, H + 1):
        if H % th == 0 and th * W <= max_pixels:
            best = th
    return best


def basic_block_forward(x_nchw, w1, w2, bn1, bn2, eps=1e-5, max_chunk_pixels=256):
    """x_nchw: (B, C, H, W) float32.  w1, w2: (Cout, Cin, 3, 3) PyTorch layout.
       bn1, bn2: dicts with gamma, beta, mean, var of shape (C,)."""
    B, C, H, W = x_nchw.shape
    Cp = ((C + 127) // 128) * 128            # lane-dense channel dim
    off = _LEFT_PAD
    Wp = ((off + W + 1 + 7) // 8) * 8        # sublane-aligned padded width
    th = _pick_row_tile(H, W, max_chunk_pixels)

    # NCHW -> NHWC bf16; spatial halo + sublane-aligned W padding + channel
    # padding done once in the wrapper (no in-kernel VMEM->VMEM copy).
    x = jnp.transpose(x_nchw, (0, 2, 3, 1)).astype(jnp.bfloat16)
    xp = jnp.pad(x, ((0, 0), (1, 1), (off, Wp - off - W), (0, Cp - C)))

    def fuse_weight(w):
        # (Cout, Cin, 3, 3) -> (ky, kx, Cin, Cout) -> pad channels -> (9, Cp, Cp)
        wk = jnp.transpose(w, (2, 3, 1, 0)).astype(jnp.float32)
        wk = jnp.pad(wk, ((0, 0), (0, 0), (0, Cp - C), (0, Cp - C)))
        return wk.reshape(9, Cp, Cp).astype(jnp.bfloat16)

    w1_k = fuse_weight(w1)
    w2_k = fuse_weight(w2)

    def fold_bn(bn):
        scale = bn["gamma"] / jnp.sqrt(bn["var"] + eps)
        bias = bn["beta"] - bn["mean"] * scale
        # Padded channels: conv taps are zero there, so acc==0; scale 1 / bias 0
        # keeps them zero through BN, ReLU and the residual add.
        scale = jnp.pad(scale.astype(jnp.float32), (0, Cp - C),
                        constant_values=1.0)
        bias = jnp.pad(bias.astype(jnp.float32), (0, Cp - C))
        return scale.reshape(1, Cp), bias.reshape(1, Cp)

    s1, b1 = fold_bn(bn1)
    s2, b2 = fold_bn(bn2)

    kernel = functools.partial(_basic_block_kernel, H=H, W=W, Cp=Cp, th=th)

    # Explicit VMEM budget derived from the shapes (double-buffered in/out
    # blocks + weights + the persistent intermediate scratch), with headroom.
    bytes_in = (H + 2) * Wp * Cp * 2
    bytes_out = H * W * Cp * 2
    bytes_w = 2 * 9 * Cp * Cp * 2
    bytes_scratch = (H + 2) * Wp * Cp * 2
    vmem_bytes = 2 * (bytes_in + bytes_out + bytes_w) + bytes_scratch
    vmem_limit = int(min(100 * 2 ** 20, max(2 * vmem_bytes, 16 * 2 ** 20)))

    out_nhwc = pl.pallas_call(
        kernel,
        out_shape=jax.ShapeDtypeStruct((B, H, W, Cp), jnp.bfloat16),
        grid=(B,),
        in_specs=[
            pl.BlockSpec((None, H + 2, Wp, Cp), lambda b: (b, 0, 0, 0)),
            pl.BlockSpec((9, Cp, Cp), lambda b: (0, 0, 0)),
            pl.BlockSpec((9, Cp, Cp), lambda b: (0, 0, 0)),
            pl.BlockSpec((1, Cp), lambda b: (0, 0)),
            pl.BlockSpec((1, Cp), lambda b: (0, 0)),
            pl.BlockSpec((1, Cp), lambda b: (0, 0)),
            pl.BlockSpec((1, Cp), lambda b: (0, 0)),
        ],
        out_specs=pl.BlockSpec((None, H, W, Cp), lambda b: (b, 0, 0, 0)),
        scratch_shapes=[
            pltpu.VMEM((H + 2, Wp, Cp), jnp.bfloat16),
        ],
        compiler_params=pltpu.CompilerParams(
            dimension_semantics=("parallel",),
            vmem_limit_bytes=vmem_limit),
    )(xp, w1_k, w2_k, s1, b1, s2, b2)

    # Drop channel padding; NHWC -> NCHW, back to f32 for the caller.
    return jnp.transpose(out_nhwc[..., :C].astype(jnp.float32), (0, 3, 1, 2))


def _reference(x_nchw, w1, w2, bn1, bn2, eps=1e-5):
    """Pure-JAX f32 reference (lax.conv) for correctness checking."""
    def conv(x, w):
        return lax.conv_general_dilated(
            x, w, window_strides=(1, 1), padding=((1, 1), (1, 1)),
            dimension_numbers=("NCHW", "OIHW", "NCHW"))

    def bn(x, p):
        scale = (p["gamma"] / jnp.sqrt(p["var"] + eps)).reshape(1, -1, 1, 1)
        bias = (p["beta"] - p["mean"] * p["gamma"] / jnp.sqrt(p["var"] + eps)
                ).reshape(1, -1, 1, 1)
        return x * scale + bias

    out = jax.nn.relu(bn(conv(x_nchw, w1), bn1))
    out = bn(conv(out, w2), bn2)
    return jax.nn.relu(out + x_nchw)


if __name__ == "__main__":
    B, C, H, W = 2, 4, 16, 16  # inplanes == planes, stride=1, downsample=None

    key = jax.random.PRNGKey(0)
    k_x, k_w1, k_w2, k_g1, k_b1, k_g2, k_b2, k_m1, k_v1, k_m2, k_v2 = \
        jax.random.split(key, 11)

    x = jax.random.normal(k_x, (B, C, H, W), jnp.float32)
    w1 = jax.random.normal(k_w1, (C, C, 3, 3), jnp.float32) * 0.1
    w2 = jax.random.normal(k_w2, (C, C, 3, 3), jnp.float32) * 0.1

    bn1 = dict(
        gamma=1.0 + 0.1 * jax.random.normal(k_g1, (C,), jnp.float32),
        beta=0.1 * jax.random.normal(k_b1, (C,), jnp.float32),
        mean=0.05 * jax.random.normal(k_m1, (C,), jnp.float32),
        var=1.0 + 0.1 * jax.random.uniform(k_v1, (C,), jnp.float32),
    )
    bn2 = dict(
        gamma=1.0 + 0.1 * jax.random.normal(k_g2, (C,), jnp.float32),
        beta=0.1 * jax.random.normal(k_b2, (C,), jnp.float32),
        mean=0.05 * jax.random.normal(k_m2, (C,), jnp.float32),
        var=1.0 + 0.1 * jax.random.uniform(k_v2, (C,), jnp.float32),
    )

    out = basic_block_forward(x, w1, w2, bn1, bn2)
    out = jax.block_until_ready(out)

    ref = jax.block_until_ready(_reference(x, w1, w2, bn1, bn2))
    assert out.shape == (B, C, H, W)
    # bf16 matmul inputs, bf16 intermediate and bf16 output with f32 MXU
    # accumulation -> relaxed tolerance vs. the f32 reference.
    assert jnp.max(jnp.abs(out - ref)) < 1e-1, "mismatch vs reference"

    print("KERNEL_OK")
</pallas_src>

<mosaic_0001>
module attributes {stable_mosaic.version = 11 : i64} {
  func.func @_basic_block_kernel(%arg0: i32, %arg1: memref<1x18x32x128xbf16, #tpu.memory_space<vmem>>, %arg2: memref<9x128x128xbf16, #tpu.memory_space<vmem>>, %arg3: memref<9x128x128xbf16, #tpu.memory_space<vmem>>, %arg4: memref<1x128xf32, #tpu.memory_space<vmem>>, %arg5: memref<1x128xf32, #tpu.memory_space<vmem>>, %arg6: memref<1x128xf32, #tpu.memory_space<vmem>>, %arg7: memref<1x128xf32, #tpu.memory_space<vmem>>, %arg8: memref<1x16x16x128xbf16, #tpu.memory_space<vmem>>, %arg9: memref<18x32x128xbf16, #tpu.memory_space<vmem>>) attributes {dimension_semantics = [#tpu.dimension_semantics<parallel>], iteration_bounds = array<i64: 2>, scalar_prefetch = 0 : i64, scratch_operands = 1 : i64, tpu.core_type = #tpu.core_type<tc>, window_params = [{transform_indices = @transform_0, window_bounds = array<i64: 1, 18, 32, 128>}, {pipeline_mode = #tpu.pipeline_mode<synchronous>, transform_indices = @transform_1, window_bounds = array<i64: 9, 128, 128>}, {pipeline_mode = #tpu.pipeline_mode<synchronous>, transform_indices = @transform_2, window_bounds = array<i64: 9, 128, 128>}, {pipeline_mode = #tpu.pipeline_mode<synchronous>, transform_indices = @transform_3, window_bounds = array<i64: 1, 128>}, {pipeline_mode = #tpu.pipeline_mode<synchronous>, transform_indices = @transform_4, window_bounds = array<i64: 1, 128>}, {pipeline_mode = #tpu.pipeline_mode<synchronous>, transform_indices = @transform_5, window_bounds = array<i64: 1, 128>}, {pipeline_mode = #tpu.pipeline_mode<synchronous>, transform_indices = @transform_6, window_bounds = array<i64: 1, 128>}, {transform_indices = @transform_7, window_bounds = array<i64: 1, 16, 16, 128>}]} {
    %cst = arith.constant 0.000000e+00 : bf16
    %0 = vector.broadcast %cst : bf16 to vector<32x128xbf16>
    %c0 = arith.constant 0 : index
    %c0_0 = arith.constant 0 : index
    %c0_1 = arith.constant 0 : index
    %1 = vector.load %arg9[%c0, %c0_0, %c0_1] : memref<18x32x128xbf16, #tpu.memory_space<vmem>>, vector<1x32x128xbf16>
    %2 = vector.shape_cast %1 : vector<1x32x128xbf16> to vector<32x128xbf16>
    %3 = vector.shape_cast %0 : vector<32x128xbf16> to vector<1x32x128xbf16>
    tpu.vector_store %arg9[%c0, %c0_0, %c0_1], %3 {strides = array<i32>} : memref<18x32x128xbf16, #tpu.memory_space<vmem>>, vector<1x32x128xbf16>,
    %cst_2 = arith.constant 0.000000e+00 : bf16
    %4 = vector.broadcast %cst_2 : bf16 to vector<32x128xbf16>
    %c17 = arith.constant 17 : index
    %c0_3 = arith.constant 0 : index
    %c0_4 = arith.constant 0 : index
    %5 = vector.load %arg9[%c17, %c0_3, %c0_4] : memref<18x32x128xbf16, #tpu.memory_space<vmem>>, vector<1x32x128xbf16>
    %6 = vector.shape_cast %5 : vector<1x32x128xbf16> to vector<32x128xbf16>
    %7 = vector.shape_cast %4 : vector<32x128xbf16> to vector<1x32x128xbf16>
    tpu.vector_store %arg9[%c17, %c0_3, %c0_4], %7 {strides = array<i32>} : memref<18x32x128xbf16, #tpu.memory_space<vmem>>, vector<1x32x128xbf16>,
    %cst_5 = arith.constant 0.000000e+00 : bf16
    %8 = vector.broadcast %cst_5 : bf16 to vector<18x8x128xbf16>
    %c0_6 = arith.constant 0 : index
    %c0_7 = arith.constant 0 : index
    %c0_8 = arith.constant 0 : index
    %9 = vector.load %arg9[%c0_6, %c0_7, %c0_8] : memref<18x32x128xbf16, #tpu.memory_space<vmem>>, vector<18x8x128xbf16>
    tpu.vector_store %arg9[%c0_6, %c0_7, %c0_8], %8 {strides = array<i32>} : memref<18x32x128xbf16, #tpu.memory_space<vmem>>, vector<18x8x128xbf16>,
    %cst_9 = arith.constant 0.000000e+00 : bf16
    %10 = vector.broadcast %cst_9 : bf16 to vector<18x8x128xbf16>
    %c0_10 = arith.constant 0 : index
    %c24 = arith.constant 24 : index
    %c0_11 = arith.constant 0 : index
    %11 = vector.load %arg9[%c0_10, %c24, %c0_11] : memref<18x32x128xbf16, #tpu.memory_space<vmem>>, vector<18x8x128xbf16>
    tpu.vector_store %arg9[%c0_10, %c24, %c0_11], %10 {strides = array<i32>} : memref<18x32x128xbf16, #tpu.memory_space<vmem>>, vector<18x8x128xbf16>,
    %c0_12 = arith.constant 0 : index
    %c0_13 = arith.constant 0 : index
    %12 = vector.load %arg4[%c0_12, %c0_13] : memref<1x128xf32, #tpu.memory_space<vmem>>, vector<1x128xf32>
    %c0_14 = arith.constant 0 : index
    %c0_15 = arith.constant 0 : index
    %13 = vector.load %arg5[%c0_14, %c0_15] : memref<1x128xf32, #tpu.memory_space<vmem>>, vector<1x128xf32>
    %c0_16 = arith.constant 0 : index
    %c0_17 = arith.constant 0 : index
    %14 = vector.load %arg6[%c0_16, %c0_17] : memref<1x128xf32, #tpu.memory_space<vmem>>, vector<1x128xf32>
    %c0_18 = arith.constant 0 : index
    %c0_19 = arith.constant 0 : index
    %15 = vector.load %arg7[%c0_18, %c0_19] : memref<1x128xf32, #tpu.memory_space<vmem>>, vector<1x128xf32>
    %c0_i32 = arith.constant 0 : i32
    %c16_i32 = arith.constant 16 : i32
    %16 = arith.muli %c0_i32, %c16_i32 : i32
    %17 = tpu.assume_multiple %16, 16 : i32
    %cst_20 = arith.constant 0.000000e+00 : f32
    %18 = vector.broadcast %cst_20 : f32 to vector<256x128xf32>
    %c0_i32_21 = arith.constant 0 : i32
    %19 = arith.addi %17, %c0_i32_21 : i32
    %c0_22 = arith.constant 0 : index
    %20 = arith.index_cast %19 : i32 to index
    %c7 = arith.constant 7 : index
    %c0_23 = arith.constant 0 : index
    %21 = vector.load %arg1[%c0_22, %20, %c7, %c0_23] : memref<1x18x32x128xbf16, #tpu.memory_space<vmem>>, vector<1x16x16x128xbf16>
    %22 = vector.shape_cast %21 : vector<1x16x16x128xbf16> to vector<16x16x128xbf16>
    %23 = vector.shape_cast %22 : vector<16x16x128xbf16> to vector<256x128xbf16>
    %c0_24 = arith.constant 0 : index
    %c0_25 = arith.constant 0 : index
    %c0_26 = arith.constant 0 : index
    %24 = vector.load %arg2[%c0_24, %c0_25, %c0_26] : memref<9x128x128xbf16, #tpu.memory_space<vmem>>, vector<1x128x128xbf16>
    %25 = vector.shape_cast %24 : vector<1x128x128xbf16> to vector<128x128xbf16>
    %cst_27 = arith.constant dense<0.000000e+00> : vector<256x128xf32>
    %26 = tpu.matmul %23, %25, %cst_27 {dimension_numbers = #tpu.dot_dimension_numbers<[1], [0], [0], [1], [0, 0, 1, 1], [], []>} : vector<256x128xbf16>, vector<128x128xbf16>, vector<256x128xf32> -> vector<256x128xf32>
    %27 = arith.addf %18, %26 : vector<256x128xf32>
    %c0_i32_28 = arith.constant 0 : i32
    %28 = arith.addi %17, %c0_i32_28 : i32
    %c0_29 = arith.constant 0 : index
    %29 = arith.index_cast %28 : i32 to index
    %c8 = arith.constant 8 : index
    %c0_30 = arith.constant 0 : index
    %30 = vector.load %arg1[%c0_29, %29, %c8, %c0_30] : memref<1x18x32x128xbf16, #tpu.memory_space<vmem>>, vector<1x16x16x128xbf16>
    %31 = vector.shape_cast %30 : vector<1x16x16x128xbf16> to vector<16x16x128xbf16>
    %32 = vector.shape_cast %31 : vector<16x16x128xbf16> to vector<256x128xbf16>
    %c1 = arith.constant 1 : index
    %c0_31 = arith.constant 0 : index
    %c0_32 = arith.constant 0 : index
    %33 = vector.load %arg2[%c1, %c0_31, %c0_32] : memref<9x128x128xbf16, #tpu.memory_space<vmem>>, vector<1x128x128xbf16>
    %34 = vector.shape_cast %33 : vector<1x128x128xbf16> to vector<128x128xbf16>
    %cst_33 = arith.constant dense<0.000000e+00> : vector<256x128xf32>
    %35 = tpu.matmul %32, %34, %cst_33 {dimension_numbers = #tpu.dot_dimension_numbers<[1], [0], [0], [1], [0, 0, 1, 1], [], []>} : vector<256x128xbf16>, vector<128x128xbf16>, vector<256x128xf32> -> vector<256x128xf32>
    %36 = arith.addf %27, %35 : vector<256x128xf32>
    %c0_i32_34 = arith.constant 0 : i32
    %37 = arith.addi %17, %c0_i32_34 : i32
    %c0_35 = arith.constant 0 : index
    %38 = arith.index_cast %37 : i32 to index
    %c9 = arith.constant 9 : index
    %c0_36 = arith.constant 0 : index
    %39 = vector.load %arg1[%c0_35, %38, %c9, %c0_36] : memref<1x18x32x128xbf16, #tpu.memory_space<vmem>>, vector<1x16x16x128xbf16>
    %40 = vector.shape_cast %39 : vector<1x16x16x128xbf16> to vector<16x16x128xbf16>
    %41 = vector.shape_cast %40 : vector<16x16x128xbf16> to vector<256x128xbf16>
    %c2 = arith.constant 2 : index
    %c0_37 = arith.constant 0 : index
    %c0_38 = arith.constant 0 : index
    %42 = vector.load %arg2[%c2, %c0_37, %c0_38] : memref<9x128x128xbf16, #tpu.memory_space<vmem>>, vector<1x128x128xbf16>
    %43 = vector.shape_cast %42 : vector<1x128x128xbf16> to vector<128x128xbf16>
    %cst_39 = arith.constant dense<0.000000e+00> : vector<256x128xf32>
    %44 = tpu.matmul %41, %43, %cst_39 {dimension_numbers = #tpu.dot_dimension_numbers<[1], [0], [0], [1], [0, 0, 1, 1], [], []>} : vector<256x128xbf16>, vector<128x128xbf16>, vector<256x128xf32> -> vector<256x128xf32>
    %45 = arith.addf %36, %44 : vector<256x128xf32>
    %c1_i32 = arith.constant 1 : i32
    %46 = arith.addi %17, %c1_i32 : i32
    %c0_40 = arith.constant 0 : index
    %47 = arith.index_cast %46 : i32 to index
    %c7_41 = arith.constant 7 : index
    %c0_42 = arith.constant 0 : index
    %48 = vector.load %arg1[%c0_40, %47, %c7_41, %c0_42] : memref<1x18x32x128xbf16, #tpu.memory_space<vmem>>, vector<1x16x16x128xbf16>
    %49 = vector.shape_cast %48 : vector<1x16x16x128xbf16> to vector<16x16x128xbf16>
    %50 = vector.shape_cast %49 : vector<16x16x128xbf16> to vector<256x128xbf16>
    %c3 = arith.constant 3 : index
    %c0_43 = arith.constant 0 : index
    %c0_44 = arith.constant 0 : index
    %51 = vector.load %arg2[%c3, %c0_43, %c0_44] : memref<9x128x128xbf16, #tpu.memory_space<vmem>>, vector<1x128x128xbf16>
    %52 = vector.shape_cast %51 : vector<1x128x128xbf16> to vector<128x128xbf16>
    %cst_45 = arith.constant dense<0.000000e+00> : vector<256x128xf32>
    %53 = tpu.matmul %50, %52, %cst_45 {dimension_numbers = #tpu.dot_dimension_numbers<[1], [0], [0], [1], [0, 0, 1, 1], [], []>} : vector<256x128xbf16>, vector<128x128xbf16>, vector<256x128xf32> -> vector<256x128xf32>
    %54 = arith.addf %45, %53 : vector<256x128xf32>
    %c1_i32_46 = arith.constant 1 : i32
    %55 = arith.addi %17, %c1_i32_46 : i32
    %c0_47 = arith.constant 0 : index
    %56 = arith.index_cast %55 : i32 to index
    %c8_48 = arith.constant 8 : index
    %c0_49 = arith.constant 0 : index
    %57 = vector.load %arg1[%c0_47, %56, %c8_48, %c0_49] : memref<1x18x32x128xbf16, #tpu.memory_space<vmem>>, vector<1x16x16x128xbf16>
    %58 = vector.shape_cast %57 : vector<1x16x16x128xbf16> to vector<16x16x128xbf16>
    %59 = vector.shape_cast %58 : vector<16x16x128xbf16> to vector<256x128xbf16>
    %c4 = arith.constant 4 : index
    %c0_50 = arith.constant 0 : index
    %c0_51 = arith.constant 0 : index
    %60 = vector.load %arg2[%c4, %c0_50, %c0_51] : memref<9x128x128xbf16, #tpu.memory_space<vmem>>, vector<1x128x128xbf16>
    %61 = vector.shape_cast %60 : vector<1x128x128xbf16> to vector<128x128xbf16>
    %cst_52 = arith.constant dense<0.000000e+00> : vector<256x128xf32>
    %62 = tpu.matmul %59, %61, %cst_52 {dimension_numbers = #tpu.dot_dimension_numbers<[1], [0], [0], [1], [0, 0, 1, 1], [], []>} : vector<256x128xbf16>, vector<128x128xbf16>, vector<256x128xf32> -> vector<256x128xf32>
    %63 = arith.addf %54, %62 : vector<256x128xf32>
    %c1_i32_53 = arith.constant 1 : i32
    %64 = arith.addi %17, %c1_i32_53 : i32
    %c0_54 = arith.constant 0 : index
    %65 = arith.index_cast %64 : i32 to index
    %c9_55 = arith.constant 9 : index
    %c0_56 = arith.constant 0 : index
    %66 = vector.load %arg1[%c0_54, %65, %c9_55, %c0_56] : memref<1x18x32x128xbf16, #tpu.memory_space<vmem>>, vector<1x16x16x128xbf16>
    %67 = vector.shape_cast %66 : vector<1x16x16x128xbf16> to vector<16x16x128xbf16>
    %68 = vector.shape_cast %67 : vector<16x16x128xbf16> to vector<256x128xbf16>
    %c5 = arith.constant 5 : index
    %c0_57 = arith.constant 0 : index
    %c0_58 = arith.constant 0 : index
    %69 = vector.load %arg2[%c5, %c0_57, %c0_58] : memref<9x128x128xbf16, #tpu.memory_space<vmem>>, vector<1x128x128xbf16>
    %70 = vector.shape_cast %69 : vector<1x128x128xbf16> to vector<128x128xbf16>
    %cst_59 = arith.constant dense<0.000000e+00> : vector<256x128xf32>
    %71 = tpu.matmul %68, %70, %cst_59 {dimension_numbers = #tpu.dot_dimension_numbers<[1], [0], [0], [1], [0, 0, 1, 1], [], []>} : vector<256x128xbf16>, vector<128x128xbf16>, vector<256x128xf32> -> vector<256x128xf32>
    %72 = arith.addf %63, %71 : vector<256x128xf32>
    %c2_i32 = arith.constant 2 : i32
    %73 = arith.addi %17, %c2_i32 : i32
    %c0_60 = arith.constant 0 : index
    %74 = arith.index_cast %73 : i32 to index
    %c7_61 = arith.constant 7 : index
    %c0_62 = arith.constant 0 : index
    %75 = vector.load %arg1[%c0_60, %74, %c7_61, %c0_62] : memref<1x18x32x128xbf16, #tpu.memory_space<vmem>>, vector<1x16x16x128xbf16>
    %76 = vector.shape_cast %75 : vector<1x16x16x128xbf16> to vector<16x16x128xbf16>
    %77 = vector.shape_cast %76 : vector<16x16x128xbf16> to vector<256x128xbf16>
    %c6 = arith.constant 6 : index
    %c0_63 = arith.constant 0 : index
    %c0_64 = arith.constant 0 : index
    %78 = vector.load %arg2[%c6, %c0_63, %c0_64] : memref<9x128x128xbf16, #tpu.memory_space<vmem>>, vector<1x128x128xbf16>
    %79 = vector.shape_cast %78 : vector<1x128x128xbf16> to vector<128x128xbf16>
    %cst_65 = arith.constant dense<0.000000e+00> : vector<256x128xf32>
    %80 = tpu.matmul %77, %79, %cst_65 {dimension_numbers = #tpu.dot_dimension_numbers<[1], [0], [0], [1], [0, 0, 1, 1], [], []>} : vector<256x128xbf16>, vector<128x128xbf16>, vector<256x128xf32> -> vector<256x128xf32>
    %81 = arith.addf %72, %80 : vector<256x128xf32>
    %c2_i32_66 = arith.constant 2 : i32
    %82 = arith.addi %17, %c2_i32_66 : i32
    %c0_67 = arith.constant 0 : index
    %83 = arith.index_cast %82 : i32 to index
    %c8_68 = arith.constant 8 : index
    %c0_69 = arith.constant 0 : index
    %84 = vector.load %arg1[%c0_67, %83, %c8_68, %c0_69] : memref<1x18x32x128xbf16, #tpu.memory_space<vmem>>, vector<1x16x16x128xbf16>
    %85 = vector.shape_cast %84 : vector<1x16x16x128xbf16> to vector<16x16x128xbf16>
    %86 = vector.shape_cast %85 : vector<16x16x128xbf16> to vector<256x128xbf16>
    %c7_70 = arith.constant 7 : index
    %c0_71 = arith.constant 0 : index
    %c0_72 = arith.constant 0 : index
    %87 = vector.load %arg2[%c7_70, %c0_71, %c0_72] : memref<9x128x128xbf16, #tpu.memory_space<vmem>>, vector<1x128x128xbf16>
    %88 = vector.shape_cast %87 : vector<1x128x128xbf16> to vector<128x128xbf16>
    %cst_73 = arith.constant dense<0.000000e+00> : vector<256x128xf32>
    %89 = tpu.matmul %86, %88, %cst_73 {dimension_numbers = #tpu.dot_dimension_numbers<[1], [0], [0], [1], [0, 0, 1, 1], [], []>} : vector<256x128xbf16>, vector<128x128xbf16>, vector<256x128xf32> -> vector<256x128xf32>
    %90 = arith.addf %81, %89 : vector<256x128xf32>
    %c2_i32_74 = arith.constant 2 : i32
    %91 = arith.addi %17, %c2_i32_74 : i32
    %c0_75 = arith.constant 0 : index
    %92 = arith.index_cast %91 : i32 to index
    %c9_76 = arith.constant 9 : index
    %c0_77 = arith.constant 0 : index
    %93 = vector.load %arg1[%c0_75, %92, %c9_76, %c0_77] : memref<1x18x32x128xbf16, #tpu.memory_space<vmem>>, vector<1x16x16x128xbf16>
    %94 = vector.shape_cast %93 : vector<1x16x16x128xbf16> to vector<16x16x128xbf16>
    %95 = vector.shape_cast %94 : vector<16x16x128xbf16> to vector<256x128xbf16>
    %c8_78 = arith.constant 8 : index
    %c0_79 = arith.constant 0 : index
    %c0_80 = arith.constant 0 : index
    %96 = vector.load %arg2[%c8_78, %c0_79, %c0_80] : memref<9x128x128xbf16, #tpu.memory_space<vmem>>, vector<1x128x128xbf16>
    %97 = vector.shape_cast %96 : vector<1x128x128xbf16> to vector<128x128xbf16>
    %cst_81 = arith.constant dense<0.000000e+00> : vector<256x128xf32>
    %98 = tpu.matmul %95, %97, %cst_81 {dimension_numbers = #tpu.dot_dimension_numbers<[1], [0], [0], [1], [0, 0, 1, 1], [], []>} : vector<256x128xbf16>, vector<128x128xbf16>, vector<256x128xf32> -> vector<256x128xf32>
    %99 = arith.addf %90, %98 : vector<256x128xf32>
    %100 = vector.broadcast %12 : vector<1x128xf32> to vector<256x128xf32>
    %101 = arith.mulf %99, %100 : vector<256x128xf32>
    %102 = vector.broadcast %13 : vector<1x128xf32> to vector<256x128xf32>
    %103 = arith.addf %101, %102 : vector<256x128xf32>
    %cst_82 = arith.constant 0.000000e+00 : f32
    %104 = vector.broadcast %cst_82 : f32 to vector<256x128xf32>
    %105 = arith.maximumf %103, %104 : vector<256x128xf32>
    %106 = vector.shape_cast %105 : vector<256x128xf32> to vector<16x16x128xf32>
    %107 = arith.truncf %106 : vector<16x16x128xf32> to vector<16x16x128xbf16>
    %c1_i32_83 = arith.constant 1 : i32
    %108 = arith.addi %17, %c1_i32_83 : i32
    %109 = arith.index_cast %108 : i32 to index
    %c8_84 = arith.constant 8 : index
    %c0_85 = arith.constant 0 : index
    %110 = vector.load %arg9[%109, %c8_84, %c0_85] : memref<18x32x128xbf16, #tpu.memory_space<vmem>>, vector<16x16x128xbf16>
    tpu.vector_store %arg9[%109, %c8_84, %c0_85], %107 {strides = array<i32>} : memref<18x32x128xbf16, #tpu.memory_space<vmem>>, vector<16x16x128xbf16>,
    %c1_i32_86 = arith.constant 1 : i32
    %c0_i32_87 = arith.constant 0 : i32
    %c16_i32_88 = arith.constant 16 : i32
    %111 = arith.muli %c0_i32_87, %c16_i32_88 : i32
    %112 = tpu.assume_multiple %111, 16 : i32
    %cst_89 = arith.constant 0.000000e+00 : f32
    %113 = vector.broadcast %cst_89 : f32 to vector<256x128xf32>
    %c0_i32_90 = arith.constant 0 : i32
    %114 = arith.addi %112, %c0_i32_90 : i32
    %115 = arith.index_cast %114 : i32 to index
    %c7_91 = arith.constant 7 : index
    %c0_92 = arith.constant 0 : index
    %116 = vector.load %arg9[%115, %c7_91, %c0_92] : memref<18x32x128xbf16, #tpu.memory_space<vmem>>, vector<16x16x128xbf16>
    %117 = vector.shape_cast %116 : vector<16x16x128xbf16> to vector<256x128xbf16>
    %c0_93 = arith.constant 0 : index
    %c0_94 = arith.constant 0 : index
    %c0_95 = arith.constant 0 : index
    %118 = vector.load %arg3[%c0_93, %c0_94, %c0_95] : memref<9x128x128xbf16, #tpu.memory_space<vmem>>, vector<1x128x128xbf16>
    %119 = vector.shape_cast %118 : vector<1x128x128xbf16> to vector<128x128xbf16>
    %cst_96 = arith.constant dense<0.000000e+00> : vector<256x128xf32>
    %120 = tpu.matmul %117, %119, %cst_96 {dimension_numbers = #tpu.dot_dimension_numbers<[1], [0], [0], [1], [0, 0, 1, 1], [], []>} : vector<256x128xbf16>, vector<128x128xbf16>, vector<256x128xf32> -> vector<256x128xf32>
    %121 = arith.addf %113, %120 : vector<256x128xf32>
    %c0_i32_97 = arith.constant 0 : i32
    %122 = arith.addi %112, %c0_i32_97 : i32
    %123 = arith.index_cast %122 : i32 to index
    %c8_98 = arith.constant 8 : index
    %c0_99 = arith.constant 0 : index
    %124 = vector.load %arg9[%123, %c8_98, %c0_99] : memref<18x32x128xbf16, #tpu.memory_space<vmem>>, vector<16x16x128xbf16>
    %125 = vector.shape_cast %124 : vector<16x16x128xbf16> to vector<256x128xbf16>
    %c1_100 = arith.constant 1 : index
    %c0_101 = arith.constant 0 : index
    %c0_102 = arith.constant 0 : index
    %126 = vector.load %arg3[%c1_100, %c0_101, %c0_102] : memref<9x128x128xbf16, #tpu.memory_space<vmem>>, vector<1x128x128xbf16>
    %127 = vector.shape_cast %126 : vector<1x128x128xbf16> to vector<128x128xbf16>
    %cst_103 = arith.constant dense<0.000000e+00> : vector<256x128xf32>
    %128 = tpu.matmul %125, %127, %cst_103 {dimension_numbers = #tpu.dot_dimension_numbers<[1], [0], [0], [1], [0, 0, 1, 1], [], []>} : vector<256x128xbf16>, vector<128x128xbf16>, vector<256x128xf32> -> vector<256x128xf32>
    %129 = arith.addf %121, %128 : vector<256x128xf32>
    %c0_i32_104 = arith.constant 0 : i32
    %130 = arith.addi %112, %c0_i32_104 : i32
    %131 = arith.index_cast %130 : i32 to index
    %c9_105 = arith.constant 9 : index
    %c0_106 = arith.constant 0 : index
    %132 = vector.load %arg9[%131, %c9_105, %c0_106] : memref<18x32x128xbf16, #tpu.memory_space<vmem>>, vector<16x16x128xbf16>
    %133 = vector.shape_cast %132 : vector<16x16x128xbf16> to vector<256x128xbf16>
    %c2_107 = arith.constant 2 : index
    %c0_108 = arith.constant 0 : index
    %c0_109 = arith.constant 0 : index
    %134 = vector.load %arg3[%c2_107, %c0_108, %c0_109] : memref<9x128x128xbf16, #tpu.memory_space<vmem>>, vector<1x128x128xbf16>
    %135 = vector.shape_cast %134 : vector<1x128x128xbf16> to vector<128x128xbf16>
    %cst_110 = arith.constant dense<0.000000e+00> : vector<256x128xf32>
    %136 = tpu.matmul %133, %135, %cst_110 {dimension_numbers = #tpu.dot_dimension_numbers<[1], [0], [0], [1], [0, 0, 1, 1], [], []>} : vector<256x128xbf16>, vector<128x128xbf16>, vector<256x128xf32> -> vector<256x128xf32>
    %137 = arith.addf %129, %136 : vector<256x128xf32>
    %c1_i32_111 = arith.constant 1 : i32
    %138 = arith.addi %112, %c1_i32_111 : i32
    %139 = arith.index_cast %138 : i32 to index
    %c7_112 = arith.constant 7 : index
    %c0_113 = arith.constant 0 : index
    %140 = vector.load %arg9[%139, %c7_112, %c0_113] : memref<18x32x128xbf16, #tpu.memory_space<vmem>>, vector<16x16x128xbf16>
    %141 = vector.shape_cast %140 : vector<16x16x128xbf16> to vector<256x128xbf16>
    %c3_114 = arith.constant 3 : index
    %c0_115 = arith.constant 0 : index
    %c0_116 = arith.constant 0 : index
    %142 = vector.load %arg3[%c3_114, %c0_115, %c0_116] : memref<9x128x128xbf16, #tpu.memory_space<vmem>>, vector<1x128x128xbf16>
    %143 = vector.shape_cast %142 : vector<1x128x128xbf16> to vector<128x128xbf16>
    %cst_117 = arith.constant dense<0.000000e+00> : vector<256x128xf32>
    %144 = tpu.matmul %141, %143, %cst_117 {dimension_numbers = #tpu.dot_dimension_numbers<[1], [0], [0], [1], [0, 0, 1, 1], [], []>} : vector<256x128xbf16>, vector<128x128xbf16>, vector<256x128xf32> -> vector<256x128xf32>
    %145 = arith.addf %137, %144 : vector<256x128xf32>
    %c1_i32_118 = arith.constant 1 : i32
    %146 = arith.addi %112, %c1_i32_118 : i32
    %147 = arith.index_cast %146 : i32 to index
    %c8_119 = arith.constant 8 : index
    %c0_120 = arith.constant 0 : index
    %148 = vector.load %arg9[%147, %c8_119, %c0_120] : memref<18x32x128xbf16, #tpu.memory_space<vmem>>, vector<16x16x128xbf16>
    %149 = vector.shape_cast %148 : vector<16x16x128xbf16> to vector<256x128xbf16>
    %c4_121 = arith.constant 4 : index
    %c0_122 = arith.constant 0 : index
    %c0_123 = arith.constant 0 : index
    %150 = vector.load %arg3[%c4_121, %c0_122, %c0_123] : memref<9x128x128xbf16, #tpu.memory_space<vmem>>, vector<1x128x128xbf16>
    %151 = vector.shape_cast %150 : vector<1x128x128xbf16> to vector<128x128xbf16>
    %cst_124 = arith.constant dense<0.000000e+00> : vector<256x128xf32>
    %152 = tpu.matmul %149, %151, %cst_124 {dimension_numbers = #tpu.dot_dimension_numbers<[1], [0], [0], [1], [0, 0, 1, 1], [], []>} : vector<256x128xbf16>, vector<128x128xbf16>, vector<256x128xf32> -> vector<256x128xf32>
    %153 = arith.addf %145, %152 : vector<256x128xf32>
    %c1_i32_125 = arith.constant 1 : i32
    %154 = arith.addi %112, %c1_i32_125 : i32
    %155 = arith.index_cast %154 : i32 to index
    %c9_126 = arith.constant 9 : index
    %c0_127 = arith.constant 0 : index
    %156 = vector.load %arg9[%155, %c9_126, %c0_127] : memref<18x32x128xbf16, #tpu.memory_space<vmem>>, vector<16x16x128xbf16>
    %157 = vector.shape_cast %156 : vector<16x16x128xbf16> to vector<256x128xbf16>
    %c5_128 = arith.constant 5 : index
    %c0_129 = arith.constant 0 : index
    %c0_130 = arith.constant 0 : index
    %158 = vector.load %arg3[%c5_128, %c0_129, %c0_130] : memref<9x128x128xbf16, #tpu.memory_space<vmem>>, vector<1x128x128xbf16>
    %159 = vector.shape_cast %158 : vector<1x128x128xbf16> to vector<128x128xbf16>
    %cst_131 = arith.constant dense<0.000000e+00> : vector<256x128xf32>
    %160 = tpu.matmul %157, %159, %cst_131 {dimension_numbers = #tpu.dot_dimension_numbers<[1], [0], [0], [1], [0, 0, 1, 1], [], []>} : vector<256x128xbf16>, vector<128x128xbf16>, vector<256x128xf32> -> vector<256x128xf32>
    %161 = arith.addf %153, %160 : vector<256x128xf32>
    %c2_i32_132 = arith.constant 2 : i32
    %162 = arith.addi %112, %c2_i32_132 : i32
    %163 = arith.index_cast %162 : i32 to index
    %c7_133 = arith.constant 7 : index
    %c0_134 = arith.constant 0 : index
    %164 = vector.load %arg9[%163, %c7_133, %c0_134] : memref<18x32x128xbf16, #tpu.memory_space<vmem>>, vector<16x16x128xbf16>
    %165 = vector.shape_cast %164 : vector<16x16x128xbf16> to vector<256x128xbf16>
    %c6_135 = arith.constant 6 : index
    %c0_136 = arith.constant 0 : index
    %c0_137 = arith.constant 0 : index
    %166 = vector.load %arg3[%c6_135, %c0_136, %c0_137] : memref<9x128x128xbf16, #tpu.memory_space<vmem>>, vector<1x128x128xbf16>
    %167 = vector.shape_cast %166 : vector<1x128x128xbf16> to vector<128x128xbf16>
    %cst_138 = arith.constant dense<0.000000e+00> : vector<256x128xf32>
    %168 = tpu.matmul %165, %167, %cst_138 {dimension_numbers = #tpu.dot_dimension_numbers<[1], [0], [0], [1], [0, 0, 1, 1], [], []>} : vector<256x128xbf16>, vector<128x128xbf16>, vector<256x128xf32> -> vector<256x128xf32>
    %169 = arith.addf %161, %168 : vector<256x128xf32>
    %c2_i32_139 = arith.constant 2 : i32
    %170 = arith.addi %112, %c2_i32_139 : i32
    %171 = arith.index_cast %170 : i32 to index
    %c8_140 = arith.constant 8 : index
    %c0_141 = arith.constant 0 : index
    %172 = vector.load %arg9[%171, %c8_140, %c0_141] : memref<18x32x128xbf16, #tpu.memory_space<vmem>>, vector<16x16x128xbf16>
    %173 = vector.shape_cast %172 : vector<16x16x128xbf16> to vector<256x128xbf16>
    %c7_142 = arith.constant 7 : index
    %c0_143 = arith.constant 0 : index
    %c0_144 = arith.constant 0 : index
    %174 = vector.load %arg3[%c7_142, %c0_143, %c0_144] : memref<9x128x128xbf16, #tpu.memory_space<vmem>>, vector<1x128x128xbf16>
    %175 = vector.shape_cast %174 : vector<1x128x128xbf16> to vector<128x128xbf16>
    %cst_145 = arith.constant dense<0.000000e+00> : vector<256x128xf32>
    %176 = tpu.matmul %173, %175, %cst_145 {dimension_numbers = #tpu.dot_dimension_numbers<[1], [0], [0], [1], [0, 0, 1, 1], [], []>} : vector<256x128xbf16>, vector<128x128xbf16>, vector<256x128xf32> -> vector<256x128xf32>
    %177 = arith.addf %169, %176 : vector<256x128xf32>
    %c2_i32_146 = arith.constant 2 : i32
    %178 = arith.addi %112, %c2_i32_146 : i32
    %179 = arith.index_cast %178 : i32 to index
    %c9_147 = arith.constant 9 : index
    %c0_148 = arith.constant 0 : index
    %180 = vector.load %arg9[%179, %c9_147, %c0_148] : memref<18x32x128xbf16, #tpu.memory_space<vmem>>, vector<16x16x128xbf16>
    %181 = vector.shape_cast %180 : vector<16x16x128xbf16> to vector<256x128xbf16>
    %c8_149 = arith.constant 8 : index
    %c0_150 = arith.constant 0 : index
    %c0_151 = arith.constant 0 : index
    %182 = vector.load %arg3[%c8_149, %c0_150, %c0_151] : memref<9x128x128xbf16, #tpu.memory_space<vmem>>, vector<1x128x128xbf16>
    %183 = vector.shape_cast %182 : vector<1x128x128xbf16> to vector<128x128xbf16>
    %cst_152 = arith.constant dense<0.000000e+00> : vector<256x128xf32>
    %184 = tpu.matmul %181, %183, %cst_152 {dimension_numbers = #tpu.dot_dimension_numbers<[1], [0], [0], [1], [0, 0, 1, 1], [], []>} : vector<256x128xbf16>, vector<128x128xbf16>, vector<256x128xf32> -> vector<256x128xf32>
    %185 = arith.addf %177, %184 : vector<256x128xf32>
    %c1_i32_153 = arith.constant 1 : i32
    %186 = arith.addi %112, %c1_i32_153 : i32
    %c0_154 = arith.constant 0 : index
    %187 = arith.index_cast %186 : i32 to index
    %c8_155 = arith.constant 8 : index
    %c0_156 = arith.constant 0 : index
    %188 = vector.load %arg1[%c0_154, %187, %c8_155, %c0_156] : memref<1x18x32x128xbf16, #tpu.memory_space<vmem>>, vector<1x16x16x128xbf16>
    %189 = vector.shape_cast %188 : vector<1x16x16x128xbf16> to vector<16x16x128xbf16>
    %190 = arith.extf %189 : vector<16x16x128xbf16> to vector<16x16x128xf32>
    %191 = vector.shape_cast %190 : vector<16x16x128xf32> to vector<256x128xf32>
    %192 = vector.broadcast %14 : vector<1x128xf32> to vector<256x128xf32>
    %193 = arith.mulf %185, %192 : vector<256x128xf32>
    %194 = vector.broadcast %15 : vector<1x128xf32> to vector<256x128xf32>
    %195 = arith.addf %193, %194 : vector<256x128xf32>
    %196 = arith.addf %195, %191 : vector<256x128xf32>
    %cst_157 = arith.constant 0.000000e+00 : f32
    %197 = vector.broadcast %cst_157 : f32 to vector<256x128xf32>
    %198 = arith.maximumf %196, %197 : vector<256x128xf32>
    %199 = vector.shape_cast %198 : vector<256x128xf32> to vector<16x16x128xf32>
    %200 = arith.truncf %199 : vector<16x16x128xf32> to vector<16x16x128xbf16>
    %c0_158 = arith.constant 0 : index
    %201 = arith.index_cast %112 : i32 to index
    %c0_159 = arith.constant 0 : index
    %c0_160 = arith.constant 0 : index
    %202 = vector.load %arg8[%c0_158, %201, %c0_159, %c0_160] : memref<1x16x16x128xbf16, #tpu.memory_space<vmem>>, vector<1x16x16x128xbf16>
    %203 = vector.shape_cast %202 : vector<1x16x16x128xbf16> to vector<16x16x128xbf16>
    %204 = vector.shape_cast %200 : vector<16x16x128xbf16> to vector<1x16x16x128xbf16>
    tpu.vector_store %arg8[%c0_158, %201, %c0_159, %c0_160], %204 {strides = array<i32>} : memref<1x16x16x128xbf16, #tpu.memory_space<vmem>>, vector<1x16x16x128xbf16>,
    %c1_i32_161 = arith.constant 1 : i32
    return
  }
  func.func @transform_0(%arg0: i32) -> (i32, i32, i32, i32) {
    %c0_i32 = arith.constant 0 : i32
    %c0_i32_0 = arith.constant 0 : i32
    %c0_i32_1 = arith.constant 0 : i32
    %c0_i32_2 = arith.constant 0 : i32
    return %arg0, %c0_i32, %c0_i32_0, %c0_i32_1 : i32, i32, i32, i32
  }
  func.func @transform_1(%arg0: i32) -> (i32, i32, i32) {
    %c0_i32 = arith.constant 0 : i32
    %c0_i32_0 = arith.constant 0 : i32
    %c0_i32_1 = arith.constant 0 : i32
    %c0_i32_2 = arith.constant 0 : i32
    return %c0_i32, %c0_i32_0, %c0_i32_1 : i32, i32, i32
  }
  func.func @transform_2(%arg0: i32) -> (i32, i32, i32) {
    %c0_i32 = arith.constant 0 : i32
    %c0_i32_0 = arith.constant 0 : i32
    %c0_i32_1 = arith.constant 0 : i32
    %c0_i32_2 = arith.constant 0 : i32
    return %c0_i32, %c0_i32_0, %c0_i32_1 : i32, i32, i32
  }
  func.func @transform_3(%arg0: i32) -> (i32, i32) {
    %c0_i32 = arith.constant 0 : i32
    %c0_i32_0 = arith.constant 0 : i32
    %c0_i32_1 = arith.constant 0 : i32
    return %c0_i32, %c0_i32_0 : i32, i32
  }
  func.func @transform_4(%arg0: i32) -> (i32, i32) {
    %c0_i32 = arith.constant 0 : i32
    %c0_i32_0 = arith.constant 0 : i32
    %c0_i32_1 = arith.constant 0 : i32
    return %c0_i32, %c0_i32_0 : i32, i32
  }
  func.func @transform_5(%arg0: i32) -> (i32, i32) {
    %c0_i32 = arith.constant 0 : i32
    %c0_i32_0 = arith.constant 0 : i32
    %c0_i32_1 = arith.constant 0 : i32
    return %c0_i32, %c0_i32_0 : i32, i32
  }
  func.func @transform_6(%arg0: i32) -> (i32, i32) {
    %c0_i32 = arith.constant 0 : i32
    %c0_i32_0 = arith.constant 0 : i32
    %c0_i32_1 = arith.constant 0 : i32
    return %c0_i32, %c0_i32_0 : i32, i32
  }
  func.func @transform_7(%arg0: i32) -> (i32, i32, i32, i32) {
    %c0_i32 = arith.constant 0 : i32
    %c0_i32_0 = arith.constant 0 : i32
    %c0_i32_1 = arith.constant 0 : i32
    %c0_i32_2 = arith.constant 0 : i32
    return %arg0, %c0_i32, %c0_i32_0, %c0_i32_1 : i32, i32, i32, i32
  }
}

</mosaic_0001>

<llo_original>
// kernel: tpu_custom_call.1
$region0: #{tpu_custom_call.1}
  #allocation0 [shape = 'u32[]', space=smem, size = 0x4, offset = 0x4, fixed_abs, tag = 'smem constant byte address 0x4 - core index']
  #allocation1 [shape = 'u32[72,128]{1,0:T(1,128)}', space=vmem, size = 0x9000, scoped, tag = 'internal scratch']
  #allocation2 [shape = 'bf16[18,32,128]{2,1,0:T(8,128)(2,1)}', space=vmem, size = 0x24000, scoped, tag = 'scratch operand']
  %s0 = inlined_call_operand.hbm [shape: bf16[2,18,32,128], index: 0, kind: input, shape index: {}]
  %s1 = inlined_call_operand.hbm [shape: bf16[9,128,128], index: 1, kind: input, shape index: {}]
  %s2 = inlined_call_operand.hbm [shape: bf16[9,128,128], index: 2, kind: input, shape index: {}]
  %s3 = inlined_call_operand.vmem [shape: f32[1,128], index: 3, kind: input, shape index: {}]
  %s4 = inlined_call_operand.vmem [shape: f32[1,128], index: 4, kind: input, shape index: {}]
  %s5 = inlined_call_operand.vmem [shape: f32[1,128], index: 5, kind: input, shape index: {}]
  %s6 = inlined_call_operand.vmem [shape: f32[1,128], index: 6, kind: input, shape index: {}]
  %s7 = inlined_call_operand.hbm [shape: bf16[2,16,16,128], index: 7, kind: output, shape index: {}]
  %s8 = sld [smem:[#allocation0]]
  $region73: #{tpu_custom_call.1} parent=0
    _
  %s10 = ssub.s32 1, %s8
  %s11 = scalar_select 0, %s10, %s8
  $region1: #{tpu_custom_call.1} parent=0
    #allocation3 [shape = 'u8[294912]{0}', space=vmem, size = 0x48000, scoped, tag = 'input window, operand 0']
    #allocation4 [shape = 's32[2]{0}', space=sflag, size = 0x8, scoped, tag = 'scoped memory for tpu_custom_call.1']
    #allocation5 [shape = 's32[2]{0}', space=sflag, size = 0x8, scoped, tag = 'scoped memory for tpu_custom_call.1']
    #allocation6 [shape = 'u8[294912]{0}', space=vmem, size = 0x48000, scoped, tag = 'input window, operand 1, single buffered']
    #allocation7 [shape = 's32[1]{0}', space=sflag, size = 0x4, scoped, tag = 'scoped memory for tpu_custom_call.1']
    #allocation8 [shape = 'u8[294912]{0}', space=vmem, size = 0x48000, scoped, tag = 'input window, operand 2, single buffered']
    #allocation9 [shape = 'u8[131072]{0}', space=vmem, size = 0x20000, scoped, tag = 'output window, operand 0']
    %12 = vsyncpa [#allocation4], 0
    %s13 = scalar_lea.sflag [#allocation4], 1
    %14 = vsyncpa %s13, 0
    %15 = vsyncpa [#allocation7], 0
    %16 = vsyncpa [#allocation5], 0
    %s17 = scalar_lea.sflag [#allocation5], 1
    %18 = vsyncpa %s17, 0
    loop: start=0, step=1, limit=4
    $region2: #{tpu_custom_call.1} parent=1 // loop_pre_header
      _
    $region3: #{tpu_custom_call.1} parent=1 // loop_header
      %s20 = sphi 0, %s24
      %p21 = scmp.ge.s32.totalorder %s20, 4
      %s30 = sphi 0, %s32
      %s33 = sphi 0, %s30
      %s34 = sphi 0, %s33
      %s50 = sphi 0, %s34
      %s54 = sphi 0, %s54
      %s56 = sphi 0, %s54
      %s57 = sphi 0, %s56
      %s71 = sphi 0, %s57
      %s75 = sphi 0, %s75
      %s77 = sphi 0, %s75
      %s78 = sphi 0, %s77
      %s92 = sphi 0, %s78
      %s96 = sphi 0, %s96
      %s98 = sphi 0, %s96
      %s99 = sphi 0, %s98
      %s113 = sphi 0, %s99
      %s117 = sphi 0, %s117
      %s119 = sphi 0, %s117
      %s120 = sphi 0, %s119
      %s134 = sphi 0, %s120
      %s138 = sphi 0, %s138
      %s140 = sphi 0, %s138
      %s141 = sphi 0, %s140
      %s155 = sphi 0, %s141
      %s159 = sphi 0, %s159
      %s161 = sphi 0, %s159
      %s162 = sphi 0, %s161
      %s176 = sphi 0, %s162
      %s182 = sphi 0, %s184
      %s185 = sphi 0, %s182
      %s186 = sphi 0, %s185
      %s202 = sphi 0, %s186
    $region4: #{tpu_custom_call.1} parent=1 // loop_header_branch
      %23 = sbr.rel (%p21) target = $region8
    $region5: #{tpu_custom_call.1} parent=1 // loop_body
      %s25 = ssub.s32 %s20, 1
      %s26 = ssub.s32 %s20, 2
      %s27 = sadd.s32 %s20, 1
      %s28 = ssub.s32 %s20, %s27
      %p29 = scmp.eq.s32.totalorder %s28, 0
      %s31 = sadd.s32 %s30, 1
      %s32 = scalar_select %p29, %s30, %s31
      %p35 = pneg %p29
      %p36 = scmp.eq.s32.totalorder %s20, 1
      %p37 = por %p35, %p36
      %p38 = scmp.ne.s32.totalorder %s30, %s33
      %p39 = scmp.eq.s32.totalorder %s20, 0
      %p40 = por %p38, %p39
      %p41 = scmp.ne.s32.totalorder %s30, %s33
      %p42 = scmp.eq.s32.totalorder %s25, 1
      %p43 = por %p41, %p42
      %p44 = scmp.ne.s32.totalorder %s33, %s34
      %p45 = scmp.eq.s32.totalorder %s25, 0
      %p46 = por %p44, %p45
      %p47 = scmp.ne.s32.totalorder %s33, %s34
      %p48 = scmp.eq.s32.totalorder %s26, 1
      %p49 = por %p47, %p48
      %p51 = scmp.ne.s32.totalorder %s34, %s50
      %p52 = scmp.eq.s32.totalorder %s26, 0
      %p53 = por %p51, %p52
      %s55 = sadd.s32 %s54, 1
      %p58 = scmp.eq.s32.totalorder %s20, 1
      %p59 = scmp.ne.s32.totalorder %s54, %s56
      %p60 = scmp.eq.s32.totalorder %s20, 0
      %p61 = por %p59, %p60
      %p62 = scmp.ne.s32.totalorder %s54, %s56
      %p63 = scmp.eq.s32.totalorder %s25, 1
      %p64 = por %p62, %p63
      %p65 = scmp.ne.s32.totalorder %s56, %s57
      %p66 = scmp.eq.s32.totalorder %s25, 0
      %p67 = por %p65, %p66
      %p68 = scmp.ne.s32.totalorder %s56, %s57
      %p69 = scmp.eq.s32.totalorder %s26, 1
      %p70 = por %p68, %p69
      %p72 = scmp.ne.s32.totalorder %s57, %s71
      %p73 = scmp.eq.s32.totalorder %s26, 0
      %p74 = por %p72, %p73
      %s76 = sadd.s32 %s75, 1
      %p79 = scmp.eq.s32.totalorder %s20, 1
      %p80 = scmp.ne.s32.totalorder %s75, %s77
      %p81 = scmp.eq.s32.totalorder %s20, 0
      %p82 = por %p80, %p81
      %p83 = scmp.ne.s32.totalorder %s75, %s77
      %p84 = scmp.eq.s32.totalorder %s25, 1
      %p85 = por %p83, %p84
      %p86 = scmp.ne.s32.totalorder %s77, %s78
      %p87 = scmp.eq.s32.totalorder %s25, 0
      %p88 = por %p86, %p87
      %p89 = scmp.ne.s32.totalorder %s77, %s78
      %p90 = scmp.eq.s32.totalorder %s26, 1
      %p91 = por %p89, %p90
      %p93 = scmp.ne.s32.totalorder %s78, %s92
      %p94 = scmp.eq.s32.totalorder %s26, 0
      %p95 = por %p93, %p94
      %s97 = sadd.s32 %s96, 1
      %p100 = scmp.eq.s32.totalorder %s20, 1
      %p101 = scmp.ne.s32.totalorder %s96, %s98
      %p102 = scmp.eq.s32.totalorder %s20, 0
      %p103 = por %p101, %p102
      %p104 = scmp.ne.s32.totalorder %s96, %s98
      %p105 = scmp.eq.s32.totalorder %s25, 1
      %p106 = por %p104, %p105
      %p107 = scmp.ne.s32.totalorder %s98, %s99
      %p108 = scmp.eq.s32.totalorder %s25, 0
      %p109 = por %p107, %p108
      %p110 = scmp.ne.s32.totalorder %s98, %s99
      %p111 = scmp.eq.s32.totalorder %s26, 1
      %p112 = por %p110, %p111
      %p114 = scmp.ne.s32.totalorder %s99, %s113
      %p115 = scmp.eq.s32.totalorder %s26, 0
      %p116 = por %p114, %p115
      %s118 = sadd.s32 %s117, 1
      %p121 = scmp.eq.s32.totalorder %s20, 1
      %p122 = scmp.ne.s32.totalorder %s117, %s119
      %p123 = scmp.eq.s32.totalorder %s20, 0
      %p124 = por %p122, %p123
      %p125 = scmp.ne.s32.totalorder %s117, %s119
      %p126 = scmp.eq.s32.totalorder %s25, 1
      %p127 = por %p125, %p126
      %p128 = scmp.ne.s32.totalorder %s119, %s120
      %p129 = scmp.eq.s32.totalorder %s25, 0
      %p130 = por %p128, %p129
      %p131 = scmp.ne.s32.totalorder %s119, %s120
      %p132 = scmp.eq.s32.totalorder %s26, 1
      %p133 = por %p131, %p132
      %p135 = scmp.ne.s32.totalorder %s120, %s134
      %p136 = scmp.eq.s32.totalorder %s26, 0
      %p137 = por %p135, %p136
      %s139 = sadd.s32 %s138, 1
      %p142 = scmp.eq.s32.totalorder %s20, 1
      %p143 = scmp.ne.s32.totalorder %s138, %s140
      %p144 = scmp.eq.s32.totalorder %s20, 0
      %p145 = por %p143, %p144
      %p146 = scmp.ne.s32.totalorder %s138, %s140
      %p147 = scmp.eq.s32.totalorder %s25, 1
      %p148 = por %p146, %p147
      %p149 = scmp.ne.s32.totalorder %s140, %s141
      %p150 = scmp.eq.s32.totalorder %s25, 0
      %p151 = por %p149, %p150
      %p152 = scmp.ne.s32.totalorder %s140, %s141
      %p153 = scmp.eq.s32.totalorder %s26, 1
      %p154 = por %p152, %p153
      %p156 = scmp.ne.s32.totalorder %s141, %s155
      %p157 = scmp.eq.s32.totalorder %s26, 0
      %p158 = por %p156, %p157
      %s160 = sadd.s32 %s159, 1
      %p163 = scmp.eq.s32.totalorder %s20, 1
      %p164 = scmp.ne.s32.totalorder %s159, %s161
      %p165 = scmp.eq.s32.totalorder %s20, 0
      %p166 = por %p164, %p165
      %p167 = scmp.ne.s32.totalorder %s159, %s161
      %p168 = scmp.eq.s32.totalorder %s25, 1
      %p169 = por %p167, %p168
      %p170 = scmp.ne.s32.totalorder %s161, %s162
      %p171 = scmp.eq.s32.totalorder %s25, 0
      %p172 = por %p170, %p171
      %p173 = scmp.ne.s32.totalorder %s161, %s162
      %p174 = scmp.eq.s32.totalorder %s26, 1
      %p175 = por %p173, %p174
      %p177 = scmp.ne.s32.totalorder %s162, %s176
      %p178 = scmp.eq.s32.totalorder %s26, 0
      %p179 = por %p177, %p178
      %s180 = ssub.s32 %s20, %s27
      %p181 = scmp.eq.s32.totalorder %s180, 0
      %s183 = sadd.s32 %s182, 1
      %s184 = scalar_select %p181, %s182, %s183
      %p187 = pneg %p181
      %p188 = scmp.eq.s32.totalorder %s20, 1
      %p189 = por %p187, %p188
      %p190 = scmp.ne.s32.totalorder %s182, %s185
      %p191 = scmp.eq.s32.totalorder %s20, 0
      %p192 = por %p190, %p191
      %p193 = scmp.ne.s32.totalorder %s182, %s185
      %p194 = scmp.eq.s32.totalorder %s25, 1
      %p195 = por %p193, %p194
      %p196 = scmp.ne.s32.totalorder %s185, %s186
      %p197 = scmp.eq.s32.totalorder %s25, 0
      %p198 = por %p196, %p197
      %p199 = scmp.ne.s32.totalorder %s185, %s186
      %p200 = scmp.eq.s32.totalorder %s26, 1
      %p201 = por %p199, %p200
      %p203 = scmp.ne.s32.totalorder %s186, %s202
      %p204 = scmp.eq.s32.totalorder %s26, 0
      %p205 = por %p203, %p204
      %p206 = scmp.le.s32.totalorder 1, %s20
      %p207 = scmp.lt.s32.totalorder %s20, 3
      %p208 = pnand %p206, %p207
      %p209 = pneg %p208
      // Predicated region
      $region9: #{tpu_custom_call.1} parent=5 // pred_check
        _
      $region10: #{tpu_custom_call.1} parent=5 // pred_check_branch
        %211 = sbr.rel (%p208) target = $region12
      $region11: #{tpu_custom_call.1} parent=5 // pred_region
        %s212 = ssub.s32 %s20, 1
        // Predicated region
        $region13: #{tpu_custom_call.1} parent=11 // pred_check
          %p213 = pneg %p67
        $region14: #{tpu_custom_call.1} parent=11 // pred_check_branch
          %215 = sbr.rel (%p213) target = $region16
        $region15: #{tpu_custom_call.1} parent=11 // pred_region
          %217 = vsyncadd [#allocation7], 0
          %s218 = sshll.u32 %s1, 4
          %s219 = int_to_ptr.hbm [resolvable:$true] %s218
          %s220 = sshll.u32 [#allocation6], 4
          %s221 = int_to_ptr.vmem [resolvable:$true] %s220
          %226 = dma.hbm_to_vmem [thread:$0]  %s219, 9216, %s221, [#allocation7], 64, 64, 4
        $region16: #{tpu_custom_call.1} parent=11 // pred_fallthru
          _
        // Predicated region
        $region17: #{tpu_custom_call.1} parent=11 // pred_check
          %p227 = pneg %p88
        $region18: #{tpu_custom_call.1} parent=11 // pred_check_branch
          %229 = sbr.rel (%p227) target = $region20
        $region19: #{tpu_custom_call.1} parent=11 // pred_region
          %231 = vsyncadd [#allocation7], 0
          %s232 = sshll.u32 %s2, 4
          %s233 = int_to_ptr.hbm [resolvable:$true] %s232
          %s234 = sshll.u32 [#allocation8], 4
          %s235 = int_to_ptr.vmem [resolvable:$true] %s234
          %240 = dma.hbm_to_vmem [thread:$0]  %s233, 9216, %s235, [#allocation7], 64, 64, 4
        $region20: #{tpu_custom_call.1} parent=11 // pred_fallthru
          _
        // Predicated region
        $region21: #{tpu_custom_call.1} parent=11 // pred_check
          %p241 = pneg %p109
        $region22: #{tpu_custom_call.1} parent=11 // pred_check_branch
          %243 = sbr.rel (%p241) target = $region24
        $region23: #{tpu_custom_call.1} parent=11 // pred_region
          _
        $region24: #{tpu_custom_call.1} parent=11 // pred_fallthru
          _
        // Predicated region
        $region25: #{tpu_custom_call.1} parent=11 // pred_check
          %p244 = pneg %p130
        $region26: #{tpu_custom_call.1} parent=11 // pred_check_branch
          %246 = sbr.rel (%p244) target = $region28
        $region27: #{tpu_custom_call.1} parent=11 // pred_region
          _
        $region28: #{tpu_custom_call.1} parent=11 // pred_fallthru
          _
        // Predicated region
        $region29: #{tpu_custom_call.1} parent=11 // pred_check
          %p247 = pneg %p151
        $region30: #{tpu_custom_call.1} parent=11 // pred_check_branch
          %249 = sbr.rel (%p247) target = $region32
        $region31: #{tpu_custom_call.1} parent=11 // pred_region
          _
        $region32: #{tpu_custom_call.1} parent=11 // pred_fallthru
          _
        // Predicated region
        $region33: #{tpu_custom_call.1} parent=11 // pred_check
          %p250 = pneg %p172
        $region34: #{tpu_custom_call.1} parent=11 // pred_check_branch
          %252 = sbr.rel (%p250) target = $region36
        $region35: #{tpu_custom_call.1} parent=11 // pred_region
          _
        $region36: #{tpu_custom_call.1} parent=11 // pred_fallthru
          _
      $region12: #{tpu_custom_call.1} parent=5 // pred_fallthru
        _
      %p253 = scmp.lt.s32.totalorder %s20, 2
      // Predicated region
      $region37: #{tpu_custom_call.1} parent=5 // pred_check
        %p254 = pneg %p253
      $region38: #{tpu_custom_call.1} parent=5 // pred_check_branch
        %256 = sbr.rel (%p254) target = $region40
      $region39: #{tpu_custom_call.1} parent=5 // pred_region
        // Predicated region
        $region41: #{tpu_custom_call.1} parent=39 // pred_check
          %p257 = pneg %p40
        $region42: #{tpu_custom_call.1} parent=39 // pred_check_branch
          %259 = sbr.rel (%p257) target = $region44
        $region43: #{tpu_custom_call.1} parent=39 // pred_region
          %s260 = sand.u32 %s30, 1
          %s261 = scalar_lea.sflag [#allocation4], %s260
          %s262 = sand.u32 %s30, 1
          %s263 = smul.addr %s262, 288
          %s264 = scalar_lea.vmem [#allocation3], %s263
          %266 = vsyncadd %s261, 0
          %s267 = smul.addr %s20, 72
          %s268 = smul.addr %s267, 4
          %s269 = scalar_lea.hbm %s0, %s268
          %s270 = sshll.u32 %s269, 4
          %s271 = int_to_ptr.hbm [resolvable:$true] %s270
          %s272 = sshll.u32 %s264, 4
          %s273 = int_to_ptr.vmem [resolvable:$true] %s272
          %278 = dma.hbm_to_vmem [thread:$0]  %s271, 4608, %s273, %s261, 64, 64, 4
        $region44: #{tpu_custom_call.1} parent=39 // pred_fallthru
          _
      $region40: #{tpu_custom_call.1} parent=5 // pred_fallthru
        _
      %p279 = scmp.le.s32.totalorder 1, %s20
      %p280 = scmp.lt.s32.totalorder %s20, 3
      %p281 = pnand %p279, %p280
      %p282 = pneg %p281
      // Predicated region
      $region45: #{tpu_custom_call.1} parent=5 // pred_check
        _
      $region46: #{tpu_custom_call.1} parent=5 // pred_check_branch
        %284 = sbr.rel (%p281) target = $region48
      $region47: #{tpu_custom_call.1} parent=5 // pred_region
        %s285 = ssub.s32 %s20, 1
        %s286 = sand.u32 %s33, 1
        %s287 = scalar_lea.sflag [#allocation4], %s286
        %s288 = sand.u32 %s33, 1
        %s289 = smul.addr %s288, 288
        %s290 = scalar_lea.vmem [#allocation3], %s289
        // Predicated region
        $region49: #{tpu_custom_call.1} parent=47 // pred_check
          %p291 = pneg %p46
        $region50: #{tpu_custom_call.1} parent=47 // pred_check_branch
          %293 = sbr.rel (%p291) target = $region52
        $region51: #{tpu_custom_call.1} parent=47 // pred_region
          %295 = dma.done %s287, 4608
        $region52: #{tpu_custom_call.1} parent=47 // pred_fallthru
          _
        // Predicated region
        $region53: #{tpu_custom_call.1} parent=47 // pred_check
          %p296 = pneg %p67
        $region54: #{tpu_custom_call.1} parent=47 // pred_check_branch
          %298 = sbr.rel (%p296) target = $region56
        $region55: #{tpu_custom_call.1} parent=47 // pred_region
          %300 = dma.done [#allocation7], 9216
        $region56: #{tpu_custom_call.1} parent=47 // pred_fallthru
          _
        // Predicated region
        $region57: #{tpu_custom_call.1} parent=47 // pred_check
          %p301 = pneg %p88
        $region58: #{tpu_custom_call.1} parent=47 // pred_check_branch
          %303 = sbr.rel (%p301) target = $region60
        $region59: #{tpu_custom_call.1} parent=47 // pred_region
          %305 = dma.done [#allocation7], 9216
        $region60: #{tpu_custom_call.1} parent=47 // pred_fallthru
          _
        %s306 = sand.u32 %s33, 1
        %s307 = scalar_lea.sflag [#allocation4], %s306
        %s308 = sand.u32 %s33, 1
        %s309 = smul.addr %s308, 288
        %s310 = scalar_lea.vmem [#allocation3], %s309
        %p311 = pneg %p46
        %p312 = pneg %p43
        %p313 = pneg %p67
        %p314 = pneg %p64
        %p315 = pneg %p88
        %p316 = pneg %p85
        %p317 = pneg %p109
        %p318 = pneg %p106
        %p319 = pneg %p130
        %p320 = pneg %p127
        %p321 = pneg %p151
        %p322 = pneg %p148
        %p323 = pneg %p172
        %p324 = pneg %p169
        %p325 = pneg %p198
        %p326 = pneg %p195
        %s327 = sand.u32 %s185, 1
        %s328 = scalar_lea.sflag [#allocation5], %s327
        %s329 = sand.u32 %s185, 1
        %s330 = smul.addr %s329, 128
        %s331 = scalar_lea.vmem [#allocation9], %s330
        %333 = vst [vmem:[#allocation2] sm:$0xf] 0
        %334 = vst [vmem:[#allocation2 + $0x4] sm:$0xf] 0
        %335 = vst [vmem:[#allocation2 + $0x8] sm:$0xf] 0
        %336 = vst [vmem:[#allocation2 + $0xc] sm:$0xf] 0
        %s337 = scalar_lea.vmem [#allocation2], 272
        %338 = vst [vmem:[%s337] sm:$0xf] 0
        %339 = vst [vmem:[%s337 + $0x4] sm:$0xf] 0
        %340 = vst [vmem:[%s337 + $0x8] sm:$0xf] 0
        %341 = vst [vmem:[%s337 + $0xc] sm:$0xf] 0
        %342 = vst [vmem:[#allocation2] sm:$0xf] 0
        %343 = vst [vmem:[#allocation2 + $0x10] sm:$0xf] 0
        %344 = vst [vmem:[#allocation2 + $0x20] sm:$0xf] 0
        %345 = vst [vmem:[#allocation2 + $0x30] sm:$0xf] 0
        %346 = vst [vmem:[#allocation2 + $0x40] sm:$0xf] 0
        %347 = vst [vmem:[#allocation2 + $0x50] sm:$0xf] 0
        %348 = vst [vmem:[#allocation2 + $0x60] sm:$0xf] 0
        %349 = vst [vmem:[#allocation2 + $0x70] sm:$0xf] 0
        %350 = vst [vmem:[#allocation2 + $0x80] sm:$0xf] 0
        %351 = vst [vmem:[#allocation2 + $0x90] sm:$0xf] 0
        %352 = vst [vmem:[#allocation2 + $0xa0] sm:$0xf] 0
        %353 = vst [vmem:[#allocation2 + $0xb0] sm:$0xf] 0
        %354 = vst [vmem:[#allocation2 + $0xc0] sm:$0xf] 0
        %355 = vst [vmem:[#allocation2 + $0xd0] sm:$0xf] 0
        %356 = vst [vmem:[#allocation2 + $0xe0] sm:$0xf] 0
        %357 = vst [vmem:[#allocation2 + $0xf0] sm:$0xf] 0
        %358 = vst [vmem:[#allocation2 + $0x100] sm:$0xf] 0
        %359 = vst [vmem:[#allocation2 + $0x110] sm:$0xf] 0
        %360 = vst [vmem:[#allocation2 + $0xc] sm:$0xf] 0
        %361 = vst [vmem:[#allocation2 + $0x1c] sm:$0xf] 0
        %362 = vst [vmem:[#allocation2 + $0x2c] sm:$0xf] 0
        %363 = vst [vmem:[#allocation2 + $0x3c] sm:$0xf] 0
        %364 = vst [vmem:[#allocation2 + $0x4c] sm:$0xf] 0
        %365 = vst [vmem:[#allocation2 + $0x5c] sm:$0xf] 0
        %366 = vst [vmem:[#allocation2 + $0x6c] sm:$0xf] 0
        %367 = vst [vmem:[#allocation2 + $0x7c] sm:$0xf] 0
        %368 = vst [vmem:[#allocation2 + $0x8c] sm:$0xf] 0
        %369 = vst [vmem:[#allocation2 + $0x9c] sm:$0xf] 0
        %370 = vst [vmem:[#allocation2 + $0xac] sm:$0xf] 0
        %371 = vst [vmem:[#allocation2 + $0xbc] sm:$0xf] 0
        %372 = vst [vmem:[#allocation2 + $0xcc] sm:$0xf] 0
        %373 = vst [vmem:[#allocation2 + $0xdc] sm:$0xf] 0
        %374 = vst [vmem:[#allocation2 + $0xec] sm:$0xf] 0
        %375 = vst [vmem:[#allocation2 + $0xfc] sm:$0xf] 0
        %376 = vst [vmem:[#allocation2 + $0x10c] sm:$0xf] 0
        %377 = vst [vmem:[#allocation2 + $0x11c] sm:$0xf] 0
        %v378 = vld [vmem:[%s3] sm:$0x1]
        %v379 = vld [vmem:[%s4] sm:$0x1]
        %v380 = vld [vmem:[%s5] sm:$0x1]
        %v381 = vld [vmem:[%s6] sm:$0x1]
        %s382 = smul.u32 0, 4
        %s383 = smul.addr %s382, 4
        %s384 = scalar_lea.vmem %s290, %s383 [#allocation3]
        %v385 = vld [vmem:[%s384] sm:$0x8]
        %v386 = vld [vmem:[%s384 + $0x4] sm:$0xf]
        %v387 = vld [vmem:[%s384 + $0x8] sm:$0xf]
        %v388 = vld [vmem:[%s384 + $0x10] sm:$0x8]
        %v389 = vld [vmem:[%s384 + $0x14] sm:$0xf]
        %v390 = vld [vmem:[%s384 + $0x18] sm:$0xf]
        %v391 = vld [vmem:[%s384 + $0x20] sm:$0x8]
        %v392 = vld [vmem:[%s384 + $0x24] sm:$0xf]
        %v393 = vld [vmem:[%s384 + $0x28] sm:$0xf]
        %v394 = vld [vmem:[%s384 + $0x30] sm:$0x8]
        %v395 = vld [vmem:[%s384 + $0x34] sm:$0xf]
        %v396 = vld [vmem:[%s384 + $0x38] sm:$0xf]
        %v397 = vld [vmem:[%s384 + $0x40] sm:$0x8]
        %v398 = vld [vmem:[%s384 + $0x44] sm:$0xf]
        %v399 = vld [vmem:[%s384 + $0x48] sm:$0xf]
        %v400 = vld [vmem:[%s384 + $0x50] sm:$0x8]
        %v401 = vld [vmem:[%s384 + $0x54] sm:$0xf]
        %v402 = vld [vmem:[%s384 + $0x58] sm:$0xf]
        %v403 = vld [vmem:[%s384 + $0x60] sm:$0x8]
        %v404 = vld [vmem:[%s384 + $0x64] sm:$0xf]
        %v405 = vld [vmem:[%s384 + $0x68] sm:$0xf]
        %v406 = vld [vmem:[%s384 + $0x70] sm:$0x8]
        %v407 = vld [vmem:[%s384 + $0x74] sm:$0xf]
        %v408 = vld [vmem:[%s384 + $0x78] sm:$0xf]
        %v409 = vld [vmem:[%s384 + $0x80] sm:$0x8]
        %v410 = vld [vmem:[%s384 + $0x84] sm:$0xf]
        %v411 = vld [vmem:[%s384 + $0x88] sm:$0xf]
        %v412 = vld [vmem:[%s384 + $0x90] sm:$0x8]
        %v413 = vld [vmem:[%s384 + $0x94] sm:$0xf]
        %v414 = vld [vmem:[%s384 + $0x98] sm:$0xf]
        %v415 = vld [vmem:[%s384 + $0xa0] sm:$0x8]
        %v416 = vld [vmem:[%s384 + $0xa4] sm:$0xf]
        %v417 = vld [vmem:[%s384 + $0xa8] sm:$0xf]
        %v418 = vld [vmem:[%s384 + $0xb0] sm:$0x8]
        %v419 = vld [vmem:[%s384 + $0xb4] sm:$0xf]
        %v420 = vld [vmem:[%s384 + $0xb8] sm:$0xf]
        %v421 = vld [vmem:[%s384 + $0xc0] sm:$0x8]
        %v422 = vld [vmem:[%s384 + $0xc4] sm:$0xf]
        %v423 = vld [vmem:[%s384 + $0xc8] sm:$0xf]
        %v424 = vld [vmem:[%s384 + $0xd0] sm:$0x8]
        %v425 = vld [vmem:[%s384 + $0xd4] sm:$0xf]
        %v426 = vld [vmem:[%s384 + $0xd8] sm:$0xf]
        %v427 = vld [vmem:[%s384 + $0xe0] sm:$0x8]
        %v428 = vld [vmem:[%s384 + $0xe4] sm:$0xf]
        %v429 = vld [vmem:[%s384 + $0xe8] sm:$0xf]
        %v430 = vld [vmem:[%s384 + $0xf0] sm:$0x8]
        %v431 = vld [vmem:[%s384 + $0xf4] sm:$0xf]
        %v432 = vld [vmem:[%s384 + $0xf8] sm:$0xf]
        %vm433 = vsmask.f32 256
        %vm434 = vsmask.f32 4368
        %vm435 = vmor %vm433, %vm434
        %v437 = vshrl.u32 %v385, 16
        %v439 = vrot.slane %v437, 7
        %v440 = vrot.slane %v439, 4
        %v442 = vshrl.u32 %v386, 16
        %v444 = vrot.slane %v442, 7
        %v445 = vshll.u32 %v386, 16
        %v447 = vor.u32 %v444, %v445
        %v448 = vsel %vm435, %v440, %v447
        %v449 = vrot.slane %v444, 4
        %v451 = vshrl.u32 %v387, 16
        %v453 = vrot.slane %v451, 7
        %v454 = vshll.u32 %v387, 16
        %v456 = vor.u32 %v453, %v454
        %v457 = vsel %vm435, %v449, %v456
        %v459 = vshrl.u32 %v388, 16
        %v461 = vrot.slane %v459, 7
        %v462 = vrot.slane %v461, 4
        %v464 = vshrl.u32 %v389, 16
        %v466 = vrot.slane %v464, 7
        %v467 = vshll.u32 %v389, 16
        %v469 = vor.u32 %v466, %v467
        %v470 = vsel %vm435, %v462, %v469
        %v471 = vrot.slane %v466, 4
        %v473 = vshrl.u32 %v390, 16
        %v475 = vrot.slane %v473, 7
        %v476 = vshll.u32 %v390, 16
        %v478 = vor.u32 %v475, %v476
        %v479 = vsel %vm435, %v471, %v478
        %v481 = vshrl.u32 %v391, 16
        %v483 = vrot.slane %v481, 7
        %v484 = vrot.slane %v483, 4
        %v486 = vshrl.u32 %v392, 16
        %v488 = vrot.slane %v486, 7
        %v489 = vshll.u32 %v392, 16
        %v491 = vor.u32 %v488, %v489
        %v492 = vsel %vm435, %v484, %v491
        %v493 = vrot.slane %v488, 4
        %v495 = vshrl.u32 %v393, 16
        %v497 = vrot.slane %v495, 7
        %v498 = vshll.u32 %v393, 16
        %v500 = vor.u32 %v497, %v498
        %v501 = vsel %vm435, %v493, %v500
        %v503 = vshrl.u32 %v394, 16
        %v505 = vrot.slane %v503, 7
        %v506 = vrot.slane %v505, 4
        %v508 = vshrl.u32 %v395, 16
        %v510 = vrot.slane %v508, 7
        %v511 = vshll.u32 %v395, 16
        %v513 = vor.u32 %v510, %v511
        %v514 = vsel %vm435, %v506, %v513
        %v515 = vrot.slane %v510, 4
        %v517 = vshrl.u32 %v396, 16
        %v519 = vrot.slane %v517, 7
        %v520 = vshll.u32 %v396, 16
        %v522 = vor.u32 %v519, %v520
        %v523 = vsel %vm435, %v515, %v522
        %v525 = vshrl.u32 %v397, 16
        %v527 = vrot.slane %v525, 7
        %v528 = vrot.slane %v527, 4
        %v530 = vshrl.u32 %v398, 16
        %v532 = vrot.slane %v530, 7
        %v533 = vshll.u32 %v398, 16
        %v535 = vor.u32 %v532, %v533
        %v536 = vsel %vm435, %v528, %v535
        %v537 = vrot.slane %v532, 4
        %v539 = vshrl.u32 %v399, 16
        %v541 = vrot.slane %v539, 7
        %v542 = vshll.u32 %v399, 16
        %v544 = vor.u32 %v541, %v542
        %v545 = vsel %vm435, %v537, %v544
        %v547 = vshrl.u32 %v400, 16
        %v549 = vrot.slane %v547, 7
        %v550 = vrot.slane %v549, 4
        %v552 = vshrl.u32 %v401, 16
        %v554 = vrot.slane %v552, 7
        %v555 = vshll.u32 %v401, 16
        %v557 = vor.u32 %v554, %v555
        %v558 = vsel %vm435, %v550, %v557
        %v559 = vrot.slane %v554, 4
        %v561 = vshrl.u32 %v402, 16
        %v563 = vrot.slane %v561, 7
        %v564 = vshll.u32 %v402, 16
        %v566 = vor.u32 %v563, %v564
        %v567 = vsel %vm435, %v559, %v566
        %v569 = vshrl.u32 %v403, 16
        %v571 = vrot.slane %v569, 7
        %v572 = vrot.slane %v571, 4
        %v574 = vshrl.u32 %v404, 16
        %v576 = vrot.slane %v574, 7
        %v577 = vshll.u32 %v404, 16
        %v579 = vor.u32 %v576, %v577
        %v580 = vsel %vm435, %v572, %v579
        %v581 = vrot.slane %v576, 4
        %v583 = vshrl.u32 %v405, 16
        %v585 = vrot.slane %v583, 7
        %v586 = vshll.u32 %v405, 16
        %v588 = vor.u32 %v585, %v586
        %v589 = vsel %vm435, %v581, %v588
        %v591 = vshrl.u32 %v406, 16
        %v593 = vrot.slane %v591, 7
        %v594 = vrot.slane %v593, 4
        %v596 = vshrl.u32 %v407, 16
        %v598 = vrot.slane %v596, 7
        %v599 = vshll.u32 %v407, 16
        %v601 = vor.u32 %v598, %v599
        %v602 = vsel %vm435, %v594, %v601
        %v603 = vrot.slane %v598, 4
        %v605 = vshrl.u32 %v408, 16
        %v607 = vrot.slane %v605, 7
        %v608 = vshll.u32 %v408, 16
        %v610 = vor.u32 %v607, %v608
        %v611 = vsel %vm435, %v603, %v610
        %v613 = vshrl.u32 %v409, 16
        %v615 = vrot.slane %v613, 7
        %v616 = vrot.slane %v615, 4
        %v618 = vshrl.u32 %v410, 16
        %v620 = vrot.slane %v618, 7
        %v621 = vshll.u32 %v410, 16
        %v623 = vor.u32 %v620, %v621
        %v624 = vsel %vm435, %v616, %v623
        %v625 = vrot.slane %v620, 4
        %v627 = vshrl.u32 %v411, 16
        %v629 = vrot.slane %v627, 7
        %v630 = vshll.u32 %v411, 16
        %v632 = vor.u32 %v629, %v630
        %v633 = vsel %vm435, %v625, %v632
        %v635 = vshrl.u32 %v412, 16
        %v637 = vrot.slane %v635, 7
        %v638 = vrot.slane %v637, 4
        %v640 = vshrl.u32 %v413, 16
        %v642 = vrot.slane %v640, 7
        %v643 = vshll.u32 %v413, 16
        %v645 = vor.u32 %v642, %v643
        %v646 = vsel %vm435, %v638, %v645
        %v647 = vrot.slane %v642, 4
        %v649 = vshrl.u32 %v414, 16
        %v651 = vrot.slane %v649, 7
        %v652 = vshll.u32 %v414, 16
        %v654 = vor.u32 %v651, %v652
        %v655 = vsel %vm435, %v647, %v654
        %v657 = vshrl.u32 %v415, 16
        %v659 = vrot.slane %v657, 7
        %v660 = vrot.slane %v659, 4
        %v662 = vshrl.u32 %v416, 16
        %v664 = vrot.slane %v662, 7
        %v665 = vshll.u32 %v416, 16
        %v667 = vor.u32 %v664, %v665
        %v668 = vsel %vm435, %v660, %v667
        %v669 = vrot.slane %v664, 4
        %v671 = vshrl.u32 %v417, 16
        %v673 = vrot.slane %v671, 7
        %v674 = vshll.u32 %v417, 16
        %v676 = vor.u32 %v673, %v674
        %v677 = vsel %vm435, %v669, %v676
        %v679 = vshrl.u32 %v418, 16
        %v681 = vrot.slane %v679, 7
        %v682 = vrot.slane %v681, 4
        %v684 = vshrl.u32 %v419, 16
        %v686 = vrot.slane %v684, 7
        %v687 = vshll.u32 %v419, 16
        %v689 = vor.u32 %v686, %v687
        %v690 = vsel %vm435, %v682, %v689
        %v691 = vrot.slane %v686, 4
        %v693 = vshrl.u32 %v420, 16
        %v695 = vrot.slane %v693, 7
        %v696 = vshll.u32 %v420, 16
        %v698 = vor.u32 %v695, %v696
        %v699 = vsel %vm435, %v691, %v698
        %v701 = vshrl.u32 %v421, 16
        %v703 = vrot.slane %v701, 7
        %v704 = vrot.slane %v703, 4
        %v706 = vshrl.u32 %v422, 16
        %v708 = vrot.slane %v706, 7
        %v709 = vshll.u32 %v422, 16
        %v711 = vor.u32 %v708, %v709
        %v712 = vsel %vm435, %v704, %v711
        %v713 = vrot.slane %v708, 4
        %v715 = vshrl.u32 %v423, 16
        %v717 = vrot.slane %v715, 7
        %v718 = vshll.u32 %v423, 16
        %v720 = vor.u32 %v717, %v718
        %v721 = vsel %vm435, %v713, %v720
        %v723 = vshrl.u32 %v424, 16
        %v725 = vrot.slane %v723, 7
        %v726 = vrot.slane %v725, 4
        %v728 = vshrl.u32 %v425, 16
        %v730 = vrot.slane %v728, 7
        %v731 = vshll.u32 %v425, 16
        %v733 = vor.u32 %v730, %v731
        %v734 = vsel %vm435, %v726, %v733
        %v735 = vrot.slane %v730, 4
        %v737 = vshrl.u32 %v426, 16
        %v739 = vrot.slane %v737, 7
        %v740 = vshll.u32 %v426, 16
        %v742 = vor.u32 %v739, %v740
        %v743 = vsel %vm435, %v735, %v742
        %v745 = vshrl.u32 %v427, 16
        %v747 = vrot.slane %v745, 7
        %v748 = vrot.slane %v747, 4
        %v750 = vshrl.u32 %v428, 16
        %v752 = vrot.slane %v750, 7
        %v753 = vshll.u32 %v428, 16
        %v755 = vor.u32 %v752, %v753
        %v756 = vsel %vm435, %v748, %v755
        %v757 = vrot.slane %v752, 4
        %v759 = vshrl.u32 %v429, 16
        %v761 = vrot.slane %v759, 7
        %v762 = vshll.u32 %v429, 16
        %v764 = vor.u32 %v761, %v762
        %v765 = vsel %vm435, %v757, %v764
        %v767 = vshrl.u32 %v430, 16
        %v769 = vrot.slane %v767, 7
        %v770 = vrot.slane %v769, 4
        %v772 = vshrl.u32 %v431, 16
        %v774 = vrot.slane %v772, 7
        %v775 = vshll.u32 %v431, 16
        %v777 = vor.u32 %v774, %v775
        %v778 = vsel %vm435, %v770, %v777
        %v779 = vrot.slane %v774, 4
        %v781 = vshrl.u32 %v432, 16
        %v783 = vrot.slane %v781, 7
        %v784 = vshll.u32 %v432, 16
        %v786 = vor.u32 %v783, %v784
        %v787 = vsel %vm435, %v779, %v786
        %v788 = vld [vmem:[#allocation6] sm:$0xf]
        %v789 = vld [vmem:[#allocation6 + $0x4] sm:$0xf]
        %v790 = vld [vmem:[#allocation6 + $0x8] sm:$0xf]
        %v791 = vld [vmem:[#allocation6 + $0xc] sm:$0xf]
        %v792 = vld [vmem:[#allocation6 + $0x10] sm:$0xf]
        %v793 = vld [vmem:[#allocation6 + $0x14] sm:$0xf]
        %v794 = vld [vmem:[#allocation6 + $0x18] sm:$0xf]
        %v795 = vld [vmem:[#allocation6 + $0x1c] sm:$0xf]
        %v796 = vld [vmem:[#allocation6 + $0x20] sm:$0xf]
        %v797 = vld [vmem:[#allocation6 + $0x24] sm:$0xf]
        %v798 = vld [vmem:[#allocation6 + $0x28] sm:$0xf]
        %v799 = vld [vmem:[#allocation6 + $0x2c] sm:$0xf]
        %v800 = vld [vmem:[#allocation6 + $0x30] sm:$0xf]
        %v801 = vld [vmem:[#allocation6 + $0x34] sm:$0xf]
        %v802 = vld [vmem:[#allocation6 + $0x38] sm:$0xf]
        %v803 = vld [vmem:[#allocation6 + $0x3c] sm:$0xf]
        %s804 = scalar_lea.vmem [#allocation6], 64
        %v805 = vld [vmem:[%s804] sm:$0xf]
        %v806 = vld [vmem:[%s804 + $0x4] sm:$0xf]
        %v807 = vld [vmem:[%s804 + $0x8] sm:$0xf]
        %v808 = vld [vmem:[%s804 + $0xc] sm:$0xf]
        %v809 = vld [vmem:[%s804 + $0x10] sm:$0xf]
        %v810 = vld [vmem:[%s804 + $0x14] sm:$0xf]
        %v811 = vld [vmem:[%s804 + $0x18] sm:$0xf]
        %v812 = vld [vmem:[%s804 + $0x1c] sm:$0xf]
        %v813 = vld [vmem:[%s804 + $0x20] sm:$0xf]
        %v814 = vld [vmem:[%s804 + $0x24] sm:$0xf]
        %v815 = vld [vmem:[%s804 + $0x28] sm:$0xf]
        %v816 = vld [vmem:[%s804 + $0x2c] sm:$0xf]
        %v817 = vld [vmem:[%s804 + $0x30] sm:$0xf]
        %v818 = vld [vmem:[%s804 + $0x34] sm:$0xf]
        %v819 = vld [vmem:[%s804 + $0x38] sm:$0xf]
        %v820 = vld [vmem:[%s804 + $0x3c] sm:$0xf]
        %v853 = vunpack.c.l.b16 %v386
        %v854 = vunpack.c.l.b16 %v387
        %v855 = vunpack.c.l.b16 %v389
        %v856 = vunpack.c.l.b16 %v390
        %v857 = vunpack.c.l.b16 %v392
        %v858 = vunpack.c.l.b16 %v393
        %v859 = vunpack.c.l.b16 %v395
        %v860 = vunpack.c.l.b16 %v396
        %v861 = vunpack.c.l.b16 %v398
        %v862 = vunpack.c.l.b16 %v399
        %v863 = vunpack.c.l.b16 %v401
        %v864 = vunpack.c.l.b16 %v402
        %v865 = vunpack.c.l.b16 %v404
        %v866 = vunpack.c.l.b16 %v405
        %v867 = vunpack.c.l.b16 %v407
        %v868 = vunpack.c.l.b16 %v408
        %v869 = vunpack.c.l.b16 %v410
        %v870 = vunpack.c.l.b16 %v411
        %v871 = vunpack.c.l.b16 %v413
        %v872 = vunpack.c.l.b16 %v414
        %v873 = vunpack.c.l.b16 %v416
        %v874 = vunpack.c.l.b16 %v417
        %v875 = vunpack.c.l.b16 %v419
        %v876 = vunpack.c.l.b16 %v420
        %v877 = vunpack.c.l.b16 %v422
        %v878 = vunpack.c.l.b16 %v423
        %v879 = vunpack.c.l.b16 %v425
        %v880 = vunpack.c.l.b16 %v426
        %v881 = vunpack.c.l.b16 %v428
        %v882 = vunpack.c.l.b16 %v429
        %v883 = vunpack.c.l.b16 %v431
        %v884 = vunpack.c.l.b16 %v432
        %v885 = vpack.c.b16 %v854, %v853
        %v886 = vpack.c.b16 %v856, %v855
        %v887 = vpack.c.b16 %v858, %v857
        %v888 = vpack.c.b16 %v860, %v859
        %v889 = vpack.c.b16 %v862, %v861
        %v890 = vpack.c.b16 %v864, %v863
        %v891 = vpack.c.b16 %v866, %v865
        %v892 = vpack.c.b16 %v868, %v867
        %v893 = vpack.c.b16 %v870, %v869
        %v894 = vpack.c.b16 %v872, %v871
        %v895 = vpack.c.b16 %v874, %v873
        %v896 = vpack.c.b16 %v876, %v875
        %v897 = vpack.c.b16 %v878, %v877
        %v898 = vpack.c.b16 %v880, %v879
        %v899 = vpack.c.b16 %v882, %v881
        %v900 = vpack.c.b16 %v884, %v883
        %v933 = vunpack.c.l.b16 %v805
        %v934 = vunpack.c.l.b16 %v806
        %v935 = vunpack.c.l.b16 %v807
        %v936 = vunpack.c.l.b16 %v808
        %v937 = vunpack.c.l.b16 %v809
        %v938 = vunpack.c.l.b16 %v810
        %v939 = vunpack.c.l.b16 %v811
        %v940 = vunpack.c.l.b16 %v812
        %v941 = vunpack.c.l.b16 %v813
        %v942 = vunpack.c.l.b16 %v814
        %v943 = vunpack.c.l.b16 %v815
        %v944 = vunpack.c.l.b16 %v816
        %v945 = vunpack.c.l.b16 %v817
        %v946 = vunpack.c.l.b16 %v818
        %v947 = vunpack.c.l.b16 %v819
        %v948 = vunpack.c.l.b16 %v820
        %v949 = vpack.c.b16 %v934, %v933
        %v950 = vpack.c.b16 %v936, %v935
        %v951 = vpack.c.b16 %v938, %v937
        %v952 = vpack.c.b16 %v940, %v939
        %v953 = vpack.c.b16 %v942, %v941
        %v954 = vpack.c.b16 %v944, %v943
        %v955 = vpack.c.b16 %v946, %v945
        %v956 = vpack.c.b16 %v948, %v947
        %965 = vmatpush.bf16.msra.mxu0 %v956
        %966 = vmatpush.bf16.msra.mxu0 %v955
        %967 = vmatpush.bf16.msra.mxu0 %v954
        %968 = vmatpush.bf16.msra.mxu0 %v953
        %969 = vmatpush.bf16.msra.mxu0 %v952
        %970 = vmatpush.bf16.msra.mxu0 %v951
        %971 = vmatpush.bf16.msra.mxu0 %v950
        %972 = vmatpush.bf16.msra.mxu0 %v949
        %973 = vmatmul.bf16.gmra.mxu0 %v885
        %v974 = vpop.f32.mrf.mxu0
        %v975 = vadd.f32 0.0, %v974
        %v976 = vpop.f32.mrf.mxu0
        %v977 = vadd.f32 0.0, %v976
        %978 = vmatmul.bf16.gmra.mxu0 %v886
        %v979 = vpop.f32.mrf.mxu0
        %v980 = vadd.f32 0.0, %v979
        %v981 = vpop.f32.mrf.mxu0
        %v982 = vadd.f32 0.0, %v981
        %983 = vmatmul.bf16.gmra.mxu0 %v887
        %v984 = vpop.f32.mrf.mxu0
        %v985 = vadd.f32 0.0, %v984
        %v986 = vpop.f32.mrf.mxu0
        %v987 = vadd.f32 0.0, %v986
        %988 = vmatmul.bf16.gmra.mxu0 %v888
        %v989 = vpop.f32.mrf.mxu0
        %v990 = vadd.f32 0.0, %v989
        %v991 = vpop.f32.mrf.mxu0
        %v992 = vadd.f32 0.0, %v991
        %993 = vmatmul.bf16.gmra.mxu0 %v889
        %v994 = vpop.f32.mrf.mxu0
        %v995 = vadd.f32 0.0, %v994
        %v996 = vpop.f32.mrf.mxu0
        %v997 = vadd.f32 0.0, %v996
        %998 = vmatmul.bf16.gmra.mxu0 %v890
        %v999 = vpop.f32.mrf.mxu0
        %v1000 = vadd.f32 0.0, %v999
        %v1001 = vpop.f32.mrf.mxu0
        %v1002 = vadd.f32 0.0, %v1001
        %1003 = vmatmul.bf16.gmra.mxu0 %v891
        %v1004 = vpop.f32.mrf.mxu0
        %v1005 = vadd.f32 0.0, %v1004
        %v1006 = vpop.f32.mrf.mxu0
        %v1007 = vadd.f32 0.0, %v1006
        %1008 = vmatmul.bf16.gmra.mxu0 %v892
        %v1009 = vpop.f32.mrf.mxu0
        %v1010 = vadd.f32 0.0, %v1009
        %v1011 = vpop.f32.mrf.mxu0
        %v1012 = vadd.f32 0.0, %v1011
        %1013 = vmatmul.bf16.gmra.mxu0 %v893
        %v1014 = vpop.f32.mrf.mxu0
        %v1015 = vadd.f32 0.0, %v1014
        %v1016 = vpop.f32.mrf.mxu0
        %v1017 = vadd.f32 0.0, %v1016
        %1018 = vmatmul.bf16.gmra.mxu0 %v894
        %v1019 = vpop.f32.mrf.mxu0
        %v1020 = vadd.f32 0.0, %v1019
        %v1021 = vpop.f32.mrf.mxu0
        %v1022 = vadd.f32 0.0, %v1021
        %1023 = vmatmul.bf16.gmra.mxu0 %v895
        %v1024 = vpop.f32.mrf.mxu0
        %v1025 = vadd.f32 0.0, %v1024
        %v1026 = vpop.f32.mrf.mxu0
        %v1027 = vadd.f32 0.0, %v1026
        %1028 = vmatmul.bf16.gmra.mxu0 %v896
        %v1029 = vpop.f32.mrf.mxu0
        %v1030 = vadd.f32 0.0, %v1029
        %v1031 = vpop.f32.mrf.mxu0
        %v1032 = vadd.f32 0.0, %v1031
        %1033 = vmatmul.bf16.gmra.mxu0 %v897
        %v1034 = vpop.f32.mrf.mxu0
        %v1035 = vadd.f32 0.0, %v1034
        %v1036 = vpop.f32.mrf.mxu0
        %v1037 = vadd.f32 0.0, %v1036
        %1038 = vmatmul.bf16.gmra.mxu0 %v898
        %v1039 = vpop.f32.mrf.mxu0
        %v1040 = vadd.f32 0.0, %v1039
        %v1041 = vpop.f32.mrf.mxu0
        %v1042 = vadd.f32 0.0, %v1041
        %1043 = vmatmul.bf16.gmra.mxu0 %v899
        %v1044 = vpop.f32.mrf.mxu0
        %v1045 = vadd.f32 0.0, %v1044
        %v1046 = vpop.f32.mrf.mxu0
        %v1047 = vadd.f32 0.0, %v1046
        %1048 = vmatmul.bf16.gmra.mxu0 %v900
        %v1049 = vpop.f32.mrf.mxu0
        %v1050 = vadd.f32 0.0, %v1049
        %v1051 = vpop.f32.mrf.mxu0
        %v1052 = vadd.f32 0.0, %v1051
        %1053 = vdwg.mxu0
        %v1054 = vunpack.c.l.b16 %v448
        %v1055 = vunpack.c.l.b16 %v457
        %v1056 = vunpack.c.l.b16 %v470
        %v1057 = vunpack.c.l.b16 %v479
        %v1058 = vunpack.c.l.b16 %v492
        %v1059 = vunpack.c.l.b16 %v501
        %v1060 = vunpack.c.l.b16 %v514
        %v1061 = vunpack.c.l.b16 %v523
        %v1062 = vunpack.c.l.b16 %v536
        %v1063 = vunpack.c.l.b16 %v545
        %v1064 = vunpack.c.l.b16 %v558
        %v1065 = vunpack.c.l.b16 %v567
        %v1066 = vunpack.c.l.b16 %v580
        %v1067 = vunpack.c.l.b16 %v589
        %v1068 = vunpack.c.l.b16 %v602
        %v1069 = vunpack.c.l.b16 %v611
        %v1070 = vunpack.c.l.b16 %v624
        %v1071 = vunpack.c.l.b16 %v633
        %v1072 = vunpack.c.l.b16 %v646
        %v1073 = vunpack.c.l.b16 %v655
        %v1074 = vunpack.c.l.b16 %v668
        %v1075 = vunpack.c.l.b16 %v677
        %v1076 = vunpack.c.l.b16 %v690
        %v1077 = vunpack.c.l.b16 %v699
        %v1078 = vunpack.c.l.b16 %v712
        %v1079 = vunpack.c.l.b16 %v721
        %v1080 = vunpack.c.l.b16 %v734
        %v1081 = vunpack.c.l.b16 %v743
        %v1082 = vunpack.c.l.b16 %v756
        %v1083 = vunpack.c.l.b16 %v765
        %v1084 = vunpack.c.l.b16 %v778
        %v1085 = vunpack.c.l.b16 %v787
        %v1086 = vpack.c.b16 %v1055, %v1054
        %v1087 = vpack.c.b16 %v1057, %v1056
        %v1088 = vpack.c.b16 %v1059, %v1058
        %v1089 = vpack.c.b16 %v1061, %v1060
        %v1090 = vpack.c.b16 %v1063, %v1062
        %v1091 = vpack.c.b16 %v1065, %v1064
        %v1092 = vpack.c.b16 %v1067, %v1066
        %v1093 = vpack.c.b16 %v1069, %v1068
        %v1094 = vpack.c.b16 %v1071, %v1070
        %v1095 = vpack.c.b16 %v1073, %v1072
        %v1096 = vpack.c.b16 %v1075, %v1074
        %v1097 = vpack.c.b16 %v1077, %v1076
        %v1098 = vpack.c.b16 %v1079, %v1078
        %v1099 = vpack.c.b16 %v1081, %v1080
        %v1100 = vpack.c.b16 %v1083, %v1082
        %v1101 = vpack.c.b16 %v1085, %v1084
        %v1134 = vunpack.c.l.b16 %v788
        %v1135 = vunpack.c.l.b16 %v789
        %v1136 = vunpack.c.l.b16 %v790
        %v1137 = vunpack.c.l.b16 %v791
        %v1138 = vunpack.c.l.b16 %v792
        %v1139 = vunpack.c.l.b16 %v793
        %v1140 = vunpack.c.l.b16 %v794
        %v1141 = vunpack.c.l.b16 %v795
        %v1142 = vunpack.c.l.b16 %v796
        %v1143 = vunpack.c.l.b16 %v797
        %v1144 = vunpack.c.l.b16 %v798
        %v1145 = vunpack.c.l.b16 %v799
        %v1146 = vunpack.c.l.b16 %v800
        %v1147 = vunpack.c.l.b16 %v801
        %v1148 = vunpack.c.l.b16 %v802
        %v1149 = vunpack.c.l.b16 %v803
        %v1150 = vpack.c.b16 %v1135, %v1134
        %v1151 = vpack.c.b16 %v1137, %v1136
        %v1152 = vpack.c.b16 %v1139, %v1138
        %v1153 = vpack.c.b16 %v1141, %v1140
        %v1154 = vpack.c.b16 %v1143, %v1142
        %v1155 = vpack.c.b16 %v1145, %v1144
        %v1156 = vpack.c.b16 %v1147, %v1146
        %v1157 = vpack.c.b16 %v1149, %v1148
        %1166 = vmatpush.bf16.msra.mxu0 %v1157
        %1167 = vmatpush.bf16.msra.mxu0 %v1156
        %1168 = vmatpush.bf16.msra.mxu0 %v1155
        %1169 = vmatpush.bf16.msra.mxu0 %v1154
        %1170 = vmatpush.bf16.msra.mxu0 %v1153
        %1171 = vmatpush.bf16.msra.mxu0 %v1152
        %1172 = vmatpush.bf16.msra.mxu0 %v1151
        %1173 = vmatpush.bf16.msra.mxu0 %v1150
        %1174 = vmatmul.bf16.gmra.mxu0 %v1086
        %v1175 = vpop.f32.mrf.mxu0
        %v1176 = vadd.f32 %v975, %v1175
        %v1177 = vpop.f32.mrf.mxu0
        %v1178 = vadd.f32 %v977, %v1177
        %1179 = vmatmul.bf16.gmra.mxu0 %v1087
        %v1180 = vpop.f32.mrf.mxu0
        %v1181 = vadd.f32 %v980, %v1180
        %v1182 = vpop.f32.mrf.mxu0
        %v1183 = vadd.f32 %v982, %v1182
        %1184 = vmatmul.bf16.gmra.mxu0 %v1088
        %v1185 = vpop.f32.mrf.mxu0
        %v1186 = vadd.f32 %v985, %v1185
        %v1187 = vpop.f32.mrf.mxu0
        %v1188 = vadd.f32 %v987, %v1187
        %1189 = vmatmul.bf16.gmra.mxu0 %v1089
        %v1190 = vpop.f32.mrf.mxu0
        %v1191 = vadd.f32 %v990, %v1190
        %v1192 = vpop.f32.mrf.mxu0
        %v1193 = vadd.f32 %v992, %v1192
        %1194 = vmatmul.bf16.gmra.mxu0 %v1090
        %v1195 = vpop.f32.mrf.mxu0
        %v1196 = vadd.f32 %v995, %v1195
        %v1197 = vpop.f32.mrf.mxu0
        %v1198 = vadd.f32 %v997, %v1197
        %1199 = vmatmul.bf16.gmra.mxu0 %v1091
        %v1200 = vpop.f32.mrf.mxu0
        %v1201 = vadd.f32 %v1000, %v1200
        %v1202 = vpop.f32.mrf.mxu0
        %v1203 = vadd.f32 %v1002, %v1202
        %1204 = vmatmul.bf16.gmra.mxu0 %v1092
        %v1205 = vpop.f32.mrf.mxu0
        %v1206 = vadd.f32 %v1005, %v1205
        %v1207 = vpop.f32.mrf.mxu0
        %v1208 = vadd.f32 %v1007, %v1207
        %1209 = vmatmul.bf16.gmra.mxu0 %v1093
        %v1210 = vpop.f32.mrf.mxu0
        %v1211 = vadd.f32 %v1010, %v1210
        %v1212 = vpop.f32.mrf.mxu0
        %v1213 = vadd.f32 %v1012, %v1212
        %1214 = vmatmul.bf16.gmra.mxu0 %v1094
        %v1215 = vpop.f32.mrf.mxu0
        %v1216 = vadd.f32 %v1015, %v1215
        %v1217 = vpop.f32.mrf.mxu0
        %v1218 = vadd.f32 %v1017, %v1217
        %1219 = vmatmul.bf16.gmra.mxu0 %v1095
        %v1220 = vpop.f32.mrf.mxu0
        %v1221 = vadd.f32 %v1020, %v1220
        %v1222 = vpop.f32.mrf.mxu0
        %v1223 = vadd.f32 %v1022, %v1222
        %1224 = vmatmul.bf16.gmra.mxu0 %v1096
        %v1225 = vpop.f32.mrf.mxu0
        %v1226 = vadd.f32 %v1025, %v1225
        %v1227 = vpop.f32.mrf.mxu0
        %v1228 = vadd.f32 %v1027, %v1227
        %1229 = vmatmul.bf16.gmra.mxu0 %v1097
        %v1230 = vpop.f32.mrf.mxu0
        %v1231 = vadd.f32 %v1030, %v1230
        %v1232 = vpop.f32.mrf.mxu0
        %v1233 = vadd.f32 %v1032, %v1232
        %1234 = vmatmul.bf16.gmra.mxu0 %v1098
        %v1235 = vpop.f32.mrf.mxu0
        %v1236 = vadd.f32 %v1035, %v1235
        %v1237 = vpop.f32.mrf.mxu0
        %v1238 = vadd.f32 %v1037, %v1237
        %1239 = vmatmul.bf16.gmra.mxu0 %v1099
        %v1240 = vpop.f32.mrf.mxu0
        %v1241 = vadd.f32 %v1040, %v1240
        %v1242 = vpop.f32.mrf.mxu0
        %v1243 = vadd.f32 %v1042, %v1242
        %1244 = vmatmul.bf16.gmra.mxu0 %v1100
        %v1245 = vpop.f32.mrf.mxu0
        %v1246 = vadd.f32 %v1045, %v1245
        %v1247 = vpop.f32.mrf.mxu0
        %v1248 = vadd.f32 %v1047, %v1247
        %1249 = vmatmul.bf16.gmra.mxu0 %v1101
        %v1250 = vpop.f32.mrf.mxu0
        %v1251 = vadd.f32 %v1050, %v1250
        %v1252 = vpop.f32.mrf.mxu0
        %v1253 = vadd.f32 %v1052, %v1252
        %1254 = vdwg.mxu0
        %v1255 = vld [vmem:[%s384 + $0x4] sm:$0xf]
        %v1256 = vld [vmem:[%s384 + $0x8] sm:$0xf]
        %v1257 = vld [vmem:[%s384 + $0xc] sm:$0x1]
        %v1258 = vld [vmem:[%s384 + $0x14] sm:$0xf]
        %v1259 = vld [vmem:[%s384 + $0x18] sm:$0xf]
        %v1260 = vld [vmem:[%s384 + $0x1c] sm:$0x1]
        %v1261 = vld [vmem:[%s384 + $0x24] sm:$0xf]
        %v1262 = vld [vmem:[%s384 + $0x28] sm:$0xf]
        %v1263 = vld [vmem:[%s384 + $0x2c] sm:$0x1]
        %v1264 = vld [vmem:[%s384 + $0x34] sm:$0xf]
        %v1265 = vld [vmem:[%s384 + $0x38] sm:$0xf]
        %v1266 = vld [vmem:[%s384 + $0x3c] sm:$0x1]
        %v1267 = vld [vmem:[%s384 + $0x44] sm:$0xf]
        %v1268 = vld [vmem:[%s384 + $0x48] sm:$0xf]
        %v1269 = vld [vmem:[%s384 + $0x4c] sm:$0x1]
        %v1270 = vld [vmem:[%s384 + $0x54] sm:$0xf]
        %v1271 = vld [vmem:[%s384 + $0x58] sm:$0xf]
        %v1272 = vld [vmem:[%s384 + $0x5c] sm:$0x1]
        %v1273 = vld [vmem:[%s384 + $0x64] sm:$0xf]
        %v1274 = vld [vmem:[%s384 + $0x68] sm:$0xf]
        %v1275 = vld [vmem:[%s384 + $0x6c] sm:$0x1]
        %v1276 = vld [vmem:[%s384 + $0x74] sm:$0xf]
        %v1277 = vld [vmem:[%s384 + $0x78] sm:$0xf]
        %v1278 = vld [vmem:[%s384 + $0x7c] sm:$0x1]
        %v1279 = vld [vmem:[%s384 + $0x84] sm:$0xf]
        %v1280 = vld [vmem:[%s384 + $0x88] sm:$0xf]
        %v1281 = vld [vmem:[%s384 + $0x8c] sm:$0x1]
        %v1282 = vld [vmem:[%s384 + $0x94] sm:$0xf]
        %v1283 = vld [vmem:[%s384 + $0x98] sm:$0xf]
        %v1284 = vld [vmem:[%s384 + $0x9c] sm:$0x1]
        %v1285 = vld [vmem:[%s384 + $0xa4] sm:$0xf]
        %v1286 = vld [vmem:[%s384 + $0xa8] sm:$0xf]
        %v1287 = vld [vmem:[%s384 + $0xac] sm:$0x1]
        %v1288 = vld [vmem:[%s384 + $0xb4] sm:$0xf]
        %v1289 = vld [vmem:[%s384 + $0xb8] sm:$0xf]
        %v1290 = vld [vmem:[%s384 + $0xbc] sm:$0x1]
        %v1291 = vld [vmem:[%s384 + $0xc4] sm:$0xf]
        %v1292 = vld [vmem:[%s384 + $0xc8] sm:$0xf]
        %v1293 = vld [vmem:[%s384 + $0xcc] sm:$0x1]
        %v1294 = vld [vmem:[%s384 + $0xd4] sm:$0xf]
        %v1295 = vld [vmem:[%s384 + $0xd8] sm:$0xf]
        %v1296 = vld [vmem:[%s384 + $0xdc] sm:$0x1]
        %v1297 = vld [vmem:[%s384 + $0xe4] sm:$0xf]
        %v1298 = vld [vmem:[%s384 + $0xe8] sm:$0xf]
        %v1299 = vld [vmem:[%s384 + $0xec] sm:$0x1]
        %v1300 = vld [vmem:[%s384 + $0xf4] sm:$0xf]
        %v1301 = vld [vmem:[%s384 + $0xf8] sm:$0xf]
        %v1302 = vld [vmem:[%s384 + $0xfc] sm:$0x1]
        %vm1303 = vsmask.f32 3328
        %vm1304 = vsmask.f32 7440
        %vm1305 = vmor %vm1303, %vm1304
        %v1307 = vshrl.u32 %v1255, 16
        %v1309 = vrot.slane %v1307, 4
        %v1310 = vshll.u32 %v1255, 16
        %v1312 = vrot.slane %v1310, 5
        %v1313 = vor.u32 %v1309, %v1312
        %v1314 = vrot.slane %v1313, 4
        %v1316 = vshll.u32 %v1256, 16
        %v1318 = vrot.slane %v1316, 5
        %v1319 = vsel %vm1305, %v1314, %v1318
        %v1320 = vshrl.u32 %v1256, 16
        %v1322 = vrot.slane %v1320, 4
        %v1323 = vor.u32 %v1322, %v1318
        %v1324 = vrot.slane %v1323, 4
        %v1326 = vshll.u32 %v1257, 16
        %v1328 = vrot.slane %v1326, 5
        %v1329 = vsel %vm1305, %v1324, %v1328
        %v1331 = vshrl.u32 %v1258, 16
        %v1333 = vrot.slane %v1331, 4
        %v1334 = vshll.u32 %v1258, 16
        %v1336 = vrot.slane %v1334, 5
        %v1337 = vor.u32 %v1333, %v1336
        %v1338 = vrot.slane %v1337, 4
        %v1340 = vshll.u32 %v1259, 16
        %v1342 = vrot.slane %v1340, 5
        %v1343 = vsel %vm1305, %v1338, %v1342
        %v1344 = vshrl.u32 %v1259, 16
        %v1346 = vrot.slane %v1344, 4
        %v1347 = vor.u32 %v1346, %v1342
        %v1348 = vrot.slane %v1347, 4
        %v1350 = vshll.u32 %v1260, 16
        %v1352 = vrot.slane %v1350, 5
        %v1353 = vsel %vm1305, %v1348, %v1352
        %v1355 = vshrl.u32 %v1261, 16
        %v1357 = vrot.slane %v1355, 4
        %v1358 = vshll.u32 %v1261, 16
        %v1360 = vrot.slane %v1358, 5
        %v1361 = vor.u32 %v1357, %v1360
        %v1362 = vrot.slane %v1361, 4
        %v1364 = vshll.u32 %v1262, 16
        %v1366 = vrot.slane %v1364, 5
        %v1367 = vsel %vm1305, %v1362, %v1366
        %v1368 = vshrl.u32 %v1262, 16
        %v1370 = vrot.slane %v1368, 4
        %v1371 = vor.u32 %v1370, %v1366
        %v1372 = vrot.slane %v1371, 4
        %v1374 = vshll.u32 %v1263, 16
        %v1376 = vrot.slane %v1374, 5
        %v1377 = vsel %vm1305, %v1372, %v1376
        %v1379 = vshrl.u32 %v1264, 16
        %v1381 = vrot.slane %v1379, 4
        %v1382 = vshll.u32 %v1264, 16
        %v1384 = vrot.slane %v1382, 5
        %v1385 = vor.u32 %v1381, %v1384
        %v1386 = vrot.slane %v1385, 4
        %v1388 = vshll.u32 %v1265, 16
        %v1390 = vrot.slane %v1388, 5
        %v1391 = vsel %vm1305, %v1386, %v1390
        %v1392 = vshrl.u32 %v1265, 16
        %v1394 = vrot.slane %v1392, 4
        %v1395 = vor.u32 %v1394, %v1390
        %v1396 = vrot.slane %v1395, 4
        %v1398 = vshll.u32 %v1266, 16
        %v1400 = vrot.slane %v1398, 5
        %v1401 = vsel %vm1305, %v1396, %v1400
        %v1403 = vshrl.u32 %v1267, 16
        %v1405 = vrot.slane %v1403, 4
        %v1406 = vshll.u32 %v1267, 16
        %v1408 = vrot.slane %v1406, 5
        %v1409 = vor.u32 %v1405, %v1408
        %v1410 = vrot.slane %v1409, 4
        %v1412 = vshll.u32 %v1268, 16
        %v1414 = vrot.slane %v1412, 5
        %v1415 = vsel %vm1305, %v1410, %v1414
        %v1416 = vshrl.u32 %v1268, 16
        %v1418 = vrot.slane %v1416, 4
        %v1419 = vor.u32 %v1418, %v1414
        %v1420 = vrot.slane %v1419, 4
        %v1422 = vshll.u32 %v1269, 16
        %v1424 = vrot.slane %v1422, 5
        %v1425 = vsel %vm1305, %v1420, %v1424
        %v1427 = vshrl.u32 %v1270, 16
        %v1429 = vrot.slane %v1427, 4
        %v1430 = vshll.u32 %v1270, 16
        %v1432 = vrot.slane %v1430, 5
        %v1433 = vor.u32 %v1429, %v1432
        %v1434 = vrot.slane %v1433, 4
        %v1436 = vshll.u32 %v1271, 16
        %v1438 = vrot.slane %v1436, 5
        %v1439 = vsel %vm1305, %v1434, %v1438
        %v1440 = vshrl.u32 %v1271, 16
        %v1442 = vrot.slane %v1440, 4
        %v1443 = vor.u32 %v1442, %v1438
        %v1444 = vrot.slane %v1443, 4
        %v1446 = vshll.u32 %v1272, 16
        %v1448 = vrot.slane %v1446, 5
        %v1449 = vsel %vm1305, %v1444, %v1448
        %v1451 = vshrl.u32 %v1273, 16
        %v1453 = vrot.slane %v1451, 4
        %v1454 = vshll.u32 %v1273, 16
        %v1456 = vrot.slane %v1454, 5
        %v1457 = vor.u32 %v1453, %v1456
        %v1458 = vrot.slane %v1457, 4
        %v1460 = vshll.u32 %v1274, 16
        %v1462 = vrot.slane %v1460, 5
        %v1463 = vsel %vm1305, %v1458, %v1462
        %v1464 = vshrl.u32 %v1274, 16
        %v1466 = vrot.slane %v1464, 4
        %v1467 = vor.u32 %v1466, %v1462
        %v1468 = vrot.slane %v1467, 4
        %v1470 = vshll.u32 %v1275, 16
        %v1472 = vrot.slane %v1470, 5
        %v1473 = vsel %vm1305, %v1468, %v1472
        %v1475 = vshrl.u32 %v1276, 16
        %v1477 = vrot.slane %v1475, 4
        %v1478 = vshll.u32 %v1276, 16
        %v1480 = vrot.slane %v1478, 5
        %v1481 = vor.u32 %v1477, %v1480
        %v1482 = vrot.slane %v1481, 4
        %v1484 = vshll.u32 %v1277, 16
        %v1486 = vrot.slane %v1484, 5
        %v1487 = vsel %vm1305, %v1482, %v1486
        %v1488 = vshrl.u32 %v1277, 16
        %v1490 = vrot.slane %v1488, 4
        %v1491 = vor.u32 %v1490, %v1486
        %v1492 = vrot.slane %v1491, 4
        %v1494 = vshll.u32 %v1278, 16
        %v1496 = vrot.slane %v1494, 5
        %v1497 = vsel %vm1305, %v1492, %v1496
        %v1499 = vshrl.u32 %v1279, 16
        %v1501 = vrot.slane %v1499, 4
        %v1502 = vshll.u32 %v1279, 16
        %v1504 = vrot.slane %v1502, 5
        %v1505 = vor.u32 %v1501, %v1504
        %v1506 = vrot.slane %v1505, 4
        %v1508 = vshll.u32 %v1280, 16
        %v1510 = vrot.slane %v1508, 5
        %v1511 = vsel %vm1305, %v1506, %v1510
        %v1512 = vshrl.u32 %v1280, 16
        %v1514 = vrot.slane %v1512, 4
        %v1515 = vor.u32 %v1514, %v1510
        %v1516 = vrot.slane %v1515, 4
        %v1518 = vshll.u32 %v1281, 16
        %v1520 = vrot.slane %v1518, 5
        %v1521 = vsel %vm1305, %v1516, %v1520
        %v1523 = vshrl.u32 %v1282, 16
        %v1525 = vrot.slane %v1523, 4
        %v1526 = vshll.u32 %v1282, 16
        %v1528 = vrot.slane %v1526, 5
        %v1529 = vor.u32 %v1525, %v1528
        %v1530 = vrot.slane %v1529, 4
        %v1532 = vshll.u32 %v1283, 16
        %v1534 = vrot.slane %v1532, 5
        %v1535 = vsel %vm1305, %v1530, %v1534
        %v1536 = vshrl.u32 %v1283, 16
        %v1538 = vrot.slane %v1536, 4
        %v1539 = vor.u32 %v1538, %v1534
        %v1540 = vrot.slane %v1539, 4
        %v1542 = vshll.u32 %v1284, 16
        %v1544 = vrot.slane %v1542, 5
        %v1545 = vsel %vm1305, %v1540, %v1544
        %v1547 = vshrl.u32 %v1285, 16
        %v1549 = vrot.slane %v1547, 4
        %v1550 = vshll.u32 %v1285, 16
        %v1552 = vrot.slane %v1550, 5
        %v1553 = vor.u32 %v1549, %v1552
        %v1554 = vrot.slane %v1553, 4
        %v1556 = vshll.u32 %v1286, 16
        %v1558 = vrot.slane %v1556, 5
        %v1559 = vsel %vm1305, %v1554, %v1558
        %v1560 = vshrl.u32 %v1286, 16
        %v1562 = vrot.slane %v1560, 4
        %v1563 = vor.u32 %v1562, %v1558
        %v1564 = vrot.slane %v1563, 4
        %v1566 = vshll.u32 %v1287, 16
        %v1568 = vrot.slane %v1566, 5
        %v1569 = vsel %vm1305, %v1564, %v1568
        %v1571 = vshrl.u32 %v1288, 16
        %v1573 = vrot.slane %v1571, 4
        %v1574 = vshll.u32 %v1288, 16
        %v1576 = vrot.slane %v1574, 5
        %v1577 = vor.u32 %v1573, %v1576
        %v1578 = vrot.slane %v1577, 4
        %v1580 = vshll.u32 %v1289, 16
        %v1582 = vrot.slane %v1580, 5
        %v1583 = vsel %vm1305, %v1578, %v1582
        %v1584 = vshrl.u32 %v1289, 16
        %v1586 = vrot.slane %v1584, 4
        %v1587 = vor.u32 %v1586, %v1582
        %v1588 = vrot.slane %v1587, 4
        %v1590 = vshll.u32 %v1290, 16
        %v1592 = vrot.slane %v1590, 5
        %v1593 = vsel %vm1305, %v1588, %v1592
        %v1595 = vshrl.u32 %v1291, 16
        %v1597 = vrot.slane %v1595, 4
        %v1598 = vshll.u32 %v1291, 16
        %v1600 = vrot.slane %v1598, 5
        %v1601 = vor.u32 %v1597, %v1600
        %v1602 = vrot.slane %v1601, 4
        %v1604 = vshll.u32 %v1292, 16
        %v1606 = vrot.slane %v1604, 5
        %v1607 = vsel %vm1305, %v1602, %v1606
        %v1608 = vshrl.u32 %v1292, 16
        %v1610 = vrot.slane %v1608, 4
        %v1611 = vor.u32 %v1610, %v1606
        %v1612 = vrot.slane %v1611, 4
        %v1614 = vshll.u32 %v1293, 16
        %v1616 = vrot.slane %v1614, 5
        %v1617 = vsel %vm1305, %v1612, %v1616
        %v1619 = vshrl.u32 %v1294, 16
        %v1621 = vrot.slane %v1619, 4
        %v1622 = vshll.u32 %v1294, 16
        %v1624 = vrot.slane %v1622, 5
        %v1625 = vor.u32 %v1621, %v1624
        %v1626 = vrot.slane %v1625, 4
        %v1628 = vshll.u32 %v1295, 16
        %v1630 = vrot.slane %v1628, 5
        %v1631 = vsel %vm1305, %v1626, %v1630
        %v1632 = vshrl.u32 %v1295, 16
        %v1634 = vrot.slane %v1632, 4
        %v1635 = vor.u32 %v1634, %v1630
        %v1636 = vrot.slane %v1635, 4
        %v1638 = vshll.u32 %v1296, 16
        %v1640 = vrot.slane %v1638, 5
        %v1641 = vsel %vm1305, %v1636, %v1640
        %v1643 = vshrl.u32 %v1297, 16
        %v1645 = vrot.slane %v1643, 4
        %v1646 = vshll.u32 %v1297, 16
        %v1648 = vrot.slane %v1646, 5
        %v1649 = vor.u32 %v1645, %v1648
        %v1650 = vrot.slane %v1649, 4
        %v1652 = vshll.u32 %v1298, 16
        %v1654 = vrot.slane %v1652, 5
        %v1655 = vsel %vm1305, %v1650, %v1654
        %v1656 = vshrl.u32 %v1298, 16
        %v1658 = vrot.slane %v1656, 4
        %v1659 = vor.u32 %v1658, %v1654
        %v1660 = vrot.slane %v1659, 4
        %v1662 = vshll.u32 %v1299, 16
        %v1664 = vrot.slane %v1662, 5
        %v1665 = vsel %vm1305, %v1660, %v1664
        %v1667 = vshrl.u32 %v1300, 16
        %v1669 = vrot.slane %v1667, 4
        %v1670 = vshll.u32 %v1300, 16
        %v1672 = vrot.slane %v1670, 5
        %v1673 = vor.u32 %v1669, %v1672
        %v1674 = vrot.slane %v1673, 4
        %v1676 = vshll.u32 %v1301, 16
        %v1678 = vrot.slane %v1676, 5
        %v1679 = vsel %vm1305, %v1674, %v1678
        %v1680 = vshrl.u32 %v1301, 16
        %v1682 = vrot.slane %v1680, 4
        %v1683 = vor.u32 %v1682, %v1678
        %v1684 = vrot.slane %v1683, 4
        %v1686 = vshll.u32 %v1302, 16
        %v1688 = vrot.slane %v1686, 5
        %v1689 = vsel %vm1305, %v1684, %v1688
        %s1690 = scalar_lea.vmem [#allocation6], 128
        %v1691 = vld [vmem:[%s1690] sm:$0xf]
        %v1692 = vld [vmem:[%s1690 + $0x4] sm:$0xf]
        %v1693 = vld [vmem:[%s1690 + $0x8] sm:$0xf]
        %v1694 = vld [vmem:[%s1690 + $0xc] sm:$0xf]
        %v1695 = vld [vmem:[%s1690 + $0x10] sm:$0xf]
        %v1696 = vld [vmem:[%s1690 + $0x14] sm:$0xf]
        %v1697 = vld [vmem:[%s1690 + $0x18] sm:$0xf]
        %v1698 = vld [vmem:[%s1690 + $0x1c] sm:$0xf]
        %v1699 = vld [vmem:[%s1690 + $0x20] sm:$0xf]
        %v1700 = vld [vmem:[%s1690 + $0x24] sm:$0xf]
        %v1701 = vld [vmem:[%s1690 + $0x28] sm:$0xf]
        %v1702 = vld [vmem:[%s1690 + $0x2c] sm:$0xf]
        %v1703 = vld [vmem:[%s1690 + $0x30] sm:$0xf]
        %v1704 = vld [vmem:[%s1690 + $0x34] sm:$0xf]
        %v1705 = vld [vmem:[%s1690 + $0x38] sm:$0xf]
        %v1706 = vld [vmem:[%s1690 + $0x3c] sm:$0xf]
        %v1707 = vunpack.c.l.b16 %v1319
        %v1708 = vunpack.c.l.b16 %v1329
        %v1709 = vunpack.c.l.b16 %v1343
        %v1710 = vunpack.c.l.b16 %v1353
        %v1711 = vunpack.c.l.b16 %v1367
        %v1712 = vunpack.c.l.b16 %v1377
        %v1713 = vunpack.c.l.b16 %v1391
        %v1714 = vunpack.c.l.b16 %v1401
        %v1715 = vunpack.c.l.b16 %v1415
        %v1716 = vunpack.c.l.b16 %v1425
        %v1717 = vunpack.c.l.b16 %v1439
        %v1718 = vunpack.c.l.b16 %v1449
        %v1719 = vunpack.c.l.b16 %v1463
        %v1720 = vunpack.c.l.b16 %v1473
        %v1721 = vunpack.c.l.b16 %v1487
        %v1722 = vunpack.c.l.b16 %v1497
        %v1723 = vunpack.c.l.b16 %v1511
        %v1724 = vunpack.c.l.b16 %v1521
        %v1725 = vunpack.c.l.b16 %v1535
        %v1726 = vunpack.c.l.b16 %v1545
        %v1727 = vunpack.c.l.b16 %v1559
        %v1728 = vunpack.c.l.b16 %v1569
        %v1729 = vunpack.c.l.b16 %v1583
        %v1730 = vunpack.c.l.b16 %v1593
        %v1731 = vunpack.c.l.b16 %v1607
        %v1732 = vunpack.c.l.b16 %v1617
        %v1733 = vunpack.c.l.b16 %v1631
        %v1734 = vunpack.c.l.b16 %v1641
        %v1735 = vunpack.c.l.b16 %v1655
        %v1736 = vunpack.c.l.b16 %v1665
        %v1737 = vunpack.c.l.b16 %v1679
        %v1738 = vunpack.c.l.b16 %v1689
        %v1739 = vpack.c.b16 %v1708, %v1707
        %v1740 = vpack.c.b16 %v1710, %v1709
        %v1741 = vpack.c.b16 %v1712, %v1711
        %v1742 = vpack.c.b16 %v1714, %v1713
        %v1743 = vpack.c.b16 %v1716, %v1715
        %v1744 = vpack.c.b16 %v1718, %v1717
        %v1745 = vpack.c.b16 %v1720, %v1719
        %v1746 = vpack.c.b16 %v1722, %v1721
        %v1747 = vpack.c.b16 %v1724, %v1723
        %v1748 = vpack.c.b16 %v1726, %v1725
        %v1749 = vpack.c.b16 %v1728, %v1727
        %v1750 = vpack.c.b16 %v1730, %v1729
        %v1751 = vpack.c.b16 %v1732, %v1731
        %v1752 = vpack.c.b16 %v1734, %v1733
        %v1753 = vpack.c.b16 %v1736, %v1735
        %v1754 = vpack.c.b16 %v1738, %v1737
        %v1787 = vunpack.c.l.b16 %v1691
        %v1788 = vunpack.c.l.b16 %v1692
        %v1789 = vunpack.c.l.b16 %v1693
        %v1790 = vunpack.c.l.b16 %v1694
        %v1791 = vunpack.c.l.b16 %v1695
        %v1792 = vunpack.c.l.b16 %v1696
        %v1793 = vunpack.c.l.b16 %v1697
        %v1794 = vunpack.c.l.b16 %v1698
        %v1795 = vunpack.c.l.b16 %v1699
        %v1796 = vunpack.c.l.b16 %v1700
        %v1797 = vunpack.c.l.b16 %v1701
        %v1798 = vunpack.c.l.b16 %v1702
        %v1799 = vunpack.c.l.b16 %v1703
        %v1800 = vunpack.c.l.b16 %v1704
        %v1801 = vunpack.c.l.b16 %v1705
        %v1802 = vunpack.c.l.b16 %v1706
        %v1803 = vpack.c.b16 %v1788, %v1787
        %v1804 = vpack.c.b16 %v1790, %v1789
        %v1805 = vpack.c.b16 %v1792, %v1791
        %v1806 = vpack.c.b16 %v1794, %v1793
        %v1807 = vpack.c.b16 %v1796, %v1795
        %v1808 = vpack.c.b16 %v1798, %v1797
        %v1809 = vpack.c.b16 %v1800, %v1799
        %v1810 = vpack.c.b16 %v1802, %v1801
        %1819 = vmatpush.bf16.msra.mxu0 %v1810
        %1820 = vmatpush.bf16.msra.mxu0 %v1809
        %1821 = vmatpush.bf16.msra.mxu0 %v1808
        %1822 = vmatpush.bf16.msra.mxu0 %v1807
        %1823 = vmatpush.bf16.msra.mxu0 %v1806
        %1824 = vmatpush.bf16.msra.mxu0 %v1805
        %1825 = vmatpush.bf16.msra.mxu0 %v1804
        %1826 = vmatpush.bf16.msra.mxu0 %v1803
        %1827 = vmatmul.bf16.gmra.mxu0 %v1739
        %v1828 = vpop.f32.mrf.mxu0
        %v1829 = vadd.f32 0.0, %v1828
        %v1830 = vpop.f32.mrf.mxu0
        %v1831 = vadd.f32 0.0, %v1830
        %1832 = vmatmul.bf16.gmra.mxu0 %v1740
        %v1833 = vpop.f32.mrf.mxu0
        %v1834 = vadd.f32 0.0, %v1833
        %v1835 = vpop.f32.mrf.mxu0
        %v1836 = vadd.f32 0.0, %v1835
        %1837 = vmatmul.bf16.gmra.mxu0 %v1741
        %v1838 = vpop.f32.mrf.mxu0
        %v1839 = vadd.f32 0.0, %v1838
        %v1840 = vpop.f32.mrf.mxu0
        %v1841 = vadd.f32 0.0, %v1840
        %1842 = vmatmul.bf16.gmra.mxu0 %v1742
        %v1843 = vpop.f32.mrf.mxu0
        %v1844 = vadd.f32 0.0, %v1843
        %v1845 = vpop.f32.mrf.mxu0
        %v1846 = vadd.f32 0.0, %v1845
        %1847 = vmatmul.bf16.gmra.mxu0 %v1743
        %v1848 = vpop.f32.mrf.mxu0
        %v1849 = vadd.f32 0.0, %v1848
        %v1850 = vpop.f32.mrf.mxu0
        %v1851 = vadd.f32 0.0, %v1850
        %1852 = vmatmul.bf16.gmra.mxu0 %v1744
        %v1853 = vpop.f32.mrf.mxu0
        %v1854 = vadd.f32 0.0, %v1853
        %v1855 = vpop.f32.mrf.mxu0
        %v1856 = vadd.f32 0.0, %v1855
        %1857 = vmatmul.bf16.gmra.mxu0 %v1745
        %v1858 = vpop.f32.mrf.mxu0
        %v1859 = vadd.f32 0.0, %v1858
        %v1860 = vpop.f32.mrf.mxu0
        %v1861 = vadd.f32 0.0, %v1860
        %1862 = vmatmul.bf16.gmra.mxu0 %v1746
        %v1863 = vpop.f32.mrf.mxu0
        %v1864 = vadd.f32 0.0, %v1863
        %v1865 = vpop.f32.mrf.mxu0
        %v1866 = vadd.f32 0.0, %v1865
        %1867 = vmatmul.bf16.gmra.mxu0 %v1747
        %v1868 = vpop.f32.mrf.mxu0
        %v1869 = vadd.f32 0.0, %v1868
        %v1870 = vpop.f32.mrf.mxu0
        %v1871 = vadd.f32 0.0, %v1870
        %1872 = vmatmul.bf16.gmra.mxu0 %v1748
        %v1873 = vpop.f32.mrf.mxu0
        %v1874 = vadd.f32 0.0, %v1873
        %v1875 = vpop.f32.mrf.mxu0
        %v1876 = vadd.f32 0.0, %v1875
        %1877 = vmatmul.bf16.gmra.mxu0 %v1749
        %v1878 = vpop.f32.mrf.mxu0
        %v1879 = vadd.f32 0.0, %v1878
        %v1880 = vpop.f32.mrf.mxu0
        %v1881 = vadd.f32 0.0, %v1880
        %1882 = vmatmul.bf16.gmra.mxu0 %v1750
        %v1883 = vpop.f32.mrf.mxu0
        %v1884 = vadd.f32 0.0, %v1883
        %v1885 = vpop.f32.mrf.mxu0
        %v1886 = vadd.f32 0.0, %v1885
        %1887 = vmatmul.bf16.gmra.mxu0 %v1751
        %v1888 = vpop.f32.mrf.mxu0
        %v1889 = vadd.f32 0.0, %v1888
        %v1890 = vpop.f32.mrf.mxu0
        %v1891 = vadd.f32 0.0, %v1890
        %1892 = vmatmul.bf16.gmra.mxu0 %v1752
        %v1893 = vpop.f32.mrf.mxu0
        %v1894 = vadd.f32 0.0, %v1893
        %v1895 = vpop.f32.mrf.mxu0
        %v1896 = vadd.f32 0.0, %v1895
        %1897 = vmatmul.bf16.gmra.mxu0 %v1753
        %v1898 = vpop.f32.mrf.mxu0
        %v1899 = vadd.f32 0.0, %v1898
        %v1900 = vpop.f32.mrf.mxu0
        %v1901 = vadd.f32 0.0, %v1900
        %1902 = vmatmul.bf16.gmra.mxu0 %v1754
        %v1903 = vpop.f32.mrf.mxu0
        %v1904 = vadd.f32 0.0, %v1903
        %v1905 = vpop.f32.mrf.mxu0
        %v1906 = vadd.f32 0.0, %v1905
        %1907 = vdwg.mxu0
        %v1908 = vadd.f32 %v1176, %v1829
        %v1909 = vadd.f32 %v1178, %v1831
        %v1910 = vadd.f32 %v1181, %v1834
        %v1911 = vadd.f32 %v1183, %v1836
        %v1912 = vadd.f32 %v1186, %v1839
        %v1913 = vadd.f32 %v1188, %v1841
        %v1914 = vadd.f32 %v1191, %v1844
        %v1915 = vadd.f32 %v1193, %v1846
        %v1916 = vadd.f32 %v1196, %v1849
        %v1917 = vadd.f32 %v1198, %v1851
        %v1918 = vadd.f32 %v1201, %v1854
        %v1919 = vadd.f32 %v1203, %v1856
        %v1920 = vadd.f32 %v1206, %v1859
        %v1921 = vadd.f32 %v1208, %v1861
        %v1922 = vadd.f32 %v1211, %v1864
        %v1923 = vadd.f32 %v1213, %v1866
        %v1924 = vadd.f32 %v1216, %v1869
        %v1925 = vadd.f32 %v1218, %v1871
        %v1926 = vadd.f32 %v1221, %v1874
        %v1927 = vadd.f32 %v1223, %v1876
        %v1928 = vadd.f32 %v1226, %v1879
        %v1929 = vadd.f32 %v1228, %v1881
        %v1930 = vadd.f32 %v1231, %v1884
        %v1931 = vadd.f32 %v1233, %v1886
        %v1932 = vadd.f32 %v1236, %v1889
        %v1933 = vadd.f32 %v1238, %v1891
        %v1934 = vadd.f32 %v1241, %v1894
        %v1935 = vadd.f32 %v1243, %v1896
        %v1936 = vadd.f32 %v1246, %v1899
        %v1937 = vadd.f32 %v1248, %v1901
        %v1938 = vadd.f32 %v1251, %v1904
        %v1939 = vadd.f32 %v1253, %v1906
        %s1940 = sadd.s32 0, 1
        %s1941 = smul.u32 %s1940, 4
        %s1942 = smul.addr %s1941, 4
        %s1943 = scalar_lea.vmem %s290, %s1942 [#allocation3]
        %v1944 = vld [vmem:[%s1943] sm:$0x8]
        %v1945 = vld [vmem:[%s1943 + $0x4] sm:$0xf]
        %v1946 = vld [vmem:[%s1943 + $0x8] sm:$0xf]
        %v1947 = vld [vmem:[%s1943 + $0x10] sm:$0x8]
        %v1948 = vld [vmem:[%s1943 + $0x14] sm:$0xf]
        %v1949 = vld [vmem:[%s1943 + $0x18] sm:$0xf]
        %v1950 = vld [vmem:[%s1943 + $0x20] sm:$0x8]
        %v1951 = vld [vmem:[%s1943 + $0x24] sm:$0xf]
        %v1952 = vld [vmem:[%s1943 + $0x28] sm:$0xf]
        %v1953 = vld [vmem:[%s1943 + $0x30] sm:$0x8]
        %v1954 = vld [vmem:[%s1943 + $0x34] sm:$0xf]
        %v1955 = vld [vmem:[%s1943 + $0x38] sm:$0xf]
        %v1956 = vld [vmem:[%s1943 + $0x40] sm:$0x8]
        %v1957 = vld [vmem:[%s1943 + $0x44] sm:$0xf]
        %v1958 = vld [vmem:[%s1943 + $0x48] sm:$0xf]
        %v1959 = vld [vmem:[%s1943 + $0x50] sm:$0x8]
        %v1960 = vld [vmem:[%s1943 + $0x54] sm:$0xf]
        %v1961 = vld [vmem:[%s1943 + $0x58] sm:$0xf]
        %v1962 = vld [vmem:[%s1943 + $0x60] sm:$0x8]
        %v1963 = vld [vmem:[%s1943 + $0x64] sm:$0xf]
        %v1964 = vld [vmem:[%s1943 + $0x68] sm:$0xf]
        %v1965 = vld [vmem:[%s1943 + $0x70] sm:$0x8]
        %v1966 = vld [vmem:[%s1943 + $0x74] sm:$0xf]
        %v1967 = vld [vmem:[%s1943 + $0x78] sm:$0xf]
        %v1968 = vld [vmem:[%s1943 + $0x80] sm:$0x8]
        %v1969 = vld [vmem:[%s1943 + $0x84] sm:$0xf]
        %v1970 = vld [vmem:[%s1943 + $0x88] sm:$0xf]
        %v1971 = vld [vmem:[%s1943 + $0x90] sm:$0x8]
        %v1972 = vld [vmem:[%s1943 + $0x94] sm:$0xf]
        %v1973 = vld [vmem:[%s1943 + $0x98] sm:$0xf]
        %v1974 = vld [vmem:[%s1943 + $0xa0] sm:$0x8]
        %v1975 = vld [vmem:[%s1943 + $0xa4] sm:$0xf]
        %v1976 = vld [vmem:[%s1943 + $0xa8] sm:$0xf]
        %v1977 = vld [vmem:[%s1943 + $0xb0] sm:$0x8]
        %v1978 = vld [vmem:[%s1943 + $0xb4] sm:$0xf]
        %v1979 = vld [vmem:[%s1943 + $0xb8] sm:$0xf]
        %v1980 = vld [vmem:[%s1943 + $0xc0] sm:$0x8]
        %v1981 = vld [vmem:[%s1943 + $0xc4] sm:$0xf]
        %v1982 = vld [vmem:[%s1943 + $0xc8] sm:$0xf]
        %v1983 = vld [vmem:[%s1943 + $0xd0] sm:$0x8]
        %v1984 = vld [vmem:[%s1943 + $0xd4] sm:$0xf]
        %v1985 = vld [vmem:[%s1943 + $0xd8] sm:$0xf]
        %v1986 = vld [vmem:[%s1943 + $0xe0] sm:$0x8]
        %v1987 = vld [vmem:[%s1943 + $0xe4] sm:$0xf]
        %v1988 = vld [vmem:[%s1943 + $0xe8] sm:$0xf]
        %v1989 = vld [vmem:[%s1943 + $0xf0] sm:$0x8]
        %v1990 = vld [vmem:[%s1943 + $0xf4] sm:$0xf]
        %v1991 = vld [vmem:[%s1943 + $0xf8] sm:$0xf]
        %v1993 = vshrl.u32 %v1944, 16
        %v1995 = vrot.slane %v1993, 7
        %v1996 = vrot.slane %v1995, 4
        %v1998 = vshrl.u32 %v1945, 16
        %v2000 = vrot.slane %v1998, 7
        %v2001 = vshll.u32 %v1945, 16
        %v2003 = vor.u32 %v2000, %v2001
        %v2004 = vsel %vm435, %v1996, %v2003
        %v2005 = vrot.slane %v2000, 4
        %v2007 = vshrl.u32 %v1946, 16
        %v2009 = vrot.slane %v2007, 7
        %v2010 = vshll.u32 %v1946, 16
        %v2012 = vor.u32 %v2009, %v2010
        %v2013 = vsel %vm435, %v2005, %v2012
        %v2015 = vshrl.u32 %v1947, 16
        %v2017 = vrot.slane %v2015, 7
        %v2018 = vrot.slane %v2017, 4
        %v2020 = vshrl.u32 %v1948, 16
        %v2022 = vrot.slane %v2020, 7
        %v2023 = vshll.u32 %v1948, 16
        %v2025 = vor.u32 %v2022, %v2023
        %v2026 = vsel %vm435, %v2018, %v2025
        %v2027 = vrot.slane %v2022, 4
        %v2029 = vshrl.u32 %v1949, 16
        %v2031 = vrot.slane %v2029, 7
        %v2032 = vshll.u32 %v1949, 16
        %v2034 = vor.u32 %v2031, %v2032
        %v2035 = vsel %vm435, %v2027, %v2034
        %v2037 = vshrl.u32 %v1950, 16
        %v2039 = vrot.slane %v2037, 7
        %v2040 = vrot.slane %v2039, 4
        %v2042 = vshrl.u32 %v1951, 16
        %v2044 = vrot.slane %v2042, 7
        %v2045 = vshll.u32 %v1951, 16
        %v2047 = vor.u32 %v2044, %v2045
        %v2048 = vsel %vm435, %v2040, %v2047
        %v2049 = vrot.slane %v2044, 4
        %v2051 = vshrl.u32 %v1952, 16
        %v2053 = vrot.slane %v2051, 7
        %v2054 = vshll.u32 %v1952, 16
        %v2056 = vor.u32 %v2053, %v2054
        %v2057 = vsel %vm435, %v2049, %v2056
        %v2059 = vshrl.u32 %v1953, 16
        %v2061 = vrot.slane %v2059, 7
        %v2062 = vrot.slane %v2061, 4
        %v2064 = vshrl.u32 %v1954, 16
        %v2066 = vrot.slane %v2064, 7
        %v2067 = vshll.u32 %v1954, 16
        %v2069 = vor.u32 %v2066, %v2067
        %v2070 = vsel %vm435, %v2062, %v2069
        %v2071 = vrot.slane %v2066, 4
        %v2073 = vshrl.u32 %v1955, 16
        %v2075 = vrot.slane %v2073, 7
        %v2076 = vshll.u32 %v1955, 16
        %v2078 = vor.u32 %v2075, %v2076
        %v2079 = vsel %vm435, %v2071, %v2078
        %v2081 = vshrl.u32 %v1956, 16
        %v2083 = vrot.slane %v2081, 7
        %v2084 = vrot.slane %v2083, 4
        %v2086 = vshrl.u32 %v1957, 16
        %v2088 = vrot.slane %v2086, 7
        %v2089 = vshll.u32 %v1957, 16
        %v2091 = vor.u32 %v2088, %v2089
        %v2092 = vsel %vm435, %v2084, %v2091
        %v2093 = vrot.slane %v2088, 4
        %v2095 = vshrl.u32 %v1958, 16
        %v2097 = vrot.slane %v2095, 7
        %v2098 = vshll.u32 %v1958, 16
        %v2100 = vor.u32 %v2097, %v2098
        %v2101 = vsel %vm435, %v2093, %v2100
        %v2103 = vshrl.u32 %v1959, 16
        %v2105 = vrot.slane %v2103, 7
        %v2106 = vrot.slane %v2105, 4
        %v2108 = vshrl.u32 %v1960, 16
        %v2110 = vrot.slane %v2108, 7
        %v2111 = vshll.u32 %v1960, 16
        %v2113 = vor.u32 %v2110, %v2111
        %v2114 = vsel %vm435, %v2106, %v2113
        %v2115 = vrot.slane %v2110, 4
        %v2117 = vshrl.u32 %v1961, 16
        %v2119 = vrot.slane %v2117, 7
        %v2120 = vshll.u32 %v1961, 16
        %v2122 = vor.u32 %v2119, %v2120
        %v2123 = vsel %vm435, %v2115, %v2122
        %v2125 = vshrl.u32 %v1962, 16
        %v2127 = vrot.slane %v2125, 7
        %v2128 = vrot.slane %v2127, 4
        %v2130 = vshrl.u32 %v1963, 16
        %v2132 = vrot.slane %v2130, 7
        %v2133 = vshll.u32 %v1963, 16
        %v2135 = vor.u32 %v2132, %v2133
        %v2136 = vsel %vm435, %v2128, %v2135
        %v2137 = vrot.slane %v2132, 4
        %v2139 = vshrl.u32 %v1964, 16
        %v2141 = vrot.slane %v2139, 7
        %v2142 = vshll.u32 %v1964, 16
        %v2144 = vor.u32 %v2141, %v2142
        %v2145 = vsel %vm435, %v2137, %v2144
        %v2147 = vshrl.u32 %v1965, 16
        %v2149 = vrot.slane %v2147, 7
        %v2150 = vrot.slane %v2149, 4
        %v2152 = vshrl.u32 %v1966, 16
        %v2154 = vrot.slane %v2152, 7
        %v2155 = vshll.u32 %v1966, 16
        %v2157 = vor.u32 %v2154, %v2155
        %v2158 = vsel %vm435, %v2150, %v2157
        %v2159 = vrot.slane %v2154, 4
        %v2161 = vshrl.u32 %v1967, 16
        %v2163 = vrot.slane %v2161, 7
        %v2164 = vshll.u32 %v1967, 16
        %v2166 = vor.u32 %v2163, %v2164
        %v2167 = vsel %vm435, %v2159, %v2166
        %v2169 = vshrl.u32 %v1968, 16
        %v2171 = vrot.slane %v2169, 7
        %v2172 = vrot.slane %v2171, 4
        %v2174 = vshrl.u32 %v1969, 16
        %v2176 = vrot.slane %v2174, 7
        %v2177 = vshll.u32 %v1969, 16
        %v2179 = vor.u32 %v2176, %v2177
        %v2180 = vsel %vm435, %v2172, %v2179
        %v2181 = vrot.slane %v2176, 4
        %v2183 = vshrl.u32 %v1970, 16
        %v2185 = vrot.slane %v2183, 7
        %v2186 = vshll.u32 %v1970, 16
        %v2188 = vor.u32 %v2185, %v2186
        %v2189 = vsel %vm435, %v2181, %v2188
        %v2191 = vshrl.u32 %v1971, 16
        %v2193 = vrot.slane %v2191, 7
        %v2194 = vrot.slane %v2193, 4
        %v2196 = vshrl.u32 %v1972, 16
        %v2198 = vrot.slane %v2196, 7
        %v2199 = vshll.u32 %v1972, 16
        %v2201 = vor.u32 %v2198, %v2199
        %v2202 = vsel %vm435, %v2194, %v2201
        %v2203 = vrot.slane %v2198, 4
        %v2205 = vshrl.u32 %v1973, 16
        %v2207 = vrot.slane %v2205, 7
        %v2208 = vshll.u32 %v1973, 16
        %v2210 = vor.u32 %v2207, %v2208
        %v2211 = vsel %vm435, %v2203, %v2210
        %v2213 = vshrl.u32 %v1974, 16
        %v2215 = vrot.slane %v2213, 7
        %v2216 = vrot.slane %v2215, 4
        %v2218 = vshrl.u32 %v1975, 16
        %v2220 = vrot.slane %v2218, 7
        %v2221 = vshll.u32 %v1975, 16
        %v2223 = vor.u32 %v2220, %v2221
        %v2224 = vsel %vm435, %v2216, %v2223
        %v2225 = vrot.slane %v2220, 4
        %v2227 = vshrl.u32 %v1976, 16
        %v2229 = vrot.slane %v2227, 7
        %v2230 = vshll.u32 %v1976, 16
        %v2232 = vor.u32 %v2229, %v2230
        %v2233 = vsel %vm435, %v2225, %v2232
        %v2235 = vshrl.u32 %v1977, 16
        %v2237 = vrot.slane %v2235, 7
        %v2238 = vrot.slane %v2237, 4
        %v2240 = vshrl.u32 %v1978, 16
        %v2242 = vrot.slane %v2240, 7
        %v2243 = vshll.u32 %v1978, 16
        %v2245 = vor.u32 %v2242, %v2243
        %v2246 = vsel %vm435, %v2238, %v2245
        %v2247 = vrot.slane %v2242, 4
        %v2249 = vshrl.u32 %v1979, 16
        %v2251 = vrot.slane %v2249, 7
        %v2252 = vshll.u32 %v1979, 16
        %v2254 = vor.u32 %v2251, %v2252
        %v2255 = vsel %vm435, %v2247, %v2254
        %v2257 = vshrl.u32 %v1980, 16
        %v2259 = vrot.slane %v2257, 7
        %v2260 = vrot.slane %v2259, 4
        %v2262 = vshrl.u32 %v1981, 16
        %v2264 = vrot.slane %v2262, 7
        %v2265 = vshll.u32 %v1981, 16
        %v2267 = vor.u32 %v2264, %v2265
        %v2268 = vsel %vm435, %v2260, %v2267
        %v2269 = vrot.slane %v2264, 4
        %v2271 = vshrl.u32 %v1982, 16
        %v2273 = vrot.slane %v2271, 7
        %v2274 = vshll.u32 %v1982, 16
        %v2276 = vor.u32 %v2273, %v2274
        %v2277 = vsel %vm435, %v2269, %v2276
        %v2279 = vshrl.u32 %v1983, 16
        %v2281 = vrot.slane %v2279, 7
        %v2282 = vrot.slane %v2281, 4
        %v2284 = vshrl.u32 %v1984, 16
        %v2286 = vrot.slane %v2284, 7
        %v2287 = vshll.u32 %v1984, 16
        %v2289 = vor.u32 %v2286, %v2287
        %v2290 = vsel %vm435, %v2282, %v2289
        %v2291 = vrot.slane %v2286, 4
        %v2293 = vshrl.u32 %v1985, 16
        %v2295 = vrot.slane %v2293, 7
        %v2296 = vshll.u32 %v1985, 16
        %v2298 = vor.u32 %v2295, %v2296
        %v2299 = vsel %vm435, %v2291, %v2298
        %v2301 = vshrl.u32 %v1986, 16
        %v2303 = vrot.slane %v2301, 7
        %v2304 = vrot.slane %v2303, 4
        %v2306 = vshrl.u32 %v1987, 16
        %v2308 = vrot.slane %v2306, 7
        %v2309 = vshll.u32 %v1987, 16
        %v2311 = vor.u32 %v2308, %v2309
        %v2312 = vsel %vm435, %v2304, %v2311
        %v2313 = vrot.slane %v2308, 4
        %v2315 = vshrl.u32 %v1988, 16
        %v2317 = vrot.slane %v2315, 7
        %v2318 = vshll.u32 %v1988, 16
        %v2320 = vor.u32 %v2317, %v2318
        %v2321 = vsel %vm435, %v2313, %v2320
        %v2323 = vshrl.u32 %v1989, 16
        %v2325 = vrot.slane %v2323, 7
        %v2326 = vrot.slane %v2325, 4
        %v2328 = vshrl.u32 %v1990, 16
        %v2330 = vrot.slane %v2328, 7
        %v2331 = vshll.u32 %v1990, 16
        %v2333 = vor.u32 %v2330, %v2331
        %v2334 = vsel %vm435, %v2326, %v2333
        %v2335 = vrot.slane %v2330, 4
        %v2337 = vshrl.u32 %v1991, 16
        %v2339 = vrot.slane %v2337, 7
        %v2340 = vshll.u32 %v1991, 16
        %v2342 = vor.u32 %v2339, %v2340
        %v2343 = vsel %vm435, %v2335, %v2342
        %s2344 = scalar_lea.vmem [#allocation6], 192
        %v2345 = vld [vmem:[%s2344] sm:$0xf]
        %v2346 = vld [vmem:[%s2344 + $0x4] sm:$0xf]
        %v2347 = vld [vmem:[%s2344 + $0x8] sm:$0xf]
        %v2348 = vld [vmem:[%s2344 + $0xc] sm:$0xf]
        %v2349 = vld [vmem:[%s2344 + $0x10] sm:$0xf]
        %v2350 = vld [vmem:[%s2344 + $0x14] sm:$0xf]
        %v2351 = vld [vmem:[%s2344 + $0x18] sm:$0xf]
        %v2352 = vld [vmem:[%s2344 + $0x1c] sm:$0xf]
        %v2353 = vld [vmem:[%s2344 + $0x20] sm:$0xf]
        %v2354 = vld [vmem:[%s2344 + $0x24] sm:$0xf]
        %v2355 = vld [vmem:[%s2344 + $0x28] sm:$0xf]
        %v2356 = vld [vmem:[%s2344 + $0x2c] sm:$0xf]
        %v2357 = vld [vmem:[%s2344 + $0x30] sm:$0xf]
        %v2358 = vld [vmem:[%s2344 + $0x34] sm:$0xf]
        %v2359 = vld [vmem:[%s2344 + $0x38] sm:$0xf]
        %v2360 = vld [vmem:[%s2344 + $0x3c] sm:$0xf]
        %v2361 = vunpack.c.l.b16 %v2004
        %v2362 = vunpack.c.l.b16 %v2013
        %v2363 = vunpack.c.l.b16 %v2026
        %v2364 = vunpack.c.l.b16 %v2035
        %v2365 = vunpack.c.l.b16 %v2048
        %v2366 = vunpack.c.l.b16 %v2057
        %v2367 = vunpack.c.l.b16 %v2070
        %v2368 = vunpack.c.l.b16 %v2079
        %v2369 = vunpack.c.l.b16 %v2092
        %v2370 = vunpack.c.l.b16 %v2101
        %v2371 = vunpack.c.l.b16 %v2114
        %v2372 = vunpack.c.l.b16 %v2123
        %v2373 = vunpack.c.l.b16 %v2136
        %v2374 = vunpack.c.l.b16 %v2145
        %v2375 = vunpack.c.l.b16 %v2158
        %v2376 = vunpack.c.l.b16 %v2167
        %v2377 = vunpack.c.l.b16 %v2180
        %v2378 = vunpack.c.l.b16 %v2189
        %v2379 = vunpack.c.l.b16 %v2202
        %v2380 = vunpack.c.l.b16 %v2211
        %v2381 = vunpack.c.l.b16 %v2224
        %v2382 = vunpack.c.l.b16 %v2233
        %v2383 = vunpack.c.l.b16 %v2246
        %v2384 = vunpack.c.l.b16 %v2255
        %v2385 = vunpack.c.l.b16 %v2268
        %v2386 = vunpack.c.l.b16 %v2277
        %v2387 = vunpack.c.l.b16 %v2290
        %v2388 = vunpack.c.l.b16 %v2299
        %v2389 = vunpack.c.l.b16 %v2312
        %v2390 = vunpack.c.l.b16 %v2321
        %v2391 = vunpack.c.l.b16 %v2334
        %v2392 = vunpack.c.l.b16 %v2343
        %v2393 = vpack.c.b16 %v2362, %v2361
        %v2394 = vpack.c.b16 %v2364, %v2363
        %v2395 = vpack.c.b16 %v2366, %v2365
        %v2396 = vpack.c.b16 %v2368, %v2367
        %v2397 = vpack.c.b16 %v2370, %v2369
        %v2398 = vpack.c.b16 %v2372, %v2371
        %v2399 = vpack.c.b16 %v2374, %v2373
        %v2400 = vpack.c.b16 %v2376, %v2375
        %v2401 = vpack.c.b16 %v2378, %v2377
        %v2402 = vpack.c.b16 %v2380, %v2379
        %v2403 = vpack.c.b16 %v2382, %v2381
        %v2404 = vpack.c.b16 %v2384, %v2383
        %v2405 = vpack.c.b16 %v2386, %v2385
        %v2406 = vpack.c.b16 %v2388, %v2387
        %v2407 = vpack.c.b16 %v2390, %v2389
        %v2408 = vpack.c.b16 %v2392, %v2391
        %v2441 = vunpack.c.l.b16 %v2345
        %v2442 = vunpack.c.l.b16 %v2346
        %v2443 = vunpack.c.l.b16 %v2347
        %v2444 = vunpack.c.l.b16 %v2348
        %v2445 = vunpack.c.l.b16 %v2349
        %v2446 = vunpack.c.l.b16 %v2350
        %v2447 = vunpack.c.l.b16 %v2351
        %v2448 = vunpack.c.l.b16 %v2352
        %v2449 = vunpack.c.l.b16 %v2353
        %v2450 = vunpack.c.l.b16 %v2354
        %v2451 = vunpack.c.l.b16 %v2355
        %v2452 = vunpack.c.l.b16 %v2356
        %v2453 = vunpack.c.l.b16 %v2357
        %v2454 = vunpack.c.l.b16 %v2358
        %v2455 = vunpack.c.l.b16 %v2359
        %v2456 = vunpack.c.l.b16 %v2360
        %v2457 = vpack.c.b16 %v2442, %v2441
        %v2458 = vpack.c.b16 %v2444, %v2443
        %v2459 = vpack.c.b16 %v2446, %v2445
        %v2460 = vpack.c.b16 %v2448, %v2447
        %v2461 = vpack.c.b16 %v2450, %v2449
        %v2462 = vpack.c.b16 %v2452, %v2451
        %v2463 = vpack.c.b16 %v2454, %v2453
        %v2464 = vpack.c.b16 %v2456, %v2455
        %2473 = vmatpush.bf16.msra.mxu0 %v2464
        %2474 = vmatpush.bf16.msra.mxu0 %v2463
        %2475 = vmatpush.bf16.msra.mxu0 %v2462
        %2476 = vmatpush.bf16.msra.mxu0 %v2461
        %2477 = vmatpush.bf16.msra.mxu0 %v2460
        %2478 = vmatpush.bf16.msra.mxu0 %v2459
        %2479 = vmatpush.bf16.msra.mxu0 %v2458
        %2480 = vmatpush.bf16.msra.mxu0 %v2457
        %2481 = vmatmul.bf16.gmra.mxu0 %v2393
        %v2482 = vpop.f32.mrf.mxu0
        %v2483 = vadd.f32 0.0, %v2482
        %v2484 = vpop.f32.mrf.mxu0
        %v2485 = vadd.f32 0.0, %v2484
        %2486 = vmatmul.bf16.gmra.mxu0 %v2394
        %v2487 = vpop.f32.mrf.mxu0
        %v2488 = vadd.f32 0.0, %v2487
        %v2489 = vpop.f32.mrf.mxu0
        %v2490 = vadd.f32 0.0, %v2489
        %2491 = vmatmul.bf16.gmra.mxu0 %v2395
        %v2492 = vpop.f32.mrf.mxu0
        %v2493 = vadd.f32 0.0, %v2492
        %v2494 = vpop.f32.mrf.mxu0
        %v2495 = vadd.f32 0.0, %v2494
        %2496 = vmatmul.bf16.gmra.mxu0 %v2396
        %v2497 = vpop.f32.mrf.mxu0
        %v2498 = vadd.f32 0.0, %v2497
        %v2499 = vpop.f32.mrf.mxu0
        %v2500 = vadd.f32 0.0, %v2499
        %2501 = vmatmul.bf16.gmra.mxu0 %v2397
        %v2502 = vpop.f32.mrf.mxu0
        %v2503 = vadd.f32 0.0, %v2502
        %v2504 = vpop.f32.mrf.mxu0
        %v2505 = vadd.f32 0.0, %v2504
        %2506 = vmatmul.bf16.gmra.mxu0 %v2398
        %v2507 = vpop.f32.mrf.mxu0
        %v2508 = vadd.f32 0.0, %v2507
        %v2509 = vpop.f32.mrf.mxu0
        %v2510 = vadd.f32 0.0, %v2509
        %2511 = vmatmul.bf16.gmra.mxu0 %v2399
        %v2512 = vpop.f32.mrf.mxu0
        %v2513 = vadd.f32 0.0, %v2512
        %v2514 = vpop.f32.mrf.mxu0
        %v2515 = vadd.f32 0.0, %v2514
        %2516 = vmatmul.bf16.gmra.mxu0 %v2400
        %v2517 = vpop.f32.mrf.mxu0
        %v2518 = vadd.f32 0.0, %v2517
        %v2519 = vpop.f32.mrf.mxu0
        %v2520 = vadd.f32 0.0, %v2519
        %2521 = vmatmul.bf16.gmra.mxu0 %v2401
        %v2522 = vpop.f32.mrf.mxu0
        %v2523 = vadd.f32 0.0, %v2522
        %v2524 = vpop.f32.mrf.mxu0
        %v2525 = vadd.f32 0.0, %v2524
        %2526 = vmatmul.bf16.gmra.mxu0 %v2402
        %v2527 = vpop.f32.mrf.mxu0
        %v2528 = vadd.f32 0.0, %v2527
        %v2529 = vpop.f32.mrf.mxu0
        %v2530 = vadd.f32 0.0, %v2529
        %2531 = vmatmul.bf16.gmra.mxu0 %v2403
        %v2532 = vpop.f32.mrf.mxu0
        %v2533 = vadd.f32 0.0, %v2532
        %v2534 = vpop.f32.mrf.mxu0
        %v2535 = vadd.f32 0.0, %v2534
        %2536 = vmatmul.bf16.gmra.mxu0 %v2404
        %v2537 = vpop.f32.mrf.mxu0
        %v2538 = vadd.f32 0.0, %v2537
        %v2539 = vpop.f32.mrf.mxu0
        %v2540 = vadd.f32 0.0, %v2539
        %2541 = vmatmul.bf16.gmra.mxu0 %v2405
        %v2542 = vpop.f32.mrf.mxu0
        %v2543 = vadd.f32 0.0, %v2542
        %v2544 = vpop.f32.mrf.mxu0
        %v2545 = vadd.f32 0.0, %v2544
        %2546 = vmatmul.bf16.gmra.mxu0 %v2406
        %v2547 = vpop.f32.mrf.mxu0
        %v2548 = vadd.f32 0.0, %v2547
        %v2549 = vpop.f32.mrf.mxu0
        %v2550 = vadd.f32 0.0, %v2549
        %2551 = vmatmul.bf16.gmra.mxu0 %v2407
        %v2552 = vpop.f32.mrf.mxu0
        %v2553 = vadd.f32 0.0, %v2552
        %v2554 = vpop.f32.mrf.mxu0
        %v2555 = vadd.f32 0.0, %v2554
        %2556 = vmatmul.bf16.gmra.mxu0 %v2408
        %v2557 = vpop.f32.mrf.mxu0
        %v2558 = vadd.f32 0.0, %v2557
        %v2559 = vpop.f32.mrf.mxu0
        %v2560 = vadd.f32 0.0, %v2559
        %2561 = vdwg.mxu0
        %v2562 = vadd.f32 %v1908, %v2483
        %v2563 = vadd.f32 %v1909, %v2485
        %v2564 = vadd.f32 %v1910, %v2488
        %v2565 = vadd.f32 %v1911, %v2490
        %v2566 = vadd.f32 %v1912, %v2493
        %v2567 = vadd.f32 %v1913, %v2495
        %v2568 = vadd.f32 %v1914, %v2498
        %v2569 = vadd.f32 %v1915, %v2500
        %v2570 = vadd.f32 %v1916, %v2503
        %v2571 = vadd.f32 %v1917, %v2505
        %v2572 = vadd.f32 %v1918, %v2508
        %v2573 = vadd.f32 %v1919, %v2510
        %v2574 = vadd.f32 %v1920, %v2513
        %v2575 = vadd.f32 %v1921, %v2515
        %v2576 = vadd.f32 %v1922, %v2518
        %v2577 = vadd.f32 %v1923, %v2520
        %v2578 = vadd.f32 %v1924, %v2523
        %v2579 = vadd.f32 %v1925, %v2525
        %v2580 = vadd.f32 %v1926, %v2528
        %v2581 = vadd.f32 %v1927, %v2530
        %v2582 = vadd.f32 %v1928, %v2533
        %v2583 = vadd.f32 %v1929, %v2535
        %v2584 = vadd.f32 %v1930, %v2538
        %v2585 = vadd.f32 %v1931, %v2540
        %v2586 = vadd.f32 %v1932, %v2543
        %v2587 = vadd.f32 %v1933, %v2545
        %v2588 = vadd.f32 %v1934, %v2548
        %v2589 = vadd.f32 %v1935, %v2550
        %v2590 = vadd.f32 %v1936, %v2553
        %v2591 = vadd.f32 %v1937, %v2555
        %v2592 = vadd.f32 %v1938, %v2558
        %v2593 = vadd.f32 %v1939, %v2560
        %s2594 = scalar_lea.vmem [#allocation6], 256
        %v2595 = vld [vmem:[%s2594] sm:$0xf]
        %v2596 = vld [vmem:[%s2594 + $0x4] sm:$0xf]
        %v2597 = vld [vmem:[%s2594 + $0x8] sm:$0xf]
        %v2598 = vld [vmem:[%s2594 + $0xc] sm:$0xf]
        %v2599 = vld [vmem:[%s2594 + $0x10] sm:$0xf]
        %v2600 = vld [vmem:[%s2594 + $0x14] sm:$0xf]
        %v2601 = vld [vmem:[%s2594 + $0x18] sm:$0xf]
        %v2602 = vld [vmem:[%s2594 + $0x1c] sm:$0xf]
        %v2603 = vld [vmem:[%s2594 + $0x20] sm:$0xf]
        %v2604 = vld [vmem:[%s2594 + $0x24] sm:$0xf]
        %v2605 = vld [vmem:[%s2594 + $0x28] sm:$0xf]
        %v2606 = vld [vmem:[%s2594 + $0x2c] sm:$0xf]
        %v2607 = vld [vmem:[%s2594 + $0x30] sm:$0xf]
        %v2608 = vld [vmem:[%s2594 + $0x34] sm:$0xf]
        %v2609 = vld [vmem:[%s2594 + $0x38] sm:$0xf]
        %v2610 = vld [vmem:[%s2594 + $0x3c] sm:$0xf]
        %v2643 = vunpack.c.l.b16 %v1945
        %v2644 = vunpack.c.l.b16 %v1946
        %v2645 = vunpack.c.l.b16 %v1948
        %v2646 = vunpack.c.l.b16 %v1949
        %v2647 = vunpack.c.l.b16 %v1951
        %v2648 = vunpack.c.l.b16 %v1952
        %v2649 = vunpack.c.l.b16 %v1954
        %v2650 = vunpack.c.l.b16 %v1955
        %v2651 = vunpack.c.l.b16 %v1957
        %v2652 = vunpack.c.l.b16 %v1958
        %v2653 = vunpack.c.l.b16 %v1960
        %v2654 = vunpack.c.l.b16 %v1961
        %v2655 = vunpack.c.l.b16 %v1963
        %v2656 = vunpack.c.l.b16 %v1964
        %v2657 = vunpack.c.l.b16 %v1966
        %v2658 = vunpack.c.l.b16 %v1967
        %v2659 = vunpack.c.l.b16 %v1969
        %v2660 = vunpack.c.l.b16 %v1970
        %v2661 = vunpack.c.l.b16 %v1972
        %v2662 = vunpack.c.l.b16 %v1973
        %v2663 = vunpack.c.l.b16 %v1975
        %v2664 = vunpack.c.l.b16 %v1976
        %v2665 = vunpack.c.l.b16 %v1978
        %v2666 = vunpack.c.l.b16 %v1979
        %v2667 = vunpack.c.l.b16 %v1981
        %v2668 = vunpack.c.l.b16 %v1982
        %v2669 = vunpack.c.l.b16 %v1984
        %v2670 = vunpack.c.l.b16 %v1985
        %v2671 = vunpack.c.l.b16 %v1987
        %v2672 = vunpack.c.l.b16 %v1988
        %v2673 = vunpack.c.l.b16 %v1990
        %v2674 = vunpack.c.l.b16 %v1991
        %v2675 = vpack.c.b16 %v2644, %v2643
        %v2676 = vpack.c.b16 %v2646, %v2645
        %v2677 = vpack.c.b16 %v2648, %v2647
        %v2678 = vpack.c.b16 %v2650, %v2649
        %v2679 = vpack.c.b16 %v2652, %v2651
        %v2680 = vpack.c.b16 %v2654, %v2653
        %v2681 = vpack.c.b16 %v2656, %v2655
        %v2682 = vpack.c.b16 %v2658, %v2657
        %v2683 = vpack.c.b16 %v2660, %v2659
        %v2684 = vpack.c.b16 %v2662, %v2661
        %v2685 = vpack.c.b16 %v2664, %v2663
        %v2686 = vpack.c.b16 %v2666, %v2665
        %v2687 = vpack.c.b16 %v2668, %v2667
        %v2688 = vpack.c.b16 %v2670, %v2669
        %v2689 = vpack.c.b16 %v2672, %v2671
        %v2690 = vpack.c.b16 %v2674, %v2673
        %v2723 = vunpack.c.l.b16 %v2595
        %v2724 = vunpack.c.l.b16 %v2596
        %v2725 = vunpack.c.l.b16 %v2597
        %v2726 = vunpack.c.l.b16 %v2598
        %v2727 = vunpack.c.l.b16 %v2599
        %v2728 = vunpack.c.l.b16 %v2600
        %v2729 = vunpack.c.l.b16 %v2601
        %v2730 = vunpack.c.l.b16 %v2602
        %v2731 = vunpack.c.l.b16 %v2603
        %v2732 = vunpack.c.l.b16 %v2604
        %v2733 = vunpack.c.l.b16 %v2605
        %v2734 = vunpack.c.l.b16 %v2606
        %v2735 = vunpack.c.l.b16 %v2607
        %v2736 = vunpack.c.l.b16 %v2608
        %v2737 = vunpack.c.l.b16 %v2609
        %v2738 = vunpack.c.l.b16 %v2610
        %v2739 = vpack.c.b16 %v2724, %v2723
        %v2740 = vpack.c.b16 %v2726, %v2725
        %v2741 = vpack.c.b16 %v2728, %v2727
        %v2742 = vpack.c.b16 %v2730, %v2729
        %v2743 = vpack.c.b16 %v2732, %v2731
        %v2744 = vpack.c.b16 %v2734, %v2733
        %v2745 = vpack.c.b16 %v2736, %v2735
        %v2746 = vpack.c.b16 %v2738, %v2737
        %2755 = vmatpush.bf16.msra.mxu0 %v2746
        %2756 = vmatpush.bf16.msra.mxu0 %v2745
        %2757 = vmatpush.bf16.msra.mxu0 %v2744
        %2758 = vmatpush.bf16.msra.mxu0 %v2743
        %2759 = vmatpush.bf16.msra.mxu0 %v2742
        %2760 = vmatpush.bf16.msra.mxu0 %v2741
        %2761 = vmatpush.bf16.msra.mxu0 %v2740
        %2762 = vmatpush.bf16.msra.mxu0 %v2739
        %2763 = vmatmul.bf16.gmra.mxu0 %v2675
        %v2764 = vpop.f32.mrf.mxu0
        %v2765 = vadd.f32 0.0, %v2764
        %v2766 = vpop.f32.mrf.mxu0
        %v2767 = vadd.f32 0.0, %v2766
        %2768 = vmatmul.bf16.gmra.mxu0 %v2676
        %v2769 = vpop.f32.mrf.mxu0
        %v2770 = vadd.f32 0.0, %v2769
        %v2771 = vpop.f32.mrf.mxu0
        %v2772 = vadd.f32 0.0, %v2771
        %2773 = vmatmul.bf16.gmra.mxu0 %v2677
        %v2774 = vpop.f32.mrf.mxu0
        %v2775 = vadd.f32 0.0, %v2774
        %v2776 = vpop.f32.mrf.mxu0
        %v2777 = vadd.f32 0.0, %v2776
        %2778 = vmatmul.bf16.gmra.mxu0 %v2678
        %v2779 = vpop.f32.mrf.mxu0
        %v2780 = vadd.f32 0.0, %v2779
        %v2781 = vpop.f32.mrf.mxu0
        %v2782 = vadd.f32 0.0, %v2781
        %2783 = vmatmul.bf16.gmra.mxu0 %v2679
        %v2784 = vpop.f32.mrf.mxu0
        %v2785 = vadd.f32 0.0, %v2784
        %v2786 = vpop.f32.mrf.mxu0
        %v2787 = vadd.f32 0.0, %v2786
        %2788 = vmatmul.bf16.gmra.mxu0 %v2680
        %v2789 = vpop.f32.mrf.mxu0
        %v2790 = vadd.f32 0.0, %v2789
        %v2791 = vpop.f32.mrf.mxu0
        %v2792 = vadd.f32 0.0, %v2791
        %2793 = vmatmul.bf16.gmra.mxu0 %v2681
        %v2794 = vpop.f32.mrf.mxu0
        %v2795 = vadd.f32 0.0, %v2794
        %v2796 = vpop.f32.mrf.mxu0
        %v2797 = vadd.f32 0.0, %v2796
        %2798 = vmatmul.bf16.gmra.mxu0 %v2682
        %v2799 = vpop.f32.mrf.mxu0
        %v2800 = vadd.f32 0.0, %v2799
        %v2801 = vpop.f32.mrf.mxu0
        %v2802 = vadd.f32 0.0, %v2801
        %2803 = vmatmul.bf16.gmra.mxu0 %v2683
        %v2804 = vpop.f32.mrf.mxu0
        %v2805 = vadd.f32 0.0, %v2804
        %v2806 = vpop.f32.mrf.mxu0
        %v2807 = vadd.f32 0.0, %v2806
        %2808 = vmatmul.bf16.gmra.mxu0 %v2684
        %v2809 = vpop.f32.mrf.mxu0
        %v2810 = vadd.f32 0.0, %v2809
        %v2811 = vpop.f32.mrf.mxu0
        %v2812 = vadd.f32 0.0, %v2811
        %2813 = vmatmul.bf16.gmra.mxu0 %v2685
        %v2814 = vpop.f32.mrf.mxu0
        %v2815 = vadd.f32 0.0, %v2814
        %v2816 = vpop.f32.mrf.mxu0
        %v2817 = vadd.f32 0.0, %v2816
        %2818 = vmatmul.bf16.gmra.mxu0 %v2686
        %v2819 = vpop.f32.mrf.mxu0
        %v2820 = vadd.f32 0.0, %v2819
        %v2821 = vpop.f32.mrf.mxu0
        %v2822 = vadd.f32 0.0, %v2821
        %2823 = vmatmul.bf16.gmra.mxu0 %v2687
        %v2824 = vpop.f32.mrf.mxu0
        %v2825 = vadd.f32 0.0, %v2824
        %v2826 = vpop.f32.mrf.mxu0
        %v2827 = vadd.f32 0.0, %v2826
        %2828 = vmatmul.bf16.gmra.mxu0 %v2688
        %v2829 = vpop.f32.mrf.mxu0
        %v2830 = vadd.f32 0.0, %v2829
        %v2831 = vpop.f32.mrf.mxu0
        %v2832 = vadd.f32 0.0, %v2831
        %2833 = vmatmul.bf16.gmra.mxu0 %v2689
        %v2834 = vpop.f32.mrf.mxu0
        %v2835 = vadd.f32 0.0, %v2834
        %v2836 = vpop.f32.mrf.mxu0
        %v2837 = vadd.f32 0.0, %v2836
        %2838 = vmatmul.bf16.gmra.mxu0 %v2690
        %v2839 = vpop.f32.mrf.mxu0
        %v2840 = vadd.f32 0.0, %v2839
        %v2841 = vpop.f32.mrf.mxu0
        %v2842 = vadd.f32 0.0, %v2841
        %2843 = vdwg.mxu0
        %v2844 = vadd.f32 %v2562, %v2765
        %v2845 = vadd.f32 %v2563, %v2767
        %v2846 = vadd.f32 %v2564, %v2770
        %v2847 = vadd.f32 %v2565, %v2772
        %v2848 = vadd.f32 %v2566, %v2775
        %v2849 = vadd.f32 %v2567, %v2777
        %v2850 = vadd.f32 %v2568, %v2780
        %v2851 = vadd.f32 %v2569, %v2782
        %v2852 = vadd.f32 %v2570, %v2785
        %v2853 = vadd.f32 %v2571, %v2787
        %v2854 = vadd.f32 %v2572, %v2790
        %v2855 = vadd.f32 %v2573, %v2792
        %v2856 = vadd.f32 %v2574, %v2795
        %v2857 = vadd.f32 %v2575, %v2797
        %v2858 = vadd.f32 %v2576, %v2800
        %v2859 = vadd.f32 %v2577, %v2802
        %v2860 = vadd.f32 %v2578, %v2805
        %v2861 = vadd.f32 %v2579, %v2807
        %v2862 = vadd.f32 %v2580, %v2810
        %v2863 = vadd.f32 %v2581, %v2812
        %v2864 = vadd.f32 %v2582, %v2815
        %v2865 = vadd.f32 %v2583, %v2817
        %v2866 = vadd.f32 %v2584, %v2820
        %v2867 = vadd.f32 %v2585, %v2822
        %v2868 = vadd.f32 %v2586, %v2825
        %v2869 = vadd.f32 %v2587, %v2827
        %v2870 = vadd.f32 %v2588, %v2830
        %v2871 = vadd.f32 %v2589, %v2832
        %v2872 = vadd.f32 %v2590, %v2835
        %v2873 = vadd.f32 %v2591, %v2837
        %v2874 = vadd.f32 %v2592, %v2840
        %v2875 = vadd.f32 %v2593, %v2842
        %v2876 = vld [vmem:[%s1943 + $0x4] sm:$0xf]
        %v2877 = vld [vmem:[%s1943 + $0x8] sm:$0xf]
        %v2878 = vld [vmem:[%s1943 + $0xc] sm:$0x1]
        %v2879 = vld [vmem:[%s1943 + $0x14] sm:$0xf]
        %v2880 = vld [vmem:[%s1943 + $0x18] sm:$0xf]
        %v2881 = vld [vmem:[%s1943 + $0x1c] sm:$0x1]
        %v2882 = vld [vmem:[%s1943 + $0x24] sm:$0xf]
        %v2883 = vld [vmem:[%s1943 + $0x28] sm:$0xf]
        %v2884 = vld [vmem:[%s1943 + $0x2c] sm:$0x1]
        %v2885 = vld [vmem:[%s1943 + $0x34] sm:$0xf]
        %v2886 = vld [vmem:[%s1943 + $0x38] sm:$0xf]
        %v2887 = vld [vmem:[%s1943 + $0x3c] sm:$0x1]
        %v2888 = vld [vmem:[%s1943 + $0x44] sm:$0xf]
        %v2889 = vld [vmem:[%s1943 + $0x48] sm:$0xf]
        %v2890 = vld [vmem:[%s1943 + $0x4c] sm:$0x1]
        %v2891 = vld [vmem:[%s1943 + $0x54] sm:$0xf]
        %v2892 = vld [vmem:[%s1943 + $0x58] sm:$0xf]
        %v2893 = vld [vmem:[%s1943 + $0x5c] sm:$0x1]
        %v2894 = vld [vmem:[%s1943 + $0x64] sm:$0xf]
        %v2895 = vld [vmem:[%s1943 + $0x68] sm:$0xf]
        %v2896 = vld [vmem:[%s1943 + $0x6c] sm:$0x1]
        %v2897 = vld [vmem:[%s1943 + $0x74] sm:$0xf]
        %v2898 = vld [vmem:[%s1943 + $0x78] sm:$0xf]
        %v2899 = vld [vmem:[%s1943 + $0x7c] sm:$0x1]
        %v2900 = vld [vmem:[%s1943 + $0x84] sm:$0xf]
        %v2901 = vld [vmem:[%s1943 + $0x88] sm:$0xf]
        %v2902 = vld [vmem:[%s1943 + $0x8c] sm:$0x1]
        %v2903 = vld [vmem:[%s1943 + $0x94] sm:$0xf]
        %v2904 = vld [vmem:[%s1943 + $0x98] sm:$0xf]
        %v2905 = vld [vmem:[%s1943 + $0x9c] sm:$0x1]
        %v2906 = vld [vmem:[%s1943 + $0xa4] sm:$0xf]
        %v2907 = vld [vmem:[%s1943 + $0xa8] sm:$0xf]
        %v2908 = vld [vmem:[%s1943 + $0xac] sm:$0x1]
        %v2909 = vld [vmem:[%s1943 + $0xb4] sm:$0xf]
        %v2910 = vld [vmem:[%s1943 + $0xb8] sm:$0xf]
        %v2911 = vld [vmem:[%s1943 + $0xbc] sm:$0x1]
        %v2912 = vld [vmem:[%s1943 + $0xc4] sm:$0xf]
        %v2913 = vld [vmem:[%s1943 + $0xc8] sm:$0xf]
        %v2914 = vld [vmem:[%s1943 + $0xcc] sm:$0x1]
        %v2915 = vld [vmem:[%s1943 + $0xd4] sm:$0xf]
        %v2916 = vld [vmem:[%s1943 + $0xd8] sm:$0xf]
        %v2917 = vld [vmem:[%s1943 + $0xdc] sm:$0x1]
        %v2918 = vld [vmem:[%s1943 + $0xe4] sm:$0xf]
        %v2919 = vld [vmem:[%s1943 + $0xe8] sm:$0xf]
        %v2920 = vld [vmem:[%s1943 + $0xec] sm:$0x1]
        %v2921 = vld [vmem:[%s1943 + $0xf4] sm:$0xf]
        %v2922 = vld [vmem:[%s1943 + $0xf8] sm:$0xf]
        %v2923 = vld [vmem:[%s1943 + $0xfc] sm:$0x1]
        %v2925 = vshrl.u32 %v2876, 16
        %v2927 = vrot.slane %v2925, 4
        %v2928 = vshll.u32 %v2876, 16
        %v2930 = vrot.slane %v2928, 5
        %v2931 = vor.u32 %v2927, %v2930
        %v2932 = vrot.slane %v2931, 4
        %v2934 = vshll.u32 %v2877, 16
        %v2936 = vrot.slane %v2934, 5
        %v2937 = vsel %vm1305, %v2932, %v2936
        %v2938 = vshrl.u32 %v2877, 16
        %v2940 = vrot.slane %v2938, 4
        %v2941 = vor.u32 %v2940, %v2936
        %v2942 = vrot.slane %v2941, 4
        %v2944 = vshll.u32 %v2878, 16
        %v2946 = vrot.slane %v2944, 5
        %v2947 = vsel %vm1305, %v2942, %v2946
        %v2949 = vshrl.u32 %v2879, 16
        %v2951 = vrot.slane %v2949, 4
        %v2952 = vshll.u32 %v2879, 16
        %v2954 = vrot.slane %v2952, 5
        %v2955 = vor.u32 %v2951, %v2954
        %v2956 = vrot.slane %v2955, 4
        %v2958 = vshll.u32 %v2880, 16
        %v2960 = vrot.slane %v2958, 5
        %v2961 = vsel %vm1305, %v2956, %v2960
        %v2962 = vshrl.u32 %v2880, 16
        %v2964 = vrot.slane %v2962, 4
        %v2965 = vor.u32 %v2964, %v2960
        %v2966 = vrot.slane %v2965, 4
        %v2968 = vshll.u32 %v2881, 16
        %v2970 = vrot.slane %v2968, 5
        %v2971 = vsel %vm1305, %v2966, %v2970
        %v2973 = vshrl.u32 %v2882, 16
        %v2975 = vrot.slane %v2973, 4
        %v2976 = vshll.u32 %v2882, 16
        %v2978 = vrot.slane %v2976, 5
        %v2979 = vor.u32 %v2975, %v2978
        %v2980 = vrot.slane %v2979, 4
        %v2982 = vshll.u32 %v2883, 16
        %v2984 = vrot.slane %v2982, 5
        %v2985 = vsel %vm1305, %v2980, %v2984
        %v2986 = vshrl.u32 %v2883, 16
        %v2988 = vrot.slane %v2986, 4
        %v2989 = vor.u32 %v2988, %v2984
        %v2990 = vrot.slane %v2989, 4
        %v2992 = vshll.u32 %v2884, 16
        %v2994 = vrot.slane %v2992, 5
        %v2995 = vsel %vm1305, %v2990, %v2994
        %v2997 = vshrl.u32 %v2885, 16
        %v2999 = vrot.slane %v2997, 4
        %v3000 = vshll.u32 %v2885, 16
        %v3002 = vrot.slane %v3000, 5
        %v3003 = vor.u32 %v2999, %v3002
        %v3004 = vrot.slane %v3003, 4
        %v3006 = vshll.u32 %v2886, 16
        %v3008 = vrot.slane %v3006, 5
        %v3009 = vsel %vm1305, %v3004, %v3008
        %v3010 = vshrl.u32 %v2886, 16
        %v3012 = vrot.slane %v3010, 4
        %v3013 = vor.u32 %v3012, %v3008
        %v3014 = vrot.slane %v3013, 4
        %v3016 = vshll.u32 %v2887, 16
        %v3018 = vrot.slane %v3016, 5
        %v3019 = vsel %vm1305, %v3014, %v3018
        %v3021 = vshrl.u32 %v2888, 16
        %v3023 = vrot.slane %v3021, 4
        %v3024 = vshll.u32 %v2888, 16
        %v3026 = vrot.slane %v3024, 5
        %v3027 = vor.u32 %v3023, %v3026
        %v3028 = vrot.slane %v3027, 4
        %v3030 = vshll.u32 %v2889, 16
        %v3032 = vrot.slane %v3030, 5
        %v3033 = vsel %vm1305, %v3028, %v3032
        %v3034 = vshrl.u32 %v2889, 16
        %v3036 = vrot.slane %v3034, 4
        %v3037 = vor.u32 %v3036, %v3032
        %v3038 = vrot.slane %v3037, 4
        %v3040 = vshll.u32 %v2890, 16
        %v3042 = vrot.slane %v3040, 5
        %v3043 = vsel %vm1305, %v3038, %v3042
        %v3045 = vshrl.u32 %v2891, 16
        %v3047 = vrot.slane %v3045, 4
        %v3048 = vshll.u32 %v2891, 16
        %v3050 = vrot.slane %v3048, 5
        %v3051 = vor.u32 %v3047, %v3050
        %v3052 = vrot.slane %v3051, 4
        %v3054 = vshll.u32 %v2892, 16
        %v3056 = vrot.slane %v3054, 5
        %v3057 = vsel %vm1305, %v3052, %v3056
        %v3058 = vshrl.u32 %v2892, 16
        %v3060 = vrot.slane %v3058, 4
        %v3061 = vor.u32 %v3060, %v3056
        %v3062 = vrot.slane %v3061, 4
        %v3064 = vshll.u32 %v2893, 16
        %v3066 = vrot.slane %v3064, 5
        %v3067 = vsel %vm1305, %v3062, %v3066
        %v3069 = vshrl.u32 %v2894, 16
        %v3071 = vrot.slane %v3069, 4
        %v3072 = vshll.u32 %v2894, 16
        %v3074 = vrot.slane %v3072, 5
        %v3075 = vor.u32 %v3071, %v3074
        %v3076 = vrot.slane %v3075, 4
        %v3078 = vshll.u32 %v2895, 16
        %v3080 = vrot.slane %v3078, 5
        %v3081 = vsel %vm1305, %v3076, %v3080
        %v3082 = vshrl.u32 %v2895, 16
        %v3084 = vrot.slane %v3082, 4
        %v3085 = vor.u32 %v3084, %v3080
        %v3086 = vrot.slane %v3085, 4
        %v3088 = vshll.u32 %v2896, 16
        %v3090 = vrot.slane %v3088, 5
        %v3091 = vsel %vm1305, %v3086, %v3090
        %v3093 = vshrl.u32 %v2897, 16
        %v3095 = vrot.slane %v3093, 4
        %v3096 = vshll.u32 %v2897, 16
        %v3098 = vrot.slane %v3096, 5
        %v3099 = vor.u32 %v3095, %v3098
        %v3100 = vrot.slane %v3099, 4
        %v3102 = vshll.u32 %v2898, 16
        %v3104 = vrot.slane %v3102, 5
        %v3105 = vsel %vm1305, %v3100, %v3104
        %v3106 = vshrl.u32 %v2898, 16
        %v3108 = vrot.slane %v3106, 4
        %v3109 = vor.u32 %v3108, %v3104
        %v3110 = vrot.slane %v3109, 4
        %v3112 = vshll.u32 %v2899, 16
        %v3114 = vrot.slane %v3112, 5
        %v3115 = vsel %vm1305, %v3110, %v3114
        %v3117 = vshrl.u32 %v2900, 16
        %v3119 = vrot.slane %v3117, 4
        %v3120 = vshll.u32 %v2900, 16
        %v3122 = vrot.slane %v3120, 5
        %v3123 = vor.u32 %v3119, %v3122
        %v3124 = vrot.slane %v3123, 4
        %v3126 = vshll.u32 %v2901, 16
        %v3128 = vrot.slane %v3126, 5
        %v3129 = vsel %vm1305, %v3124, %v3128
        %v3130 = vshrl.u32 %v2901, 16
        %v3132 = vrot.slane %v3130, 4
        %v3133 = vor.u32 %v3132, %v3128
        %v3134 = vrot.slane %v3133, 4
        %v3136 = vshll.u32 %v2902, 16
        %v3138 = vrot.slane %v3136, 5
        %v3139 = vsel %vm1305, %v3134, %v3138
        %v3141 = vshrl.u32 %v2903, 16
        %v3143 = vrot.slane %v3141, 4
        %v3144 = vshll.u32 %v2903, 16
        %v3146 = vrot.slane %v3144, 5
        %v3147 = vor.u32 %v3143, %v3146
        %v3148 = vrot.slane %v3147, 4
        %v3150 = vshll.u32 %v2904, 16
        %v3152 = vrot.slane %v3150, 5
        %v3153 = vsel %vm1305, %v3148, %v3152
        %v3154 = vshrl.u32 %v2904, 16
        %v3156 = vrot.slane %v3154, 4
        %v3157 = vor.u32 %v3156, %v3152
        %v3158 = vrot.slane %v3157, 4
        %v3160 = vshll.u32 %v2905, 16
        %v3162 = vrot.slane %v3160, 5
        %v3163 = vsel %vm1305, %v3158, %v3162
        %v3165 = vshrl.u32 %v2906, 16
        %v3167 = vrot.slane %v3165, 4
        %v3168 = vshll.u32 %v2906, 16
        %v3170 = vrot.slane %v3168, 5
        %v3171 = vor.u32 %v3167, %v3170
        %v3172 = vrot.slane %v3171, 4
        %v3174 = vshll.u32 %v2907, 16
        %v3176 = vrot.slane %v3174, 5
        %v3177 = vsel %vm1305, %v3172, %v3176
        %v3178 = vshrl.u32 %v2907, 16
        %v3180 = vrot.slane %v3178, 4
        %v3181 = vor.u32 %v3180, %v3176
        %v3182 = vrot.slane %v3181, 4
        %v3184 = vshll.u32 %v2908, 16
        %v3186 = vrot.slane %v3184, 5
        %v3187 = vsel %vm1305, %v3182, %v3186
        %v3189 = vshrl.u32 %v2909, 16
        %v3191 = vrot.slane %v3189, 4
        %v3192 = vshll.u32 %v2909, 16
        %v3194 = vrot.slane %v3192, 5
        %v3195 = vor.u32 %v3191, %v3194
        %v3196 = vrot.slane %v3195, 4
        %v3198 = vshll.u32 %v2910, 16
        %v3200 = vrot.slane %v3198, 5
        %v3201 = vsel %vm1305, %v3196, %v3200
        %v3202 = vshrl.u32 %v2910, 16
        %v3204 = vrot.slane %v3202, 4
        %v3205 = vor.u32 %v3204, %v3200
        %v3206 = vrot.slane %v3205, 4
        %v3208 = vshll.u32 %v2911, 16
        %v3210 = vrot.slane %v3208, 5
        %v3211 = vsel %vm1305, %v3206, %v3210
        %v3213 = vshrl.u32 %v2912, 16
        %v3215 = vrot.slane %v3213, 4
        %v3216 = vshll.u32 %v2912, 16
        %v3218 = vrot.slane %v3216, 5
        %v3219 = vor.u32 %v3215, %v3218
        %v3220 = vrot.slane %v3219, 4
        %v3222 = vshll.u32 %v2913, 16
        %v3224 = vrot.slane %v3222, 5
        %v3225 = vsel %vm1305, %v3220, %v3224
        %v3226 = vshrl.u32 %v2913, 16
        %v3228 = vrot.slane %v3226, 4
        %v3229 = vor.u32 %v3228, %v3224
        %v3230 = vrot.slane %v3229, 4
        %v3232 = vshll.u32 %v2914, 16
        %v3234 = vrot.slane %v3232, 5
        %v3235 = vsel %vm1305, %v3230, %v3234
        %v3237 = vshrl.u32 %v2915, 16
        %v3239 = vrot.slane %v3237, 4
        %v3240 = vshll.u32 %v2915, 16
        %v3242 = vrot.slane %v3240, 5
        %v3243 = vor.u32 %v3239, %v3242
        %v3244 = vrot.slane %v3243, 4
        %v3246 = vshll.u32 %v2916, 16
        %v3248 = vrot.slane %v3246, 5
        %v3249 = vsel %vm1305, %v3244, %v3248
        %v3250 = vshrl.u32 %v2916, 16
        %v3252 = vrot.slane %v3250, 4
        %v3253 = vor.u32 %v3252, %v3248
        %v3254 = vrot.slane %v3253, 4
        %v3256 = vshll.u32 %v2917, 16
        %v3258 = vrot.slane %v3256, 5
        %v3259 = vsel %vm1305, %v3254, %v3258
        %v3261 = vshrl.u32 %v2918, 16
        %v3263 = vrot.slane %v3261, 4
        %v3264 = vshll.u32 %v2918, 16
        %v3266 = vrot.slane %v3264, 5
        %v3267 = vor.u32 %v3263, %v3266
        %v3268 = vrot.slane %v3267, 4
        %v3270 = vshll.u32 %v2919, 16
        %v3272 = vrot.slane %v3270, 5
        %v3273 = vsel %vm1305, %v3268, %v3272
        %v3274 = vshrl.u32 %v2919, 16
        %v3276 = vrot.slane %v3274, 4
        %v3277 = vor.u32 %v3276, %v3272
        %v3278 = vrot.slane %v3277, 4
        %v3280 = vshll.u32 %v2920, 16
        %v3282 = vrot.slane %v3280, 5
        %v3283 = vsel %vm1305, %v3278, %v3282
        %v3285 = vshrl.u32 %v2921, 16
        %v3287 = vrot.slane %v3285, 4
        %v3288 = vshll.u32 %v2921, 16
        %v3290 = vrot.slane %v3288, 5
        %v3291 = vor.u32 %v3287, %v3290
        %v3292 = vrot.slane %v3291, 4
        %v3294 = vshll.u32 %v2922, 16
        %v3296 = vrot.slane %v3294, 5
        %v3297 = vsel %vm1305, %v3292, %v3296
        %v3298 = vshrl.u32 %v2922, 16
        %v3300 = vrot.slane %v3298, 4
        %v3301 = vor.u32 %v3300, %v3296
        %v3302 = vrot.slane %v3301, 4
        %v3304 = vshll.u32 %v2923, 16
        %v3306 = vrot.slane %v3304, 5
        %v3307 = vsel %vm1305, %v3302, %v3306
        %s3308 = scalar_lea.vmem [#allocation6], 320
        %v3309 = vld [vmem:[%s3308] sm:$0xf]
        %v3310 = vld [vmem:[%s3308 + $0x4] sm:$0xf]
        %v3311 = vld [vmem:[%s3308 + $0x8] sm:$0xf]
        %v3312 = vld [vmem:[%s3308 + $0xc] sm:$0xf]
        %v3313 = vld [vmem:[%s3308 + $0x10] sm:$0xf]
        %v3314 = vld [vmem:[%s3308 + $0x14] sm:$0xf]
        %v3315 = vld [vmem:[%s3308 + $0x18] sm:$0xf]
        %v3316 = vld [vmem:[%s3308 + $0x1c] sm:$0xf]
        %v3317 = vld [vmem:[%s3308 + $0x20] sm:$0xf]
        %v3318 = vld [vmem:[%s3308 + $0x24] sm:$0xf]
        %v3319 = vld [vmem:[%s3308 + $0x28] sm:$0xf]
        %v3320 = vld [vmem:[%s3308 + $0x2c] sm:$0xf]
        %v3321 = vld [vmem:[%s3308 + $0x30] sm:$0xf]
        %v3322 = vld [vmem:[%s3308 + $0x34] sm:$0xf]
        %v3323 = vld [vmem:[%s3308 + $0x38] sm:$0xf]
        %v3324 = vld [vmem:[%s3308 + $0x3c] sm:$0xf]
        %v3325 = vunpack.c.l.b16 %v2937
        %v3326 = vunpack.c.l.b16 %v2947
        %v3327 = vunpack.c.l.b16 %v2961
        %v3328 = vunpack.c.l.b16 %v2971
        %v3329 = vunpack.c.l.b16 %v2985
        %v3330 = vunpack.c.l.b16 %v2995
        %v3331 = vunpack.c.l.b16 %v3009
        %v3332 = vunpack.c.l.b16 %v3019
        %v3333 = vunpack.c.l.b16 %v3033
        %v3334 = vunpack.c.l.b16 %v3043
        %v3335 = vunpack.c.l.b16 %v3057
        %v3336 = vunpack.c.l.b16 %v3067
        %v3337 = vunpack.c.l.b16 %v3081
        %v3338 = vunpack.c.l.b16 %v3091
        %v3339 = vunpack.c.l.b16 %v3105
        %v3340 = vunpack.c.l.b16 %v3115
        %v3341 = vunpack.c.l.b16 %v3129
        %v3342 = vunpack.c.l.b16 %v3139
        %v3343 = vunpack.c.l.b16 %v3153
        %v3344 = vunpack.c.l.b16 %v3163
        %v3345 = vunpack.c.l.b16 %v3177
        %v3346 = vunpack.c.l.b16 %v3187
        %v3347 = vunpack.c.l.b16 %v3201
        %v3348 = vunpack.c.l.b16 %v3211
        %v3349 = vunpack.c.l.b16 %v3225
        %v3350 = vunpack.c.l.b16 %v3235
        %v3351 = vunpack.c.l.b16 %v3249
        %v3352 = vunpack.c.l.b16 %v3259
        %v3353 = vunpack.c.l.b16 %v3273
        %v3354 = vunpack.c.l.b16 %v3283
        %v3355 = vunpack.c.l.b16 %v3297
        %v3356 = vunpack.c.l.b16 %v3307
        %v3357 = vpack.c.b16 %v3326, %v3325
        %v3358 = vpack.c.b16 %v3328, %v3327
        %v3359 = vpack.c.b16 %v3330, %v3329
        %v3360 = vpack.c.b16 %v3332, %v3331
        %v3361 = vpack.c.b16 %v3334, %v3333
        %v3362 = vpack.c.b16 %v3336, %v3335
        %v3363 = vpack.c.b16 %v3338, %v3337
        %v3364 = vpack.c.b16 %v3340, %v3339
        %v3365 = vpack.c.b16 %v3342, %v3341
        %v3366 = vpack.c.b16 %v3344, %v3343
        %v3367 = vpack.c.b16 %v3346, %v3345
        %v3368 = vpack.c.b16 %v3348, %v3347
        %v3369 = vpack.c.b16 %v3350, %v3349
        %v3370 = vpack.c.b16 %v3352, %v3351
        %v3371 = vpack.c.b16 %v3354, %v3353
        %v3372 = vpack.c.b16 %v3356, %v3355
        %v3405 = vunpack.c.l.b16 %v3309
        %v3406 = vunpack.c.l.b16 %v3310
        %v3407 = vunpack.c.l.b16 %v3311
        %v3408 = vunpack.c.l.b16 %v3312
        %v3409 = vunpack.c.l.b16 %v3313
        %v3410 = vunpack.c.l.b16 %v3314
        %v3411 = vunpack.c.l.b16 %v3315
        %v3412 = vunpack.c.l.b16 %v3316
        %v3413 = vunpack.c.l.b16 %v3317
        %v3414 = vunpack.c.l.b16 %v3318
        %v3415 = vunpack.c.l.b16 %v3319
        %v3416 = vunpack.c.l.b16 %v3320
        %v3417 = vunpack.c.l.b16 %v3321
        %v3418 = vunpack.c.l.b16 %v3322
        %v3419 = vunpack.c.l.b16 %v3323
        %v3420 = vunpack.c.l.b16 %v3324
        %v3421 = vpack.c.b16 %v3406, %v3405
        %v3422 = vpack.c.b16 %v3408, %v3407
        %v3423 = vpack.c.b16 %v3410, %v3409
        %v3424 = vpack.c.b16 %v3412, %v3411
        %v3425 = vpack.c.b16 %v3414, %v3413
        %v3426 = vpack.c.b16 %v3416, %v3415
        %v3427 = vpack.c.b16 %v3418, %v3417
        %v3428 = vpack.c.b16 %v3420, %v3419
        %3437 = vmatpush.bf16.msra.mxu0 %v3428
        %3438 = vmatpush.bf16.msra.mxu0 %v3427
        %3439 = vmatpush.bf16.msra.mxu0 %v3426
        %3440 = vmatpush.bf16.msra.mxu0 %v3425
        %3441 = vmatpush.bf16.msra.mxu0 %v3424
        %3442 = vmatpush.bf16.msra.mxu0 %v3423
        %3443 = vmatpush.bf16.msra.mxu0 %v3422
        %3444 = vmatpush.bf16.msra.mxu0 %v3421
        %3445 = vmatmul.bf16.gmra.mxu0 %v3357
        %v3446 = vpop.f32.mrf.mxu0
        %v3447 = vadd.f32 0.0, %v3446
        %v3448 = vpop.f32.mrf.mxu0
        %v3449 = vadd.f32 0.0, %v3448
        %3450 = vmatmul.bf16.gmra.mxu0 %v3358
        %v3451 = vpop.f32.mrf.mxu0
        %v3452 = vadd.f32 0.0, %v3451
        %v3453 = vpop.f32.mrf.mxu0
        %v3454 = vadd.f32 0.0, %v3453
        %3455 = vmatmul.bf16.gmra.mxu0 %v3359
        %v3456 = vpop.f32.mrf.mxu0
        %v3457 = vadd.f32 0.0, %v3456
        %v3458 = vpop.f32.mrf.mxu0
        %v3459 = vadd.f32 0.0, %v3458
        %3460 = vmatmul.bf16.gmra.mxu0 %v3360
        %v3461 = vpop.f32.mrf.mxu0
        %v3462 = vadd.f32 0.0, %v3461
        %v3463 = vpop.f32.mrf.mxu0
        %v3464 = vadd.f32 0.0, %v3463
        %3465 = vmatmul.bf16.gmra.mxu0 %v3361
        %v3466 = vpop.f32.mrf.mxu0
        %v3467 = vadd.f32 0.0, %v3466
        %v3468 = vpop.f32.mrf.mxu0
        %v3469 = vadd.f32 0.0, %v3468
        %3470 = vmatmul.bf16.gmra.mxu0 %v3362
        %v3471 = vpop.f32.mrf.mxu0
        %v3472 = vadd.f32 0.0, %v3471
        %v3473 = vpop.f32.mrf.mxu0
        %v3474 = vadd.f32 0.0, %v3473
        %3475 = vmatmul.bf16.gmra.mxu0 %v3363
        %v3476 = vpop.f32.mrf.mxu0
        %v3477 = vadd.f32 0.0, %v3476
        %v3478 = vpop.f32.mrf.mxu0
        %v3479 = vadd.f32 0.0, %v3478
        %3480 = vmatmul.bf16.gmra.mxu0 %v3364
        %v3481 = vpop.f32.mrf.mxu0
        %v3482 = vadd.f32 0.0, %v3481
        %v3483 = vpop.f32.mrf.mxu0
        %v3484 = vadd.f32 0.0, %v3483
        %3485 = vmatmul.bf16.gmra.mxu0 %v3365
        %v3486 = vpop.f32.mrf.mxu0
        %v3487 = vadd.f32 0.0, %v3486
        %v3488 = vpop.f32.mrf.mxu0
        %v3489 = vadd.f32 0.0, %v3488
        %3490 = vmatmul.bf16.gmra.mxu0 %v3366
        %v3491 = vpop.f32.mrf.mxu0
        %v3492 = vadd.f32 0.0, %v3491
        %v3493 = vpop.f32.mrf.mxu0
        %v3494 = vadd.f32 0.0, %v3493
        %3495 = vmatmul.bf16.gmra.mxu0 %v3367
        %v3496 = vpop.f32.mrf.mxu0
        %v3497 = vadd.f32 0.0, %v3496
        %v3498 = vpop.f32.mrf.mxu0
        %v3499 = vadd.f32 0.0, %v3498
        %3500 = vmatmul.bf16.gmra.mxu0 %v3368
        %v3501 = vpop.f32.mrf.mxu0
        %v3502 = vadd.f32 0.0, %v3501
        %v3503 = vpop.f32.mrf.mxu0
        %v3504 = vadd.f32 0.0, %v3503
        %3505 = vmatmul.bf16.gmra.mxu0 %v3369
        %v3506 = vpop.f32.mrf.mxu0
        %v3507 = vadd.f32 0.0, %v3506
        %v3508 = vpop.f32.mrf.mxu0
        %v3509 = vadd.f32 0.0, %v3508
        %3510 = vmatmul.bf16.gmra.mxu0 %v3370
        %v3511 = vpop.f32.mrf.mxu0
        %v3512 = vadd.f32 0.0, %v3511
        %v3513 = vpop.f32.mrf.mxu0
        %v3514 = vadd.f32 0.0, %v3513
        %3515 = vmatmul.bf16.gmra.mxu0 %v3371
        %v3516 = vpop.f32.mrf.mxu0
        %v3517 = vadd.f32 0.0, %v3516
        %v3518 = vpop.f32.mrf.mxu0
        %v3519 = vadd.f32 0.0, %v3518
        %3520 = vmatmul.bf16.gmra.mxu0 %v3372
        %v3521 = vpop.f32.mrf.mxu0
        %v3522 = vadd.f32 0.0, %v3521
        %v3523 = vpop.f32.mrf.mxu0
        %v3524 = vadd.f32 0.0, %v3523
        %3525 = vdwg.mxu0
        %v3526 = vadd.f32 %v2844, %v3447
        %v3527 = vadd.f32 %v2845, %v3449
        %v3528 = vadd.f32 %v2846, %v3452
        %v3529 = vadd.f32 %v2847, %v3454
        %v3530 = vadd.f32 %v2848, %v3457
        %v3531 = vadd.f32 %v2849, %v3459
        %v3532 = vadd.f32 %v2850, %v3462
        %v3533 = vadd.f32 %v2851, %v3464
        %v3534 = vadd.f32 %v2852, %v3467
        %v3535 = vadd.f32 %v2853, %v3469
        %v3536 = vadd.f32 %v2854, %v3472
        %v3537 = vadd.f32 %v2855, %v3474
        %v3538 = vadd.f32 %v2856, %v3477
        %v3539 = vadd.f32 %v2857, %v3479
        %v3540 = vadd.f32 %v2858, %v3482
        %v3541 = vadd.f32 %v2859, %v3484
        %v3542 = vadd.f32 %v2860, %v3487
        %v3543 = vadd.f32 %v2861, %v3489
        %v3544 = vadd.f32 %v2862, %v3492
        %v3545 = vadd.f32 %v2863, %v3494
        %v3546 = vadd.f32 %v2864, %v3497
        %v3547 = vadd.f32 %v2865, %v3499
        %v3548 = vadd.f32 %v2866, %v3502
        %v3549 = vadd.f32 %v2867, %v3504
        %v3550 = vadd.f32 %v2868, %v3507
        %v3551 = vadd.f32 %v2869, %v3509
        %v3552 = vadd.f32 %v2870, %v3512
        %v3553 = vadd.f32 %v2871, %v3514
        %v3554 = vadd.f32 %v2872, %v3517
        %v3555 = vadd.f32 %v2873, %v3519
        %v3556 = vadd.f32 %v2874, %v3522
        %v3557 = vadd.f32 %v2875, %v3524
        %s3558 = sadd.s32 0, 2
        %s3559 = smul.u32 %s3558, 4
        %s3560 = smul.addr %s3559, 4
        %s3561 = scalar_lea.vmem %s290, %s3560 [#allocation3]
        %v3562 = vld [vmem:[%s3561] sm:$0x8]
        %v3563 = vld [vmem:[%s3561 + $0x4] sm:$0xf]
        %v3564 = vld [vmem:[%s3561 + $0x8] sm:$0xf]
        %v3565 = vld [vmem:[%s3561 + $0x10] sm:$0x8]
        %v3566 = vld [vmem:[%s3561 + $0x14] sm:$0xf]
        %v3567 = vld [vmem:[%s3561 + $0x18] sm:$0xf]
        %v3568 = vld [vmem:[%s3561 + $0x20] sm:$0x8]
        %v3569 = vld [vmem:[%s3561 + $0x24] sm:$0xf]
        %v3570 = vld [vmem:[%s3561 + $0x28] sm:$0xf]
        %v3571 = vld [vmem:[%s3561 + $0x30] sm:$0x8]
        %v3572 = vld [vmem:[%s3561 + $0x34] sm:$0xf]
        %v3573 = vld [vmem:[%s3561 + $0x38] sm:$0xf]
        %v3574 = vld [vmem:[%s3561 + $0x40] sm:$0x8]
        %v3575 = vld [vmem:[%s3561 + $0x44] sm:$0xf]
        %v3576 = vld [vmem:[%s3561 + $0x48] sm:$0xf]
        %v3577 = vld [vmem:[%s3561 + $0x50] sm:$0x8]
        %v3578 = vld [vmem:[%s3561 + $0x54] sm:$0xf]
        %v3579 = vld [vmem:[%s3561 + $0x58] sm:$0xf]
        %v3580 = vld [vmem:[%s3561 + $0x60] sm:$0x8]
        %v3581 = vld [vmem:[%s3561 + $0x64] sm:$0xf]
        %v3582 = vld [vmem:[%s3561 + $0x68] sm:$0xf]
        %v3583 = vld [vmem:[%s3561 + $0x70] sm:$0x8]
        %v3584 = vld [vmem:[%s3561 + $0x74] sm:$0xf]
        %v3585 = vld [vmem:[%s3561 + $0x78] sm:$0xf]
        %v3586 = vld [vmem:[%s3561 + $0x80] sm:$0x8]
        %v3587 = vld [vmem:[%s3561 + $0x84] sm:$0xf]
        %v3588 = vld [vmem:[%s3561 + $0x88] sm:$0xf]
        %v3589 = vld [vmem:[%s3561 + $0x90] sm:$0x8]
        %v3590 = vld [vmem:[%s3561 + $0x94] sm:$0xf]
        %v3591 = vld [vmem:[%s3561 + $0x98] sm:$0xf]
        %v3592 = vld [vmem:[%s3561 + $0xa0] sm:$0x8]
        %v3593 = vld [vmem:[%s3561 + $0xa4] sm:$0xf]
        %v3594 = vld [vmem:[%s3561 + $0xa8] sm:$0xf]
        %v3595 = vld [vmem:[%s3561 + $0xb0] sm:$0x8]
        %v3596 = vld [vmem:[%s3561 + $0xb4] sm:$0xf]
        %v3597 = vld [vmem:[%s3561 + $0xb8] sm:$0xf]
        %v3598 = vld [vmem:[%s3561 + $0xc0] sm:$0x8]
        %v3599 = vld [vmem:[%s3561 + $0xc4] sm:$0xf]
        %v3600 = vld [vmem:[%s3561 + $0xc8] sm:$0xf]
        %v3601 = vld [vmem:[%s3561 + $0xd0] sm:$0x8]
        %v3602 = vld [vmem:[%s3561 + $0xd4] sm:$0xf]
        %v3603 = vld [vmem:[%s3561 + $0xd8] sm:$0xf]
        %v3604 = vld [vmem:[%s3561 + $0xe0] sm:$0x8]
        %v3605 = vld [vmem:[%s3561 + $0xe4] sm:$0xf]
        %v3606 = vld [vmem:[%s3561 + $0xe8] sm:$0xf]
        %v3607 = vld [vmem:[%s3561 + $0xf0] sm:$0x8]
        %v3608 = vld [vmem:[%s3561 + $0xf4] sm:$0xf]
        %v3609 = vld [vmem:[%s3561 + $0xf8] sm:$0xf]
        %v3611 = vshrl.u32 %v3562, 16
        %v3613 = vrot.slane %v3611, 7
        %v3614 = vrot.slane %v3613, 4
        %v3616 = vshrl.u32 %v3563, 16
        %v3618 = vrot.slane %v3616, 7
        %v3619 = vshll.u32 %v3563, 16
        %v3621 = vor.u32 %v3618, %v3619
        %v3622 = vsel %vm435, %v3614, %v3621
        %v3623 = vrot.slane %v3618, 4
        %v3625 = vshrl.u32 %v3564, 16
        %v3627 = vrot.slane %v3625, 7
        %v3628 = vshll.u32 %v3564, 16
        %v3630 = vor.u32 %v3627, %v3628
        %v3631 = vsel %vm435, %v3623, %v3630
        %v3633 = vshrl.u32 %v3565, 16
        %v3635 = vrot.slane %v3633, 7
        %v3636 = vrot.slane %v3635, 4
        %v3638 = vshrl.u32 %v3566, 16
        %v3640 = vrot.slane %v3638, 7
        %v3641 = vshll.u32 %v3566, 16
        %v3643 = vor.u32 %v3640, %v3641
        %v3644 = vsel %vm435, %v3636, %v3643
        %v3645 = vrot.slane %v3640, 4
        %v3647 = vshrl.u32 %v3567, 16
        %v3649 = vrot.slane %v3647, 7
        %v3650 = vshll.u32 %v3567, 16
        %v3652 = vor.u32 %v3649, %v3650
        %v3653 = vsel %vm435, %v3645, %v3652
        %v3655 = vshrl.u32 %v3568, 16
        %v3657 = vrot.slane %v3655, 7
        %v3658 = vrot.slane %v3657, 4
        %v3660 = vshrl.u32 %v3569, 16
        %v3662 = vrot.slane %v3660, 7
        %v3663 = vshll.u32 %v3569, 16
        %v3665 = vor.u32 %v3662, %v3663
        %v3666 = vsel %vm435, %v3658, %v3665
        %v3667 = vrot.slane %v3662, 4
        %v3669 = vshrl.u32 %v3570, 16
        %v3671 = vrot.slane %v3669, 7
        %v3672 = vshll.u32 %v3570, 16
        %v3674 = vor.u32 %v3671, %v3672
        %v3675 = vsel %vm435, %v3667, %v3674
        %v3677 = vshrl.u32 %v3571, 16
        %v3679 = vrot.slane %v3677, 7
        %v3680 = vrot.slane %v3679, 4
        %v3682 = vshrl.u32 %v3572, 16
        %v3684 = vrot.slane %v3682, 7
        %v3685 = vshll.u32 %v3572, 16
        %v3687 = vor.u32 %v3684, %v3685
        %v3688 = vsel %vm435, %v3680, %v3687
        %v3689 = vrot.slane %v3684, 4
        %v3691 = vshrl.u32 %v3573, 16
        %v3693 = vrot.slane %v3691, 7
        %v3694 = vshll.u32 %v3573, 16
        %v3696 = vor.u32 %v3693, %v3694
        %v3697 = vsel %vm435, %v3689, %v3696
        %v3699 = vshrl.u32 %v3574, 16
        %v3701 = vrot.slane %v3699, 7
        %v3702 = vrot.slane %v3701, 4
        %v3704 = vshrl.u32 %v3575, 16
        %v3706 = vrot.slane %v3704, 7
        %v3707 = vshll.u32 %v3575, 16
        %v3709 = vor.u32 %v3706, %v3707
        %v3710 = vsel %vm435, %v3702, %v3709
        %v3711 = vrot.slane %v3706, 4
        %v3713 = vshrl.u32 %v3576, 16
        %v3715 = vrot.slane %v3713, 7
        %v3716 = vshll.u32 %v3576, 16
        %v3718 = vor.u32 %v3715, %v3716
        %v3719 = vsel %vm435, %v3711, %v3718
        %v3721 = vshrl.u32 %v3577, 16
        %v3723 = vrot.slane %v3721, 7
        %v3724 = vrot.slane %v3723, 4
        %v3726 = vshrl.u32 %v3578, 16
        %v3728 = vrot.slane %v3726, 7
        %v3729 = vshll.u32 %v3578, 16
        %v3731 = vor.u32 %v3728, %v3729
        %v3732 = vsel %vm435, %v3724, %v3731
        %v3733 = vrot.slane %v3728, 4
        %v3735 = vshrl.u32 %v3579, 16
        %v3737 = vrot.slane %v3735, 7
        %v3738 = vshll.u32 %v3579, 16
        %v3740 = vor.u32 %v3737, %v3738
        %v3741 = vsel %vm435, %v3733, %v3740
        %v3743 = vshrl.u32 %v3580, 16
        %v3745 = vrot.slane %v3743, 7
        %v3746 = vrot.slane %v3745, 4
        %v3748 = vshrl.u32 %v3581, 16
        %v3750 = vrot.slane %v3748, 7
        %v3751 = vshll.u32 %v3581, 16
        %v3753 = vor.u32 %v3750, %v3751
        %v3754 = vsel %vm435, %v3746, %v3753
        %v3755 = vrot.slane %v3750, 4
        %v3757 = vshrl.u32 %v3582, 16
        %v3759 = vrot.slane %v3757, 7
        %v3760 = vshll.u32 %v3582, 16
        %v3762 = vor.u32 %v3759, %v3760
        %v3763 = vsel %vm435, %v3755, %v3762
        %v3765 = vshrl.u32 %v3583, 16
        %v3767 = vrot.slane %v3765, 7
        %v3768 = vrot.slane %v3767, 4
        %v3770 = vshrl.u32 %v3584, 16
        %v3772 = vrot.slane %v3770, 7
        %v3773 = vshll.u32 %v3584, 16
        %v3775 = vor.u32 %v3772, %v3773
        %v3776 = vsel %vm435, %v3768, %v3775
        %v3777 = vrot.slane %v3772, 4
        %v3779 = vshrl.u32 %v3585, 16
        %v3781 = vrot.slane %v3779, 7
        %v3782 = vshll.u32 %v3585, 16
        %v3784 = vor.u32 %v3781, %v3782
        %v3785 = vsel %vm435, %v3777, %v3784
        %v3787 = vshrl.u32 %v3586, 16
        %v3789 = vrot.slane %v3787, 7
        %v3790 = vrot.slane %v3789, 4
        %v3792 = vshrl.u32 %v3587, 16
        %v3794 = vrot.slane %v3792, 7
        %v3795 = vshll.u32 %v3587, 16
        %v3797 = vor.u32 %v3794, %v3795
        %v3798 = vsel %vm435, %v3790, %v3797
        %v3799 = vrot.slane %v3794, 4
        %v3801 = vshrl.u32 %v3588, 16
        %v3803 = vrot.slane %v3801, 7
        %v3804 = vshll.u32 %v3588, 16
        %v3806 = vor.u32 %v3803, %v3804
        %v3807 = vsel %vm435, %v3799, %v3806
        %v3809 = vshrl.u32 %v3589, 16
        %v3811 = vrot.slane %v3809, 7
        %v3812 = vrot.slane %v3811, 4
        %v3814 = vshrl.u32 %v3590, 16
        %v3816 = vrot.slane %v3814, 7
        %v3817 = vshll.u32 %v3590, 16
        %v3819 = vor.u32 %v3816, %v3817
        %v3820 = vsel %vm435, %v3812, %v3819
        %v3821 = vrot.slane %v3816, 4
        %v3823 = vshrl.u32 %v3591, 16
        %v3825 = vrot.slane %v3823, 7
        %v3826 = vshll.u32 %v3591, 16
        %v3828 = vor.u32 %v3825, %v3826
        %v3829 = vsel %vm435, %v3821, %v3828
        %v3831 = vshrl.u32 %v3592, 16
        %v3833 = vrot.slane %v3831, 7
        %v3834 = vrot.slane %v3833, 4
        %v3836 = vshrl.u32 %v3593, 16
        %v3838 = vrot.slane %v3836, 7
        %v3839 = vshll.u32 %v3593, 16
        %v3841 = vor.u32 %v3838, %v3839
        %v3842 = vsel %vm435, %v3834, %v3841
        %v3843 = vrot.slane %v3838, 4
        %v3845 = vshrl.u32 %v3594, 16
        %v3847 = vrot.slane %v3845, 7
        %v3848 = vshll.u32 %v3594, 16
        %v3850 = vor.u32 %v3847, %v3848
        %v3851 = vsel %vm435, %v3843, %v3850
        %v3853 = vshrl.u32 %v3595, 16
        %v3855 = vrot.slane %v3853, 7
        %v3856 = vrot.slane %v3855, 4
        %v3858 = vshrl.u32 %v3596, 16
        %v3860 = vrot.slane %v3858, 7
        %v3861 = vshll.u32 %v3596, 16
        %v3863 = vor.u32 %v3860, %v3861
        %v3864 = vsel %vm435, %v3856, %v3863
        %v3865 = vrot.slane %v3860, 4
        %v3867 = vshrl.u32 %v3597, 16
        %v3869 = vrot.slane %v3867, 7
        %v3870 = vshll.u32 %v3597, 16
        %v3872 = vor.u32 %v3869, %v3870
        %v3873 = vsel %vm435, %v3865, %v3872
        %v3875 = vshrl.u32 %v3598, 16
        %v3877 = vrot.slane %v3875, 7
        %v3878 = vrot.slane %v3877, 4
        %v3880 = vshrl.u32 %v3599, 16
        %v3882 = vrot.slane %v3880, 7
        %v3883 = vshll.u32 %v3599, 16
        %v3885 = vor.u32 %v3882, %v3883
        %v3886 = vsel %vm435, %v3878, %v3885
        %v3887 = vrot.slane %v3882, 4
        %v3889 = vshrl.u32 %v3600, 16
        %v3891 = vrot.slane %v3889, 7
        %v3892 = vshll.u32 %v3600, 16
        %v3894 = vor.u32 %v3891, %v3892
        %v3895 = vsel %vm435, %v3887, %v3894
        %v3897 = vshrl.u32 %v3601, 16
        %v3899 = vrot.slane %v3897, 7
        %v3900 = vrot.slane %v3899, 4
        %v3902 = vshrl.u32 %v3602, 16
        %v3904 = vrot.slane %v3902, 7
        %v3905 = vshll.u32 %v3602, 16
        %v3907 = vor.u32 %v3904, %v3905
        %v3908 = vsel %vm435, %v3900, %v3907
        %v3909 = vrot.slane %v3904, 4
        %v3911 = vshrl.u32 %v3603, 16
        %v3913 = vrot.slane %v3911, 7
        %v3914 = vshll.u32 %v3603, 16
        %v3916 = vor.u32 %v3913, %v3914
        %v3917 = vsel %vm435, %v3909, %v3916
        %v3919 = vshrl.u32 %v3604, 16
        %v3921 = vrot.slane %v3919, 7
        %v3922 = vrot.slane %v3921, 4
        %v3924 = vshrl.u32 %v3605, 16
        %v3926 = vrot.slane %v3924, 7
        %v3927 = vshll.u32 %v3605, 16
        %v3929 = vor.u32 %v3926, %v3927
        %v3930 = vsel %vm435, %v3922, %v3929
        %v3931 = vrot.slane %v3926, 4
        %v3933 = vshrl.u32 %v3606, 16
        %v3935 = vrot.slane %v3933, 7
        %v3936 = vshll.u32 %v3606, 16
        %v3938 = vor.u32 %v3935, %v3936
        %v3939 = vsel %vm435, %v3931, %v3938
        %v3941 = vshrl.u32 %v3607, 16
        %v3943 = vrot.slane %v3941, 7
        %v3944 = vrot.slane %v3943, 4
        %v3946 = vshrl.u32 %v3608, 16
        %v3948 = vrot.slane %v3946, 7
        %v3949 = vshll.u32 %v3608, 16
        %v3951 = vor.u32 %v3948, %v3949
        %v3952 = vsel %vm435, %v3944, %v3951
        %v3953 = vrot.slane %v3948, 4
        %v3955 = vshrl.u32 %v3609, 16
        %v3957 = vrot.slane %v3955, 7
        %v3958 = vshll.u32 %v3609, 16
        %v3960 = vor.u32 %v3957, %v3958
        %v3961 = vsel %vm435, %v3953, %v3960
        %s3962 = scalar_lea.vmem [#allocation6], 384
        %v3963 = vld [vmem:[%s3962] sm:$0xf]
        %v3964 = vld [vmem:[%s3962 + $0x4] sm:$0xf]
        %v3965 = vld [vmem:[%s3962 + $0x8] sm:$0xf]
        %v3966 = vld [vmem:[%s3962 + $0xc] sm:$0xf]
        %v3967 = vld [vmem:[%s3962 + $0x10] sm:$0xf]
        %v3968 = vld [vmem:[%s3962 + $0x14] sm:$0xf]
        %v3969 = vld [vmem:[%s3962 + $0x18] sm:$0xf]
        %v3970 = vld [vmem:[%s3962 + $0x1c] sm:$0xf]
        %v3971 = vld [vmem:[%s3962 + $0x20] sm:$0xf]
        %v3972 = vld [vmem:[%s3962 + $0x24] sm:$0xf]
        %v3973 = vld [vmem:[%s3962 + $0x28] sm:$0xf]
        %v3974 = vld [vmem:[%s3962 + $0x2c] sm:$0xf]
        %v3975 = vld [vmem:[%s3962 + $0x30] sm:$0xf]
        %v3976 = vld [vmem:[%s3962 + $0x34] sm:$0xf]
        %v3977 = vld [vmem:[%s3962 + $0x38] sm:$0xf]
        %v3978 = vld [vmem:[%s3962 + $0x3c] sm:$0xf]
        %v3979 = vunpack.c.l.b16 %v3622
        %v3980 = vunpack.c.l.b16 %v3631
        %v3981 = vunpack.c.l.b16 %v3644
        %v3982 = vunpack.c.l.b16 %v3653
        %v3983 = vunpack.c.l.b16 %v3666
        %v3984 = vunpack.c.l.b16 %v3675
        %v3985 = vunpack.c.l.b16 %v3688
        %v3986 = vunpack.c.l.b16 %v3697
        %v3987 = vunpack.c.l.b16 %v3710
        %v3988 = vunpack.c.l.b16 %v3719
        %v3989 = vunpack.c.l.b16 %v3732
        %v3990 = vunpack.c.l.b16 %v3741
        %v3991 = vunpack.c.l.b16 %v3754
        %v3992 = vunpack.c.l.b16 %v3763
        %v3993 = vunpack.c.l.b16 %v3776
        %v3994 = vunpack.c.l.b16 %v3785
        %v3995 = vunpack.c.l.b16 %v3798
        %v3996 = vunpack.c.l.b16 %v3807
        %v3997 = vunpack.c.l.b16 %v3820
        %v3998 = vunpack.c.l.b16 %v3829
        %v3999 = vunpack.c.l.b16 %v3842
        %v4000 = vunpack.c.l.b16 %v3851
        %v4001 = vunpack.c.l.b16 %v3864
        %v4002 = vunpack.c.l.b16 %v3873
        %v4003 = vunpack.c.l.b16 %v3886
        %v4004 = vunpack.c.l.b16 %v3895
        %v4005 = vunpack.c.l.b16 %v3908
        %v4006 = vunpack.c.l.b16 %v3917
        %v4007 = vunpack.c.l.b16 %v3930
        %v4008 = vunpack.c.l.b16 %v3939
        %v4009 = vunpack.c.l.b16 %v3952
        %v4010 = vunpack.c.l.b16 %v3961
        %v4011 = vpack.c.b16 %v3980, %v3979
        %v4012 = vpack.c.b16 %v3982, %v3981
        %v4013 = vpack.c.b16 %v3984, %v3983
        %v4014 = vpack.c.b16 %v3986, %v3985
        %v4015 = vpack.c.b16 %v3988, %v3987
        %v4016 = vpack.c.b16 %v3990, %v3989
        %v4017 = vpack.c.b16 %v3992, %v3991
        %v4018 = vpack.c.b16 %v3994, %v3993
        %v4019 = vpack.c.b16 %v3996, %v3995
        %v4020 = vpack.c.b16 %v3998, %v3997
        %v4021 = vpack.c.b16 %v4000, %v3999
        %v4022 = vpack.c.b16 %v4002, %v4001
        %v4023 = vpack.c.b16 %v4004, %v4003
        %v4024 = vpack.c.b16 %v4006, %v4005
        %v4025 = vpack.c.b16 %v4008, %v4007
        %v4026 = vpack.c.b16 %v4010, %v4009
        %v4059 = vunpack.c.l.b16 %v3963
        %v4060 = vunpack.c.l.b16 %v3964
        %v4061 = vunpack.c.l.b16 %v3965
        %v4062 = vunpack.c.l.b16 %v3966
        %v4063 = vunpack.c.l.b16 %v3967
        %v4064 = vunpack.c.l.b16 %v3968
        %v4065 = vunpack.c.l.b16 %v3969
        %v4066 = vunpack.c.l.b16 %v3970
        %v4067 = vunpack.c.l.b16 %v3971
        %v4068 = vunpack.c.l.b16 %v3972
        %v4069 = vunpack.c.l.b16 %v3973
        %v4070 = vunpack.c.l.b16 %v3974
        %v4071 = vunpack.c.l.b16 %v3975
        %v4072 = vunpack.c.l.b16 %v3976
        %v4073 = vunpack.c.l.b16 %v3977
        %v4074 = vunpack.c.l.b16 %v3978
        %v4075 = vpack.c.b16 %v4060, %v4059
        %v4076 = vpack.c.b16 %v4062, %v4061
        %v4077 = vpack.c.b16 %v4064, %v4063
        %v4078 = vpack.c.b16 %v4066, %v4065
        %v4079 = vpack.c.b16 %v4068, %v4067
        %v4080 = vpack.c.b16 %v4070, %v4069
        %v4081 = vpack.c.b16 %v4072, %v4071
        %v4082 = vpack.c.b16 %v4074, %v4073
        %4091 = vmatpush.bf16.msra.mxu0 %v4082
        %4092 = vmatpush.bf16.msra.mxu0 %v4081
        %4093 = vmatpush.bf16.msra.mxu0 %v4080
        %4094 = vmatpush.bf16.msra.mxu0 %v4079
        %4095 = vmatpush.bf16.msra.mxu0 %v4078
        %4096 = vmatpush.bf16.msra.mxu0 %v4077
        %4097 = vmatpush.bf16.msra.mxu0 %v4076
        %4098 = vmatpush.bf16.msra.mxu0 %v4075
        %4099 = vmatmul.bf16.gmra.mxu0 %v4011
        %v4100 = vpop.f32.mrf.mxu0
        %v4101 = vadd.f32 0.0, %v4100
        %v4102 = vpop.f32.mrf.mxu0
        %v4103 = vadd.f32 0.0, %v4102
        %4104 = vmatmul.bf16.gmra.mxu0 %v4012
        %v4105 = vpop.f32.mrf.mxu0
        %v4106 = vadd.f32 0.0, %v4105
        %v4107 = vpop.f32.mrf.mxu0
        %v4108 = vadd.f32 0.0, %v4107
        %4109 = vmatmul.bf16.gmra.mxu0 %v4013
        %v4110 = vpop.f32.mrf.mxu0
        %v4111 = vadd.f32 0.0, %v4110
        %v4112 = vpop.f32.mrf.mxu0
        %v4113 = vadd.f32 0.0, %v4112
        %4114 = vmatmul.bf16.gmra.mxu0 %v4014
        %v4115 = vpop.f32.mrf.mxu0
        %v4116 = vadd.f32 0.0, %v4115
        %v4117 = vpop.f32.mrf.mxu0
        %v4118 = vadd.f32 0.0, %v4117
        %4119 = vmatmul.bf16.gmra.mxu0 %v4015
        %v4120 = vpop.f32.mrf.mxu0
        %v4121 = vadd.f32 0.0, %v4120
        %v4122 = vpop.f32.mrf.mxu0
        %v4123 = vadd.f32 0.0, %v4122
        %4124 = vmatmul.bf16.gmra.mxu0 %v4016
        %v4125 = vpop.f32.mrf.mxu0
        %v4126 = vadd.f32 0.0, %v4125
        %v4127 = vpop.f32.mrf.mxu0
        %v4128 = vadd.f32 0.0, %v4127
        %4129 = vmatmul.bf16.gmra.mxu0 %v4017
        %v4130 = vpop.f32.mrf.mxu0
        %v4131 = vadd.f32 0.0, %v4130
        %v4132 = vpop.f32.mrf.mxu0
        %v4133 = vadd.f32 0.0, %v4132
        %4134 = vmatmul.bf16.gmra.mxu0 %v4018
        %v4135 = vpop.f32.mrf.mxu0
        %v4136 = vadd.f32 0.0, %v4135
        %v4137 = vpop.f32.mrf.mxu0
        %v4138 = vadd.f32 0.0, %v4137
        %4139 = vmatmul.bf16.gmra.mxu0 %v4019
        %v4140 = vpop.f32.mrf.mxu0
        %v4141 = vadd.f32 0.0, %v4140
        %v4142 = vpop.f32.mrf.mxu0
        %v4143 = vadd.f32 0.0, %v4142
        %4144 = vmatmul.bf16.gmra.mxu0 %v4020
        %v4145 = vpop.f32.mrf.mxu0
        %v4146 = vadd.f32 0.0, %v4145
        %v4147 = vpop.f32.mrf.mxu0
        %v4148 = vadd.f32 0.0, %v4147
        %4149 = vmatmul.bf16.gmra.mxu0 %v4021
        %v4150 = vpop.f32.mrf.mxu0
        %v4151 = vadd.f32 0.0, %v4150
        %v4152 = vpop.f32.mrf.mxu0
        %v4153 = vadd.f32 0.0, %v4152
        %4154 = vmatmul.bf16.gmra.mxu0 %v4022
        %v4155 = vpop.f32.mrf.mxu0
        %v4156 = vadd.f32 0.0, %v4155
        %v4157 = vpop.f32.mrf.mxu0
        %v4158 = vadd.f32 0.0, %v4157
        %4159 = vmatmul.bf16.gmra.mxu0 %v4023
        %v4160 = vpop.f32.mrf.mxu0
        %v4161 = vadd.f32 0.0, %v4160
        %v4162 = vpop.f32.mrf.mxu0
        %v4163 = vadd.f32 0.0, %v4162
        %4164 = vmatmul.bf16.gmra.mxu0 %v4024
        %v4165 = vpop.f32.mrf.mxu0
        %v4166 = vadd.f32 0.0, %v4165
        %v4167 = vpop.f32.mrf.mxu0
        %v4168 = vadd.f32 0.0, %v4167
        %4169 = vmatmul.bf16.gmra.mxu0 %v4025
        %v4170 = vpop.f32.mrf.mxu0
        %v4171 = vadd.f32 0.0, %v4170
        %v4172 = vpop.f32.mrf.mxu0
        %v4173 = vadd.f32 0.0, %v4172
        %4174 = vmatmul.bf16.gmra.mxu0 %v4026
        %v4175 = vpop.f32.mrf.mxu0
        %v4176 = vadd.f32 0.0, %v4175
        %v4177 = vpop.f32.mrf.mxu0
        %v4178 = vadd.f32 0.0, %v4177
        %4179 = vdwg.mxu0
        %v4180 = vadd.f32 %v3526, %v4101
        %v4181 = vadd.f32 %v3527, %v4103
        %v4182 = vadd.f32 %v3528, %v4106
        %v4183 = vadd.f32 %v3529, %v4108
        %v4184 = vadd.f32 %v3530, %v4111
        %v4185 = vadd.f32 %v3531, %v4113
        %v4186 = vadd.f32 %v3532, %v4116
        %v4187 = vadd.f32 %v3533, %v4118
        %v4188 = vadd.f32 %v3534, %v4121
        %v4189 = vadd.f32 %v3535, %v4123
        %v4190 = vadd.f32 %v3536, %v4126
        %v4191 = vadd.f32 %v3537, %v4128
        %v4192 = vadd.f32 %v3538, %v4131
        %v4193 = vadd.f32 %v3539, %v4133
        %v4194 = vadd.f32 %v3540, %v4136
        %v4195 = vadd.f32 %v3541, %v4138
        %v4196 = vadd.f32 %v3542, %v4141
        %v4197 = vadd.f32 %v3543, %v4143
        %v4198 = vadd.f32 %v3544, %v4146
        %v4199 = vadd.f32 %v3545, %v4148
        %v4200 = vadd.f32 %v3546, %v4151
        %v4201 = vadd.f32 %v3547, %v4153
        %v4202 = vadd.f32 %v3548, %v4156
        %v4203 = vadd.f32 %v3549, %v4158
        %v4204 = vadd.f32 %v3550, %v4161
        %v4205 = vadd.f32 %v3551, %v4163
        %v4206 = vadd.f32 %v3552, %v4166
        %v4207 = vadd.f32 %v3553, %v4168
        %v4208 = vadd.f32 %v3554, %v4171
        %v4209 = vadd.f32 %v3555, %v4173
        %v4210 = vadd.f32 %v3556, %v4176
        %v4211 = vadd.f32 %v3557, %v4178
        %s4212 = scalar_lea.vmem [#allocation6], 448
        %v4213 = vld [vmem:[%s4212] sm:$0xf]
        %v4214 = vld [vmem:[%s4212 + $0x4] sm:$0xf]
        %v4215 = vld [vmem:[%s4212 + $0x8] sm:$0xf]
        %v4216 = vld [vmem:[%s4212 + $0xc] sm:$0xf]
        %v4217 = vld [vmem:[%s4212 + $0x10] sm:$0xf]
        %v4218 = vld [vmem:[%s4212 + $0x14] sm:$0xf]
        %v4219 = vld [vmem:[%s4212 + $0x18] sm:$0xf]
        %v4220 = vld [vmem:[%s4212 + $0x1c] sm:$0xf]
        %v4221 = vld [vmem:[%s4212 + $0x20] sm:$0xf]
        %v4222 = vld [vmem:[%s4212 + $0x24] sm:$0xf]
        %v4223 = vld [vmem:[%s4212 + $0x28] sm:$0xf]
        %v4224 = vld [vmem:[%s4212 + $0x2c] sm:$0xf]
        %v4225 = vld [vmem:[%s4212 + $0x30] sm:$0xf]
        %v4226 = vld [vmem:[%s4212 + $0x34] sm:$0xf]
        %v4227 = vld [vmem:[%s4212 + $0x38] sm:$0xf]
        %v4228 = vld [vmem:[%s4212 + $0x3c] sm:$0xf]
        %v4261 = vunpack.c.l.b16 %v3563
        %v4262 = vunpack.c.l.b16 %v3564
        %v4263 = vunpack.c.l.b16 %v3566
        %v4264 = vunpack.c.l.b16 %v3567
        %v4265 = vunpack.c.l.b16 %v3569
        %v4266 = vunpack.c.l.b16 %v3570
        %v4267 = vunpack.c.l.b16 %v3572
        %v4268 = vunpack.c.l.b16 %v3573
        %v4269 = vunpack.c.l.b16 %v3575
        %v4270 = vunpack.c.l.b16 %v3576
        %v4271 = vunpack.c.l.b16 %v3578
        %v4272 = vunpack.c.l.b16 %v3579
        %v4273 = vunpack.c.l.b16 %v3581
        %v4274 = vunpack.c.l.b16 %v3582
        %v4275 = vunpack.c.l.b16 %v3584
        %v4276 = vunpack.c.l.b16 %v3585
        %v4277 = vunpack.c.l.b16 %v3587
        %v4278 = vunpack.c.l.b16 %v3588
        %v4279 = vunpack.c.l.b16 %v3590
        %v4280 = vunpack.c.l.b16 %v3591
        %v4281 = vunpack.c.l.b16 %v3593
        %v4282 = vunpack.c.l.b16 %v3594
        %v4283 = vunpack.c.l.b16 %v3596
        %v4284 = vunpack.c.l.b16 %v3597
        %v4285 = vunpack.c.l.b16 %v3599
        %v4286 = vunpack.c.l.b16 %v3600
        %v4287 = vunpack.c.l.b16 %v3602
        %v4288 = vunpack.c.l.b16 %v3603
        %v4289 = vunpack.c.l.b16 %v3605
        %v4290 = vunpack.c.l.b16 %v3606
        %v4291 = vunpack.c.l.b16 %v3608
        %v4292 = vunpack.c.l.b16 %v3609
        %v4293 = vpack.c.b16 %v4262, %v4261
        %v4294 = vpack.c.b16 %v4264, %v4263
        %v4295 = vpack.c.b16 %v4266, %v4265
        %v4296 = vpack.c.b16 %v4268, %v4267
        %v4297 = vpack.c.b16 %v4270, %v4269
        %v4298 = vpack.c.b16 %v4272, %v4271
        %v4299 = vpack.c.b16 %v4274, %v4273
        %v4300 = vpack.c.b16 %v4276, %v4275
        %v4301 = vpack.c.b16 %v4278, %v4277
        %v4302 = vpack.c.b16 %v4280, %v4279
        %v4303 = vpack.c.b16 %v4282, %v4281
        %v4304 = vpack.c.b16 %v4284, %v4283
        %v4305 = vpack.c.b16 %v4286, %v4285
        %v4306 = vpack.c.b16 %v4288, %v4287
        %v4307 = vpack.c.b16 %v4290, %v4289
        %v4308 = vpack.c.b16 %v4292, %v4291
        %v4341 = vunpack.c.l.b16 %v4213
        %v4342 = vunpack.c.l.b16 %v4214
        %v4343 = vunpack.c.l.b16 %v4215
        %v4344 = vunpack.c.l.b16 %v4216
        %v4345 = vunpack.c.l.b16 %v4217
        %v4346 = vunpack.c.l.b16 %v4218
        %v4347 = vunpack.c.l.b16 %v4219
        %v4348 = vunpack.c.l.b16 %v4220
        %v4349 = vunpack.c.l.b16 %v4221
        %v4350 = vunpack.c.l.b16 %v4222
        %v4351 = vunpack.c.l.b16 %v4223
        %v4352 = vunpack.c.l.b16 %v4224
        %v4353 = vunpack.c.l.b16 %v4225
        %v4354 = vunpack.c.l.b16 %v4226
        %v4355 = vunpack.c.l.b16 %v4227
        %v4356 = vunpack.c.l.b16 %v4228
        %v4357 = vpack.c.b16 %v4342, %v4341
        %v4358 = vpack.c.b16 %v4344, %v4343
        %v4359 = vpack.c.b16 %v4346, %v4345
        %v4360 = vpack.c.b16 %v4348, %v4347
        %v4361 = vpack.c.b16 %v4350, %v4349
        %v4362 = vpack.c.b16 %v4352, %v4351
        %v4363 = vpack.c.b16 %v4354, %v4353
        %v4364 = vpack.c.b16 %v4356, %v4355
        %4373 = vmatpush.bf16.msra.mxu0 %v4364
        %4374 = vmatpush.bf16.msra.mxu0 %v4363
        %4375 = vmatpush.bf16.msra.mxu0 %v4362
        %4376 = vmatpush.bf16.msra.mxu0 %v4361
        %4377 = vmatpush.bf16.msra.mxu0 %v4360
        %4378 = vmatpush.bf16.msra.mxu0 %v4359
        %4379 = vmatpush.bf16.msra.mxu0 %v4358
        %4380 = vmatpush.bf16.msra.mxu0 %v4357
        %4381 = vmatmul.bf16.gmra.mxu0 %v4293
        %v4382 = vpop.f32.mrf.mxu0
        %v4383 = vadd.f32 0.0, %v4382
        %v4384 = vpop.f32.mrf.mxu0
        %v4385 = vadd.f32 0.0, %v4384
        %4386 = vmatmul.bf16.gmra.mxu0 %v4294
        %v4387 = vpop.f32.mrf.mxu0
        %v4388 = vadd.f32 0.0, %v4387
        %v4389 = vpop.f32.mrf.mxu0
        %v4390 = vadd.f32 0.0, %v4389
        %4391 = vmatmul.bf16.gmra.mxu0 %v4295
        %v4392 = vpop.f32.mrf.mxu0
        %v4393 = vadd.f32 0.0, %v4392
        %v4394 = vpop.f32.mrf.mxu0
        %v4395 = vadd.f32 0.0, %v4394
        %4396 = vmatmul.bf16.gmra.mxu0 %v4296
        %v4397 = vpop.f32.mrf.mxu0
        %v4398 = vadd.f32 0.0, %v4397
        %v4399 = vpop.f32.mrf.mxu0
        %v4400 = vadd.f32 0.0, %v4399
        %4401 = vmatmul.bf16.gmra.mxu0 %v4297
        %v4402 = vpop.f32.mrf.mxu0
        %v4403 = vadd.f32 0.0, %v4402
        %v4404 = vpop.f32.mrf.mxu0
        %v4405 = vadd.f32 0.0, %v4404
        %4406 = vmatmul.bf16.gmra.mxu0 %v4298
        %v4407 = vpop.f32.mrf.mxu0
        %v4408 = vadd.f32 0.0, %v4407
        %v4409 = vpop.f32.mrf.mxu0
        %v4410 = vadd.f32 0.0, %v4409
        %4411 = vmatmul.bf16.gmra.mxu0 %v4299
        %v4412 = vpop.f32.mrf.mxu0
        %v4413 = vadd.f32 0.0, %v4412
        %v4414 = vpop.f32.mrf.mxu0
        %v4415 = vadd.f32 0.0, %v4414
        %4416 = vmatmul.bf16.gmra.mxu0 %v4300
        %v4417 = vpop.f32.mrf.mxu0
        %v4418 = vadd.f32 0.0, %v4417
        %v4419 = vpop.f32.mrf.mxu0
        %v4420 = vadd.f32 0.0, %v4419
        %4421 = vmatmul.bf16.gmra.mxu0 %v4301
        %v4422 = vpop.f32.mrf.mxu0
        %v4423 = vadd.f32 0.0, %v4422
        %v4424 = vpop.f32.mrf.mxu0
        %v4425 = vadd.f32 0.0, %v4424
        %4426 = vmatmul.bf16.gmra.mxu0 %v4302
        %v4427 = vpop.f32.mrf.mxu0
        %v4428 = vadd.f32 0.0, %v4427
        %v4429 = vpop.f32.mrf.mxu0
        %v4430 = vadd.f32 0.0, %v4429
        %4431 = vmatmul.bf16.gmra.mxu0 %v4303
        %v4432 = vpop.f32.mrf.mxu0
        %v4433 = vadd.f32 0.0, %v4432
        %v4434 = vpop.f32.mrf.mxu0
        %v4435 = vadd.f32 0.0, %v4434
        %4436 = vmatmul.bf16.gmra.mxu0 %v4304
        %v4437 = vpop.f32.mrf.mxu0
        %v4438 = vadd.f32 0.0, %v4437
        %v4439 = vpop.f32.mrf.mxu0
        %v4440 = vadd.f32 0.0, %v4439
        %4441 = vmatmul.bf16.gmra.mxu0 %v4305
        %v4442 = vpop.f32.mrf.mxu0
        %v4443 = vadd.f32 0.0, %v4442
        %v4444 = vpop.f32.mrf.mxu0
        %v4445 = vadd.f32 0.0, %v4444
        %4446 = vmatmul.bf16.gmra.mxu0 %v4306
        %v4447 = vpop.f32.mrf.mxu0
        %v4448 = vadd.f32 0.0, %v4447
        %v4449 = vpop.f32.mrf.mxu0
        %v4450 = vadd.f32 0.0, %v4449
        %4451 = vmatmul.bf16.gmra.mxu0 %v4307
        %v4452 = vpop.f32.mrf.mxu0
        %v4453 = vadd.f32 0.0, %v4452
        %v4454 = vpop.f32.mrf.mxu0
        %v4455 = vadd.f32 0.0, %v4454
        %4456 = vmatmul.bf16.gmra.mxu0 %v4308
        %v4457 = vpop.f32.mrf.mxu0
        %v4458 = vadd.f32 0.0, %v4457
        %v4459 = vpop.f32.mrf.mxu0
        %v4460 = vadd.f32 0.0, %v4459
        %4461 = vdwg.mxu0
        %v4462 = vadd.f32 %v4180, %v4383
        %v4463 = vadd.f32 %v4181, %v4385
        %v4464 = vadd.f32 %v4182, %v4388
        %v4465 = vadd.f32 %v4183, %v4390
        %v4466 = vadd.f32 %v4184, %v4393
        %v4467 = vadd.f32 %v4185, %v4395
        %v4468 = vadd.f32 %v4186, %v4398
        %v4469 = vadd.f32 %v4187, %v4400
        %v4470 = vadd.f32 %v4188, %v4403
        %v4471 = vadd.f32 %v4189, %v4405
        %v4472 = vadd.f32 %v4190, %v4408
        %v4473 = vadd.f32 %v4191, %v4410
        %v4474 = vadd.f32 %v4192, %v4413
        %v4475 = vadd.f32 %v4193, %v4415
        %v4476 = vadd.f32 %v4194, %v4418
        %v4477 = vadd.f32 %v4195, %v4420
        %v4478 = vadd.f32 %v4196, %v4423
        %v4479 = vadd.f32 %v4197, %v4425
        %v4480 = vadd.f32 %v4198, %v4428
        %v4481 = vadd.f32 %v4199, %v4430
        %v4482 = vadd.f32 %v4200, %v4433
        %v4483 = vadd.f32 %v4201, %v4435
        %v4484 = vadd.f32 %v4202, %v4438
        %v4485 = vadd.f32 %v4203, %v4440
        %v4486 = vadd.f32 %v4204, %v4443
        %v4487 = vadd.f32 %v4205, %v4445
        %v4488 = vadd.f32 %v4206, %v4448
        %v4489 = vadd.f32 %v4207, %v4450
        %v4490 = vadd.f32 %v4208, %v4453
        %v4491 = vadd.f32 %v4209, %v4455
        %v4492 = vadd.f32 %v4210, %v4458
        %v4493 = vadd.f32 %v4211, %v4460
        %v4494 = vld [vmem:[%s3561 + $0x4] sm:$0xf]
        %v4495 = vld [vmem:[%s3561 + $0x8] sm:$0xf]
        %v4496 = vld [vmem:[%s3561 + $0xc] sm:$0x1]
        %v4497 = vld [vmem:[%s3561 + $0x14] sm:$0xf]
        %v4498 = vld [vmem:[%s3561 + $0x18] sm:$0xf]
        %v4499 = vld [vmem:[%s3561 + $0x1c] sm:$0x1]
        %v4500 = vld [vmem:[%s3561 + $0x24] sm:$0xf]
        %v4501 = vld [vmem:[%s3561 + $0x28] sm:$0xf]
        %v4502 = vld [vmem:[%s3561 + $0x2c] sm:$0x1]
        %v4503 = vld [vmem:[%s3561 + $0x34] sm:$0xf]
        %v4504 = vld [vmem:[%s3561 + $0x38] sm:$0xf]
        %v4505 = vld [vmem:[%s3561 + $0x3c] sm:$0x1]
        %v4506 = vld [vmem:[%s3561 + $0x44] sm:$0xf]
        %v4507 = vld [vmem:[%s3561 + $0x48] sm:$0xf]
        %v4508 = vld [vmem:[%s3561 + $0x4c] sm:$0x1]
        %v4509 = vld [vmem:[%s3561 + $0x54] sm:$0xf]
        %v4510 = vld [vmem:[%s3561 + $0x58] sm:$0xf]
        %v4511 = vld [vmem:[%s3561 + $0x5c] sm:$0x1]
        %v4512 = vld [vmem:[%s3561 + $0x64] sm:$0xf]
        %v4513 = vld [vmem:[%s3561 + $0x68] sm:$0xf]
        %v4514 = vld [vmem:[%s3561 + $0x6c] sm:$0x1]
        %v4515 = vld [vmem:[%s3561 + $0x74] sm:$0xf]
        %v4516 = vld [vmem:[%s3561 + $0x78] sm:$0xf]
        %v4517 = vld [vmem:[%s3561 + $0x7c] sm:$0x1]
        %v4518 = vld [vmem:[%s3561 + $0x84] sm:$0xf]
        %v4519 = vld [vmem:[%s3561 + $0x88] sm:$0xf]
        %v4520 = vld [vmem:[%s3561 + $0x8c] sm:$0x1]
        %v4521 = vld [vmem:[%s3561 + $0x94] sm:$0xf]
        %v4522 = vld [vmem:[%s3561 + $0x98] sm:$0xf]
        %v4523 = vld [vmem:[%s3561 + $0x9c] sm:$0x1]
        %v4524 = vld [vmem:[%s3561 + $0xa4] sm:$0xf]
        %v4525 = vld [vmem:[%s3561 + $0xa8] sm:$0xf]
        %v4526 = vld [vmem:[%s3561 + $0xac] sm:$0x1]
        %v4527 = vld [vmem:[%s3561 + $0xb4] sm:$0xf]
        %v4528 = vld [vmem:[%s3561 + $0xb8] sm:$0xf]
        %v4529 = vld [vmem:[%s3561 + $0xbc] sm:$0x1]
        %v4530 = vld [vmem:[%s3561 + $0xc4] sm:$0xf]
        %v4531 = vld [vmem:[%s3561 + $0xc8] sm:$0xf]
        %v4532 = vld [vmem:[%s3561 + $0xcc] sm:$0x1]
        %v4533 = vld [vmem:[%s3561 + $0xd4] sm:$0xf]
        %v4534 = vld [vmem:[%s3561 + $0xd8] sm:$0xf]
        %v4535 = vld [vmem:[%s3561 + $0xdc] sm:$0x1]
        %v4536 = vld [vmem:[%s3561 + $0xe4] sm:$0xf]
        %v4537 = vld [vmem:[%s3561 + $0xe8] sm:$0xf]
        %v4538 = vld [vmem:[%s3561 + $0xec] sm:$0x1]
        %v4539 = vld [vmem:[%s3561 + $0xf4] sm:$0xf]
        %v4540 = vld [vmem:[%s3561 + $0xf8] sm:$0xf]
        %v4541 = vld [vmem:[%s3561 + $0xfc] sm:$0x1]
        %v4543 = vshrl.u32 %v4494, 16
        %v4545 = vrot.slane %v4543, 4
        %v4546 = vshll.u32 %v4494, 16
        %v4548 = vrot.slane %v4546, 5
        %v4549 = vor.u32 %v4545, %v4548
        %v4550 = vrot.slane %v4549, 4
        %v4552 = vshll.u32 %v4495, 16
        %v4554 = vrot.slane %v4552, 5
        %v4555 = vsel %vm1305, %v4550, %v4554
        %v4556 = vshrl.u32 %v4495, 16
        %v4558 = vrot.slane %v4556, 4
        %v4559 = vor.u32 %v4558, %v4554
        %v4560 = vrot.slane %v4559, 4
        %v4562 = vshll.u32 %v4496, 16
        %v4564 = vrot.slane %v4562, 5
        %v4565 = vsel %vm1305, %v4560, %v4564
        %v4567 = vshrl.u32 %v4497, 16
        %v4569 = vrot.slane %v4567, 4
        %v4570 = vshll.u32 %v4497, 16
        %v4572 = vrot.slane %v4570, 5
        %v4573 = vor.u32 %v4569, %v4572
        %v4574 = vrot.slane %v4573, 4
        %v4576 = vshll.u32 %v4498, 16
        %v4578 = vrot.slane %v4576, 5
        %v4579 = vsel %vm1305, %v4574, %v4578
        %v4580 = vshrl.u32 %v4498, 16
        %v4582 = vrot.slane %v4580, 4
        %v4583 = vor.u32 %v4582, %v4578
        %v4584 = vrot.slane %v4583, 4
        %v4586 = vshll.u32 %v4499, 16
        %v4588 = vrot.slane %v4586, 5
        %v4589 = vsel %vm1305, %v4584, %v4588
        %v4591 = vshrl.u32 %v4500, 16
        %v4593 = vrot.slane %v4591, 4
        %v4594 = vshll.u32 %v4500, 16
        %v4596 = vrot.slane %v4594, 5
        %v4597 = vor.u32 %v4593, %v4596
        %v4598 = vrot.slane %v4597, 4
        %v4600 = vshll.u32 %v4501, 16
        %v4602 = vrot.slane %v4600, 5
        %v4603 = vsel %vm1305, %v4598, %v4602
        %v4604 = vshrl.u32 %v4501, 16
        %v4606 = vrot.slane %v4604, 4
        %v4607 = vor.u32 %v4606, %v4602
        %v4608 = vrot.slane %v4607, 4
        %v4610 = vshll.u32 %v4502, 16
        %v4612 = vrot.slane %v4610, 5
        %v4613 = vsel %vm1305, %v4608, %v4612
        %v4615 = vshrl.u32 %v4503, 16
        %v4617 = vrot.slane %v4615, 4
        %v4618 = vshll.u32 %v4503, 16
        %v4620 = vrot.slane %v4618, 5
        %v4621 = vor.u32 %v4617, %v4620
        %v4622 = vrot.slane %v4621, 4
        %v4624 = vshll.u32 %v4504, 16
        %v4626 = vrot.slane %v4624, 5
        %v4627 = vsel %vm1305, %v4622, %v4626
        %v4628 = vshrl.u32 %v4504, 16
        %v4630 = vrot.slane %v4628, 4
        %v4631 = vor.u32 %v4630, %v4626
        %v4632 = vrot.slane %v4631, 4
        %v4634 = vshll.u32 %v4505, 16
        %v4636 = vrot.slane %v4634, 5
        %v4637 = vsel %vm1305, %v4632, %v4636
        %v4639 = vshrl.u32 %v4506, 16
        %v4641 = vrot.slane %v4639, 4
        %v4642 = vshll.u32 %v4506, 16
        %v4644 = vrot.slane %v4642, 5
        %v4645 = vor.u32 %v4641, %v4644
        %v4646 = vrot.slane %v4645, 4
        %v4648 = vshll.u32 %v4507, 16
        %v4650 = vrot.slane %v4648, 5
        %v4651 = vsel %vm1305, %v4646, %v4650
        %v4652 = vshrl.u32 %v4507, 16
        %v4654 = vrot.slane %v4652, 4
        %v4655 = vor.u32 %v4654, %v4650
        %v4656 = vrot.slane %v4655, 4
        %v4658 = vshll.u32 %v4508, 16
        %v4660 = vrot.slane %v4658, 5
        %v4661 = vsel %vm1305, %v4656, %v4660
        %v4663 = vshrl.u32 %v4509, 16
        %v4665 = vrot.slane %v4663, 4
        %v4666 = vshll.u32 %v4509, 16
        %v4668 = vrot.slane %v4666, 5
        %v4669 = vor.u32 %v4665, %v4668
        %v4670 = vrot.slane %v4669, 4
        %v4672 = vshll.u32 %v4510, 16
        %v4674 = vrot.slane %v4672, 5
        %v4675 = vsel %vm1305, %v4670, %v4674
        %v4676 = vshrl.u32 %v4510, 16
        %v4678 = vrot.slane %v4676, 4
        %v4679 = vor.u32 %v4678, %v4674
        %v4680 = vrot.slane %v4679, 4
        %v4682 = vshll.u32 %v4511, 16
        %v4684 = vrot.slane %v4682, 5
        %v4685 = vsel %vm1305, %v4680, %v4684
        %v4687 = vshrl.u32 %v4512, 16
        %v4689 = vrot.slane %v4687, 4
        %v4690 = vshll.u32 %v4512, 16
        %v4692 = vrot.slane %v4690, 5
        %v4693 = vor.u32 %v4689, %v4692
        %v4694 = vrot.slane %v4693, 4
        %v4696 = vshll.u32 %v4513, 16
        %v4698 = vrot.slane %v4696, 5
        %v4699 = vsel %vm1305, %v4694, %v4698
        %v4700 = vshrl.u32 %v4513, 16
        %v4702 = vrot.slane %v4700, 4
        %v4703 = vor.u32 %v4702, %v4698
        %v4704 = vrot.slane %v4703, 4
        %v4706 = vshll.u32 %v4514, 16
        %v4708 = vrot.slane %v4706, 5
        %v4709 = vsel %vm1305, %v4704, %v4708
        %v4711 = vshrl.u32 %v4515, 16
        %v4713 = vrot.slane %v4711, 4
        %v4714 = vshll.u32 %v4515, 16
        %v4716 = vrot.slane %v4714, 5
        %v4717 = vor.u32 %v4713, %v4716
        %v4718 = vrot.slane %v4717, 4
        %v4720 = vshll.u32 %v4516, 16
        %v4722 = vrot.slane %v4720, 5
        %v4723 = vsel %vm1305, %v4718, %v4722
        %v4724 = vshrl.u32 %v4516, 16
        %v4726 = vrot.slane %v4724, 4
        %v4727 = vor.u32 %v4726, %v4722
        %v4728 = vrot.slane %v4727, 4
        %v4730 = vshll.u32 %v4517, 16
        %v4732 = vrot.slane %v4730, 5
        %v4733 = vsel %vm1305, %v4728, %v4732
        %v4735 = vshrl.u32 %v4518, 16
        %v4737 = vrot.slane %v4735, 4
        %v4738 = vshll.u32 %v4518, 16
        %v4740 = vrot.slane %v4738, 5
        %v4741 = vor.u32 %v4737, %v4740
        %v4742 = vrot.slane %v4741, 4
        %v4744 = vshll.u32 %v4519, 16
        %v4746 = vrot.slane %v4744, 5
        %v4747 = vsel %vm1305, %v4742, %v4746
        %v4748 = vshrl.u32 %v4519, 16
        %v4750 = vrot.slane %v4748, 4
        %v4751 = vor.u32 %v4750, %v4746
        %v4752 = vrot.slane %v4751, 4
        %v4754 = vshll.u32 %v4520, 16
        %v4756 = vrot.slane %v4754, 5
        %v4757 = vsel %vm1305, %v4752, %v4756
        %v4759 = vshrl.u32 %v4521, 16
        %v4761 = vrot.slane %v4759, 4
        %v4762 = vshll.u32 %v4521, 16
        %v4764 = vrot.slane %v4762, 5
        %v4765 = vor.u32 %v4761, %v4764
        %v4766 = vrot.slane %v4765, 4
        %v4768 = vshll.u32 %v4522, 16
        %v4770 = vrot.slane %v4768, 5
        %v4771 = vsel %vm1305, %v4766, %v4770
        %v4772 = vshrl.u32 %v4522, 16
        %v4774 = vrot.slane %v4772, 4
        %v4775 = vor.u32 %v4774, %v4770
        %v4776 = vrot.slane %v4775, 4
        %v4778 = vshll.u32 %v4523, 16
        %v4780 = vrot.slane %v4778, 5
        %v4781 = vsel %vm1305, %v4776, %v4780
        %v4783 = vshrl.u32 %v4524, 16
        %v4785 = vrot.slane %v4783, 4
        %v4786 = vshll.u32 %v4524, 16
        %v4788 = vrot.slane %v4786, 5
        %v4789 = vor.u32 %v4785, %v4788
        %v4790 = vrot.slane %v4789, 4
        %v4792 = vshll.u32 %v4525, 16
        %v4794 = vrot.slane %v4792, 5
        %v4795 = vsel %vm1305, %v4790, %v4794
        %v4796 = vshrl.u32 %v4525, 16
        %v4798 = vrot.slane %v4796, 4
        %v4799 = vor.u32 %v4798, %v4794
        %v4800 = vrot.slane %v4799, 4
        %v4802 = vshll.u32 %v4526, 16
        %v4804 = vrot.slane %v4802, 5
        %v4805 = vsel %vm1305, %v4800, %v4804
        %v4807 = vshrl.u32 %v4527, 16
        %v4809 = vrot.slane %v4807, 4
        %v4810 = vshll.u32 %v4527, 16
        %v4812 = vrot.slane %v4810, 5
        %v4813 = vor.u32 %v4809, %v4812
        %v4814 = vrot.slane %v4813, 4
        %v4816 = vshll.u32 %v4528, 16
        %v4818 = vrot.slane %v4816, 5
        %v4819 = vsel %vm1305, %v4814, %v4818
        %v4820 = vshrl.u32 %v4528, 16
        %v4822 = vrot.slane %v4820, 4
        %v4823 = vor.u32 %v4822, %v4818
        %v4824 = vrot.slane %v4823, 4
        %v4826 = vshll.u32 %v4529, 16
        %v4828 = vrot.slane %v4826, 5
        %v4829 = vsel %vm1305, %v4824, %v4828
        %v4831 = vshrl.u32 %v4530, 16
        %v4833 = vrot.slane %v4831, 4
        %v4834 = vshll.u32 %v4530, 16
        %v4836 = vrot.slane %v4834, 5
        %v4837 = vor.u32 %v4833, %v4836
        %v4838 = vrot.slane %v4837, 4
        %v4840 = vshll.u32 %v4531, 16
        %v4842 = vrot.slane %v4840, 5
        %v4843 = vsel %vm1305, %v4838, %v4842
        %v4844 = vshrl.u32 %v4531, 16
        %v4846 = vrot.slane %v4844, 4
        %v4847 = vor.u32 %v4846, %v4842
        %v4848 = vrot.slane %v4847, 4
        %v4850 = vshll.u32 %v4532, 16
        %v4852 = vrot.slane %v4850, 5
        %v4853 = vsel %vm1305, %v4848, %v4852
        %v4855 = vshrl.u32 %v4533, 16
        %v4857 = vrot.slane %v4855, 4
        %v4858 = vshll.u32 %v4533, 16
        %v4860 = vrot.slane %v4858, 5
        %v4861 = vor.u32 %v4857, %v4860
        %v4862 = vrot.slane %v4861, 4
        %v4864 = vshll.u32 %v4534, 16
        %v4866 = vrot.slane %v4864, 5
        %v4867 = vsel %vm1305, %v4862, %v4866
        %v4868 = vshrl.u32 %v4534, 16
        %v4870 = vrot.slane %v4868, 4
        %v4871 = vor.u32 %v4870, %v4866
        %v4872 = vrot.slane %v4871, 4
        %v4874 = vshll.u32 %v4535, 16
        %v4876 = vrot.slane %v4874, 5
        %v4877 = vsel %vm1305, %v4872, %v4876
        %v4879 = vshrl.u32 %v4536, 16
        %v4881 = vrot.slane %v4879, 4
        %v4882 = vshll.u32 %v4536, 16
        %v4884 = vrot.slane %v4882, 5
        %v4885 = vor.u32 %v4881, %v4884
        %v4886 = vrot.slane %v4885, 4
        %v4888 = vshll.u32 %v4537, 16
        %v4890 = vrot.slane %v4888, 5
        %v4891 = vsel %vm1305, %v4886, %v4890
        %v4892 = vshrl.u32 %v4537, 16
        %v4894 = vrot.slane %v4892, 4
        %v4895 = vor.u32 %v4894, %v4890
        %v4896 = vrot.slane %v4895, 4
        %v4898 = vshll.u32 %v4538, 16
        %v4900 = vrot.slane %v4898, 5
        %v4901 = vsel %vm1305, %v4896, %v4900
        %v4903 = vshrl.u32 %v4539, 16
        %v4905 = vrot.slane %v4903, 4
        %v4906 = vshll.u32 %v4539, 16
        %v4908 = vrot.slane %v4906, 5
        %v4909 = vor.u32 %v4905, %v4908
        %v4910 = vrot.slane %v4909, 4
        %v4912 = vshll.u32 %v4540, 16
        %v4914 = vrot.slane %v4912, 5
        %v4915 = vsel %vm1305, %v4910, %v4914
        %v4916 = vshrl.u32 %v4540, 16
        %v4918 = vrot.slane %v4916, 4
        %v4919 = vor.u32 %v4918, %v4914
        %v4920 = vrot.slane %v4919, 4
        %v4922 = vshll.u32 %v4541, 16
        %v4924 = vrot.slane %v4922, 5
        %v4925 = vsel %vm1305, %v4920, %v4924
        %s4926 = scalar_lea.vmem [#allocation6], 512
        %v4927 = vld [vmem:[%s4926] sm:$0xf]
        %v4928 = vld [vmem:[%s4926 + $0x4] sm:$0xf]
        %v4929 = vld [vmem:[%s4926 + $0x8] sm:$0xf]
        %v4930 = vld [vmem:[%s4926 + $0xc] sm:$0xf]
        %v4931 = vld [vmem:[%s4926 + $0x10] sm:$0xf]
        %v4932 = vld [vmem:[%s4926 + $0x14] sm:$0xf]
        %v4933 = vld [vmem:[%s4926 + $0x18] sm:$0xf]
        %v4934 = vld [vmem:[%s4926 + $0x1c] sm:$0xf]
        %v4935 = vld [vmem:[%s4926 + $0x20] sm:$0xf]
        %v4936 = vld [vmem:[%s4926 + $0x24] sm:$0xf]
        %v4937 = vld [vmem:[%s4926 + $0x28] sm:$0xf]
        %v4938 = vld [vmem:[%s4926 + $0x2c] sm:$0xf]
        %v4939 = vld [vmem:[%s4926 + $0x30] sm:$0xf]
        %v4940 = vld [vmem:[%s4926 + $0x34] sm:$0xf]
        %v4941 = vld [vmem:[%s4926 + $0x38] sm:$0xf]
        %v4942 = vld [vmem:[%s4926 + $0x3c] sm:$0xf]
        %v4943 = vunpack.c.l.b16 %v4555
        %v4944 = vunpack.c.l.b16 %v4565
        %v4945 = vunpack.c.l.b16 %v4579
        %v4946 = vunpack.c.l.b16 %v4589
        %v4947 = vunpack.c.l.b16 %v4603
        %v4948 = vunpack.c.l.b16 %v4613
        %v4949 = vunpack.c.l.b16 %v4627
        %v4950 = vunpack.c.l.b16 %v4637
        %v4951 = vunpack.c.l.b16 %v4651
        %v4952 = vunpack.c.l.b16 %v4661
        %v4953 = vunpack.c.l.b16 %v4675
        %v4954 = vunpack.c.l.b16 %v4685
        %v4955 = vunpack.c.l.b16 %v4699
        %v4956 = vunpack.c.l.b16 %v4709
        %v4957 = vunpack.c.l.b16 %v4723
        %v4958 = vunpack.c.l.b16 %v4733
        %v4959 = vunpack.c.l.b16 %v4747
        %v4960 = vunpack.c.l.b16 %v4757
        %v4961 = vunpack.c.l.b16 %v4771
        %v4962 = vunpack.c.l.b16 %v4781
        %v4963 = vunpack.c.l.b16 %v4795
        %v4964 = vunpack.c.l.b16 %v4805
        %v4965 = vunpack.c.l.b16 %v4819
        %v4966 = vunpack.c.l.b16 %v4829
        %v4967 = vunpack.c.l.b16 %v4843
        %v4968 = vunpack.c.l.b16 %v4853
        %v4969 = vunpack.c.l.b16 %v4867
        %v4970 = vunpack.c.l.b16 %v4877
        %v4971 = vunpack.c.l.b16 %v4891
        %v4972 = vunpack.c.l.b16 %v4901
        %v4973 = vunpack.c.l.b16 %v4915
        %v4974 = vunpack.c.l.b16 %v4925
        %v4975 = vpack.c.b16 %v4944, %v4943
        %v4976 = vpack.c.b16 %v4946, %v4945
        %v4977 = vpack.c.b16 %v4948, %v4947
        %v4978 = vpack.c.b16 %v4950, %v4949
        %v4979 = vpack.c.b16 %v4952, %v4951
        %v4980 = vpack.c.b16 %v4954, %v4953
        %v4981 = vpack.c.b16 %v4956, %v4955
        %v4982 = vpack.c.b16 %v4958, %v4957
        %v4983 = vpack.c.b16 %v4960, %v4959
        %v4984 = vpack.c.b16 %v4962, %v4961
        %v4985 = vpack.c.b16 %v4964, %v4963
        %v4986 = vpack.c.b16 %v4966, %v4965
        %v4987 = vpack.c.b16 %v4968, %v4967
        %v4988 = vpack.c.b16 %v4970, %v4969
        %v4989 = vpack.c.b16 %v4972, %v4971
        %v4990 = vpack.c.b16 %v4974, %v4973
        %v5023 = vunpack.c.l.b16 %v4927
        %v5024 = vunpack.c.l.b16 %v4928
        %v5025 = vunpack.c.l.b16 %v4929
        %v5026 = vunpack.c.l.b16 %v4930
        %v5027 = vunpack.c.l.b16 %v4931
        %v5028 = vunpack.c.l.b16 %v4932
        %v5029 = vunpack.c.l.b16 %v4933
        %v5030 = vunpack.c.l.b16 %v4934
        %v5031 = vunpack.c.l.b16 %v4935
        %v5032 = vunpack.c.l.b16 %v4936
        %v5033 = vunpack.c.l.b16 %v4937
        %v5034 = vunpack.c.l.b16 %v4938
        %v5035 = vunpack.c.l.b16 %v4939
        %v5036 = vunpack.c.l.b16 %v4940
        %v5037 = vunpack.c.l.b16 %v4941
        %v5038 = vunpack.c.l.b16 %v4942
        %v5039 = vpack.c.b16 %v5024, %v5023
        %v5040 = vpack.c.b16 %v5026, %v5025
        %v5041 = vpack.c.b16 %v5028, %v5027
        %v5042 = vpack.c.b16 %v5030, %v5029
        %v5043 = vpack.c.b16 %v5032, %v5031
        %v5044 = vpack.c.b16 %v5034, %v5033
        %v5045 = vpack.c.b16 %v5036, %v5035
        %v5046 = vpack.c.b16 %v5038, %v5037
        %5055 = vmatpush.bf16.msra.mxu0 %v5046
        %5056 = vmatpush.bf16.msra.mxu0 %v5045
        %5057 = vmatpush.bf16.msra.mxu0 %v5044
        %5058 = vmatpush.bf16.msra.mxu0 %v5043
        %5059 = vmatpush.bf16.msra.mxu0 %v5042
        %5060 = vmatpush.bf16.msra.mxu0 %v5041
        %5061 = vmatpush.bf16.msra.mxu0 %v5040
        %5062 = vmatpush.bf16.msra.mxu0 %v5039
        %5063 = vmatmul.bf16.gmra.mxu0 %v4975
        %v5064 = vpop.f32.mrf.mxu0
        %v5065 = vadd.f32 0.0, %v5064
        %v5066 = vpop.f32.mrf.mxu0
        %v5067 = vadd.f32 0.0, %v5066
        %5068 = vmatmul.bf16.gmra.mxu0 %v4976
        %v5069 = vpop.f32.mrf.mxu0
        %v5070 = vadd.f32 0.0, %v5069
        %v5071 = vpop.f32.mrf.mxu0
        %v5072 = vadd.f32 0.0, %v5071
        %5073 = vmatmul.bf16.gmra.mxu0 %v4977
        %v5074 = vpop.f32.mrf.mxu0
        %v5075 = vadd.f32 0.0, %v5074
        %v5076 = vpop.f32.mrf.mxu0
        %v5077 = vadd.f32 0.0, %v5076
        %5078 = vmatmul.bf16.gmra.mxu0 %v4978
        %v5079 = vpop.f32.mrf.mxu0
        %v5080 = vadd.f32 0.0, %v5079
        %v5081 = vpop.f32.mrf.mxu0
        %v5082 = vadd.f32 0.0, %v5081
        %5083 = vmatmul.bf16.gmra.mxu0 %v4979
        %v5084 = vpop.f32.mrf.mxu0
        %v5085 = vadd.f32 0.0, %v5084
        %v5086 = vpop.f32.mrf.mxu0
        %v5087 = vadd.f32 0.0, %v5086
        %5088 = vmatmul.bf16.gmra.mxu0 %v4980
        %v5089 = vpop.f32.mrf.mxu0
        %v5090 = vadd.f32 0.0, %v5089
        %v5091 = vpop.f32.mrf.mxu0
        %v5092 = vadd.f32 0.0, %v5091
        %5093 = vmatmul.bf16.gmra.mxu0 %v4981
        %v5094 = vpop.f32.mrf.mxu0
        %v5095 = vadd.f32 0.0, %v5094
        %v5096 = vpop.f32.mrf.mxu0
        %v5097 = vadd.f32 0.0, %v5096
        %5098 = vmatmul.bf16.gmra.mxu0 %v4982
        %v5099 = vpop.f32.mrf.mxu0
        %v5100 = vadd.f32 0.0, %v5099
        %v5101 = vpop.f32.mrf.mxu0
        %v5102 = vadd.f32 0.0, %v5101
        %5103 = vmatmul.bf16.gmra.mxu0 %v4983
        %v5104 = vpop.f32.mrf.mxu0
        %v5105 = vadd.f32 0.0, %v5104
        %v5106 = vpop.f32.mrf.mxu0
        %v5107 = vadd.f32 0.0, %v5106
        %5108 = vmatmul.bf16.gmra.mxu0 %v4984
        %v5109 = vpop.f32.mrf.mxu0
        %v5110 = vadd.f32 0.0, %v5109
        %v5111 = vpop.f32.mrf.mxu0
        %v5112 = vadd.f32 0.0, %v5111
        %5113 = vmatmul.bf16.gmra.mxu0 %v4985
        %v5114 = vpop.f32.mrf.mxu0
        %v5115 = vadd.f32 0.0, %v5114
        %v5116 = vpop.f32.mrf.mxu0
        %v5117 = vadd.f32 0.0, %v5116
        %5118 = vmatmul.bf16.gmra.mxu0 %v4986
        %v5119 = vpop.f32.mrf.mxu0
        %v5120 = vadd.f32 0.0, %v5119
        %v5121 = vpop.f32.mrf.mxu0
        %v5122 = vadd.f32 0.0, %v5121
        %5123 = vmatmul.bf16.gmra.mxu0 %v4987
        %v5124 = vpop.f32.mrf.mxu0
        %v5125 = vadd.f32 0.0, %v5124
        %v5126 = vpop.f32.mrf.mxu0
        %v5127 = vadd.f32 0.0, %v5126
        %5128 = vmatmul.bf16.gmra.mxu0 %v4988
        %v5129 = vpop.f32.mrf.mxu0
        %v5130 = vadd.f32 0.0, %v5129
        %v5131 = vpop.f32.mrf.mxu0
        %v5132 = vadd.f32 0.0, %v5131
        %5133 = vmatmul.bf16.gmra.mxu0 %v4989
        %v5134 = vpop.f32.mrf.mxu0
        %v5135 = vadd.f32 0.0, %v5134
        %v5136 = vpop.f32.mrf.mxu0
        %v5137 = vadd.f32 0.0, %v5136
        %5138 = vmatmul.bf16.gmra.mxu0 %v4990
        %v5139 = vpop.f32.mrf.mxu0
        %v5140 = vadd.f32 0.0, %v5139
        %v5141 = vpop.f32.mrf.mxu0
        %v5142 = vadd.f32 0.0, %v5141
        %5143 = vdwg.mxu0
        %v5144 = vadd.f32 %v4462, %v5065
        %v5145 = vadd.f32 %v4463, %v5067
        %v5146 = vadd.f32 %v4464, %v5070
        %v5147 = vadd.f32 %v4465, %v5072
        %v5148 = vadd.f32 %v4466, %v5075
        %v5149 = vadd.f32 %v4467, %v5077
        %v5150 = vadd.f32 %v4468, %v5080
        %v5151 = vadd.f32 %v4469, %v5082
        %v5152 = vadd.f32 %v4470, %v5085
        %v5153 = vadd.f32 %v4471, %v5087
        %v5154 = vadd.f32 %v4472, %v5090
        %v5155 = vadd.f32 %v4473, %v5092
        %v5156 = vadd.f32 %v4474, %v5095
        %v5157 = vadd.f32 %v4475, %v5097
        %v5158 = vadd.f32 %v4476, %v5100
        %v5159 = vadd.f32 %v4477, %v5102
        %v5160 = vadd.f32 %v4478, %v5105
        %v5161 = vadd.f32 %v4479, %v5107
        %v5162 = vadd.f32 %v4480, %v5110
        %v5163 = vadd.f32 %v4481, %v5112
        %v5164 = vadd.f32 %v4482, %v5115
        %v5165 = vadd.f32 %v4483, %v5117
        %v5166 = vadd.f32 %v4484, %v5120
        %v5167 = vadd.f32 %v4485, %v5122
        %v5168 = vadd.f32 %v4486, %v5125
        %v5169 = vadd.f32 %v4487, %v5127
        %v5170 = vadd.f32 %v4488, %v5130
        %v5171 = vadd.f32 %v4489, %v5132
        %v5172 = vadd.f32 %v4490, %v5135
        %v5173 = vadd.f32 %v4491, %v5137
        %v5174 = vadd.f32 %v4492, %v5140
        %v5175 = vadd.f32 %v4493, %v5142
        %v5177 = vperm.slane %v378, 0
        %v5179 = vmul.f32 %v5144, %v5177
        %v5180 = vmul.f32 %v5145, %v5177
        %v5181 = vmul.f32 %v5146, %v5177
        %v5182 = vmul.f32 %v5147, %v5177
        %v5183 = vmul.f32 %v5148, %v5177
        %v5184 = vmul.f32 %v5149, %v5177
        %v5185 = vmul.f32 %v5150, %v5177
        %v5186 = vmul.f32 %v5151, %v5177
        %v5187 = vmul.f32 %v5152, %v5177
        %v5188 = vmul.f32 %v5153, %v5177
        %v5189 = vmul.f32 %v5154, %v5177
        %v5190 = vmul.f32 %v5155, %v5177
        %v5191 = vmul.f32 %v5156, %v5177
        %v5192 = vmul.f32 %v5157, %v5177
        %v5193 = vmul.f32 %v5158, %v5177
        %v5194 = vmul.f32 %v5159, %v5177
        %v5195 = vmul.f32 %v5160, %v5177
        %v5196 = vmul.f32 %v5161, %v5177
        %v5197 = vmul.f32 %v5162, %v5177
        %v5198 = vmul.f32 %v5163, %v5177
        %v5199 = vmul.f32 %v5164, %v5177
        %v5200 = vmul.f32 %v5165, %v5177
        %v5201 = vmul.f32 %v5166, %v5177
        %v5202 = vmul.f32 %v5167, %v5177
        %v5203 = vmul.f32 %v5168, %v5177
        %v5204 = vmul.f32 %v5169, %v5177
        %v5205 = vmul.f32 %v5170, %v5177
        %v5206 = vmul.f32 %v5171, %v5177
        %v5207 = vmul.f32 %v5172, %v5177
        %v5208 = vmul.f32 %v5173, %v5177
        %v5209 = vmul.f32 %v5174, %v5177
        %v5210 = vmul.f32 %v5175, %v5177
        %v5212 = vperm.slane %v379, 0
        %v5214 = vadd.f32 %v5179, %v5212
        %v5215 = vadd.f32 %v5180, %v5212
        %v5216 = vadd.f32 %v5181, %v5212
        %v5217 = vadd.f32 %v5182, %v5212
        %v5218 = vadd.f32 %v5183, %v5212
        %v5219 = vadd.f32 %v5184, %v5212
        %v5220 = vadd.f32 %v5185, %v5212
        %v5221 = vadd.f32 %v5186, %v5212
        %v5222 = vadd.f32 %v5187, %v5212
        %v5223 = vadd.f32 %v5188, %v5212
        %v5224 = vadd.f32 %v5189, %v5212
        %v5225 = vadd.f32 %v5190, %v5212
        %v5226 = vadd.f32 %v5191, %v5212
        %v5227 = vadd.f32 %v5192, %v5212
        %v5228 = vadd.f32 %v5193, %v5212
        %v5229 = vadd.f32 %v5194, %v5212
        %v5230 = vadd.f32 %v5195, %v5212
        %v5231 = vadd.f32 %v5196, %v5212
        %v5232 = vadd.f32 %v5197, %v5212
        %v5233 = vadd.f32 %v5198, %v5212
        %v5234 = vadd.f32 %v5199, %v5212
        %v5235 = vadd.f32 %v5200, %v5212
        %v5236 = vadd.f32 %v5201, %v5212
        %v5237 = vadd.f32 %v5202, %v5212
        %v5238 = vadd.f32 %v5203, %v5212
        %v5239 = vadd.f32 %v5204, %v5212
        %v5240 = vadd.f32 %v5205, %v5212
        %v5241 = vadd.f32 %v5206, %v5212
        %v5242 = vadd.f32 %v5207, %v5212
        %v5243 = vadd.f32 %v5208, %v5212
        %v5244 = vadd.f32 %v5209, %v5212
        %v5245 = vadd.f32 %v5210, %v5212
        %v5246 = vmax.f32 %v5214, 0.0
        %v5247 = vmax.f32 %v5215, 0.0
        %v5248 = vmax.f32 %v5216, 0.0
        %v5249 = vmax.f32 %v5217, 0.0
        %v5250 = vmax.f32 %v5218, 0.0
        %v5251 = vmax.f32 %v5219, 0.0
        %v5252 = vmax.f32 %v5220, 0.0
        %v5253 = vmax.f32 %v5221, 0.0
        %v5254 = vmax.f32 %v5222, 0.0
        %v5255 = vmax.f32 %v5223, 0.0
        %v5256 = vmax.f32 %v5224, 0.0
        %v5257 = vmax.f32 %v5225, 0.0
        %v5258 = vmax.f32 %v5226, 0.0
        %v5259 = vmax.f32 %v5227, 0.0
        %v5260 = vmax.f32 %v5228, 0.0
        %v5261 = vmax.f32 %v5229, 0.0
        %v5262 = vmax.f32 %v5230, 0.0
        %v5263 = vmax.f32 %v5231, 0.0
        %v5264 = vmax.f32 %v5232, 0.0
        %v5265 = vmax.f32 %v5233, 0.0
        %v5266 = vmax.f32 %v5234, 0.0
        %v5267 = vmax.f32 %v5235, 0.0
        %v5268 = vmax.f32 %v5236, 0.0
        %v5269 = vmax.f32 %v5237, 0.0
        %v5270 = vmax.f32 %v5238, 0.0
        %v5271 = vmax.f32 %v5239, 0.0
        %v5272 = vmax.f32 %v5240, 0.0
        %v5273 = vmax.f32 %v5241, 0.0
        %v5274 = vmax.f32 %v5242, 0.0
        %v5275 = vmax.f32 %v5243, 0.0
        %v5276 = vmax.f32 %v5244, 0.0
        %v5277 = vmax.f32 %v5245, 0.0
        %v5278 = vpack.c.bf16 %v5246, %v5246
        %v5279 = vpack.c.bf16 %v5247, %v5247
        %v5280 = vpack.c.bf16 %v5248, %v5248
        %v5281 = vpack.c.bf16 %v5249, %v5249
        %v5282 = vpack.c.bf16 %v5250, %v5250
        %v5283 = vpack.c.bf16 %v5251, %v5251
        %v5284 = vpack.c.bf16 %v5252, %v5252
        %v5285 = vpack.c.bf16 %v5253, %v5253
        %v5286 = vpack.c.bf16 %v5254, %v5254
        %v5287 = vpack.c.bf16 %v5255, %v5255
        %v5288 = vpack.c.bf16 %v5256, %v5256
        %v5289 = vpack.c.bf16 %v5257, %v5257
        %v5290 = vpack.c.bf16 %v5258, %v5258
        %v5291 = vpack.c.bf16 %v5259, %v5259
        %v5292 = vpack.c.bf16 %v5260, %v5260
        %v5293 = vpack.c.bf16 %v5261, %v5261
        %v5294 = vpack.c.bf16 %v5262, %v5262
        %v5295 = vpack.c.bf16 %v5263, %v5263
        %v5296 = vpack.c.bf16 %v5264, %v5264
        %v5297 = vpack.c.bf16 %v5265, %v5265
        %v5298 = vpack.c.bf16 %v5266, %v5266
        %v5299 = vpack.c.bf16 %v5267, %v5267
        %v5300 = vpack.c.bf16 %v5268, %v5268
        %v5301 = vpack.c.bf16 %v5269, %v5269
        %v5302 = vpack.c.bf16 %v5270, %v5270
        %v5303 = vpack.c.bf16 %v5271, %v5271
        %v5304 = vpack.c.bf16 %v5272, %v5272
        %v5305 = vpack.c.bf16 %v5273, %v5273
        %v5306 = vpack.c.bf16 %v5274, %v5274
        %v5307 = vpack.c.bf16 %v5275, %v5275
        %v5308 = vpack.c.bf16 %v5276, %v5276
        %v5309 = vpack.c.bf16 %v5277, %v5277
        %s5310 = smul.addr %s1941, 4
        %s5311 = scalar_lea.vmem [#allocation2], %s5310
        %5312 = vst [vmem:[%s5311 + $0x4] sm:$0xf] %v5278
        %5313 = vst [vmem:[%s5311 + $0x8] sm:$0xf] %v5279
        %5314 = vst [vmem:[%s5311 + $0x14] sm:$0xf] %v5280
        %5315 = vst [vmem:[%s5311 + $0x18] sm:$0xf] %v5281
        %5316 = vst [vmem:[%s5311 + $0x24] sm:$0xf] %v5282
        %5317 = vst [vmem:[%s5311 + $0x28] sm:$0xf] %v5283
        %5318 = vst [vmem:[%s5311 + $0x34] sm:$0xf] %v5284
        %5319 = vst [vmem:[%s5311 + $0x38] sm:$0xf] %v5285
        %5320 = vst [vmem:[%s5311 + $0x44] sm:$0xf] %v5286
        %5321 = vst [vmem:[%s5311 + $0x48] sm:$0xf] %v5287
        %5322 = vst [vmem:[%s5311 + $0x54] sm:$0xf] %v5288
        %5323 = vst [vmem:[%s5311 + $0x58] sm:$0xf] %v5289
        %5324 = vst [vmem:[%s5311 + $0x64] sm:$0xf] %v5290
        %5325 = vst [vmem:[%s5311 + $0x68] sm:$0xf] %v5291
        %5326 = vst [vmem:[%s5311 + $0x74] sm:$0xf] %v5292
        %5327 = vst [vmem:[%s5311 + $0x78] sm:$0xf] %v5293
        %5328 = vst [vmem:[%s5311 + $0x84] sm:$0xf] %v5294
        %5329 = vst [vmem:[%s5311 + $0x88] sm:$0xf] %v5295
        %5330 = vst [vmem:[%s5311 + $0x94] sm:$0xf] %v5296
        %5331 = vst [vmem:[%s5311 + $0x98] sm:$0xf] %v5297
        %5332 = vst [vmem:[%s5311 + $0xa4] sm:$0xf] %v5298
        %5333 = vst [vmem:[%s5311 + $0xa8] sm:$0xf] %v5299
        %5334 = vst [vmem:[%s5311 + $0xb4] sm:$0xf] %v5300
        %5335 = vst [vmem:[%s5311 + $0xb8] sm:$0xf] %v5301
        %5336 = vst [vmem:[%s5311 + $0xc4] sm:$0xf] %v5302
        %5337 = vst [vmem:[%s5311 + $0xc8] sm:$0xf] %v5303
        %5338 = vst [vmem:[%s5311 + $0xd4] sm:$0xf] %v5304
        %5339 = vst [vmem:[%s5311 + $0xd8] sm:$0xf] %v5305
        %5340 = vst [vmem:[%s5311 + $0xe4] sm:$0xf] %v5306
        %5341 = vst [vmem:[%s5311 + $0xe8] sm:$0xf] %v5307
        %5342 = vst [vmem:[%s5311 + $0xf4] sm:$0xf] %v5308
        %5343 = vst [vmem:[%s5311 + $0xf8] sm:$0xf] %v5309
        %s5344 = smul.addr %s382, 4
        %s5345 = scalar_lea.vmem [#allocation2], %s5344
        %v5346 = vld [vmem:[%s5345] sm:$0x8]
        %v5347 = vld [vmem:[%s5345 + $0x4] sm:$0xf]
        %v5348 = vld [vmem:[%s5345 + $0x8] sm:$0xf]
        %v5349 = vld [vmem:[%s5345 + $0x10] sm:$0x8]
        %v5350 = vld [vmem:[%s5345 + $0x14] sm:$0xf]
        %v5351 = vld [vmem:[%s5345 + $0x18] sm:$0xf]
        %v5352 = vld [vmem:[%s5345 + $0x20] sm:$0x8]
        %v5353 = vld [vmem:[%s5345 + $0x24] sm:$0xf]
        %v5354 = vld [vmem:[%s5345 + $0x28] sm:$0xf]
        %v5355 = vld [vmem:[%s5345 + $0x30] sm:$0x8]
        %v5356 = vld [vmem:[%s5345 + $0x34] sm:$0xf]
        %v5357 = vld [vmem:[%s5345 + $0x38] sm:$0xf]
        %v5358 = vld [vmem:[%s5345 + $0x40] sm:$0x8]
        %v5359 = vld [vmem:[%s5345 + $0x44] sm:$0xf]
        %v5360 = vld [vmem:[%s5345 + $0x48] sm:$0xf]
        %v5361 = vld [vmem:[%s5345 + $0x50] sm:$0x8]
        %v5362 = vld [vmem:[%s5345 + $0x54] sm:$0xf]
        %v5363 = vld [vmem:[%s5345 + $0x58] sm:$0xf]
        %v5364 = vld [vmem:[%s5345 + $0x60] sm:$0x8]
        %v5365 = vld [vmem:[%s5345 + $0x64] sm:$0xf]
        %v5366 = vld [vmem:[%s5345 + $0x68] sm:$0xf]
        %v5367 = vld [vmem:[%s5345 + $0x70] sm:$0x8]
        %v5368 = vld [vmem:[%s5345 + $0x74] sm:$0xf]
        %v5369 = vld [vmem:[%s5345 + $0x78] sm:$0xf]
        %v5370 = vld [vmem:[%s5345 + $0x80] sm:$0x8]
        %v5371 = vld [vmem:[%s5345 + $0x84] sm:$0xf]
        %v5372 = vld [vmem:[%s5345 + $0x88] sm:$0xf]
        %v5373 = vld [vmem:[%s5345 + $0x90] sm:$0x8]
        %v5374 = vld [vmem:[%s5345 + $0x94] sm:$0xf]
        %v5375 = vld [vmem:[%s5345 + $0x98] sm:$0xf]
        %v5376 = vld [vmem:[%s5345 + $0xa0] sm:$0x8]
        %v5377 = vld [vmem:[%s5345 + $0xa4] sm:$0xf]
        %v5378 = vld [vmem:[%s5345 + $0xa8] sm:$0xf]
        %v5379 = vld [vmem:[%s5345 + $0xb0] sm:$0x8]
        %v5380 = vld [vmem:[%s5345 + $0xb4] sm:$0xf]
        %v5381 = vld [vmem:[%s5345 + $0xb8] sm:$0xf]
        %v5382 = vld [vmem:[%s5345 + $0xc0] sm:$0x8]
        %v5383 = vld [vmem:[%s5345 + $0xc4] sm:$0xf]
        %v5384 = vld [vmem:[%s5345 + $0xc8] sm:$0xf]
        %v5385 = vld [vmem:[%s5345 + $0xd0] sm:$0x8]
        %v5386 = vld [vmem:[%s5345 + $0xd4] sm:$0xf]
        %v5387 = vld [vmem:[%s5345 + $0xd8] sm:$0xf]
        %v5388 = vld [vmem:[%s5345 + $0xe0] sm:$0x8]
        %v5389 = vld [vmem:[%s5345 + $0xe4] sm:$0xf]
        %v5390 = vld [vmem:[%s5345 + $0xe8] sm:$0xf]
        %v5391 = vld [vmem:[%s5345 + $0xf0] sm:$0x8]
        %v5392 = vld [vmem:[%s5345 + $0xf4] sm:$0xf]
        %v5393 = vld [vmem:[%s5345 + $0xf8] sm:$0xf]
        %v5395 = vshrl.u32 %v5346, 16
        %v5397 = vrot.slane %v5395, 7
        %v5398 = vrot.slane %v5397, 4
        %v5400 = vshrl.u32 %v5347, 16
        %v5402 = vrot.slane %v5400, 7
        %v5403 = vshll.u32 %v5347, 16
        %v5405 = vor.u32 %v5402, %v5403
        %v5406 = vsel %vm435, %v5398, %v5405
        %v5407 = vrot.slane %v5402, 4
        %v5409 = vshrl.u32 %v5348, 16
        %v5411 = vrot.slane %v5409, 7
        %v5412 = vshll.u32 %v5348, 16
        %v5414 = vor.u32 %v5411, %v5412
        %v5415 = vsel %vm435, %v5407, %v5414
        %v5417 = vshrl.u32 %v5349, 16
        %v5419 = vrot.slane %v5417, 7
        %v5420 = vrot.slane %v5419, 4
        %v5422 = vshrl.u32 %v5350, 16
        %v5424 = vrot.slane %v5422, 7
        %v5425 = vshll.u32 %v5350, 16
        %v5427 = vor.u32 %v5424, %v5425
        %v5428 = vsel %vm435, %v5420, %v5427
        %v5429 = vrot.slane %v5424, 4
        %v5431 = vshrl.u32 %v5351, 16
        %v5433 = vrot.slane %v5431, 7
        %v5434 = vshll.u32 %v5351, 16
        %v5436 = vor.u32 %v5433, %v5434
        %v5437 = vsel %vm435, %v5429, %v5436
        %v5439 = vshrl.u32 %v5352, 16
        %v5441 = vrot.slane %v5439, 7
        %v5442 = vrot.slane %v5441, 4
        %v5444 = vshrl.u32 %v5353, 16
        %v5446 = vrot.slane %v5444, 7
        %v5447 = vshll.u32 %v5353, 16
        %v5449 = vor.u32 %v5446, %v5447
        %v5450 = vsel %vm435, %v5442, %v5449
        %v5451 = vrot.slane %v5446, 4
        %v5453 = vshrl.u32 %v5354, 16
        %v5455 = vrot.slane %v5453, 7
        %v5456 = vshll.u32 %v5354, 16
        %v5458 = vor.u32 %v5455, %v5456
        %v5459 = vsel %vm435, %v5451, %v5458
        %v5461 = vshrl.u32 %v5355, 16
        %v5463 = vrot.slane %v5461, 7
        %v5464 = vrot.slane %v5463, 4
        %v5466 = vshrl.u32 %v5356, 16
        %v5468 = vrot.slane %v5466, 7
        %v5469 = vshll.u32 %v5356, 16
        %v5471 = vor.u32 %v5468, %v5469
        %v5472 = vsel %vm435, %v5464, %v5471
        %v5473 = vrot.slane %v5468, 4
        %v5475 = vshrl.u32 %v5357, 16
        %v5477 = vrot.slane %v5475, 7
        %v5478 = vshll.u32 %v5357, 16
        %v5480 = vor.u32 %v5477, %v5478
        %v5481 = vsel %vm435, %v5473, %v5480
        %v5483 = vshrl.u32 %v5358, 16
        %v5485 = vrot.slane %v5483, 7
        %v5486 = vrot.slane %v5485, 4
        %v5488 = vshrl.u32 %v5359, 16
        %v5490 = vrot.slane %v5488, 7
        %v5491 = vshll.u32 %v5359, 16
        %v5493 = vor.u32 %v5490, %v5491
        %v5494 = vsel %vm435, %v5486, %v5493
        %v5495 = vrot.slane %v5490, 4
        %v5497 = vshrl.u32 %v5360, 16
        %v5499 = vrot.slane %v5497, 7
        %v5500 = vshll.u32 %v5360, 16
        %v5502 = vor.u32 %v5499, %v5500
        %v5503 = vsel %vm435, %v5495, %v5502
        %v5505 = vshrl.u32 %v5361, 16
        %v5507 = vrot.slane %v5505, 7
        %v5508 = vrot.slane %v5507, 4
        %v5510 = vshrl.u32 %v5362, 16
        %v5512 = vrot.slane %v5510, 7
        %v5513 = vshll.u32 %v5362, 16
        %v5515 = vor.u32 %v5512, %v5513
        %v5516 = vsel %vm435, %v5508, %v5515
        %v5517 = vrot.slane %v5512, 4
        %v5519 = vshrl.u32 %v5363, 16
        %v5521 = vrot.slane %v5519, 7
        %v5522 = vshll.u32 %v5363, 16
        %v5524 = vor.u32 %v5521, %v5522
        %v5525 = vsel %vm435, %v5517, %v5524
        %v5527 = vshrl.u32 %v5364, 16
        %v5529 = vrot.slane %v5527, 7
        %v5530 = vrot.slane %v5529, 4
        %v5532 = vshrl.u32 %v5365, 16
        %v5534 = vrot.slane %v5532, 7
        %v5535 = vshll.u32 %v5365, 16
        %v5537 = vor.u32 %v5534, %v5535
        %v5538 = vsel %vm435, %v5530, %v5537
        %v5539 = vrot.slane %v5534, 4
        %v5541 = vshrl.u32 %v5366, 16
        %v5543 = vrot.slane %v5541, 7
        %v5544 = vshll.u32 %v5366, 16
        %v5546 = vor.u32 %v5543, %v5544
        %v5547 = vsel %vm435, %v5539, %v5546
        %v5549 = vshrl.u32 %v5367, 16
        %v5551 = vrot.slane %v5549, 7
        %v5552 = vrot.slane %v5551, 4
        %v5554 = vshrl.u32 %v5368, 16
        %v5556 = vrot.slane %v5554, 7
        %v5557 = vshll.u32 %v5368, 16
        %v5559 = vor.u32 %v5556, %v5557
        %v5560 = vsel %vm435, %v5552, %v5559
        %v5561 = vrot.slane %v5556, 4
        %v5563 = vshrl.u32 %v5369, 16
        %v5565 = vrot.slane %v5563, 7
        %v5566 = vshll.u32 %v5369, 16
        %v5568 = vor.u32 %v5565, %v5566
        %v5569 = vsel %vm435, %v5561, %v5568
        %v5571 = vshrl.u32 %v5370, 16
        %v5573 = vrot.slane %v5571, 7
        %v5574 = vrot.slane %v5573, 4
        %v5576 = vshrl.u32 %v5371, 16
        %v5578 = vrot.slane %v5576, 7
        %v5579 = vshll.u32 %v5371, 16
        %v5581 = vor.u32 %v5578, %v5579
        %v5582 = vsel %vm435, %v5574, %v5581
        %v5583 = vrot.slane %v5578, 4
        %v5585 = vshrl.u32 %v5372, 16
        %v5587 = vrot.slane %v5585, 7
        %v5588 = vshll.u32 %v5372, 16
        %v5590 = vor.u32 %v5587, %v5588
        %v5591 = vsel %vm435, %v5583, %v5590
        %v5593 = vshrl.u32 %v5373, 16
        %v5595 = vrot.slane %v5593, 7
        %v5596 = vrot.slane %v5595, 4
        %v5598 = vshrl.u32 %v5374, 16
        %v5600 = vrot.slane %v5598, 7
        %v5601 = vshll.u32 %v5374, 16
        %v5603 = vor.u32 %v5600, %v5601
        %v5604 = vsel %vm435, %v5596, %v5603
        %v5605 = vrot.slane %v5600, 4
        %v5607 = vshrl.u32 %v5375, 16
        %v5609 = vrot.slane %v5607, 7
        %v5610 = vshll.u32 %v5375, 16
        %v5612 = vor.u32 %v5609, %v5610
        %v5613 = vsel %vm435, %v5605, %v5612
        %v5615 = vshrl.u32 %v5376, 16
        %v5617 = vrot.slane %v5615, 7
        %v5618 = vrot.slane %v5617, 4
        %v5620 = vshrl.u32 %v5377, 16
        %v5622 = vrot.slane %v5620, 7
        %v5623 = vshll.u32 %v5377, 16
        %v5625 = vor.u32 %v5622, %v5623
        %v5626 = vsel %vm435, %v5618, %v5625
        %v5627 = vrot.slane %v5622, 4
        %v5629 = vshrl.u32 %v5378, 16
        %v5631 = vrot.slane %v5629, 7
        %v5632 = vshll.u32 %v5378, 16
        %v5634 = vor.u32 %v5631, %v5632
        %v5635 = vsel %vm435, %v5627, %v5634
        %v5637 = vshrl.u32 %v5379, 16
        %v5639 = vrot.slane %v5637, 7
        %v5640 = vrot.slane %v5639, 4
        %v5642 = vshrl.u32 %v5380, 16
        %v5644 = vrot.slane %v5642, 7
        %v5645 = vshll.u32 %v5380, 16
        %v5647 = vor.u32 %v5644, %v5645
        %v5648 = vsel %vm435, %v5640, %v5647
        %v5649 = vrot.slane %v5644, 4
        %v5651 = vshrl.u32 %v5381, 16
        %v5653 = vrot.slane %v5651, 7
        %v5654 = vshll.u32 %v5381, 16
        %v5656 = vor.u32 %v5653, %v5654
        %v5657 = vsel %vm435, %v5649, %v5656
        %v5659 = vshrl.u32 %v5382, 16
        %v5661 = vrot.slane %v5659, 7
        %v5662 = vrot.slane %v5661, 4
        %v5664 = vshrl.u32 %v5383, 16
        %v5666 = vrot.slane %v5664, 7
        %v5667 = vshll.u32 %v5383, 16
        %v5669 = vor.u32 %v5666, %v5667
        %v5670 = vsel %vm435, %v5662, %v5669
        %v5671 = vrot.slane %v5666, 4
        %v5673 = vshrl.u32 %v5384, 16
        %v5675 = vrot.slane %v5673, 7
        %v5676 = vshll.u32 %v5384, 16
        %v5678 = vor.u32 %v5675, %v5676
        %v5679 = vsel %vm435, %v5671, %v5678
        %v5681 = vshrl.u32 %v5385, 16
        %v5683 = vrot.slane %v5681, 7
        %v5684 = vrot.slane %v5683, 4
        %v5686 = vshrl.u32 %v5386, 16
        %v5688 = vrot.slane %v5686, 7
        %v5689 = vshll.u32 %v5386, 16
        %v5691 = vor.u32 %v5688, %v5689
        %v5692 = vsel %vm435, %v5684, %v5691
        %v5693 = vrot.slane %v5688, 4
        %v5695 = vshrl.u32 %v5387, 16
        %v5697 = vrot.slane %v5695, 7
        %v5698 = vshll.u32 %v5387, 16
        %v5700 = vor.u32 %v5697, %v5698
        %v5701 = vsel %vm435, %v5693, %v5700
        %v5703 = vshrl.u32 %v5388, 16
        %v5705 = vrot.slane %v5703, 7
        %v5706 = vrot.slane %v5705, 4
        %v5708 = vshrl.u32 %v5389, 16
        %v5710 = vrot.slane %v5708, 7
        %v5711 = vshll.u32 %v5389, 16
        %v5713 = vor.u32 %v5710, %v5711
        %v5714 = vsel %vm435, %v5706, %v5713
        %v5715 = vrot.slane %v5710, 4
        %v5717 = vshrl.u32 %v5390, 16
        %v5719 = vrot.slane %v5717, 7
        %v5720 = vshll.u32 %v5390, 16
        %v5722 = vor.u32 %v5719, %v5720
        %v5723 = vsel %vm435, %v5715, %v5722
        %v5725 = vshrl.u32 %v5391, 16
        %v5727 = vrot.slane %v5725, 7
        %v5728 = vrot.slane %v5727, 4
        %v5730 = vshrl.u32 %v5392, 16
        %v5732 = vrot.slane %v5730, 7
        %v5733 = vshll.u32 %v5392, 16
        %v5735 = vor.u32 %v5732, %v5733
        %v5736 = vsel %vm435, %v5728, %v5735
        %v5737 = vrot.slane %v5732, 4
        %v5739 = vshrl.u32 %v5393, 16
        %v5741 = vrot.slane %v5739, 7
        %v5742 = vshll.u32 %v5393, 16
        %v5744 = vor.u32 %v5741, %v5742
        %v5745 = vsel %vm435, %v5737, %v5744
        %v5746 = vld [vmem:[#allocation8] sm:$0xf]
        %v5747 = vld [vmem:[#allocation8 + $0x4] sm:$0xf]
        %v5748 = vld [vmem:[#allocation8 + $0x8] sm:$0xf]
        %v5749 = vld [vmem:[#allocation8 + $0xc] sm:$0xf]
        %v5750 = vld [vmem:[#allocation8 + $0x10] sm:$0xf]
        %v5751 = vld [vmem:[#allocation8 + $0x14] sm:$0xf]
        %v5752 = vld [vmem:[#allocation8 + $0x18] sm:$0xf]
        %v5753 = vld [vmem:[#allocation8 + $0x1c] sm:$0xf]
        %v5754 = vld [vmem:[#allocation8 + $0x20] sm:$0xf]
        %v5755 = vld [vmem:[#allocation8 + $0x24] sm:$0xf]
        %v5756 = vld [vmem:[#allocation8 + $0x28] sm:$0xf]
        %v5757 = vld [vmem:[#allocation8 + $0x2c] sm:$0xf]
        %v5758 = vld [vmem:[#allocation8 + $0x30] sm:$0xf]
        %v5759 = vld [vmem:[#allocation8 + $0x34] sm:$0xf]
        %v5760 = vld [vmem:[#allocation8 + $0x38] sm:$0xf]
        %v5761 = vld [vmem:[#allocation8 + $0x3c] sm:$0xf]
        %s5762 = scalar_lea.vmem [#allocation8], 64
        %v5763 = vld [vmem:[%s5762] sm:$0xf]
        %v5764 = vld [vmem:[%s5762 + $0x4] sm:$0xf]
        %v5765 = vld [vmem:[%s5762 + $0x8] sm:$0xf]
        %v5766 = vld [vmem:[%s5762 + $0xc] sm:$0xf]
        %v5767 = vld [vmem:[%s5762 + $0x10] sm:$0xf]
        %v5768 = vld [vmem:[%s5762 + $0x14] sm:$0xf]
        %v5769 = vld [vmem:[%s5762 + $0x18] sm:$0xf]
        %v5770 = vld [vmem:[%s5762 + $0x1c] sm:$0xf]
        %v5771 = vld [vmem:[%s5762 + $0x20] sm:$0xf]
        %v5772 = vld [vmem:[%s5762 + $0x24] sm:$0xf]
        %v5773 = vld [vmem:[%s5762 + $0x28] sm:$0xf]
        %v5774 = vld [vmem:[%s5762 + $0x2c] sm:$0xf]
        %v5775 = vld [vmem:[%s5762 + $0x30] sm:$0xf]
        %v5776 = vld [vmem:[%s5762 + $0x34] sm:$0xf]
        %v5777 = vld [vmem:[%s5762 + $0x38] sm:$0xf]
        %v5778 = vld [vmem:[%s5762 + $0x3c] sm:$0xf]
        %v5811 = vunpack.c.l.b16 %v5347
        %v5812 = vunpack.c.l.b16 %v5348
        %v5813 = vunpack.c.l.b16 %v5350
        %v5814 = vunpack.c.l.b16 %v5351
        %v5815 = vunpack.c.l.b16 %v5353
        %v5816 = vunpack.c.l.b16 %v5354
        %v5817 = vunpack.c.l.b16 %v5356
        %v5818 = vunpack.c.l.b16 %v5357
        %v5819 = vunpack.c.l.b16 %v5359
        %v5820 = vunpack.c.l.b16 %v5360
        %v5821 = vunpack.c.l.b16 %v5362
        %v5822 = vunpack.c.l.b16 %v5363
        %v5823 = vunpack.c.l.b16 %v5365
        %v5824 = vunpack.c.l.b16 %v5366
        %v5825 = vunpack.c.l.b16 %v5368
        %v5826 = vunpack.c.l.b16 %v5369
        %v5827 = vunpack.c.l.b16 %v5371
        %v5828 = vunpack.c.l.b16 %v5372
        %v5829 = vunpack.c.l.b16 %v5374
        %v5830 = vunpack.c.l.b16 %v5375
        %v5831 = vunpack.c.l.b16 %v5377
        %v5832 = vunpack.c.l.b16 %v5378
        %v5833 = vunpack.c.l.b16 %v5380
        %v5834 = vunpack.c.l.b16 %v5381
        %v5835 = vunpack.c.l.b16 %v5383
        %v5836 = vunpack.c.l.b16 %v5384
        %v5837 = vunpack.c.l.b16 %v5386
        %v5838 = vunpack.c.l.b16 %v5387
        %v5839 = vunpack.c.l.b16 %v5389
        %v5840 = vunpack.c.l.b16 %v5390
        %v5841 = vunpack.c.l.b16 %v5392
        %v5842 = vunpack.c.l.b16 %v5393
        %v5843 = vpack.c.b16 %v5812, %v5811
        %v5844 = vpack.c.b16 %v5814, %v5813
        %v5845 = vpack.c.b16 %v5816, %v5815
        %v5846 = vpack.c.b16 %v5818, %v5817
        %v5847 = vpack.c.b16 %v5820, %v5819
        %v5848 = vpack.c.b16 %v5822, %v5821
        %v5849 = vpack.c.b16 %v5824, %v5823
        %v5850 = vpack.c.b16 %v5826, %v5825
        %v5851 = vpack.c.b16 %v5828, %v5827
        %v5852 = vpack.c.b16 %v5830, %v5829
        %v5853 = vpack.c.b16 %v5832, %v5831
        %v5854 = vpack.c.b16 %v5834, %v5833
        %v5855 = vpack.c.b16 %v5836, %v5835
        %v5856 = vpack.c.b16 %v5838, %v5837
        %v5857 = vpack.c.b16 %v5840, %v5839
        %v5858 = vpack.c.b16 %v5842, %v5841
        %v5891 = vunpack.c.l.b16 %v5763
        %v5892 = vunpack.c.l.b16 %v5764
        %v5893 = vunpack.c.l.b16 %v5765
        %v5894 = vunpack.c.l.b16 %v5766
        %v5895 = vunpack.c.l.b16 %v5767
        %v5896 = vunpack.c.l.b16 %v5768
        %v5897 = vunpack.c.l.b16 %v5769
        %v5898 = vunpack.c.l.b16 %v5770
        %v5899 = vunpack.c.l.b16 %v5771
        %v5900 = vunpack.c.l.b16 %v5772
        %v5901 = vunpack.c.l.b16 %v5773
        %v5902 = vunpack.c.l.b16 %v5774
        %v5903 = vunpack.c.l.b16 %v5775
        %v5904 = vunpack.c.l.b16 %v5776
        %v5905 = vunpack.c.l.b16 %v5777
        %v5906 = vunpack.c.l.b16 %v5778
        %v5907 = vpack.c.b16 %v5892, %v5891
        %v5908 = vpack.c.b16 %v5894, %v5893
        %v5909 = vpack.c.b16 %v5896, %v5895
        %v5910 = vpack.c.b16 %v5898, %v5897
        %v5911 = vpack.c.b16 %v5900, %v5899
        %v5912 = vpack.c.b16 %v5902, %v5901
        %v5913 = vpack.c.b16 %v5904, %v5903
        %v5914 = vpack.c.b16 %v5906, %v5905
        %5923 = vmatpush.bf16.msra.mxu0 %v5914
        %5924 = vmatpush.bf16.msra.mxu0 %v5913
        %5925 = vmatpush.bf16.msra.mxu0 %v5912
        %5926 = vmatpush.bf16.msra.mxu0 %v5911
        %5927 = vmatpush.bf16.msra.mxu0 %v5910
        %5928 = vmatpush.bf16.msra.mxu0 %v5909
        %5929 = vmatpush.bf16.msra.mxu0 %v5908
        %5930 = vmatpush.bf16.msra.mxu0 %v5907
        %5931 = vmatmul.bf16.gmra.mxu0 %v5843
        %v5932 = vpop.f32.mrf.mxu0
        %v5933 = vadd.f32 0.0, %v5932
        %v5934 = vpop.f32.mrf.mxu0
        %v5935 = vadd.f32 0.0, %v5934
        %5936 = vmatmul.bf16.gmra.mxu0 %v5844
        %v5937 = vpop.f32.mrf.mxu0
        %v5938 = vadd.f32 0.0, %v5937
        %v5939 = vpop.f32.mrf.mxu0
        %v5940 = vadd.f32 0.0, %v5939
        %5941 = vmatmul.bf16.gmra.mxu0 %v5845
        %v5942 = vpop.f32.mrf.mxu0
        %v5943 = vadd.f32 0.0, %v5942
        %v5944 = vpop.f32.mrf.mxu0
        %v5945 = vadd.f32 0.0, %v5944
        %5946 = vmatmul.bf16.gmra.mxu0 %v5846
        %v5947 = vpop.f32.mrf.mxu0
        %v5948 = vadd.f32 0.0, %v5947
        %v5949 = vpop.f32.mrf.mxu0
        %v5950 = vadd.f32 0.0, %v5949
        %5951 = vmatmul.bf16.gmra.mxu0 %v5847
        %v5952 = vpop.f32.mrf.mxu0
        %v5953 = vadd.f32 0.0, %v5952
        %v5954 = vpop.f32.mrf.mxu0
        %v5955 = vadd.f32 0.0, %v5954
        %5956 = vmatmul.bf16.gmra.mxu0 %v5848
        %v5957 = vpop.f32.mrf.mxu0
        %v5958 = vadd.f32 0.0, %v5957
        %v5959 = vpop.f32.mrf.mxu0
        %v5960 = vadd.f32 0.0, %v5959
        %5961 = vmatmul.bf16.gmra.mxu0 %v5849
        %v5962 = vpop.f32.mrf.mxu0
        %v5963 = vadd.f32 0.0, %v5962
        %v5964 = vpop.f32.mrf.mxu0
        %v5965 = vadd.f32 0.0, %v5964
        %5966 = vmatmul.bf16.gmra.mxu0 %v5850
        %v5967 = vpop.f32.mrf.mxu0
        %v5968 = vadd.f32 0.0, %v5967
        %v5969 = vpop.f32.mrf.mxu0
        %v5970 = vadd.f32 0.0, %v5969
        %5971 = vmatmul.bf16.gmra.mxu0 %v5851
        %v5972 = vpop.f32.mrf.mxu0
        %v5973 = vadd.f32 0.0, %v5972
        %v5974 = vpop.f32.mrf.mxu0
        %v5975 = vadd.f32 0.0, %v5974
        %5976 = vmatmul.bf16.gmra.mxu0 %v5852
        %v5977 = vpop.f32.mrf.mxu0
        %v5978 = vadd.f32 0.0, %v5977
        %v5979 = vpop.f32.mrf.mxu0
        %v5980 = vadd.f32 0.0, %v5979
        %5981 = vmatmul.bf16.gmra.mxu0 %v5853
        %v5982 = vpop.f32.mrf.mxu0
        %v5983 = vadd.f32 0.0, %v5982
        %v5984 = vpop.f32.mrf.mxu0
        %v5985 = vadd.f32 0.0, %v5984
        %5986 = vmatmul.bf16.gmra.mxu0 %v5854
        %v5987 = vpop.f32.mrf.mxu0
        %v5988 = vadd.f32 0.0, %v5987
        %v5989 = vpop.f32.mrf.mxu0
        %v5990 = vadd.f32 0.0, %v5989
        %5991 = vmatmul.bf16.gmra.mxu0 %v5855
        %v5992 = vpop.f32.mrf.mxu0
        %v5993 = vadd.f32 0.0, %v5992
        %v5994 = vpop.f32.mrf.mxu0
        %v5995 = vadd.f32 0.0, %v5994
        %5996 = vmatmul.bf16.gmra.mxu0 %v5856
        %v5997 = vpop.f32.mrf.mxu0
        %v5998 = vadd.f32 0.0, %v5997
        %v5999 = vpop.f32.mrf.mxu0
        %v6000 = vadd.f32 0.0, %v5999
        %6001 = vmatmul.bf16.gmra.mxu0 %v5857
        %v6002 = vpop.f32.mrf.mxu0
        %v6003 = vadd.f32 0.0, %v6002
        %v6004 = vpop.f32.mrf.mxu0
        %v6005 = vadd.f32 0.0, %v6004
        %6006 = vmatmul.bf16.gmra.mxu0 %v5858
        %v6007 = vpop.f32.mrf.mxu0
        %v6008 = vadd.f32 0.0, %v6007
        %v6009 = vpop.f32.mrf.mxu0
        %v6010 = vadd.f32 0.0, %v6009
        %6011 = vdwg.mxu0
        %v6012 = vunpack.c.l.b16 %v5406
        %v6013 = vunpack.c.l.b16 %v5415
        %v6014 = vunpack.c.l.b16 %v5428
        %v6015 = vunpack.c.l.b16 %v5437
        %v6016 = vunpack.c.l.b16 %v5450
        %v6017 = vunpack.c.l.b16 %v5459
        %v6018 = vunpack.c.l.b16 %v5472
        %v6019 = vunpack.c.l.b16 %v5481
        %v6020 = vunpack.c.l.b16 %v5494
        %v6021 = vunpack.c.l.b16 %v5503
        %v6022 = vunpack.c.l.b16 %v5516
        %v6023 = vunpack.c.l.b16 %v5525
        %v6024 = vunpack.c.l.b16 %v5538
        %v6025 = vunpack.c.l.b16 %v5547
        %v6026 = vunpack.c.l.b16 %v5560
        %v6027 = vunpack.c.l.b16 %v5569
        %v6028 = vunpack.c.l.b16 %v5582
        %v6029 = vunpack.c.l.b16 %v5591
        %v6030 = vunpack.c.l.b16 %v5604
        %v6031 = vunpack.c.l.b16 %v5613
        %v6032 = vunpack.c.l.b16 %v5626
        %v6033 = vunpack.c.l.b16 %v5635
        %v6034 = vunpack.c.l.b16 %v5648
        %v6035 = vunpack.c.l.b16 %v5657
        %v6036 = vunpack.c.l.b16 %v5670
        %v6037 = vunpack.c.l.b16 %v5679
        %v6038 = vunpack.c.l.b16 %v5692
        %v6039 = vunpack.c.l.b16 %v5701
        %v6040 = vunpack.c.l.b16 %v5714
        %v6041 = vunpack.c.l.b16 %v5723
        %v6042 = vunpack.c.l.b16 %v5736
        %v6043 = vunpack.c.l.b16 %v5745
        %v6044 = vpack.c.b16 %v6013, %v6012
        %v6045 = vpack.c.b16 %v6015, %v6014
        %v6046 = vpack.c.b16 %v6017, %v6016
        %v6047 = vpack.c.b16 %v6019, %v6018
        %v6048 = vpack.c.b16 %v6021, %v6020
        %v6049 = vpack.c.b16 %v6023, %v6022
        %v6050 = vpack.c.b16 %v6025, %v6024
        %v6051 = vpack.c.b16 %v6027, %v6026
        %v6052 = vpack.c.b16 %v6029, %v6028
        %v6053 = vpack.c.b16 %v6031, %v6030
        %v6054 = vpack.c.b16 %v6033, %v6032
        %v6055 = vpack.c.b16 %v6035, %v6034
        %v6056 = vpack.c.b16 %v6037, %v6036
        %v6057 = vpack.c.b16 %v6039, %v6038
        %v6058 = vpack.c.b16 %v6041, %v6040
        %v6059 = vpack.c.b16 %v6043, %v6042
        %v6092 = vunpack.c.l.b16 %v5746
        %v6093 = vunpack.c.l.b16 %v5747
        %v6094 = vunpack.c.l.b16 %v5748
        %v6095 = vunpack.c.l.b16 %v5749
        %v6096 = vunpack.c.l.b16 %v5750
        %v6097 = vunpack.c.l.b16 %v5751
        %v6098 = vunpack.c.l.b16 %v5752
        %v6099 = vunpack.c.l.b16 %v5753
        %v6100 = vunpack.c.l.b16 %v5754
        %v6101 = vunpack.c.l.b16 %v5755
        %v6102 = vunpack.c.l.b16 %v5756
        %v6103 = vunpack.c.l.b16 %v5757
        %v6104 = vunpack.c.l.b16 %v5758
        %v6105 = vunpack.c.l.b16 %v5759
        %v6106 = vunpack.c.l.b16 %v5760
        %v6107 = vunpack.c.l.b16 %v5761
        %v6108 = vpack.c.b16 %v6093, %v6092
        %v6109 = vpack.c.b16 %v6095, %v6094
        %v6110 = vpack.c.b16 %v6097, %v6096
        %v6111 = vpack.c.b16 %v6099, %v6098
        %v6112 = vpack.c.b16 %v6101, %v6100
        %v6113 = vpack.c.b16 %v6103, %v6102
        %v6114 = vpack.c.b16 %v6105, %v6104
        %v6115 = vpack.c.b16 %v6107, %v6106
        %6124 = vmatpush.bf16.msra.mxu0 %v6115
        %6125 = vmatpush.bf16.msra.mxu0 %v6114
        %6126 = vmatpush.bf16.msra.mxu0 %v6113
        %6127 = vmatpush.bf16.msra.mxu0 %v6112
        %6128 = vmatpush.bf16.msra.mxu0 %v6111
        %6129 = vmatpush.bf16.msra.mxu0 %v6110
        %6130 = vmatpush.bf16.msra.mxu0 %v6109
        %6131 = vmatpush.bf16.msra.mxu0 %v6108
        %6132 = vmatmul.bf16.gmra.mxu0 %v6044
        %v6133 = vpop.f32.mrf.mxu0
        %v6134 = vadd.f32 %v5933, %v6133
        %v6135 = vpop.f32.mrf.mxu0
        %v6136 = vadd.f32 %v5935, %v6135
        %6137 = vmatmul.bf16.gmra.mxu0 %v6045
        %v6138 = vpop.f32.mrf.mxu0
        %v6139 = vadd.f32 %v5938, %v6138
        %v6140 = vpop.f32.mrf.mxu0
        %v6141 = vadd.f32 %v5940, %v6140
        %6142 = vmatmul.bf16.gmra.mxu0 %v6046
        %v6143 = vpop.f32.mrf.mxu0
        %v6144 = vadd.f32 %v5943, %v6143
        %v6145 = vpop.f32.mrf.mxu0
        %v6146 = vadd.f32 %v5945, %v6145
        %6147 = vmatmul.bf16.gmra.mxu0 %v6047
        %v6148 = vpop.f32.mrf.mxu0
        %v6149 = vadd.f32 %v5948, %v6148
        %v6150 = vpop.f32.mrf.mxu0
        %v6151 = vadd.f32 %v5950, %v6150
        %6152 = vmatmul.bf16.gmra.mxu0 %v6048
        %v6153 = vpop.f32.mrf.mxu0
        %v6154 = vadd.f32 %v5953, %v6153
        %v6155 = vpop.f32.mrf.mxu0
        %v6156 = vadd.f32 %v5955, %v6155
        %6157 = vmatmul.bf16.gmra.mxu0 %v6049
        %v6158 = vpop.f32.mrf.mxu0
        %v6159 = vadd.f32 %v5958, %v6158
        %v6160 = vpop.f32.mrf.mxu0
        %v6161 = vadd.f32 %v5960, %v6160
        %6162 = vmatmul.bf16.gmra.mxu0 %v6050
        %v6163 = vpop.f32.mrf.mxu0
        %v6164 = vadd.f32 %v5963, %v6163
        %v6165 = vpop.f32.mrf.mxu0
        %v6166 = vadd.f32 %v5965, %v6165
        %6167 = vmatmul.bf16.gmra.mxu0 %v6051
        %v6168 = vpop.f32.mrf.mxu0
        %v6169 = vadd.f32 %v5968, %v6168
        %v6170 = vpop.f32.mrf.mxu0
        %v6171 = vadd.f32 %v5970, %v6170
        %6172 = vmatmul.bf16.gmra.mxu0 %v6052
        %v6173 = vpop.f32.mrf.mxu0
        %v6174 = vadd.f32 %v5973, %v6173
        %v6175 = vpop.f32.mrf.mxu0
        %v6176 = vadd.f32 %v5975, %v6175
        %6177 = vmatmul.bf16.gmra.mxu0 %v6053
        %v6178 = vpop.f32.mrf.mxu0
        %v6179 = vadd.f32 %v5978, %v6178
        %v6180 = vpop.f32.mrf.mxu0
        %v6181 = vadd.f32 %v5980, %v6180
        %6182 = vmatmul.bf16.gmra.mxu0 %v6054
        %v6183 = vpop.f32.mrf.mxu0
        %v6184 = vadd.f32 %v5983, %v6183
        %v6185 = vpop.f32.mrf.mxu0
        %v6186 = vadd.f32 %v5985, %v6185
        %6187 = vmatmul.bf16.gmra.mxu0 %v6055
        %v6188 = vpop.f32.mrf.mxu0
        %v6189 = vadd.f32 %v5988, %v6188
        %v6190 = vpop.f32.mrf.mxu0
        %v6191 = vadd.f32 %v5990, %v6190
        %6192 = vmatmul.bf16.gmra.mxu0 %v6056
        %v6193 = vpop.f32.mrf.mxu0
        %v6194 = vadd.f32 %v5993, %v6193
        %v6195 = vpop.f32.mrf.mxu0
        %v6196 = vadd.f32 %v5995, %v6195
        %6197 = vmatmul.bf16.gmra.mxu0 %v6057
        %v6198 = vpop.f32.mrf.mxu0
        %v6199 = vadd.f32 %v5998, %v6198
        %v6200 = vpop.f32.mrf.mxu0
        %v6201 = vadd.f32 %v6000, %v6200
        %6202 = vmatmul.bf16.gmra.mxu0 %v6058
        %v6203 = vpop.f32.mrf.mxu0
        %v6204 = vadd.f32 %v6003, %v6203
        %v6205 = vpop.f32.mrf.mxu0
        %v6206 = vadd.f32 %v6005, %v6205
        %6207 = vmatmul.bf16.gmra.mxu0 %v6059
        %v6208 = vpop.f32.mrf.mxu0
        %v6209 = vadd.f32 %v6008, %v6208
        %v6210 = vpop.f32.mrf.mxu0
        %v6211 = vadd.f32 %v6010, %v6210
        %6212 = vdwg.mxu0
        %v6213 = vld [vmem:[%s5345 + $0x4] sm:$0xf]
        %v6214 = vld [vmem:[%s5345 + $0x8] sm:$0xf]
        %v6215 = vld [vmem:[%s5345 + $0xc] sm:$0x1]
        %v6216 = vld [vmem:[%s5345 + $0x14] sm:$0xf]
        %v6217 = vld [vmem:[%s5345 + $0x18] sm:$0xf]
        %v6218 = vld [vmem:[%s5345 + $0x1c] sm:$0x1]
        %v6219 = vld [vmem:[%s5345 + $0x24] sm:$0xf]
        %v6220 = vld [vmem:[%s5345 + $0x28] sm:$0xf]
        %v6221 = vld [vmem:[%s5345 + $0x2c] sm:$0x1]
        %v6222 = vld [vmem:[%s5345 + $0x34] sm:$0xf]
        %v6223 = vld [vmem:[%s5345 + $0x38] sm:$0xf]
        %v6224 = vld [vmem:[%s5345 + $0x3c] sm:$0x1]
        %v6225 = vld [vmem:[%s5345 + $0x44] sm:$0xf]
        %v6226 = vld [vmem:[%s5345 + $0x48] sm:$0xf]
        %v6227 = vld [vmem:[%s5345 + $0x4c] sm:$0x1]
        %v6228 = vld [vmem:[%s5345 + $0x54] sm:$0xf]
        %v6229 = vld [vmem:[%s5345 + $0x58] sm:$0xf]
        %v6230 = vld [vmem:[%s5345 + $0x5c] sm:$0x1]
        %v6231 = vld [vmem:[%s5345 + $0x64] sm:$0xf]
        %v6232 = vld [vmem:[%s5345 + $0x68] sm:$0xf]
        %v6233 = vld [vmem:[%s5345 + $0x6c] sm:$0x1]
        %v6234 = vld [vmem:[%s5345 + $0x74] sm:$0xf]
        %v6235 = vld [vmem:[%s5345 + $0x78] sm:$0xf]
        %v6236 = vld [vmem:[%s5345 + $0x7c] sm:$0x1]
        %v6237 = vld [vmem:[%s5345 + $0x84] sm:$0xf]
        %v6238 = vld [vmem:[%s5345 + $0x88] sm:$0xf]
        %v6239 = vld [vmem:[%s5345 + $0x8c] sm:$0x1]
        %v6240 = vld [vmem:[%s5345 + $0x94] sm:$0xf]
        %v6241 = vld [vmem:[%s5345 + $0x98] sm:$0xf]
        %v6242 = vld [vmem:[%s5345 + $0x9c] sm:$0x1]
        %v6243 = vld [vmem:[%s5345 + $0xa4] sm:$0xf]
        %v6244 = vld [vmem:[%s5345 + $0xa8] sm:$0xf]
        %v6245 = vld [vmem:[%s5345 + $0xac] sm:$0x1]
        %v6246 = vld [vmem:[%s5345 + $0xb4] sm:$0xf]
        %v6247 = vld [vmem:[%s5345 + $0xb8] sm:$0xf]
        %v6248 = vld [vmem:[%s5345 + $0xbc] sm:$0x1]
        %v6249 = vld [vmem:[%s5345 + $0xc4] sm:$0xf]
        %v6250 = vld [vmem:[%s5345 + $0xc8] sm:$0xf]
        %v6251 = vld [vmem:[%s5345 + $0xcc] sm:$0x1]
        %v6252 = vld [vmem:[%s5345 + $0xd4] sm:$0xf]
        %v6253 = vld [vmem:[%s5345 + $0xd8] sm:$0xf]
        %v6254 = vld [vmem:[%s5345 + $0xdc] sm:$0x1]
        %v6255 = vld [vmem:[%s5345 + $0xe4] sm:$0xf]
        %v6256 = vld [vmem:[%s5345 + $0xe8] sm:$0xf]
        %v6257 = vld [vmem:[%s5345 + $0xec] sm:$0x1]
        %v6258 = vld [vmem:[%s5345 + $0xf4] sm:$0xf]
        %v6259 = vld [vmem:[%s5345 + $0xf8] sm:$0xf]
        %v6260 = vld [vmem:[%s5345 + $0xfc] sm:$0x1]
        %v6262 = vshrl.u32 %v6213, 16
        %v6264 = vrot.slane %v6262, 4
        %v6265 = vshll.u32 %v6213, 16
        %v6267 = vrot.slane %v6265, 5
        %v6268 = vor.u32 %v6264, %v6267
        %v6269 = vrot.slane %v6268, 4
        %v6271 = vshll.u32 %v6214, 16
        %v6273 = vrot.slane %v6271, 5
        %v6274 = vsel %vm1305, %v6269, %v6273
        %v6275 = vshrl.u32 %v6214, 16
        %v6277 = vrot.slane %v6275, 4
        %v6278 = vor.u32 %v6277, %v6273
        %v6279 = vrot.slane %v6278, 4
        %v6281 = vshll.u32 %v6215, 16
        %v6283 = vrot.slane %v6281, 5
        %v6284 = vsel %vm1305, %v6279, %v6283
        %v6286 = vshrl.u32 %v6216, 16
        %v6288 = vrot.slane %v6286, 4
        %v6289 = vshll.u32 %v6216, 16
        %v6291 = vrot.slane %v6289, 5
        %v6292 = vor.u32 %v6288, %v6291
        %v6293 = vrot.slane %v6292, 4
        %v6295 = vshll.u32 %v6217, 16
        %v6297 = vrot.slane %v6295, 5
        %v6298 = vsel %vm1305, %v6293, %v6297
        %v6299 = vshrl.u32 %v6217, 16
        %v6301 = vrot.slane %v6299, 4
        %v6302 = vor.u32 %v6301, %v6297
        %v6303 = vrot.slane %v6302, 4
        %v6305 = vshll.u32 %v6218, 16
        %v6307 = vrot.slane %v6305, 5
        %v6308 = vsel %vm1305, %v6303, %v6307
        %v6310 = vshrl.u32 %v6219, 16
        %v6312 = vrot.slane %v6310, 4
        %v6313 = vshll.u32 %v6219, 16
        %v6315 = vrot.slane %v6313, 5
        %v6316 = vor.u32 %v6312, %v6315
        %v6317 = vrot.slane %v6316, 4
        %v6319 = vshll.u32 %v6220, 16
        %v6321 = vrot.slane %v6319, 5
        %v6322 = vsel %vm1305, %v6317, %v6321
        %v6323 = vshrl.u32 %v6220, 16
        %v6325 = vrot.slane %v6323, 4
        %v6326 = vor.u32 %v6325, %v6321
        %v6327 = vrot.slane %v6326, 4
        %v6329 = vshll.u32 %v6221, 16
        %v6331 = vrot.slane %v6329, 5
        %v6332 = vsel %vm1305, %v6327, %v6331
        %v6334 = vshrl.u32 %v6222, 16
        %v6336 = vrot.slane %v6334, 4
        %v6337 = vshll.u32 %v6222, 16
        %v6339 = vrot.slane %v6337, 5
        %v6340 = vor.u32 %v6336, %v6339
        %v6341 = vrot.slane %v6340, 4
        %v6343 = vshll.u32 %v6223, 16
        %v6345 = vrot.slane %v6343, 5
        %v6346 = vsel %vm1305, %v6341, %v6345
        %v6347 = vshrl.u32 %v6223, 16
        %v6349 = vrot.slane %v6347, 4
        %v6350 = vor.u32 %v6349, %v6345
        %v6351 = vrot.slane %v6350, 4
        %v6353 = vshll.u32 %v6224, 16
        %v6355 = vrot.slane %v6353, 5
        %v6356 = vsel %vm1305, %v6351, %v6355
        %v6358 = vshrl.u32 %v6225, 16
        %v6360 = vrot.slane %v6358, 4
        %v6361 = vshll.u32 %v6225, 16
        %v6363 = vrot.slane %v6361, 5
        %v6364 = vor.u32 %v6360, %v6363
        %v6365 = vrot.slane %v6364, 4
        %v6367 = vshll.u32 %v6226, 16
        %v6369 = vrot.slane %v6367, 5
        %v6370 = vsel %vm1305, %v6365, %v6369
        %v6371 = vshrl.u32 %v6226, 16
        %v6373 = vrot.slane %v6371, 4
        %v6374 = vor.u32 %v6373, %v6369
        %v6375 = vrot.slane %v6374, 4
        %v6377 = vshll.u32 %v6227, 16
        %v6379 = vrot.slane %v6377, 5
        %v6380 = vsel %vm1305, %v6375, %v6379
        %v6382 = vshrl.u32 %v6228, 16
        %v6384 = vrot.slane %v6382, 4
        %v6385 = vshll.u32 %v6228, 16
        %v6387 = vrot.slane %v6385, 5
        %v6388 = vor.u32 %v6384, %v6387
        %v6389 = vrot.slane %v6388, 4
        %v6391 = vshll.u32 %v6229, 16
        %v6393 = vrot.slane %v6391, 5
        %v6394 = vsel %vm1305, %v6389, %v6393
        %v6395 = vshrl.u32 %v6229, 16
        %v6397 = vrot.slane %v6395, 4
        %v6398 = vor.u32 %v6397, %v6393
        %v6399 = vrot.slane %v6398, 4
        %v6401 = vshll.u32 %v6230, 16
        %v6403 = vrot.slane %v6401, 5
        %v6404 = vsel %vm1305, %v6399, %v6403
        %v6406 = vshrl.u32 %v6231, 16
        %v6408 = vrot.slane %v6406, 4
        %v6409 = vshll.u32 %v6231, 16
        %v6411 = vrot.slane %v6409, 5
        %v6412 = vor.u32 %v6408, %v6411
        %v6413 = vrot.slane %v6412, 4
        %v6415 = vshll.u32 %v6232, 16
        %v6417 = vrot.slane %v6415, 5
        %v6418 = vsel %vm1305, %v6413, %v6417
        %v6419 = vshrl.u32 %v6232, 16
        %v6421 = vrot.slane %v6419, 4
        %v6422 = vor.u32 %v6421, %v6417
        %v6423 = vrot.slane %v6422, 4
        %v6425 = vshll.u32 %v6233, 16
        %v6427 = vrot.slane %v6425, 5
        %v6428 = vsel %vm1305, %v6423, %v6427
        %v6430 = vshrl.u32 %v6234, 16
        %v6432 = vrot.slane %v6430, 4
        %v6433 = vshll.u32 %v6234, 16
        %v6435 = vrot.slane %v6433, 5
        %v6436 = vor.u32 %v6432, %v6435
        %v6437 = vrot.slane %v6436, 4
        %v6439 = vshll.u32 %v6235, 16
        %v6441 = vrot.slane %v6439, 5
        %v6442 = vsel %vm1305, %v6437, %v6441
        %v6443 = vshrl.u32 %v6235, 16
        %v6445 = vrot.slane %v6443, 4
        %v6446 = vor.u32 %v6445, %v6441
        %v6447 = vrot.slane %v6446, 4
        %v6449 = vshll.u32 %v6236, 16
        %v6451 = vrot.slane %v6449, 5
        %v6452 = vsel %vm1305, %v6447, %v6451
        %v6454 = vshrl.u32 %v6237, 16
        %v6456 = vrot.slane %v6454, 4
        %v6457 = vshll.u32 %v6237, 16
        %v6459 = vrot.slane %v6457, 5
        %v6460 = vor.u32 %v6456, %v6459
        %v6461 = vrot.slane %v6460, 4
        %v6463 = vshll.u32 %v6238, 16
        %v6465 = vrot.slane %v6463, 5
        %v6466 = vsel %vm1305, %v6461, %v6465
        %v6467 = vshrl.u32 %v6238, 16
        %v6469 = vrot.slane %v6467, 4
        %v6470 = vor.u32 %v6469, %v6465
        %v6471 = vrot.slane %v6470, 4
        %v6473 = vshll.u32 %v6239, 16
        %v6475 = vrot.slane %v6473, 5
        %v6476 = vsel %vm1305, %v6471, %v6475
        %v6478 = vshrl.u32 %v6240, 16
        %v6480 = vrot.slane %v6478, 4
        %v6481 = vshll.u32 %v6240, 16
        %v6483 = vrot.slane %v6481, 5
        %v6484 = vor.u32 %v6480, %v6483
        %v6485 = vrot.slane %v6484, 4
        %v6487 = vshll.u32 %v6241, 16
        %v6489 = vrot.slane %v6487, 5
        %v6490 = vsel %vm1305, %v6485, %v6489
        %v6491 = vshrl.u32 %v6241, 16
        %v6493 = vrot.slane %v6491, 4
        %v6494 = vor.u32 %v6493, %v6489
        %v6495 = vrot.slane %v6494, 4
        %v6497 = vshll.u32 %v6242, 16
        %v6499 = vrot.slane %v6497, 5
        %v6500 = vsel %vm1305, %v6495, %v6499
        %v6502 = vshrl.u32 %v6243, 16
        %v6504 = vrot.slane %v6502, 4
        %v6505 = vshll.u32 %v6243, 16
        %v6507 = vrot.slane %v6505, 5
        %v6508 = vor.u32 %v6504, %v6507
        %v6509 = vrot.slane %v6508, 4
        %v6511 = vshll.u32 %v6244, 16
        %v6513 = vrot.slane %v6511, 5
        %v6514 = vsel %vm1305, %v6509, %v6513
        %v6515 = vshrl.u32 %v6244, 16
        %v6517 = vrot.slane %v6515, 4
        %v6518 = vor.u32 %v6517, %v6513
        %v6519 = vrot.slane %v6518, 4
        %v6521 = vshll.u32 %v6245, 16
        %v6523 = vrot.slane %v6521, 5
        %v6524 = vsel %vm1305, %v6519, %v6523
        %v6526 = vshrl.u32 %v6246, 16
        %v6528 = vrot.slane %v6526, 4
        %v6529 = vshll.u32 %v6246, 16
        %v6531 = vrot.slane %v6529, 5
        %v6532 = vor.u32 %v6528, %v6531
        %v6533 = vrot.slane %v6532, 4
        %v6535 = vshll.u32 %v6247, 16
        %v6537 = vrot.slane %v6535, 5
        %v6538 = vsel %vm1305, %v6533, %v6537
        %v6539 = vshrl.u32 %v6247, 16
        %v6541 = vrot.slane %v6539, 4
        %v6542 = vor.u32 %v6541, %v6537
        %v6543 = vrot.slane %v6542, 4
        %v6545 = vshll.u32 %v6248, 16
        %v6547 = vrot.slane %v6545, 5
        %v6548 = vsel %vm1305, %v6543, %v6547
        %v6550 = vshrl.u32 %v6249, 16
        %v6552 = vrot.slane %v6550, 4
        %v6553 = vshll.u32 %v6249, 16
        %v6555 = vrot.slane %v6553, 5
        %v6556 = vor.u32 %v6552, %v6555
        %v6557 = vrot.slane %v6556, 4
        %v6559 = vshll.u32 %v6250, 16
        %v6561 = vrot.slane %v6559, 5
        %v6562 = vsel %vm1305, %v6557, %v6561
        %v6563 = vshrl.u32 %v6250, 16
        %v6565 = vrot.slane %v6563, 4
        %v6566 = vor.u32 %v6565, %v6561
        %v6567 = vrot.slane %v6566, 4
        %v6569 = vshll.u32 %v6251, 16
        %v6571 = vrot.slane %v6569, 5
        %v6572 = vsel %vm1305, %v6567, %v6571
        %v6574 = vshrl.u32 %v6252, 16
        %v6576 = vrot.slane %v6574, 4
        %v6577 = vshll.u32 %v6252, 16
        %v6579 = vrot.slane %v6577, 5
        %v6580 = vor.u32 %v6576, %v6579
        %v6581 = vrot.slane %v6580, 4
        %v6583 = vshll.u32 %v6253, 16
        %v6585 = vrot.slane %v6583, 5
        %v6586 = vsel %vm1305, %v6581, %v6585
        %v6587 = vshrl.u32 %v6253, 16
        %v6589 = vrot.slane %v6587, 4
        %v6590 = vor.u32 %v6589, %v6585
        %v6591 = vrot.slane %v6590, 4
        %v6593 = vshll.u32 %v6254, 16
        %v6595 = vrot.slane %v6593, 5
        %v6596 = vsel %vm1305, %v6591, %v6595
        %v6598 = vshrl.u32 %v6255, 16
        %v6600 = vrot.slane %v6598, 4
        %v6601 = vshll.u32 %v6255, 16
        %v6603 = vrot.slane %v6601, 5
        %v6604 = vor.u32 %v6600, %v6603
        %v6605 = vrot.slane %v6604, 4
        %v6607 = vshll.u32 %v6256, 16
        %v6609 = vrot.slane %v6607, 5
        %v6610 = vsel %vm1305, %v6605, %v6609
        %v6611 = vshrl.u32 %v6256, 16
        %v6613 = vrot.slane %v6611, 4
        %v6614 = vor.u32 %v6613, %v6609
        %v6615 = vrot.slane %v6614, 4
        %v6617 = vshll.u32 %v6257, 16
        %v6619 = vrot.slane %v6617, 5
        %v6620 = vsel %vm1305, %v6615, %v6619
        %v6622 = vshrl.u32 %v6258, 16
        %v6624 = vrot.slane %v6622, 4
        %v6625 = vshll.u32 %v6258, 16
        %v6627 = vrot.slane %v6625, 5
        %v6628 = vor.u32 %v6624, %v6627
        %v6629 = vrot.slane %v6628, 4
        %v6631 = vshll.u32 %v6259, 16
        %v6633 = vrot.slane %v6631, 5
        %v6634 = vsel %vm1305, %v6629, %v6633
        %v6635 = vshrl.u32 %v6259, 16
        %v6637 = vrot.slane %v6635, 4
        %v6638 = vor.u32 %v6637, %v6633
        %v6639 = vrot.slane %v6638, 4
        %v6641 = vshll.u32 %v6260, 16
        %v6643 = vrot.slane %v6641, 5
        %v6644 = vsel %vm1305, %v6639, %v6643
        %s6645 = scalar_lea.vmem [#allocation8], 128
        %v6646 = vld [vmem:[%s6645] sm:$0xf]
        %v6647 = vld [vmem:[%s6645 + $0x4] sm:$0xf]
        %v6648 = vld [vmem:[%s6645 + $0x8] sm:$0xf]
        %v6649 = vld [vmem:[%s6645 + $0xc] sm:$0xf]
        %v6650 = vld [vmem:[%s6645 + $0x10] sm:$0xf]
        %v6651 = vld [vmem:[%s6645 + $0x14] sm:$0xf]
        %v6652 = vld [vmem:[%s6645 + $0x18] sm:$0xf]
        %v6653 = vld [vmem:[%s6645 + $0x1c] sm:$0xf]
        %v6654 = vld [vmem:[%s6645 + $0x20] sm:$0xf]
        %v6655 = vld [vmem:[%s6645 + $0x24] sm:$0xf]
        %v6656 = vld [vmem:[%s6645 + $0x28] sm:$0xf]
        %v6657 = vld [vmem:[%s6645 + $0x2c] sm:$0xf]
        %v6658 = vld [vmem:[%s6645 + $0x30] sm:$0xf]
        %v6659 = vld [vmem:[%s6645 + $0x34] sm:$0xf]
        %v6660 = vld [vmem:[%s6645 + $0x38] sm:$0xf]
        %v6661 = vld [vmem:[%s6645 + $0x3c] sm:$0xf]
        %v6662 = vunpack.c.l.b16 %v6274
        %v6663 = vunpack.c.l.b16 %v6284
        %v6664 = vunpack.c.l.b16 %v6298
        %v6665 = vunpack.c.l.b16 %v6308
        %v6666 = vunpack.c.l.b16 %v6322
        %v6667 = vunpack.c.l.b16 %v6332
        %v6668 = vunpack.c.l.b16 %v6346
        %v6669 = vunpack.c.l.b16 %v6356
        %v6670 = vunpack.c.l.b16 %v6370
        %v6671 = vunpack.c.l.b16 %v6380
        %v6672 = vunpack.c.l.b16 %v6394
        %v6673 = vunpack.c.l.b16 %v6404
        %v6674 = vunpack.c.l.b16 %v6418
        %v6675 = vunpack.c.l.b16 %v6428
        %v6676 = vunpack.c.l.b16 %v6442
        %v6677 = vunpack.c.l.b16 %v6452
        %v6678 = vunpack.c.l.b16 %v6466
        %v6679 = vunpack.c.l.b16 %v6476
        %v6680 = vunpack.c.l.b16 %v6490
        %v6681 = vunpack.c.l.b16 %v6500
        %v6682 = vunpack.c.l.b16 %v6514
        %v6683 = vunpack.c.l.b16 %v6524
        %v6684 = vunpack.c.l.b16 %v6538
        %v6685 = vunpack.c.l.b16 %v6548
        %v6686 = vunpack.c.l.b16 %v6562
        %v6687 = vunpack.c.l.b16 %v6572
        %v6688 = vunpack.c.l.b16 %v6586
        %v6689 = vunpack.c.l.b16 %v6596
        %v6690 = vunpack.c.l.b16 %v6610
        %v6691 = vunpack.c.l.b16 %v6620
        %v6692 = vunpack.c.l.b16 %v6634
        %v6693 = vunpack.c.l.b16 %v6644
        %v6694 = vpack.c.b16 %v6663, %v6662
        %v6695 = vpack.c.b16 %v6665, %v6664
        %v6696 = vpack.c.b16 %v6667, %v6666
        %v6697 = vpack.c.b16 %v6669, %v6668
        %v6698 = vpack.c.b16 %v6671, %v6670
        %v6699 = vpack.c.b16 %v6673, %v6672
        %v6700 = vpack.c.b16 %v6675, %v6674
        %v6701 = vpack.c.b16 %v6677, %v6676
        %v6702 = vpack.c.b16 %v6679, %v6678
        %v6703 = vpack.c.b16 %v6681, %v6680
        %v6704 = vpack.c.b16 %v6683, %v6682
        %v6705 = vpack.c.b16 %v6685, %v6684
        %v6706 = vpack.c.b16 %v6687, %v6686
        %v6707 = vpack.c.b16 %v6689, %v6688
        %v6708 = vpack.c.b16 %v6691, %v6690
        %v6709 = vpack.c.b16 %v6693, %v6692
        %v6742 = vunpack.c.l.b16 %v6646
        %v6743 = vunpack.c.l.b16 %v6647
        %v6744 = vunpack.c.l.b16 %v6648
        %v6745 = vunpack.c.l.b16 %v6649
        %v6746 = vunpack.c.l.b16 %v6650
        %v6747 = vunpack.c.l.b16 %v6651
        %v6748 = vunpack.c.l.b16 %v6652
        %v6749 = vunpack.c.l.b16 %v6653
        %v6750 = vunpack.c.l.b16 %v6654
        %v6751 = vunpack.c.l.b16 %v6655
        %v6752 = vunpack.c.l.b16 %v6656
        %v6753 = vunpack.c.l.b16 %v6657
        %v6754 = vunpack.c.l.b16 %v6658
        %v6755 = vunpack.c.l.b16 %v6659
        %v6756 = vunpack.c.l.b16 %v6660
        %v6757 = vunpack.c.l.b16 %v6661
        %v6758 = vpack.c.b16 %v6743, %v6742
        %v6759 = vpack.c.b16 %v6745, %v6744
        %v6760 = vpack.c.b16 %v6747, %v6746
        %v6761 = vpack.c.b16 %v6749, %v6748
        %v6762 = vpack.c.b16 %v6751, %v6750
        %v6763 = vpack.c.b16 %v6753, %v6752
        %v6764 = vpack.c.b16 %v6755, %v6754
        %v6765 = vpack.c.b16 %v6757, %v6756
        %6774 = vmatpush.bf16.msra.mxu0 %v6765
        %6775 = vmatpush.bf16.msra.mxu0 %v6764
        %6776 = vmatpush.bf16.msra.mxu0 %v6763
        %6777 = vmatpush.bf16.msra.mxu0 %v6762
        %6778 = vmatpush.bf16.msra.mxu0 %v6761
        %6779 = vmatpush.bf16.msra.mxu0 %v6760
        %6780 = vmatpush.bf16.msra.mxu0 %v6759
        %6781 = vmatpush.bf16.msra.mxu0 %v6758
        %6782 = vmatmul.bf16.gmra.mxu0 %v6694
        %v6783 = vpop.f32.mrf.mxu0
        %v6784 = vadd.f32 0.0, %v6783
        %v6785 = vpop.f32.mrf.mxu0
        %v6786 = vadd.f32 0.0, %v6785
        %6787 = vmatmul.bf16.gmra.mxu0 %v6695
        %v6788 = vpop.f32.mrf.mxu0
        %v6789 = vadd.f32 0.0, %v6788
        %v6790 = vpop.f32.mrf.mxu0
        %v6791 = vadd.f32 0.0, %v6790
        %6792 = vmatmul.bf16.gmra.mxu0 %v6696
        %v6793 = vpop.f32.mrf.mxu0
        %v6794 = vadd.f32 0.0, %v6793
        %v6795 = vpop.f32.mrf.mxu0
        %v6796 = vadd.f32 0.0, %v6795
        %6797 = vmatmul.bf16.gmra.mxu0 %v6697
        %v6798 = vpop.f32.mrf.mxu0
        %v6799 = vadd.f32 0.0, %v6798
        %v6800 = vpop.f32.mrf.mxu0
        %v6801 = vadd.f32 0.0, %v6800
        %6802 = vmatmul.bf16.gmra.mxu0 %v6698
        %v6803 = vpop.f32.mrf.mxu0
        %v6804 = vadd.f32 0.0, %v6803
        %v6805 = vpop.f32.mrf.mxu0
        %v6806 = vadd.f32 0.0, %v6805
        %6807 = vmatmul.bf16.gmra.mxu0 %v6699
        %v6808 = vpop.f32.mrf.mxu0
        %v6809 = vadd.f32 0.0, %v6808
        %v6810 = vpop.f32.mrf.mxu0
        %v6811 = vadd.f32 0.0, %v6810
        %6812 = vmatmul.bf16.gmra.mxu0 %v6700
        %v6813 = vpop.f32.mrf.mxu0
        %v6814 = vadd.f32 0.0, %v6813
        %v6815 = vpop.f32.mrf.mxu0
        %v6816 = vadd.f32 0.0, %v6815
        %6817 = vmatmul.bf16.gmra.mxu0 %v6701
        %v6818 = vpop.f32.mrf.mxu0
        %v6819 = vadd.f32 0.0, %v6818
        %v6820 = vpop.f32.mrf.mxu0
        %v6821 = vadd.f32 0.0, %v6820
        %6822 = vmatmul.bf16.gmra.mxu0 %v6702
        %v6823 = vpop.f32.mrf.mxu0
        %v6824 = vadd.f32 0.0, %v6823
        %v6825 = vpop.f32.mrf.mxu0
        %v6826 = vadd.f32 0.0, %v6825
        %6827 = vmatmul.bf16.gmra.mxu0 %v6703
        %v6828 = vpop.f32.mrf.mxu0
        %v6829 = vadd.f32 0.0, %v6828
        %v6830 = vpop.f32.mrf.mxu0
        %v6831 = vadd.f32 0.0, %v6830
        %6832 = vmatmul.bf16.gmra.mxu0 %v6704
        %v6833 = vpop.f32.mrf.mxu0
        %v6834 = vadd.f32 0.0, %v6833
        %v6835 = vpop.f32.mrf.mxu0
        %v6836 = vadd.f32 0.0, %v6835
        %6837 = vmatmul.bf16.gmra.mxu0 %v6705
        %v6838 = vpop.f32.mrf.mxu0
        %v6839 = vadd.f32 0.0, %v6838
        %v6840 = vpop.f32.mrf.mxu0
        %v6841 = vadd.f32 0.0, %v6840
        %6842 = vmatmul.bf16.gmra.mxu0 %v6706
        %v6843 = vpop.f32.mrf.mxu0
        %v6844 = vadd.f32 0.0, %v6843
        %v6845 = vpop.f32.mrf.mxu0
        %v6846 = vadd.f32 0.0, %v6845
        %6847 = vmatmul.bf16.gmra.mxu0 %v6707
        %v6848 = vpop.f32.mrf.mxu0
        %v6849 = vadd.f32 0.0, %v6848
        %v6850 = vpop.f32.mrf.mxu0
        %v6851 = vadd.f32 0.0, %v6850
        %6852 = vmatmul.bf16.gmra.mxu0 %v6708
        %v6853 = vpop.f32.mrf.mxu0
        %v6854 = vadd.f32 0.0, %v6853
        %v6855 = vpop.f32.mrf.mxu0
        %v6856 = vadd.f32 0.0, %v6855
        %6857 = vmatmul.bf16.gmra.mxu0 %v6709
        %v6858 = vpop.f32.mrf.mxu0
        %v6859 = vadd.f32 0.0, %v6858
        %v6860 = vpop.f32.mrf.mxu0
        %v6861 = vadd.f32 0.0, %v6860
        %6862 = vdwg.mxu0
        %v6863 = vadd.f32 %v6134, %v6784
        %v6864 = vadd.f32 %v6136, %v6786
        %v6865 = vadd.f32 %v6139, %v6789
        %v6866 = vadd.f32 %v6141, %v6791
        %v6867 = vadd.f32 %v6144, %v6794
        %v6868 = vadd.f32 %v6146, %v6796
        %v6869 = vadd.f32 %v6149, %v6799
        %v6870 = vadd.f32 %v6151, %v6801
        %v6871 = vadd.f32 %v6154, %v6804
        %v6872 = vadd.f32 %v6156, %v6806
        %v6873 = vadd.f32 %v6159, %v6809
        %v6874 = vadd.f32 %v6161, %v6811
        %v6875 = vadd.f32 %v6164, %v6814
        %v6876 = vadd.f32 %v6166, %v6816
        %v6877 = vadd.f32 %v6169, %v6819
        %v6878 = vadd.f32 %v6171, %v6821
        %v6879 = vadd.f32 %v6174, %v6824
        %v6880 = vadd.f32 %v6176, %v6826
        %v6881 = vadd.f32 %v6179, %v6829
        %v6882 = vadd.f32 %v6181, %v6831
        %v6883 = vadd.f32 %v6184, %v6834
        %v6884 = vadd.f32 %v6186, %v6836
        %v6885 = vadd.f32 %v6189, %v6839
        %v6886 = vadd.f32 %v6191, %v6841
        %v6887 = vadd.f32 %v6194, %v6844
        %v6888 = vadd.f32 %v6196, %v6846
        %v6889 = vadd.f32 %v6199, %v6849
        %v6890 = vadd.f32 %v6201, %v6851
        %v6891 = vadd.f32 %v6204, %v6854
        %v6892 = vadd.f32 %v6206, %v6856
        %v6893 = vadd.f32 %v6209, %v6859
        %v6894 = vadd.f32 %v6211, %v6861
        %v6895 = vld [vmem:[%s5311] sm:$0x8]
        %v6896 = vld [vmem:[%s5311 + $0x4] sm:$0xf]
        %v6897 = vld [vmem:[%s5311 + $0x8] sm:$0xf]
        %v6898 = vld [vmem:[%s5311 + $0x10] sm:$0x8]
        %v6899 = vld [vmem:[%s5311 + $0x14] sm:$0xf]
        %v6900 = vld [vmem:[%s5311 + $0x18] sm:$0xf]
        %v6901 = vld [vmem:[%s5311 + $0x20] sm:$0x8]
        %v6902 = vld [vmem:[%s5311 + $0x24] sm:$0xf]
        %v6903 = vld [vmem:[%s5311 + $0x28] sm:$0xf]
        %v6904 = vld [vmem:[%s5311 + $0x30] sm:$0x8]
        %v6905 = vld [vmem:[%s5311 + $0x34] sm:$0xf]
        %v6906 = vld [vmem:[%s5311 + $0x38] sm:$0xf]
        %v6907 = vld [vmem:[%s5311 + $0x40] sm:$0x8]
        %v6908 = vld [vmem:[%s5311 + $0x44] sm:$0xf]
        %v6909 = vld [vmem:[%s5311 + $0x48] sm:$0xf]
        %v6910 = vld [vmem:[%s5311 + $0x50] sm:$0x8]
        %v6911 = vld [vmem:[%s5311 + $0x54] sm:$0xf]
        %v6912 = vld [vmem:[%s5311 + $0x58] sm:$0xf]
        %v6913 = vld [vmem:[%s5311 + $0x60] sm:$0x8]
        %v6914 = vld [vmem:[%s5311 + $0x64] sm:$0xf]
        %v6915 = vld [vmem:[%s5311 + $0x68] sm:$0xf]
        %v6916 = vld [vmem:[%s5311 + $0x70] sm:$0x8]
        %v6917 = vld [vmem:[%s5311 + $0x74] sm:$0xf]
        %v6918 = vld [vmem:[%s5311 + $0x78] sm:$0xf]
        %v6919 = vld [vmem:[%s5311 + $0x80] sm:$0x8]
        %v6920 = vld [vmem:[%s5311 + $0x84] sm:$0xf]
        %v6921 = vld [vmem:[%s5311 + $0x88] sm:$0xf]
        %v6922 = vld [vmem:[%s5311 + $0x90] sm:$0x8]
        %v6923 = vld [vmem:[%s5311 + $0x94] sm:$0xf]
        %v6924 = vld [vmem:[%s5311 + $0x98] sm:$0xf]
        %v6925 = vld [vmem:[%s5311 + $0xa0] sm:$0x8]
        %v6926 = vld [vmem:[%s5311 + $0xa4] sm:$0xf]
        %v6927 = vld [vmem:[%s5311 + $0xa8] sm:$0xf]
        %v6928 = vld [vmem:[%s5311 + $0xb0] sm:$0x8]
        %v6929 = vld [vmem:[%s5311 + $0xb4] sm:$0xf]
        %v6930 = vld [vmem:[%s5311 + $0xb8] sm:$0xf]
        %v6931 = vld [vmem:[%s5311 + $0xc0] sm:$0x8]
        %v6932 = vld [vmem:[%s5311 + $0xc4] sm:$0xf]
        %v6933 = vld [vmem:[%s5311 + $0xc8] sm:$0xf]
        %v6934 = vld [vmem:[%s5311 + $0xd0] sm:$0x8]
        %v6935 = vld [vmem:[%s5311 + $0xd4] sm:$0xf]
        %v6936 = vld [vmem:[%s5311 + $0xd8] sm:$0xf]
        %v6937 = vld [vmem:[%s5311 + $0xe0] sm:$0x8]
        %v6938 = vld [vmem:[%s5311 + $0xe4] sm:$0xf]
        %v6939 = vld [vmem:[%s5311 + $0xe8] sm:$0xf]
        %v6940 = vld [vmem:[%s5311 + $0xf0] sm:$0x8]
        %v6941 = vld [vmem:[%s5311 + $0xf4] sm:$0xf]
        %v6942 = vld [vmem:[%s5311 + $0xf8] sm:$0xf]
        %v6944 = vshrl.u32 %v6895, 16
        %v6946 = vrot.slane %v6944, 7
        %v6947 = vrot.slane %v6946, 4
        %v6949 = vshrl.u32 %v6896, 16
        %v6951 = vrot.slane %v6949, 7
        %v6952 = vshll.u32 %v6896, 16
        %v6954 = vor.u32 %v6951, %v6952
        %v6955 = vsel %vm435, %v6947, %v6954
        %v6956 = vrot.slane %v6951, 4
        %v6958 = vshrl.u32 %v6897, 16
        %v6960 = vrot.slane %v6958, 7
        %v6961 = vshll.u32 %v6897, 16
        %v6963 = vor.u32 %v6960, %v6961
        %v6964 = vsel %vm435, %v6956, %v6963
        %v6966 = vshrl.u32 %v6898, 16
        %v6968 = vrot.slane %v6966, 7
        %v6969 = vrot.slane %v6968, 4
        %v6971 = vshrl.u32 %v6899, 16
        %v6973 = vrot.slane %v6971, 7
        %v6974 = vshll.u32 %v6899, 16
        %v6976 = vor.u32 %v6973, %v6974
        %v6977 = vsel %vm435, %v6969, %v6976
        %v6978 = vrot.slane %v6973, 4
        %v6980 = vshrl.u32 %v6900, 16
        %v6982 = vrot.slane %v6980, 7
        %v6983 = vshll.u32 %v6900, 16
        %v6985 = vor.u32 %v6982, %v6983
        %v6986 = vsel %vm435, %v6978, %v6985
        %v6988 = vshrl.u32 %v6901, 16
        %v6990 = vrot.slane %v6988, 7
        %v6991 = vrot.slane %v6990, 4
        %v6993 = vshrl.u32 %v6902, 16
        %v6995 = vrot.slane %v6993, 7
        %v6996 = vshll.u32 %v6902, 16
        %v6998 = vor.u32 %v6995, %v6996
        %v6999 = vsel %vm435, %v6991, %v6998
        %v7000 = vrot.slane %v6995, 4
        %v7002 = vshrl.u32 %v6903, 16
        %v7004 = vrot.slane %v7002, 7
        %v7005 = vshll.u32 %v6903, 16
        %v7007 = vor.u32 %v7004, %v7005
        %v7008 = vsel %vm435, %v7000, %v7007
        %v7010 = vshrl.u32 %v6904, 16
        %v7012 = vrot.slane %v7010, 7
        %v7013 = vrot.slane %v7012, 4
        %v7015 = vshrl.u32 %v6905, 16
        %v7017 = vrot.slane %v7015, 7
        %v7018 = vshll.u32 %v6905, 16
        %v7020 = vor.u32 %v7017, %v7018
        %v7021 = vsel %vm435, %v7013, %v7020
        %v7022 = vrot.slane %v7017, 4
        %v7024 = vshrl.u32 %v6906, 16
        %v7026 = vrot.slane %v7024, 7
        %v7027 = vshll.u32 %v6906, 16
        %v7029 = vor.u32 %v7026, %v7027
        %v7030 = vsel %vm435, %v7022, %v7029
        %v7032 = vshrl.u32 %v6907, 16
        %v7034 = vrot.slane %v7032, 7
        %v7035 = vrot.slane %v7034, 4
        %v7037 = vshrl.u32 %v6908, 16
        %v7039 = vrot.slane %v7037, 7
        %v7040 = vshll.u32 %v6908, 16
        %v7042 = vor.u32 %v7039, %v7040
        %v7043 = vsel %vm435, %v7035, %v7042
        %v7044 = vrot.slane %v7039, 4
        %v7046 = vshrl.u32 %v6909, 16
        %v7048 = vrot.slane %v7046, 7
        %v7049 = vshll.u32 %v6909, 16
        %v7051 = vor.u32 %v7048, %v7049
        %v7052 = vsel %vm435, %v7044, %v7051
        %v7054 = vshrl.u32 %v6910, 16
        %v7056 = vrot.slane %v7054, 7
        %v7057 = vrot.slane %v7056, 4
        %v7059 = vshrl.u32 %v6911, 16
        %v7061 = vrot.slane %v7059, 7
        %v7062 = vshll.u32 %v6911, 16
        %v7064 = vor.u32 %v7061, %v7062
        %v7065 = vsel %vm435, %v7057, %v7064
        %v7066 = vrot.slane %v7061, 4
        %v7068 = vshrl.u32 %v6912, 16
        %v7070 = vrot.slane %v7068, 7
        %v7071 = vshll.u32 %v6912, 16
        %v7073 = vor.u32 %v7070, %v7071
        %v7074 = vsel %vm435, %v7066, %v7073
        %v7076 = vshrl.u32 %v6913, 16
        %v7078 = vrot.slane %v7076, 7
        %v7079 = vrot.slane %v7078, 4
        %v7081 = vshrl.u32 %v6914, 16
        %v7083 = vrot.slane %v7081, 7
        %v7084 = vshll.u32 %v6914, 16
        %v7086 = vor.u32 %v7083, %v7084
        %v7087 = vsel %vm435, %v7079, %v7086
        %v7088 = vrot.slane %v7083, 4
        %v7090 = vshrl.u32 %v6915, 16
        %v7092 = vrot.slane %v7090, 7
        %v7093 = vshll.u32 %v6915, 16
        %v7095 = vor.u32 %v7092, %v7093
        %v7096 = vsel %vm435, %v7088, %v7095
        %v7098 = vshrl.u32 %v6916, 16
        %v7100 = vrot.slane %v7098, 7
        %v7101 = vrot.slane %v7100, 4
        %v7103 = vshrl.u32 %v6917, 16
        %v7105 = vrot.slane %v7103, 7
        %v7106 = vshll.u32 %v6917, 16
        %v7108 = vor.u32 %v7105, %v7106
        %v7109 = vsel %vm435, %v7101, %v7108
        %v7110 = vrot.slane %v7105, 4
        %v7112 = vshrl.u32 %v6918, 16
        %v7114 = vrot.slane %v7112, 7
        %v7115 = vshll.u32 %v6918, 16
        %v7117 = vor.u32 %v7114, %v7115
        %v7118 = vsel %vm435, %v7110, %v7117
        %v7120 = vshrl.u32 %v6919, 16
        %v7122 = vrot.slane %v7120, 7
        %v7123 = vrot.slane %v7122, 4
        %v7125 = vshrl.u32 %v6920, 16
        %v7127 = vrot.slane %v7125, 7
        %v7128 = vshll.u32 %v6920, 16
        %v7130 = vor.u32 %v7127, %v7128
        %v7131 = vsel %vm435, %v7123, %v7130
        %v7132 = vrot.slane %v7127, 4
        %v7134 = vshrl.u32 %v6921, 16
        %v7136 = vrot.slane %v7134, 7
        %v7137 = vshll.u32 %v6921, 16
        %v7139 = vor.u32 %v7136, %v7137
        %v7140 = vsel %vm435, %v7132, %v7139
        %v7142 = vshrl.u32 %v6922, 16
        %v7144 = vrot.slane %v7142, 7
        %v7145 = vrot.slane %v7144, 4
        %v7147 = vshrl.u32 %v6923, 16
        %v7149 = vrot.slane %v7147, 7
        %v7150 = vshll.u32 %v6923, 16
        %v7152 = vor.u32 %v7149, %v7150
        %v7153 = vsel %vm435, %v7145, %v7152
        %v7154 = vrot.slane %v7149, 4
        %v7156 = vshrl.u32 %v6924, 16
        %v7158 = vrot.slane %v7156, 7
        %v7159 = vshll.u32 %v6924, 16
        %v7161 = vor.u32 %v7158, %v7159
        %v7162 = vsel %vm435, %v7154, %v7161
        %v7164 = vshrl.u32 %v6925, 16
        %v7166 = vrot.slane %v7164, 7
        %v7167 = vrot.slane %v7166, 4
        %v7169 = vshrl.u32 %v6926, 16
        %v7171 = vrot.slane %v7169, 7
        %v7172 = vshll.u32 %v6926, 16
        %v7174 = vor.u32 %v7171, %v7172
        %v7175 = vsel %vm435, %v7167, %v7174
        %v7176 = vrot.slane %v7171, 4
        %v7178 = vshrl.u32 %v6927, 16
        %v7180 = vrot.slane %v7178, 7
        %v7181 = vshll.u32 %v6927, 16
        %v7183 = vor.u32 %v7180, %v7181
        %v7184 = vsel %vm435, %v7176, %v7183
        %v7186 = vshrl.u32 %v6928, 16
        %v7188 = vrot.slane %v7186, 7
        %v7189 = vrot.slane %v7188, 4
        %v7191 = vshrl.u32 %v6929, 16
        %v7193 = vrot.slane %v7191, 7
        %v7194 = vshll.u32 %v6929, 16
        %v7196 = vor.u32 %v7193, %v7194
        %v7197 = vsel %vm435, %v7189, %v7196
        %v7198 = vrot.slane %v7193, 4
        %v7200 = vshrl.u32 %v6930, 16
        %v7202 = vrot.slane %v7200, 7
        %v7203 = vshll.u32 %v6930, 16
        %v7205 = vor.u32 %v7202, %v7203
        %v7206 = vsel %vm435, %v7198, %v7205
        %v7208 = vshrl.u32 %v6931, 16
        %v7210 = vrot.slane %v7208, 7
        %v7211 = vrot.slane %v7210, 4
        %v7213 = vshrl.u32 %v6932, 16
        %v7215 = vrot.slane %v7213, 7
        %v7216 = vshll.u32 %v6932, 16
        %v7218 = vor.u32 %v7215, %v7216
        %v7219 = vsel %vm435, %v7211, %v7218
        %v7220 = vrot.slane %v7215, 4
        %v7222 = vshrl.u32 %v6933, 16
        %v7224 = vrot.slane %v7222, 7
        %v7225 = vshll.u32 %v6933, 16
        %v7227 = vor.u32 %v7224, %v7225
        %v7228 = vsel %vm435, %v7220, %v7227
        %v7230 = vshrl.u32 %v6934, 16
        %v7232 = vrot.slane %v7230, 7
        %v7233 = vrot.slane %v7232, 4
        %v7235 = vshrl.u32 %v6935, 16
        %v7237 = vrot.slane %v7235, 7
        %v7238 = vshll.u32 %v6935, 16
        %v7240 = vor.u32 %v7237, %v7238
        %v7241 = vsel %vm435, %v7233, %v7240
        %v7242 = vrot.slane %v7237, 4
        %v7244 = vshrl.u32 %v6936, 16
        %v7246 = vrot.slane %v7244, 7
        %v7247 = vshll.u32 %v6936, 16
        %v7249 = vor.u32 %v7246, %v7247
        %v7250 = vsel %vm435, %v7242, %v7249
        %v7252 = vshrl.u32 %v6937, 16
        %v7254 = vrot.slane %v7252, 7
        %v7255 = vrot.slane %v7254, 4
        %v7257 = vshrl.u32 %v6938, 16
        %v7259 = vrot.slane %v7257, 7
        %v7260 = vshll.u32 %v6938, 16
        %v7262 = vor.u32 %v7259, %v7260
        %v7263 = vsel %vm435, %v7255, %v7262
        %v7264 = vrot.slane %v7259, 4
        %v7266 = vshrl.u32 %v6939, 16
        %v7268 = vrot.slane %v7266, 7
        %v7269 = vshll.u32 %v6939, 16
        %v7271 = vor.u32 %v7268, %v7269
        %v7272 = vsel %vm435, %v7264, %v7271
        %v7274 = vshrl.u32 %v6940, 16
        %v7276 = vrot.slane %v7274, 7
        %v7277 = vrot.slane %v7276, 4
        %v7279 = vshrl.u32 %v6941, 16
        %v7281 = vrot.slane %v7279, 7
        %v7282 = vshll.u32 %v6941, 16
        %v7284 = vor.u32 %v7281, %v7282
        %v7285 = vsel %vm435, %v7277, %v7284
        %v7286 = vrot.slane %v7281, 4
        %v7288 = vshrl.u32 %v6942, 16
        %v7290 = vrot.slane %v7288, 7
        %v7291 = vshll.u32 %v6942, 16
        %v7293 = vor.u32 %v7290, %v7291
        %v7294 = vsel %vm435, %v7286, %v7293
        %s7295 = scalar_lea.vmem [#allocation8], 192
        %v7296 = vld [vmem:[%s7295] sm:$0xf]
        %v7297 = vld [vmem:[%s7295 + $0x4] sm:$0xf]
        %v7298 = vld [vmem:[%s7295 + $0x8] sm:$0xf]
        %v7299 = vld [vmem:[%s7295 + $0xc] sm:$0xf]
        %v7300 = vld [vmem:[%s7295 + $0x10] sm:$0xf]
        %v7301 = vld [vmem:[%s7295 + $0x14] sm:$0xf]
        %v7302 = vld [vmem:[%s7295 + $0x18] sm:$0xf]
        %v7303 = vld [vmem:[%s7295 + $0x1c] sm:$0xf]
        %v7304 = vld [vmem:[%s7295 + $0x20] sm:$0xf]
        %v7305 = vld [vmem:[%s7295 + $0x24] sm:$0xf]
        %v7306 = vld [vmem:[%s7295 + $0x28] sm:$0xf]
        %v7307 = vld [vmem:[%s7295 + $0x2c] sm:$0xf]
        %v7308 = vld [vmem:[%s7295 + $0x30] sm:$0xf]
        %v7309 = vld [vmem:[%s7295 + $0x34] sm:$0xf]
        %v7310 = vld [vmem:[%s7295 + $0x38] sm:$0xf]
        %v7311 = vld [vmem:[%s7295 + $0x3c] sm:$0xf]
        %v7312 = vunpack.c.l.b16 %v6955
        %v7313 = vunpack.c.l.b16 %v6964
        %v7314 = vunpack.c.l.b16 %v6977
        %v7315 = vunpack.c.l.b16 %v6986
        %v7316 = vunpack.c.l.b16 %v6999
        %v7317 = vunpack.c.l.b16 %v7008
        %v7318 = vunpack.c.l.b16 %v7021
        %v7319 = vunpack.c.l.b16 %v7030
        %v7320 = vunpack.c.l.b16 %v7043
        %v7321 = vunpack.c.l.b16 %v7052
        %v7322 = vunpack.c.l.b16 %v7065
        %v7323 = vunpack.c.l.b16 %v7074
        %v7324 = vunpack.c.l.b16 %v7087
        %v7325 = vunpack.c.l.b16 %v7096
        %v7326 = vunpack.c.l.b16 %v7109
        %v7327 = vunpack.c.l.b16 %v7118
        %v7328 = vunpack.c.l.b16 %v7131
        %v7329 = vunpack.c.l.b16 %v7140
        %v7330 = vunpack.c.l.b16 %v7153
        %v7331 = vunpack.c.l.b16 %v7162
        %v7332 = vunpack.c.l.b16 %v7175
        %v7333 = vunpack.c.l.b16 %v7184
        %v7334 = vunpack.c.l.b16 %v7197
        %v7335 = vunpack.c.l.b16 %v7206
        %v7336 = vunpack.c.l.b16 %v7219
        %v7337 = vunpack.c.l.b16 %v7228
        %v7338 = vunpack.c.l.b16 %v7241
        %v7339 = vunpack.c.l.b16 %v7250
        %v7340 = vunpack.c.l.b16 %v7263
        %v7341 = vunpack.c.l.b16 %v7272
        %v7342 = vunpack.c.l.b16 %v7285
        %v7343 = vunpack.c.l.b16 %v7294
        %v7344 = vpack.c.b16 %v7313, %v7312
        %v7345 = vpack.c.b16 %v7315, %v7314
        %v7346 = vpack.c.b16 %v7317, %v7316
        %v7347 = vpack.c.b16 %v7319, %v7318
        %v7348 = vpack.c.b16 %v7321, %v7320
        %v7349 = vpack.c.b16 %v7323, %v7322
        %v7350 = vpack.c.b16 %v7325, %v7324
        %v7351 = vpack.c.b16 %v7327, %v7326
        %v7352 = vpack.c.b16 %v7329, %v7328
        %v7353 = vpack.c.b16 %v7331, %v7330
        %v7354 = vpack.c.b16 %v7333, %v7332
        %v7355 = vpack.c.b16 %v7335, %v7334
        %v7356 = vpack.c.b16 %v7337, %v7336
        %v7357 = vpack.c.b16 %v7339, %v7338
        %v7358 = vpack.c.b16 %v7341, %v7340
        %v7359 = vpack.c.b16 %v7343, %v7342
        %v7392 = vunpack.c.l.b16 %v7296
        %v7393 = vunpack.c.l.b16 %v7297
        %v7394 = vunpack.c.l.b16 %v7298
        %v7395 = vunpack.c.l.b16 %v7299
        %v7396 = vunpack.c.l.b16 %v7300
        %v7397 = vunpack.c.l.b16 %v7301
        %v7398 = vunpack.c.l.b16 %v7302
        %v7399 = vunpack.c.l.b16 %v7303
        %v7400 = vunpack.c.l.b16 %v7304
        %v7401 = vunpack.c.l.b16 %v7305
        %v7402 = vunpack.c.l.b16 %v7306
        %v7403 = vunpack.c.l.b16 %v7307
        %v7404 = vunpack.c.l.b16 %v7308
        %v7405 = vunpack.c.l.b16 %v7309
        %v7406 = vunpack.c.l.b16 %v7310
        %v7407 = vunpack.c.l.b16 %v7311
        %v7408 = vpack.c.b16 %v7393, %v7392
        %v7409 = vpack.c.b16 %v7395, %v7394
        %v7410 = vpack.c.b16 %v7397, %v7396
        %v7411 = vpack.c.b16 %v7399, %v7398
        %v7412 = vpack.c.b16 %v7401, %v7400
        %v7413 = vpack.c.b16 %v7403, %v7402
        %v7414 = vpack.c.b16 %v7405, %v7404
        %v7415 = vpack.c.b16 %v7407, %v7406
        %7424 = vmatpush.bf16.msra.mxu0 %v7415
        %7425 = vmatpush.bf16.msra.mxu0 %v7414
        %7426 = vmatpush.bf16.msra.mxu0 %v7413
        %7427 = vmatpush.bf16.msra.mxu0 %v7412
        %7428 = vmatpush.bf16.msra.mxu0 %v7411
        %7429 = vmatpush.bf16.msra.mxu0 %v7410
        %7430 = vmatpush.bf16.msra.mxu0 %v7409
        %7431 = vmatpush.bf16.msra.mxu0 %v7408
        %7432 = vmatmul.bf16.gmra.mxu0 %v7344
        %v7433 = vpop.f32.mrf.mxu0
        %v7434 = vadd.f32 0.0, %v7433
        %v7435 = vpop.f32.mrf.mxu0
        %v7436 = vadd.f32 0.0, %v7435
        %7437 = vmatmul.bf16.gmra.mxu0 %v7345
        %v7438 = vpop.f32.mrf.mxu0
        %v7439 = vadd.f32 0.0, %v7438
        %v7440 = vpop.f32.mrf.mxu0
        %v7441 = vadd.f32 0.0, %v7440
        %7442 = vmatmul.bf16.gmra.mxu0 %v7346
        %v7443 = vpop.f32.mrf.mxu0
        %v7444 = vadd.f32 0.0, %v7443
        %v7445 = vpop.f32.mrf.mxu0
        %v7446 = vadd.f32 0.0, %v7445
        %7447 = vmatmul.bf16.gmra.mxu0 %v7347
        %v7448 = vpop.f32.mrf.mxu0
        %v7449 = vadd.f32 0.0, %v7448
        %v7450 = vpop.f32.mrf.mxu0
        %v7451 = vadd.f32 0.0, %v7450
        %7452 = vmatmul.bf16.gmra.mxu0 %v7348
        %v7453 = vpop.f32.mrf.mxu0
        %v7454 = vadd.f32 0.0, %v7453
        %v7455 = vpop.f32.mrf.mxu0
        %v7456 = vadd.f32 0.0, %v7455
        %7457 = vmatmul.bf16.gmra.mxu0 %v7349
        %v7458 = vpop.f32.mrf.mxu0
        %v7459 = vadd.f32 0.0, %v7458
        %v7460 = vpop.f32.mrf.mxu0
        %v7461 = vadd.f32 0.0, %v7460
        %7462 = vmatmul.bf16.gmra.mxu0 %v7350
        %v7463 = vpop.f32.mrf.mxu0
        %v7464 = vadd.f32 0.0, %v7463
        %v7465 = vpop.f32.mrf.mxu0
        %v7466 = vadd.f32 0.0, %v7465
        %7467 = vmatmul.bf16.gmra.mxu0 %v7351
        %v7468 = vpop.f32.mrf.mxu0
        %v7469 = vadd.f32 0.0, %v7468
        %v7470 = vpop.f32.mrf.mxu0
        %v7471 = vadd.f32 0.0, %v7470
        %7472 = vmatmul.bf16.gmra.mxu0 %v7352
        %v7473 = vpop.f32.mrf.mxu0
        %v7474 = vadd.f32 0.0, %v7473
        %v7475 = vpop.f32.mrf.mxu0
        %v7476 = vadd.f32 0.0, %v7475
        %7477 = vmatmul.bf16.gmra.mxu0 %v7353
        %v7478 = vpop.f32.mrf.mxu0
        %v7479 = vadd.f32 0.0, %v7478
        %v7480 = vpop.f32.mrf.mxu0
        %v7481 = vadd.f32 0.0, %v7480
        %7482 = vmatmul.bf16.gmra.mxu0 %v7354
        %v7483 = vpop.f32.mrf.mxu0
        %v7484 = vadd.f32 0.0, %v7483
        %v7485 = vpop.f32.mrf.mxu0
        %v7486 = vadd.f32 0.0, %v7485
        %7487 = vmatmul.bf16.gmra.mxu0 %v7355
        %v7488 = vpop.f32.mrf.mxu0
        %v7489 = vadd.f32 0.0, %v7488
        %v7490 = vpop.f32.mrf.mxu0
        %v7491 = vadd.f32 0.0, %v7490
        %7492 = vmatmul.bf16.gmra.mxu0 %v7356
        %v7493 = vpop.f32.mrf.mxu0
        %v7494 = vadd.f32 0.0, %v7493
        %v7495 = vpop.f32.mrf.mxu0
        %v7496 = vadd.f32 0.0, %v7495
        %7497 = vmatmul.bf16.gmra.mxu0 %v7357
        %v7498 = vpop.f32.mrf.mxu0
        %v7499 = vadd.f32 0.0, %v7498
        %v7500 = vpop.f32.mrf.mxu0
        %v7501 = vadd.f32 0.0, %v7500
        %7502 = vmatmul.bf16.gmra.mxu0 %v7358
        %v7503 = vpop.f32.mrf.mxu0
        %v7504 = vadd.f32 0.0, %v7503
        %v7505 = vpop.f32.mrf.mxu0
        %v7506 = vadd.f32 0.0, %v7505
        %7507 = vmatmul.bf16.gmra.mxu0 %v7359
        %v7508 = vpop.f32.mrf.mxu0
        %v7509 = vadd.f32 0.0, %v7508
        %v7510 = vpop.f32.mrf.mxu0
        %v7511 = vadd.f32 0.0, %v7510
        %7512 = vdwg.mxu0
        %v7513 = vadd.f32 %v6863, %v7434
        %v7514 = vadd.f32 %v6864, %v7436
        %v7515 = vadd.f32 %v6865, %v7439
        %v7516 = vadd.f32 %v6866, %v7441
        %v7517 = vadd.f32 %v6867, %v7444
        %v7518 = vadd.f32 %v6868, %v7446
        %v7519 = vadd.f32 %v6869, %v7449
        %v7520 = vadd.f32 %v6870, %v7451
        %v7521 = vadd.f32 %v6871, %v7454
        %v7522 = vadd.f32 %v6872, %v7456
        %v7523 = vadd.f32 %v6873, %v7459
        %v7524 = vadd.f32 %v6874, %v7461
        %v7525 = vadd.f32 %v6875, %v7464
        %v7526 = vadd.f32 %v6876, %v7466
        %v7527 = vadd.f32 %v6877, %v7469
        %v7528 = vadd.f32 %v6878, %v7471
        %v7529 = vadd.f32 %v6879, %v7474
        %v7530 = vadd.f32 %v6880, %v7476
        %v7531 = vadd.f32 %v6881, %v7479
        %v7532 = vadd.f32 %v6882, %v7481
        %v7533 = vadd.f32 %v6883, %v7484
        %v7534 = vadd.f32 %v6884, %v7486
        %v7535 = vadd.f32 %v6885, %v7489
        %v7536 = vadd.f32 %v6886, %v7491
        %v7537 = vadd.f32 %v6887, %v7494
        %v7538 = vadd.f32 %v6888, %v7496
        %v7539 = vadd.f32 %v6889, %v7499
        %v7540 = vadd.f32 %v6890, %v7501
        %v7541 = vadd.f32 %v6891, %v7504
        %v7542 = vadd.f32 %v6892, %v7506
        %v7543 = vadd.f32 %v6893, %v7509
        %v7544 = vadd.f32 %v6894, %v7511
        %s7545 = scalar_lea.vmem [#allocation8], 256
        %v7546 = vld [vmem:[%s7545] sm:$0xf]
        %v7547 = vld [vmem:[%s7545 + $0x4] sm:$0xf]
        %v7548 = vld [vmem:[%s7545 + $0x8] sm:$0xf]
        %v7549 = vld [vmem:[%s7545 + $0xc] sm:$0xf]
        %v7550 = vld [vmem:[%s7545 + $0x10] sm:$0xf]
        %v7551 = vld [vmem:[%s7545 + $0x14] sm:$0xf]
        %v7552 = vld [vmem:[%s7545 + $0x18] sm:$0xf]
        %v7553 = vld [vmem:[%s7545 + $0x1c] sm:$0xf]
        %v7554 = vld [vmem:[%s7545 + $0x20] sm:$0xf]
        %v7555 = vld [vmem:[%s7545 + $0x24] sm:$0xf]
        %v7556 = vld [vmem:[%s7545 + $0x28] sm:$0xf]
        %v7557 = vld [vmem:[%s7545 + $0x2c] sm:$0xf]
        %v7558 = vld [vmem:[%s7545 + $0x30] sm:$0xf]
        %v7559 = vld [vmem:[%s7545 + $0x34] sm:$0xf]
        %v7560 = vld [vmem:[%s7545 + $0x38] sm:$0xf]
        %v7561 = vld [vmem:[%s7545 + $0x3c] sm:$0xf]
        %v7594 = vunpack.c.l.b16 %v6896
        %v7595 = vunpack.c.l.b16 %v6897
        %v7596 = vunpack.c.l.b16 %v6899
        %v7597 = vunpack.c.l.b16 %v6900
        %v7598 = vunpack.c.l.b16 %v6902
        %v7599 = vunpack.c.l.b16 %v6903
        %v7600 = vunpack.c.l.b16 %v6905
        %v7601 = vunpack.c.l.b16 %v6906
        %v7602 = vunpack.c.l.b16 %v6908
        %v7603 = vunpack.c.l.b16 %v6909
        %v7604 = vunpack.c.l.b16 %v6911
        %v7605 = vunpack.c.l.b16 %v6912
        %v7606 = vunpack.c.l.b16 %v6914
        %v7607 = vunpack.c.l.b16 %v6915
        %v7608 = vunpack.c.l.b16 %v6917
        %v7609 = vunpack.c.l.b16 %v6918
        %v7610 = vunpack.c.l.b16 %v6920
        %v7611 = vunpack.c.l.b16 %v6921
        %v7612 = vunpack.c.l.b16 %v6923
        %v7613 = vunpack.c.l.b16 %v6924
        %v7614 = vunpack.c.l.b16 %v6926
        %v7615 = vunpack.c.l.b16 %v6927
        %v7616 = vunpack.c.l.b16 %v6929
        %v7617 = vunpack.c.l.b16 %v6930
        %v7618 = vunpack.c.l.b16 %v6932
        %v7619 = vunpack.c.l.b16 %v6933
        %v7620 = vunpack.c.l.b16 %v6935
        %v7621 = vunpack.c.l.b16 %v6936
        %v7622 = vunpack.c.l.b16 %v6938
        %v7623 = vunpack.c.l.b16 %v6939
        %v7624 = vunpack.c.l.b16 %v6941
        %v7625 = vunpack.c.l.b16 %v6942
        %v7626 = vpack.c.b16 %v7595, %v7594
        %v7627 = vpack.c.b16 %v7597, %v7596
        %v7628 = vpack.c.b16 %v7599, %v7598
        %v7629 = vpack.c.b16 %v7601, %v7600
        %v7630 = vpack.c.b16 %v7603, %v7602
        %v7631 = vpack.c.b16 %v7605, %v7604
        %v7632 = vpack.c.b16 %v7607, %v7606
        %v7633 = vpack.c.b16 %v7609, %v7608
        %v7634 = vpack.c.b16 %v7611, %v7610
        %v7635 = vpack.c.b16 %v7613, %v7612
        %v7636 = vpack.c.b16 %v7615, %v7614
        %v7637 = vpack.c.b16 %v7617, %v7616
        %v7638 = vpack.c.b16 %v7619, %v7618
        %v7639 = vpack.c.b16 %v7621, %v7620
        %v7640 = vpack.c.b16 %v7623, %v7622
        %v7641 = vpack.c.b16 %v7625, %v7624
        %v7674 = vunpack.c.l.b16 %v7546
        %v7675 = vunpack.c.l.b16 %v7547
        %v7676 = vunpack.c.l.b16 %v7548
        %v7677 = vunpack.c.l.b16 %v7549
        %v7678 = vunpack.c.l.b16 %v7550
        %v7679 = vunpack.c.l.b16 %v7551
        %v7680 = vunpack.c.l.b16 %v7552
        %v7681 = vunpack.c.l.b16 %v7553
        %v7682 = vunpack.c.l.b16 %v7554
        %v7683 = vunpack.c.l.b16 %v7555
        %v7684 = vunpack.c.l.b16 %v7556
        %v7685 = vunpack.c.l.b16 %v7557
        %v7686 = vunpack.c.l.b16 %v7558
        %v7687 = vunpack.c.l.b16 %v7559
        %v7688 = vunpack.c.l.b16 %v7560
        %v7689 = vunpack.c.l.b16 %v7561
        %v7690 = vpack.c.b16 %v7675, %v7674
        %v7691 = vpack.c.b16 %v7677, %v7676
        %v7692 = vpack.c.b16 %v7679, %v7678
        %v7693 = vpack.c.b16 %v7681, %v7680
        %v7694 = vpack.c.b16 %v7683, %v7682
        %v7695 = vpack.c.b16 %v7685, %v7684
        %v7696 = vpack.c.b16 %v7687, %v7686
        %v7697 = vpack.c.b16 %v7689, %v7688
        %7706 = vmatpush.bf16.msra.mxu0 %v7697
        %7707 = vmatpush.bf16.msra.mxu0 %v7696
        %7708 = vmatpush.bf16.msra.mxu0 %v7695
        %7709 = vmatpush.bf16.msra.mxu0 %v7694
        %7710 = vmatpush.bf16.msra.mxu0 %v7693
        %7711 = vmatpush.bf16.msra.mxu0 %v7692
        %7712 = vmatpush.bf16.msra.mxu0 %v7691
        %7713 = vmatpush.bf16.msra.mxu0 %v7690
        %7714 = vmatmul.bf16.gmra.mxu0 %v7626
        %v7715 = vpop.f32.mrf.mxu0
        %v7716 = vadd.f32 0.0, %v7715
        %v7717 = vpop.f32.mrf.mxu0
        %v7718 = vadd.f32 0.0, %v7717
        %7719 = vmatmul.bf16.gmra.mxu0 %v7627
        %v7720 = vpop.f32.mrf.mxu0
        %v7721 = vadd.f32 0.0, %v7720
        %v7722 = vpop.f32.mrf.mxu0
        %v7723 = vadd.f32 0.0, %v7722
        %7724 = vmatmul.bf16.gmra.mxu0 %v7628
        %v7725 = vpop.f32.mrf.mxu0
        %v7726 = vadd.f32 0.0, %v7725
        %v7727 = vpop.f32.mrf.mxu0
        %v7728 = vadd.f32 0.0, %v7727
        %7729 = vmatmul.bf16.gmra.mxu0 %v7629
        %v7730 = vpop.f32.mrf.mxu0
        %v7731 = vadd.f32 0.0, %v7730
        %v7732 = vpop.f32.mrf.mxu0
        %v7733 = vadd.f32 0.0, %v7732
        %7734 = vmatmul.bf16.gmra.mxu0 %v7630
        %v7735 = vpop.f32.mrf.mxu0
        %v7736 = vadd.f32 0.0, %v7735
        %v7737 = vpop.f32.mrf.mxu0
        %v7738 = vadd.f32 0.0, %v7737
        %7739 = vmatmul.bf16.gmra.mxu0 %v7631
        %v7740 = vpop.f32.mrf.mxu0
        %v7741 = vadd.f32 0.0, %v7740
        %v7742 = vpop.f32.mrf.mxu0
        %v7743 = vadd.f32 0.0, %v7742
        %7744 = vmatmul.bf16.gmra.mxu0 %v7632
        %v7745 = vpop.f32.mrf.mxu0
        %v7746 = vadd.f32 0.0, %v7745
        %v7747 = vpop.f32.mrf.mxu0
        %v7748 = vadd.f32 0.0, %v7747
        %7749 = vmatmul.bf16.gmra.mxu0 %v7633
        %v7750 = vpop.f32.mrf.mxu0
        %v7751 = vadd.f32 0.0, %v7750
        %v7752 = vpop.f32.mrf.mxu0
        %v7753 = vadd.f32 0.0, %v7752
        %7754 = vmatmul.bf16.gmra.mxu0 %v7634
        %v7755 = vpop.f32.mrf.mxu0
        %v7756 = vadd.f32 0.0, %v7755
        %v7757 = vpop.f32.mrf.mxu0
        %v7758 = vadd.f32 0.0, %v7757
        %7759 = vmatmul.bf16.gmra.mxu0 %v7635
        %v7760 = vpop.f32.mrf.mxu0
        %v7761 = vadd.f32 0.0, %v7760
        %v7762 = vpop.f32.mrf.mxu0
        %v7763 = vadd.f32 0.0, %v7762
        %7764 = vmatmul.bf16.gmra.mxu0 %v7636
        %v7765 = vpop.f32.mrf.mxu0
        %v7766 = vadd.f32 0.0, %v7765
        %v7767 = vpop.f32.mrf.mxu0
        %v7768 = vadd.f32 0.0, %v7767
        %7769 = vmatmul.bf16.gmra.mxu0 %v7637
        %v7770 = vpop.f32.mrf.mxu0
        %v7771 = vadd.f32 0.0, %v7770
        %v7772 = vpop.f32.mrf.mxu0
        %v7773 = vadd.f32 0.0, %v7772
        %7774 = vmatmul.bf16.gmra.mxu0 %v7638
        %v7775 = vpop.f32.mrf.mxu0
        %v7776 = vadd.f32 0.0, %v7775
        %v7777 = vpop.f32.mrf.mxu0
        %v7778 = vadd.f32 0.0, %v7777
        %7779 = vmatmul.bf16.gmra.mxu0 %v7639
        %v7780 = vpop.f32.mrf.mxu0
        %v7781 = vadd.f32 0.0, %v7780
        %v7782 = vpop.f32.mrf.mxu0
        %v7783 = vadd.f32 0.0, %v7782
        %7784 = vmatmul.bf16.gmra.mxu0 %v7640
        %v7785 = vpop.f32.mrf.mxu0
        %v7786 = vadd.f32 0.0, %v7785
        %v7787 = vpop.f32.mrf.mxu0
        %v7788 = vadd.f32 0.0, %v7787
        %7789 = vmatmul.bf16.gmra.mxu0 %v7641
        %v7790 = vpop.f32.mrf.mxu0
        %v7791 = vadd.f32 0.0, %v7790
        %v7792 = vpop.f32.mrf.mxu0
        %v7793 = vadd.f32 0.0, %v7792
        %7794 = vdwg.mxu0
        %v7795 = vadd.f32 %v7513, %v7716
        %v7796 = vadd.f32 %v7514, %v7718
        %v7797 = vadd.f32 %v7515, %v7721
        %v7798 = vadd.f32 %v7516, %v7723
        %v7799 = vadd.f32 %v7517, %v7726
        %v7800 = vadd.f32 %v7518, %v7728
        %v7801 = vadd.f32 %v7519, %v7731
        %v7802 = vadd.f32 %v7520, %v7733
        %v7803 = vadd.f32 %v7521, %v7736
        %v7804 = vadd.f32 %v7522, %v7738
        %v7805 = vadd.f32 %v7523, %v7741
        %v7806 = vadd.f32 %v7524, %v7743
        %v7807 = vadd.f32 %v7525, %v7746
        %v7808 = vadd.f32 %v7526, %v7748
        %v7809 = vadd.f32 %v7527, %v7751
        %v7810 = vadd.f32 %v7528, %v7753
        %v7811 = vadd.f32 %v7529, %v7756
        %v7812 = vadd.f32 %v7530, %v7758
        %v7813 = vadd.f32 %v7531, %v7761
        %v7814 = vadd.f32 %v7532, %v7763
        %v7815 = vadd.f32 %v7533, %v7766
        %v7816 = vadd.f32 %v7534, %v7768
        %v7817 = vadd.f32 %v7535, %v7771
        %v7818 = vadd.f32 %v7536, %v7773
        %v7819 = vadd.f32 %v7537, %v7776
        %v7820 = vadd.f32 %v7538, %v7778
        %v7821 = vadd.f32 %v7539, %v7781
        %v7822 = vadd.f32 %v7540, %v7783
        %v7823 = vadd.f32 %v7541, %v7786
        %v7824 = vadd.f32 %v7542, %v7788
        %v7825 = vadd.f32 %v7543, %v7791
        %v7826 = vadd.f32 %v7544, %v7793
        %v7827 = vld [vmem:[%s5311 + $0x4] sm:$0xf]
        %v7828 = vld [vmem:[%s5311 + $0x8] sm:$0xf]
        %v7829 = vld [vmem:[%s5311 + $0xc] sm:$0x1]
        %v7830 = vld [vmem:[%s5311 + $0x14] sm:$0xf]
        %v7831 = vld [vmem:[%s5311 + $0x18] sm:$0xf]
        %v7832 = vld [vmem:[%s5311 + $0x1c] sm:$0x1]
        %v7833 = vld [vmem:[%s5311 + $0x24] sm:$0xf]
        %v7834 = vld [vmem:[%s5311 + $0x28] sm:$0xf]
        %v7835 = vld [vmem:[%s5311 + $0x2c] sm:$0x1]
        %v7836 = vld [vmem:[%s5311 + $0x34] sm:$0xf]
        %v7837 = vld [vmem:[%s5311 + $0x38] sm:$0xf]
        %v7838 = vld [vmem:[%s5311 + $0x3c] sm:$0x1]
        %v7839 = vld [vmem:[%s5311 + $0x44] sm:$0xf]
        %v7840 = vld [vmem:[%s5311 + $0x48] sm:$0xf]
        %v7841 = vld [vmem:[%s5311 + $0x4c] sm:$0x1]
        %v7842 = vld [vmem:[%s5311 + $0x54] sm:$0xf]
        %v7843 = vld [vmem:[%s5311 + $0x58] sm:$0xf]
        %v7844 = vld [vmem:[%s5311 + $0x5c] sm:$0x1]
        %v7845 = vld [vmem:[%s5311 + $0x64] sm:$0xf]
        %v7846 = vld [vmem:[%s5311 + $0x68] sm:$0xf]
        %v7847 = vld [vmem:[%s5311 + $0x6c] sm:$0x1]
        %v7848 = vld [vmem:[%s5311 + $0x74] sm:$0xf]
        %v7849 = vld [vmem:[%s5311 + $0x78] sm:$0xf]
        %v7850 = vld [vmem:[%s5311 + $0x7c] sm:$0x1]
        %v7851 = vld [vmem:[%s5311 + $0x84] sm:$0xf]
        %v7852 = vld [vmem:[%s5311 + $0x88] sm:$0xf]
        %v7853 = vld [vmem:[%s5311 + $0x8c] sm:$0x1]
        %v7854 = vld [vmem:[%s5311 + $0x94] sm:$0xf]
        %v7855 = vld [vmem:[%s5311 + $0x98] sm:$0xf]
        %v7856 = vld [vmem:[%s5311 + $0x9c] sm:$0x1]
        %v7857 = vld [vmem:[%s5311 + $0xa4] sm:$0xf]
        %v7858 = vld [vmem:[%s5311 + $0xa8] sm:$0xf]
        %v7859 = vld [vmem:[%s5311 + $0xac] sm:$0x1]
        %v7860 = vld [vmem:[%s5311 + $0xb4] sm:$0xf]
        %v7861 = vld [vmem:[%s5311 + $0xb8] sm:$0xf]
        %v7862 = vld [vmem:[%s5311 + $0xbc] sm:$0x1]
        %v7863 = vld [vmem:[%s5311 + $0xc4] sm:$0xf]
        %v7864 = vld [vmem:[%s5311 + $0xc8] sm:$0xf]
        %v7865 = vld [vmem:[%s5311 + $0xcc] sm:$0x1]
        %v7866 = vld [vmem:[%s5311 + $0xd4] sm:$0xf]
        %v7867 = vld [vmem:[%s5311 + $0xd8] sm:$0xf]
        %v7868 = vld [vmem:[%s5311 + $0xdc] sm:$0x1]
        %v7869 = vld [vmem:[%s5311 + $0xe4] sm:$0xf]
        %v7870 = vld [vmem:[%s5311 + $0xe8] sm:$0xf]
        %v7871 = vld [vmem:[%s5311 + $0xec] sm:$0x1]
        %v7872 = vld [vmem:[%s5311 + $0xf4] sm:$0xf]
        %v7873 = vld [vmem:[%s5311 + $0xf8] sm:$0xf]
        %v7874 = vld [vmem:[%s5311 + $0xfc] sm:$0x1]
        %v7876 = vshrl.u32 %v7827, 16
        %v7878 = vrot.slane %v7876, 4
        %v7879 = vshll.u32 %v7827, 16
        %v7881 = vrot.slane %v7879, 5
        %v7882 = vor.u32 %v7878, %v7881
        %v7883 = vrot.slane %v7882, 4
        %v7885 = vshll.u32 %v7828, 16
        %v7887 = vrot.slane %v7885, 5
        %v7888 = vsel %vm1305, %v7883, %v7887
        %v7889 = vshrl.u32 %v7828, 16
        %v7891 = vrot.slane %v7889, 4
        %v7892 = vor.u32 %v7891, %v7887
        %v7893 = vrot.slane %v7892, 4
        %v7895 = vshll.u32 %v7829, 16
        %v7897 = vrot.slane %v7895, 5
        %v7898 = vsel %vm1305, %v7893, %v7897
        %v7900 = vshrl.u32 %v7830, 16
        %v7902 = vrot.slane %v7900, 4
        %v7903 = vshll.u32 %v7830, 16
        %v7905 = vrot.slane %v7903, 5
        %v7906 = vor.u32 %v7902, %v7905
        %v7907 = vrot.slane %v7906, 4
        %v7909 = vshll.u32 %v7831, 16
        %v7911 = vrot.slane %v7909, 5
        %v7912 = vsel %vm1305, %v7907, %v7911
        %v7913 = vshrl.u32 %v7831, 16
        %v7915 = vrot.slane %v7913, 4
        %v7916 = vor.u32 %v7915, %v7911
        %v7917 = vrot.slane %v7916, 4
        %v7919 = vshll.u32 %v7832, 16
        %v7921 = vrot.slane %v7919, 5
        %v7922 = vsel %vm1305, %v7917, %v7921
        %v7924 = vshrl.u32 %v7833, 16
        %v7926 = vrot.slane %v7924, 4
        %v7927 = vshll.u32 %v7833, 16
        %v7929 = vrot.slane %v7927, 5
        %v7930 = vor.u32 %v7926, %v7929
        %v7931 = vrot.slane %v7930, 4
        %v7933 = vshll.u32 %v7834, 16
        %v7935 = vrot.slane %v7933, 5
        %v7936 = vsel %vm1305, %v7931, %v7935
        %v7937 = vshrl.u32 %v7834, 16
        %v7939 = vrot.slane %v7937, 4
        %v7940 = vor.u32 %v7939, %v7935
        %v7941 = vrot.slane %v7940, 4
        %v7943 = vshll.u32 %v7835, 16
        %v7945 = vrot.slane %v7943, 5
        %v7946 = vsel %vm1305, %v7941, %v7945
        %v7948 = vshrl.u32 %v7836, 16
        %v7950 = vrot.slane %v7948, 4
        %v7951 = vshll.u32 %v7836, 16
        %v7953 = vrot.slane %v7951, 5
        %v7954 = vor.u32 %v7950, %v7953
        %v7955 = vrot.slane %v7954, 4
        %v7957 = vshll.u32 %v7837, 16
        %v7959 = vrot.slane %v7957, 5
        %v7960 = vsel %vm1305, %v7955, %v7959
        %v7961 = vshrl.u32 %v7837, 16
        %v7963 = vrot.slane %v7961, 4
        %v7964 = vor.u32 %v7963, %v7959
        %v7965 = vrot.slane %v7964, 4
        %v7967 = vshll.u32 %v7838, 16
        %v7969 = vrot.slane %v7967, 5
        %v7970 = vsel %vm1305, %v7965, %v7969
        %v7972 = vshrl.u32 %v7839, 16
        %v7974 = vrot.slane %v7972, 4
        %v7975 = vshll.u32 %v7839, 16
        %v7977 = vrot.slane %v7975, 5
        %v7978 = vor.u32 %v7974, %v7977
        %v7979 = vrot.slane %v7978, 4
        %v7981 = vshll.u32 %v7840, 16
        %v7983 = vrot.slane %v7981, 5
        %v7984 = vsel %vm1305, %v7979, %v7983
        %v7985 = vshrl.u32 %v7840, 16
        %v7987 = vrot.slane %v7985, 4
        %v7988 = vor.u32 %v7987, %v7983
        %v7989 = vrot.slane %v7988, 4
        %v7991 = vshll.u32 %v7841, 16
        %v7993 = vrot.slane %v7991, 5
        %v7994 = vsel %vm1305, %v7989, %v7993
        %v7996 = vshrl.u32 %v7842, 16
        %v7998 = vrot.slane %v7996, 4
        %v7999 = vshll.u32 %v7842, 16
        %v8001 = vrot.slane %v7999, 5
        %v8002 = vor.u32 %v7998, %v8001
        %v8003 = vrot.slane %v8002, 4
        %v8005 = vshll.u32 %v7843, 16
        %v8007 = vrot.slane %v8005, 5
        %v8008 = vsel %vm1305, %v8003, %v8007
        %v8009 = vshrl.u32 %v7843, 16
        %v8011 = vrot.slane %v8009, 4
        %v8012 = vor.u32 %v8011, %v8007
        %v8013 = vrot.slane %v8012, 4
        %v8015 = vshll.u32 %v7844, 16
        %v8017 = vrot.slane %v8015, 5
        %v8018 = vsel %vm1305, %v8013, %v8017
        %v8020 = vshrl.u32 %v7845, 16
        %v8022 = vrot.slane %v8020, 4
        %v8023 = vshll.u32 %v7845, 16
        %v8025 = vrot.slane %v8023, 5
        %v8026 = vor.u32 %v8022, %v8025
        %v8027 = vrot.slane %v8026, 4
        %v8029 = vshll.u32 %v7846, 16
        %v8031 = vrot.slane %v8029, 5
        %v8032 = vsel %vm1305, %v8027, %v8031
        %v8033 = vshrl.u32 %v7846, 16
        %v8035 = vrot.slane %v8033, 4
        %v8036 = vor.u32 %v8035, %v8031
        %v8037 = vrot.slane %v8036, 4
        %v8039 = vshll.u32 %v7847, 16
        %v8041 = vrot.slane %v8039, 5
        %v8042 = vsel %vm1305, %v8037, %v8041
        %v8044 = vshrl.u32 %v7848, 16
        %v8046 = vrot.slane %v8044, 4
        %v8047 = vshll.u32 %v7848, 16
        %v8049 = vrot.slane %v8047, 5
        %v8050 = vor.u32 %v8046, %v8049
        %v8051 = vrot.slane %v8050, 4
        %v8053 = vshll.u32 %v7849, 16
        %v8055 = vrot.slane %v8053, 5
        %v8056 = vsel %vm1305, %v8051, %v8055
        %v8057 = vshrl.u32 %v7849, 16
        %v8059 = vrot.slane %v8057, 4
        %v8060 = vor.u32 %v8059, %v8055
        %v8061 = vrot.slane %v8060, 4
        %v8063 = vshll.u32 %v7850, 16
        %v8065 = vrot.slane %v8063, 5
        %v8066 = vsel %vm1305, %v8061, %v8065
        %v8068 = vshrl.u32 %v7851, 16
        %v8070 = vrot.slane %v8068, 4
        %v8071 = vshll.u32 %v7851, 16
        %v8073 = vrot.slane %v8071, 5
        %v8074 = vor.u32 %v8070, %v8073
        %v8075 = vrot.slane %v8074, 4
        %v8077 = vshll.u32 %v7852, 16
        %v8079 = vrot.slane %v8077, 5
        %v8080 = vsel %vm1305, %v8075, %v8079
        %v8081 = vshrl.u32 %v7852, 16
        %v8083 = vrot.slane %v8081, 4
        %v8084 = vor.u32 %v8083, %v8079
        %v8085 = vrot.slane %v8084, 4
        %v8087 = vshll.u32 %v7853, 16
        %v8089 = vrot.slane %v8087, 5
        %v8090 = vsel %vm1305, %v8085, %v8089
        %v8092 = vshrl.u32 %v7854, 16
        %v8094 = vrot.slane %v8092, 4
        %v8095 = vshll.u32 %v7854, 16
        %v8097 = vrot.slane %v8095, 5
        %v8098 = vor.u32 %v8094, %v8097
        %v8099 = vrot.slane %v8098, 4
        %v8101 = vshll.u32 %v7855, 16
        %v8103 = vrot.slane %v8101, 5
        %v8104 = vsel %vm1305, %v8099, %v8103
        %v8105 = vshrl.u32 %v7855, 16
        %v8107 = vrot.slane %v8105, 4
        %v8108 = vor.u32 %v8107, %v8103
        %v8109 = vrot.slane %v8108, 4
        %v8111 = vshll.u32 %v7856, 16
        %v8113 = vrot.slane %v8111, 5
        %v8114 = vsel %vm1305, %v8109, %v8113
        %v8116 = vshrl.u32 %v7857, 16
        %v8118 = vrot.slane %v8116, 4
        %v8119 = vshll.u32 %v7857, 16
        %v8121 = vrot.slane %v8119, 5
        %v8122 = vor.u32 %v8118, %v8121
        %v8123 = vrot.slane %v8122, 4
        %v8125 = vshll.u32 %v7858, 16
        %v8127 = vrot.slane %v8125, 5
        %v8128 = vsel %vm1305, %v8123, %v8127
        %v8129 = vshrl.u32 %v7858, 16
        %v8131 = vrot.slane %v8129, 4
        %v8132 = vor.u32 %v8131, %v8127
        %v8133 = vrot.slane %v8132, 4
        %v8135 = vshll.u32 %v7859, 16
        %v8137 = vrot.slane %v8135, 5
        %v8138 = vsel %vm1305, %v8133, %v8137
        %v8140 = vshrl.u32 %v7860, 16
        %v8142 = vrot.slane %v8140, 4
        %v8143 = vshll.u32 %v7860, 16
        %v8145 = vrot.slane %v8143, 5
        %v8146 = vor.u32 %v8142, %v8145
        %v8147 = vrot.slane %v8146, 4
        %v8149 = vshll.u32 %v7861, 16
        %v8151 = vrot.slane %v8149, 5
        %v8152 = vsel %vm1305, %v8147, %v8151
        %v8153 = vshrl.u32 %v7861, 16
        %v8155 = vrot.slane %v8153, 4
        %v8156 = vor.u32 %v8155, %v8151
        %v8157 = vrot.slane %v8156, 4
        %v8159 = vshll.u32 %v7862, 16
        %v8161 = vrot.slane %v8159, 5
        %v8162 = vsel %vm1305, %v8157, %v8161
        %v8164 = vshrl.u32 %v7863, 16
        %v8166 = vrot.slane %v8164, 4
        %v8167 = vshll.u32 %v7863, 16
        %v8169 = vrot.slane %v8167, 5
        %v8170 = vor.u32 %v8166, %v8169
        %v8171 = vrot.slane %v8170, 4
        %v8173 = vshll.u32 %v7864, 16
        %v8175 = vrot.slane %v8173, 5
        %v8176 = vsel %vm1305, %v8171, %v8175
        %v8177 = vshrl.u32 %v7864, 16
        %v8179 = vrot.slane %v8177, 4
        %v8180 = vor.u32 %v8179, %v8175
        %v8181 = vrot.slane %v8180, 4
        %v8183 = vshll.u32 %v7865, 16
        %v8185 = vrot.slane %v8183, 5
        %v8186 = vsel %vm1305, %v8181, %v8185
        %v8188 = vshrl.u32 %v7866, 16
        %v8190 = vrot.slane %v8188, 4
        %v8191 = vshll.u32 %v7866, 16
        %v8193 = vrot.slane %v8191, 5
        %v8194 = vor.u32 %v8190, %v8193
        %v8195 = vrot.slane %v8194, 4
        %v8197 = vshll.u32 %v7867, 16
        %v8199 = vrot.slane %v8197, 5
        %v8200 = vsel %vm1305, %v8195, %v8199
        %v8201 = vshrl.u32 %v7867, 16
        %v8203 = vrot.slane %v8201, 4
        %v8204 = vor.u32 %v8203, %v8199
        %v8205 = vrot.slane %v8204, 4
        %v8207 = vshll.u32 %v7868, 16
        %v8209 = vrot.slane %v8207, 5
        %v8210 = vsel %vm1305, %v8205, %v8209
        %v8212 = vshrl.u32 %v7869, 16
        %v8214 = vrot.slane %v8212, 4
        %v8215 = vshll.u32 %v7869, 16
        %v8217 = vrot.slane %v8215, 5
        %v8218 = vor.u32 %v8214, %v8217
        %v8219 = vrot.slane %v8218, 4
        %v8221 = vshll.u32 %v7870, 16
        %v8223 = vrot.slane %v8221, 5
        %v8224 = vsel %vm1305, %v8219, %v8223
        %v8225 = vshrl.u32 %v7870, 16
        %v8227 = vrot.slane %v8225, 4
        %v8228 = vor.u32 %v8227, %v8223
        %v8229 = vrot.slane %v8228, 4
        %v8231 = vshll.u32 %v7871, 16
        %v8233 = vrot.slane %v8231, 5
        %v8234 = vsel %vm1305, %v8229, %v8233
        %v8236 = vshrl.u32 %v7872, 16
        %v8238 = vrot.slane %v8236, 4
        %v8239 = vshll.u32 %v7872, 16
        %v8241 = vrot.slane %v8239, 5
        %v8242 = vor.u32 %v8238, %v8241
        %v8243 = vrot.slane %v8242, 4
        %v8245 = vshll.u32 %v7873, 16
        %v8247 = vrot.slane %v8245, 5
        %v8248 = vsel %vm1305, %v8243, %v8247
        %v8249 = vshrl.u32 %v7873, 16
        %v8251 = vrot.slane %v8249, 4
        %v8252 = vor.u32 %v8251, %v8247
        %v8253 = vrot.slane %v8252, 4
        %v8255 = vshll.u32 %v7874, 16
        %v8257 = vrot.slane %v8255, 5
        %v8258 = vsel %vm1305, %v8253, %v8257
        %s8259 = scalar_lea.vmem [#allocation8], 320
        %v8260 = vld [vmem:[%s8259] sm:$0xf]
        %v8261 = vld [vmem:[%s8259 + $0x4] sm:$0xf]
        %v8262 = vld [vmem:[%s8259 + $0x8] sm:$0xf]
        %v8263 = vld [vmem:[%s8259 + $0xc] sm:$0xf]
        %v8264 = vld [vmem:[%s8259 + $0x10] sm:$0xf]
        %v8265 = vld [vmem:[%s8259 + $0x14] sm:$0xf]
        %v8266 = vld [vmem:[%s8259 + $0x18] sm:$0xf]
        %v8267 = vld [vmem:[%s8259 + $0x1c] sm:$0xf]
        %v8268 = vld [vmem:[%s8259 + $0x20] sm:$0xf]
        %v8269 = vld [vmem:[%s8259 + $0x24] sm:$0xf]
        %v8270 = vld [vmem:[%s8259 + $0x28] sm:$0xf]
        %v8271 = vld [vmem:[%s8259 + $0x2c] sm:$0xf]
        %v8272 = vld [vmem:[%s8259 + $0x30] sm:$0xf]
        %v8273 = vld [vmem:[%s8259 + $0x34] sm:$0xf]
        %v8274 = vld [vmem:[%s8259 + $0x38] sm:$0xf]
        %v8275 = vld [vmem:[%s8259 + $0x3c] sm:$0xf]
        %v8276 = vunpack.c.l.b16 %v7888
        %v8277 = vunpack.c.l.b16 %v7898
        %v8278 = vunpack.c.l.b16 %v7912
        %v8279 = vunpack.c.l.b16 %v7922
        %v8280 = vunpack.c.l.b16 %v7936
        %v8281 = vunpack.c.l.b16 %v7946
        %v8282 = vunpack.c.l.b16 %v7960
        %v8283 = vunpack.c.l.b16 %v7970
        %v8284 = vunpack.c.l.b16 %v7984
        %v8285 = vunpack.c.l.b16 %v7994
        %v8286 = vunpack.c.l.b16 %v8008
        %v8287 = vunpack.c.l.b16 %v8018
        %v8288 = vunpack.c.l.b16 %v8032
        %v8289 = vunpack.c.l.b16 %v8042
        %v8290 = vunpack.c.l.b16 %v8056
        %v8291 = vunpack.c.l.b16 %v8066
        %v8292 = vunpack.c.l.b16 %v8080
        %v8293 = vunpack.c.l.b16 %v8090
        %v8294 = vunpack.c.l.b16 %v8104
        %v8295 = vunpack.c.l.b16 %v8114
        %v8296 = vunpack.c.l.b16 %v8128
        %v8297 = vunpack.c.l.b16 %v8138
        %v8298 = vunpack.c.l.b16 %v8152
        %v8299 = vunpack.c.l.b16 %v8162
        %v8300 = vunpack.c.l.b16 %v8176
        %v8301 = vunpack.c.l.b16 %v8186
        %v8302 = vunpack.c.l.b16 %v8200
        %v8303 = vunpack.c.l.b16 %v8210
        %v8304 = vunpack.c.l.b16 %v8224
        %v8305 = vunpack.c.l.b16 %v8234
        %v8306 = vunpack.c.l.b16 %v8248
        %v8307 = vunpack.c.l.b16 %v8258
        %v8308 = vpack.c.b16 %v8277, %v8276
        %v8309 = vpack.c.b16 %v8279, %v8278
        %v8310 = vpack.c.b16 %v8281, %v8280
        %v8311 = vpack.c.b16 %v8283, %v8282
        %v8312 = vpack.c.b16 %v8285, %v8284
        %v8313 = vpack.c.b16 %v8287, %v8286
        %v8314 = vpack.c.b16 %v8289, %v8288
        %v8315 = vpack.c.b16 %v8291, %v8290
        %v8316 = vpack.c.b16 %v8293, %v8292
        %v8317 = vpack.c.b16 %v8295, %v8294
        %v8318 = vpack.c.b16 %v8297, %v8296
        %v8319 = vpack.c.b16 %v8299, %v8298
        %v8320 = vpack.c.b16 %v8301, %v8300
        %v8321 = vpack.c.b16 %v8303, %v8302
        %v8322 = vpack.c.b16 %v8305, %v8304
        %v8323 = vpack.c.b16 %v8307, %v8306
        %v8356 = vunpack.c.l.b16 %v8260
        %v8357 = vunpack.c.l.b16 %v8261
        %v8358 = vunpack.c.l.b16 %v8262
        %v8359 = vunpack.c.l.b16 %v8263
        %v8360 = vunpack.c.l.b16 %v8264
        %v8361 = vunpack.c.l.b16 %v8265
        %v8362 = vunpack.c.l.b16 %v8266
        %v8363 = vunpack.c.l.b16 %v8267
        %v8364 = vunpack.c.l.b16 %v8268
        %v8365 = vunpack.c.l.b16 %v8269
        %v8366 = vunpack.c.l.b16 %v8270
        %v8367 = vunpack.c.l.b16 %v8271
        %v8368 = vunpack.c.l.b16 %v8272
        %v8369 = vunpack.c.l.b16 %v8273
        %v8370 = vunpack.c.l.b16 %v8274
        %v8371 = vunpack.c.l.b16 %v8275
        %v8372 = vpack.c.b16 %v8357, %v8356
        %v8373 = vpack.c.b16 %v8359, %v8358
        %v8374 = vpack.c.b16 %v8361, %v8360
        %v8375 = vpack.c.b16 %v8363, %v8362
        %v8376 = vpack.c.b16 %v8365, %v8364
        %v8377 = vpack.c.b16 %v8367, %v8366
        %v8378 = vpack.c.b16 %v8369, %v8368
        %v8379 = vpack.c.b16 %v8371, %v8370
        %8388 = vmatpush.bf16.msra.mxu0 %v8379
        %8389 = vmatpush.bf16.msra.mxu0 %v8378
        %8390 = vmatpush.bf16.msra.mxu0 %v8377
        %8391 = vmatpush.bf16.msra.mxu0 %v8376
        %8392 = vmatpush.bf16.msra.mxu0 %v8375
        %8393 = vmatpush.bf16.msra.mxu0 %v8374
        %8394 = vmatpush.bf16.msra.mxu0 %v8373
        %8395 = vmatpush.bf16.msra.mxu0 %v8372
        %8396 = vmatmul.bf16.gmra.mxu0 %v8308
        %v8397 = vpop.f32.mrf.mxu0
        %v8398 = vadd.f32 0.0, %v8397
        %v8399 = vpop.f32.mrf.mxu0
        %v8400 = vadd.f32 0.0, %v8399
        %8401 = vmatmul.bf16.gmra.mxu0 %v8309
        %v8402 = vpop.f32.mrf.mxu0
        %v8403 = vadd.f32 0.0, %v8402
        %v8404 = vpop.f32.mrf.mxu0
        %v8405 = vadd.f32 0.0, %v8404
        %8406 = vmatmul.bf16.gmra.mxu0 %v8310
        %v8407 = vpop.f32.mrf.mxu0
        %v8408 = vadd.f32 0.0, %v8407
        %v8409 = vpop.f32.mrf.mxu0
        %v8410 = vadd.f32 0.0, %v8409
        %8411 = vmatmul.bf16.gmra.mxu0 %v8311
        %v8412 = vpop.f32.mrf.mxu0
        %v8413 = vadd.f32 0.0, %v8412
        %v8414 = vpop.f32.mrf.mxu0
        %v8415 = vadd.f32 0.0, %v8414
        %8416 = vmatmul.bf16.gmra.mxu0 %v8312
        %v8417 = vpop.f32.mrf.mxu0
        %v8418 = vadd.f32 0.0, %v8417
        %v8419 = vpop.f32.mrf.mxu0
        %v8420 = vadd.f32 0.0, %v8419
        %8421 = vmatmul.bf16.gmra.mxu0 %v8313
        %v8422 = vpop.f32.mrf.mxu0
        %v8423 = vadd.f32 0.0, %v8422
        %v8424 = vpop.f32.mrf.mxu0
        %v8425 = vadd.f32 0.0, %v8424
        %8426 = vmatmul.bf16.gmra.mxu0 %v8314
        %v8427 = vpop.f32.mrf.mxu0
        %v8428 = vadd.f32 0.0, %v8427
        %v8429 = vpop.f32.mrf.mxu0
        %v8430 = vadd.f32 0.0, %v8429
        %8431 = vmatmul.bf16.gmra.mxu0 %v8315
        %v8432 = vpop.f32.mrf.mxu0
        %v8433 = vadd.f32 0.0, %v8432
        %v8434 = vpop.f32.mrf.mxu0
        %v8435 = vadd.f32 0.0, %v8434
        %8436 = vmatmul.bf16.gmra.mxu0 %v8316
        %v8437 = vpop.f32.mrf.mxu0
        %v8438 = vadd.f32 0.0, %v8437
        %v8439 = vpop.f32.mrf.mxu0
        %v8440 = vadd.f32 0.0, %v8439
        %8441 = vmatmul.bf16.gmra.mxu0 %v8317
        %v8442 = vpop.f32.mrf.mxu0
        %v8443 = vadd.f32 0.0, %v8442
        %v8444 = vpop.f32.mrf.mxu0
        %v8445 = vadd.f32 0.0, %v8444
        %8446 = vmatmul.bf16.gmra.mxu0 %v8318
        %v8447 = vpop.f32.mrf.mxu0
        %v8448 = vadd.f32 0.0, %v8447
        %v8449 = vpop.f32.mrf.mxu0
        %v8450 = vadd.f32 0.0, %v8449
        %8451 = vmatmul.bf16.gmra.mxu0 %v8319
        %v8452 = vpop.f32.mrf.mxu0
        %v8453 = vadd.f32 0.0, %v8452
        %v8454 = vpop.f32.mrf.mxu0
        %v8455 = vadd.f32 0.0, %v8454
        %8456 = vmatmul.bf16.gmra.mxu0 %v8320
        %v8457 = vpop.f32.mrf.mxu0
        %v8458 = vadd.f32 0.0, %v8457
        %v8459 = vpop.f32.mrf.mxu0
        %v8460 = vadd.f32 0.0, %v8459
        %8461 = vmatmul.bf16.gmra.mxu0 %v8321
        %v8462 = vpop.f32.mrf.mxu0
        %v8463 = vadd.f32 0.0, %v8462
        %v8464 = vpop.f32.mrf.mxu0
        %v8465 = vadd.f32 0.0, %v8464
        %8466 = vmatmul.bf16.gmra.mxu0 %v8322
        %v8467 = vpop.f32.mrf.mxu0
        %v8468 = vadd.f32 0.0, %v8467
        %v8469 = vpop.f32.mrf.mxu0
        %v8470 = vadd.f32 0.0, %v8469
        %8471 = vmatmul.bf16.gmra.mxu0 %v8323
        %v8472 = vpop.f32.mrf.mxu0
        %v8473 = vadd.f32 0.0, %v8472
        %v8474 = vpop.f32.mrf.mxu0
        %v8475 = vadd.f32 0.0, %v8474
        %8476 = vdwg.mxu0
        %v8477 = vadd.f32 %v7795, %v8398
        %v8478 = vadd.f32 %v7796, %v8400
        %v8479 = vadd.f32 %v7797, %v8403
        %v8480 = vadd.f32 %v7798, %v8405
        %v8481 = vadd.f32 %v7799, %v8408
        %v8482 = vadd.f32 %v7800, %v8410
        %v8483 = vadd.f32 %v7801, %v8413
        %v8484 = vadd.f32 %v7802, %v8415
        %v8485 = vadd.f32 %v7803, %v8418
        %v8486 = vadd.f32 %v7804, %v8420
        %v8487 = vadd.f32 %v7805, %v8423
        %v8488 = vadd.f32 %v7806, %v8425
        %v8489 = vadd.f32 %v7807, %v8428
        %v8490 = vadd.f32 %v7808, %v8430
        %v8491 = vadd.f32 %v7809, %v8433
        %v8492 = vadd.f32 %v7810, %v8435
        %v8493 = vadd.f32 %v7811, %v8438
        %v8494 = vadd.f32 %v7812, %v8440
        %v8495 = vadd.f32 %v7813, %v8443
        %v8496 = vadd.f32 %v7814, %v8445
        %v8497 = vadd.f32 %v7815, %v8448
        %v8498 = vadd.f32 %v7816, %v8450
        %v8499 = vadd.f32 %v7817, %v8453
        %v8500 = vadd.f32 %v7818, %v8455
        %v8501 = vadd.f32 %v7819, %v8458
        %v8502 = vadd.f32 %v7820, %v8460
        %v8503 = vadd.f32 %v7821, %v8463
        %v8504 = vadd.f32 %v7822, %v8465
        %v8505 = vadd.f32 %v7823, %v8468
        %v8506 = vadd.f32 %v7824, %v8470
        %v8507 = vadd.f32 %v7825, %v8473
        %v8508 = vadd.f32 %v7826, %v8475
        %s8509 = smul.addr %s3559, 4
        %s8510 = scalar_lea.vmem [#allocation2], %s8509
        %v8511 = vld [vmem:[%s8510] sm:$0x8]
        %v8512 = vld [vmem:[%s8510 + $0x4] sm:$0xf]
        %v8513 = vld [vmem:[%s8510 + $0x8] sm:$0xf]
        %v8514 = vld [vmem:[%s8510 + $0x10] sm:$0x8]
        %v8515 = vld [vmem:[%s8510 + $0x14] sm:$0xf]
        %v8516 = vld [vmem:[%s8510 + $0x18] sm:$0xf]
        %v8517 = vld [vmem:[%s8510 + $0x20] sm:$0x8]
        %v8518 = vld [vmem:[%s8510 + $0x24] sm:$0xf]
        %v8519 = vld [vmem:[%s8510 + $0x28] sm:$0xf]
        %v8520 = vld [vmem:[%s8510 + $0x30] sm:$0x8]
        %v8521 = vld [vmem:[%s8510 + $0x34] sm:$0xf]
        %v8522 = vld [vmem:[%s8510 + $0x38] sm:$0xf]
        %v8523 = vld [vmem:[%s8510 + $0x40] sm:$0x8]
        %v8524 = vld [vmem:[%s8510 + $0x44] sm:$0xf]
        %v8525 = vld [vmem:[%s8510 + $0x48] sm:$0xf]
        %v8526 = vld [vmem:[%s8510 + $0x50] sm:$0x8]
        %v8527 = vld [vmem:[%s8510 + $0x54] sm:$0xf]
        %v8528 = vld [vmem:[%s8510 + $0x58] sm:$0xf]
        %v8529 = vld [vmem:[%s8510 + $0x60] sm:$0x8]
        %v8530 = vld [vmem:[%s8510 + $0x64] sm:$0xf]
        %v8531 = vld [vmem:[%s8510 + $0x68] sm:$0xf]
        %v8532 = vld [vmem:[%s8510 + $0x70] sm:$0x8]
        %v8533 = vld [vmem:[%s8510 + $0x74] sm:$0xf]
        %v8534 = vld [vmem:[%s8510 + $0x78] sm:$0xf]
        %v8535 = vld [vmem:[%s8510 + $0x80] sm:$0x8]
        %v8536 = vld [vmem:[%s8510 + $0x84] sm:$0xf]
        %v8537 = vld [vmem:[%s8510 + $0x88] sm:$0xf]
        %v8538 = vld [vmem:[%s8510 + $0x90] sm:$0x8]
        %v8539 = vld [vmem:[%s8510 + $0x94] sm:$0xf]
        %v8540 = vld [vmem:[%s8510 + $0x98] sm:$0xf]
        %v8541 = vld [vmem:[%s8510 + $0xa0] sm:$0x8]
        %v8542 = vld [vmem:[%s8510 + $0xa4] sm:$0xf]
        %v8543 = vld [vmem:[%s8510 + $0xa8] sm:$0xf]
        %v8544 = vld [vmem:[%s8510 + $0xb0] sm:$0x8]
        %v8545 = vld [vmem:[%s8510 + $0xb4] sm:$0xf]
        %v8546 = vld [vmem:[%s8510 + $0xb8] sm:$0xf]
        %v8547 = vld [vmem:[%s8510 + $0xc0] sm:$0x8]
        %v8548 = vld [vmem:[%s8510 + $0xc4] sm:$0xf]
        %v8549 = vld [vmem:[%s8510 + $0xc8] sm:$0xf]
        %v8550 = vld [vmem:[%s8510 + $0xd0] sm:$0x8]
        %v8551 = vld [vmem:[%s8510 + $0xd4] sm:$0xf]
        %v8552 = vld [vmem:[%s8510 + $0xd8] sm:$0xf]
        %v8553 = vld [vmem:[%s8510 + $0xe0] sm:$0x8]
        %v8554 = vld [vmem:[%s8510 + $0xe4] sm:$0xf]
        %v8555 = vld [vmem:[%s8510 + $0xe8] sm:$0xf]
        %v8556 = vld [vmem:[%s8510 + $0xf0] sm:$0x8]
        %v8557 = vld [vmem:[%s8510 + $0xf4] sm:$0xf]
        %v8558 = vld [vmem:[%s8510 + $0xf8] sm:$0xf]
        %v8560 = vshrl.u32 %v8511, 16
        %v8562 = vrot.slane %v8560, 7
        %v8563 = vrot.slane %v8562, 4
        %v8565 = vshrl.u32 %v8512, 16
        %v8567 = vrot.slane %v8565, 7
        %v8568 = vshll.u32 %v8512, 16
        %v8570 = vor.u32 %v8567, %v8568
        %v8571 = vsel %vm435, %v8563, %v8570
        %v8572 = vrot.slane %v8567, 4
        %v8574 = vshrl.u32 %v8513, 16
        %v8576 = vrot.slane %v8574, 7
        %v8577 = vshll.u32 %v8513, 16
        %v8579 = vor.u32 %v8576, %v8577
        %v8580 = vsel %vm435, %v8572, %v8579
        %v8582 = vshrl.u32 %v8514, 16
        %v8584 = vrot.slane %v8582, 7
        %v8585 = vrot.slane %v8584, 4
        %v8587 = vshrl.u32 %v8515, 16
        %v8589 = vrot.slane %v8587, 7
        %v8590 = vshll.u32 %v8515, 16
        %v8592 = vor.u32 %v8589, %v8590
        %v8593 = vsel %vm435, %v8585, %v8592
        %v8594 = vrot.slane %v8589, 4
        %v8596 = vshrl.u32 %v8516, 16
        %v8598 = vrot.slane %v8596, 7
        %v8599 = vshll.u32 %v8516, 16
        %v8601 = vor.u32 %v8598, %v8599
        %v8602 = vsel %vm435, %v8594, %v8601
        %v8604 = vshrl.u32 %v8517, 16
        %v8606 = vrot.slane %v8604, 7
        %v8607 = vrot.slane %v8606, 4
        %v8609 = vshrl.u32 %v8518, 16
        %v8611 = vrot.slane %v8609, 7
        %v8612 = vshll.u32 %v8518, 16
        %v8614 = vor.u32 %v8611, %v8612
        %v8615 = vsel %vm435, %v8607, %v8614
        %v8616 = vrot.slane %v8611, 4
        %v8618 = vshrl.u32 %v8519, 16
        %v8620 = vrot.slane %v8618, 7
        %v8621 = vshll.u32 %v8519, 16
        %v8623 = vor.u32 %v8620, %v8621
        %v8624 = vsel %vm435, %v8616, %v8623
        %v8626 = vshrl.u32 %v8520, 16
        %v8628 = vrot.slane %v8626, 7
        %v8629 = vrot.slane %v8628, 4
        %v8631 = vshrl.u32 %v8521, 16
        %v8633 = vrot.slane %v8631, 7
        %v8634 = vshll.u32 %v8521, 16
        %v8636 = vor.u32 %v8633, %v8634
        %v8637 = vsel %vm435, %v8629, %v8636
        %v8638 = vrot.slane %v8633, 4
        %v8640 = vshrl.u32 %v8522, 16
        %v8642 = vrot.slane %v8640, 7
        %v8643 = vshll.u32 %v8522, 16
        %v8645 = vor.u32 %v8642, %v8643
        %v8646 = vsel %vm435, %v8638, %v8645
        %v8648 = vshrl.u32 %v8523, 16
        %v8650 = vrot.slane %v8648, 7
        %v8651 = vrot.slane %v8650, 4
        %v8653 = vshrl.u32 %v8524, 16
        %v8655 = vrot.slane %v8653, 7
        %v8656 = vshll.u32 %v8524, 16
        %v8658 = vor.u32 %v8655, %v8656
        %v8659 = vsel %vm435, %v8651, %v8658
        %v8660 = vrot.slane %v8655, 4
        %v8662 = vshrl.u32 %v8525, 16
        %v8664 = vrot.slane %v8662, 7
        %v8665 = vshll.u32 %v8525, 16
        %v8667 = vor.u32 %v8664, %v8665
        %v8668 = vsel %vm435, %v8660, %v8667
        %v8670 = vshrl.u32 %v8526, 16
        %v8672 = vrot.slane %v8670, 7
        %v8673 = vrot.slane %v8672, 4
        %v8675 = vshrl.u32 %v8527, 16
        %v8677 = vrot.slane %v8675, 7
        %v8678 = vshll.u32 %v8527, 16
        %v8680 = vor.u32 %v8677, %v8678
        %v8681 = vsel %vm435, %v8673, %v8680
        %v8682 = vrot.slane %v8677, 4
        %v8684 = vshrl.u32 %v8528, 16
        %v8686 = vrot.slane %v8684, 7
        %v8687 = vshll.u32 %v8528, 16
        %v8689 = vor.u32 %v8686, %v8687
        %v8690 = vsel %vm435, %v8682, %v8689
        %v8692 = vshrl.u32 %v8529, 16
        %v8694 = vrot.slane %v8692, 7
        %v8695 = vrot.slane %v8694, 4
        %v8697 = vshrl.u32 %v8530, 16
        %v8699 = vrot.slane %v8697, 7
        %v8700 = vshll.u32 %v8530, 16
        %v8702 = vor.u32 %v8699, %v8700
        %v8703 = vsel %vm435, %v8695, %v8702
        %v8704 = vrot.slane %v8699, 4
        %v8706 = vshrl.u32 %v8531, 16
        %v8708 = vrot.slane %v8706, 7
        %v8709 = vshll.u32 %v8531, 16
        %v8711 = vor.u32 %v8708, %v8709
        %v8712 = vsel %vm435, %v8704, %v8711
        %v8714 = vshrl.u32 %v8532, 16
        %v8716 = vrot.slane %v8714, 7
        %v8717 = vrot.slane %v8716, 4
        %v8719 = vshrl.u32 %v8533, 16
        %v8721 = vrot.slane %v8719, 7
        %v8722 = vshll.u32 %v8533, 16
        %v8724 = vor.u32 %v8721, %v8722
        %v8725 = vsel %vm435, %v8717, %v8724
        %v8726 = vrot.slane %v8721, 4
        %v8728 = vshrl.u32 %v8534, 16
        %v8730 = vrot.slane %v8728, 7
        %v8731 = vshll.u32 %v8534, 16
        %v8733 = vor.u32 %v8730, %v8731
        %v8734 = vsel %vm435, %v8726, %v8733
        %v8736 = vshrl.u32 %v8535, 16
        %v8738 = vrot.slane %v8736, 7
        %v8739 = vrot.slane %v8738, 4
        %v8741 = vshrl.u32 %v8536, 16
        %v8743 = vrot.slane %v8741, 7
        %v8744 = vshll.u32 %v8536, 16
        %v8746 = vor.u32 %v8743, %v8744
        %v8747 = vsel %vm435, %v8739, %v8746
        %v8748 = vrot.slane %v8743, 4
        %v8750 = vshrl.u32 %v8537, 16
        %v8752 = vrot.slane %v8750, 7
        %v8753 = vshll.u32 %v8537, 16
        %v8755 = vor.u32 %v8752, %v8753
        %v8756 = vsel %vm435, %v8748, %v8755
        %v8758 = vshrl.u32 %v8538, 16
        %v8760 = vrot.slane %v8758, 7
        %v8761 = vrot.slane %v8760, 4
        %v8763 = vshrl.u32 %v8539, 16
        %v8765 = vrot.slane %v8763, 7
        %v8766 = vshll.u32 %v8539, 16
        %v8768 = vor.u32 %v8765, %v8766
        %v8769 = vsel %vm435, %v8761, %v8768
        %v8770 = vrot.slane %v8765, 4
        %v8772 = vshrl.u32 %v8540, 16
        %v8774 = vrot.slane %v8772, 7
        %v8775 = vshll.u32 %v8540, 16
        %v8777 = vor.u32 %v8774, %v8775
        %v8778 = vsel %vm435, %v8770, %v8777
        %v8780 = vshrl.u32 %v8541, 16
        %v8782 = vrot.slane %v8780, 7
        %v8783 = vrot.slane %v8782, 4
        %v8785 = vshrl.u32 %v8542, 16
        %v8787 = vrot.slane %v8785, 7
        %v8788 = vshll.u32 %v8542, 16
        %v8790 = vor.u32 %v8787, %v8788
        %v8791 = vsel %vm435, %v8783, %v8790
        %v8792 = vrot.slane %v8787, 4
        %v8794 = vshrl.u32 %v8543, 16
        %v8796 = vrot.slane %v8794, 7
        %v8797 = vshll.u32 %v8543, 16
        %v8799 = vor.u32 %v8796, %v8797
        %v8800 = vsel %vm435, %v8792, %v8799
        %v8802 = vshrl.u32 %v8544, 16
        %v8804 = vrot.slane %v8802, 7
        %v8805 = vrot.slane %v8804, 4
        %v8807 = vshrl.u32 %v8545, 16
        %v8809 = vrot.slane %v8807, 7
        %v8810 = vshll.u32 %v8545, 16
        %v8812 = vor.u32 %v8809, %v8810
        %v8813 = vsel %vm435, %v8805, %v8812
        %v8814 = vrot.slane %v8809, 4
        %v8816 = vshrl.u32 %v8546, 16
        %v8818 = vrot.slane %v8816, 7
        %v8819 = vshll.u32 %v8546, 16
        %v8821 = vor.u32 %v8818, %v8819
        %v8822 = vsel %vm435, %v8814, %v8821
        %v8824 = vshrl.u32 %v8547, 16
        %v8826 = vrot.slane %v8824, 7
        %v8827 = vrot.slane %v8826, 4
        %v8829 = vshrl.u32 %v8548, 16
        %v8831 = vrot.slane %v8829, 7
        %v8832 = vshll.u32 %v8548, 16
        %v8834 = vor.u32 %v8831, %v8832
        %v8835 = vsel %vm435, %v8827, %v8834
        %v8836 = vrot.slane %v8831, 4
        %v8838 = vshrl.u32 %v8549, 16
        %v8840 = vrot.slane %v8838, 7
        %v8841 = vshll.u32 %v8549, 16
        %v8843 = vor.u32 %v8840, %v8841
        %v8844 = vsel %vm435, %v8836, %v8843
        %v8846 = vshrl.u32 %v8550, 16
        %v8848 = vrot.slane %v8846, 7
        %v8849 = vrot.slane %v8848, 4
        %v8851 = vshrl.u32 %v8551, 16
        %v8853 = vrot.slane %v8851, 7
        %v8854 = vshll.u32 %v8551, 16
        %v8856 = vor.u32 %v8853, %v8854
        %v8857 = vsel %vm435, %v8849, %v8856
        %v8858 = vrot.slane %v8853, 4
        %v8860 = vshrl.u32 %v8552, 16
        %v8862 = vrot.slane %v8860, 7
        %v8863 = vshll.u32 %v8552, 16
        %v8865 = vor.u32 %v8862, %v8863
        %v8866 = vsel %vm435, %v8858, %v8865
        %v8868 = vshrl.u32 %v8553, 16
        %v8870 = vrot.slane %v8868, 7
        %v8871 = vrot.slane %v8870, 4
        %v8873 = vshrl.u32 %v8554, 16
        %v8875 = vrot.slane %v8873, 7
        %v8876 = vshll.u32 %v8554, 16
        %v8878 = vor.u32 %v8875, %v8876
        %v8879 = vsel %vm435, %v8871, %v8878
        %v8880 = vrot.slane %v8875, 4
        %v8882 = vshrl.u32 %v8555, 16
        %v8884 = vrot.slane %v8882, 7
        %v8885 = vshll.u32 %v8555, 16
        %v8887 = vor.u32 %v8884, %v8885
        %v8888 = vsel %vm435, %v8880, %v8887
        %v8890 = vshrl.u32 %v8556, 16
        %v8892 = vrot.slane %v8890, 7
        %v8893 = vrot.slane %v8892, 4
        %v8895 = vshrl.u32 %v8557, 16
        %v8897 = vrot.slane %v8895, 7
        %v8898 = vshll.u32 %v8557, 16
        %v8900 = vor.u32 %v8897, %v8898
        %v8901 = vsel %vm435, %v8893, %v8900
        %v8902 = vrot.slane %v8897, 4
        %v8904 = vshrl.u32 %v8558, 16
        %v8906 = vrot.slane %v8904, 7
        %v8907 = vshll.u32 %v8558, 16
        %v8909 = vor.u32 %v8906, %v8907
        %v8910 = vsel %vm435, %v8902, %v8909
        %s8911 = scalar_lea.vmem [#allocation8], 384
        %v8912 = vld [vmem:[%s8911] sm:$0xf]
        %v8913 = vld [vmem:[%s8911 + $0x4] sm:$0xf]
        %v8914 = vld [vmem:[%s8911 + $0x8] sm:$0xf]
        %v8915 = vld [vmem:[%s8911 + $0xc] sm:$0xf]
        %v8916 = vld [vmem:[%s8911 + $0x10] sm:$0xf]
        %v8917 = vld [vmem:[%s8911 + $0x14] sm:$0xf]
        %v8918 = vld [vmem:[%s8911 + $0x18] sm:$0xf]
        %v8919 = vld [vmem:[%s8911 + $0x1c] sm:$0xf]
        %v8920 = vld [vmem:[%s8911 + $0x20] sm:$0xf]
        %v8921 = vld [vmem:[%s8911 + $0x24] sm:$0xf]
        %v8922 = vld [vmem:[%s8911 + $0x28] sm:$0xf]
        %v8923 = vld [vmem:[%s8911 + $0x2c] sm:$0xf]
        %v8924 = vld [vmem:[%s8911 + $0x30] sm:$0xf]
        %v8925 = vld [vmem:[%s8911 + $0x34] sm:$0xf]
        %v8926 = vld [vmem:[%s8911 + $0x38] sm:$0xf]
        %v8927 = vld [vmem:[%s8911 + $0x3c] sm:$0xf]
        %v8928 = vunpack.c.l.b16 %v8571
        %v8929 = vunpack.c.l.b16 %v8580
        %v8930 = vunpack.c.l.b16 %v8593
        %v8931 = vunpack.c.l.b16 %v8602
        %v8932 = vunpack.c.l.b16 %v8615
        %v8933 = vunpack.c.l.b16 %v8624
        %v8934 = vunpack.c.l.b16 %v8637
        %v8935 = vunpack.c.l.b16 %v8646
        %v8936 = vunpack.c.l.b16 %v8659
        %v8937 = vunpack.c.l.b16 %v8668
        %v8938 = vunpack.c.l.b16 %v8681
        %v8939 = vunpack.c.l.b16 %v8690
        %v8940 = vunpack.c.l.b16 %v8703
        %v8941 = vunpack.c.l.b16 %v8712
        %v8942 = vunpack.c.l.b16 %v8725
        %v8943 = vunpack.c.l.b16 %v8734
        %v8944 = vunpack.c.l.b16 %v8747
        %v8945 = vunpack.c.l.b16 %v8756
        %v8946 = vunpack.c.l.b16 %v8769
        %v8947 = vunpack.c.l.b16 %v8778
        %v8948 = vunpack.c.l.b16 %v8791
        %v8949 = vunpack.c.l.b16 %v8800
        %v8950 = vunpack.c.l.b16 %v8813
        %v8951 = vunpack.c.l.b16 %v8822
        %v8952 = vunpack.c.l.b16 %v8835
        %v8953 = vunpack.c.l.b16 %v8844
        %v8954 = vunpack.c.l.b16 %v8857
        %v8955 = vunpack.c.l.b16 %v8866
        %v8956 = vunpack.c.l.b16 %v8879
        %v8957 = vunpack.c.l.b16 %v8888
        %v8958 = vunpack.c.l.b16 %v8901
        %v8959 = vunpack.c.l.b16 %v8910
        %v8960 = vpack.c.b16 %v8929, %v8928
        %v8961 = vpack.c.b16 %v8931, %v8930
        %v8962 = vpack.c.b16 %v8933, %v8932
        %v8963 = vpack.c.b16 %v8935, %v8934
        %v8964 = vpack.c.b16 %v8937, %v8936
        %v8965 = vpack.c.b16 %v8939, %v8938
        %v8966 = vpack.c.b16 %v8941, %v8940
        %v8967 = vpack.c.b16 %v8943, %v8942
        %v8968 = vpack.c.b16 %v8945, %v8944
        %v8969 = vpack.c.b16 %v8947, %v8946
        %v8970 = vpack.c.b16 %v8949, %v8948
        %v8971 = vpack.c.b16 %v8951, %v8950
        %v8972 = vpack.c.b16 %v8953, %v8952
        %v8973 = vpack.c.b16 %v8955, %v8954
        %v8974 = vpack.c.b16 %v8957, %v8956
        %v8975 = vpack.c.b16 %v8959, %v8958
        %v9008 = vunpack.c.l.b16 %v8912
        %v9009 = vunpack.c.l.b16 %v8913
        %v9010 = vunpack.c.l.b16 %v8914
        %v9011 = vunpack.c.l.b16 %v8915
        %v9012 = vunpack.c.l.b16 %v8916
        %v9013 = vunpack.c.l.b16 %v8917
        %v9014 = vunpack.c.l.b16 %v8918
        %v9015 = vunpack.c.l.b16 %v8919
        %v9016 = vunpack.c.l.b16 %v8920
        %v9017 = vunpack.c.l.b16 %v8921
        %v9018 = vunpack.c.l.b16 %v8922
        %v9019 = vunpack.c.l.b16 %v8923
        %v9020 = vunpack.c.l.b16 %v8924
        %v9021 = vunpack.c.l.b16 %v8925
        %v9022 = vunpack.c.l.b16 %v8926
        %v9023 = vunpack.c.l.b16 %v8927
        %v9024 = vpack.c.b16 %v9009, %v9008
        %v9025 = vpack.c.b16 %v9011, %v9010
        %v9026 = vpack.c.b16 %v9013, %v9012
        %v9027 = vpack.c.b16 %v9015, %v9014
        %v9028 = vpack.c.b16 %v9017, %v9016
        %v9029 = vpack.c.b16 %v9019, %v9018
        %v9030 = vpack.c.b16 %v9021, %v9020
        %v9031 = vpack.c.b16 %v9023, %v9022
        %9040 = vmatpush.bf16.msra.mxu0 %v9031
        %9041 = vmatpush.bf16.msra.mxu0 %v9030
        %9042 = vmatpush.bf16.msra.mxu0 %v9029
        %9043 = vmatpush.bf16.msra.mxu0 %v9028
        %9044 = vmatpush.bf16.msra.mxu0 %v9027
        %9045 = vmatpush.bf16.msra.mxu0 %v9026
        %9046 = vmatpush.bf16.msra.mxu0 %v9025
        %9047 = vmatpush.bf16.msra.mxu0 %v9024
        %9048 = vmatmul.bf16.gmra.mxu0 %v8960
        %v9049 = vpop.f32.mrf.mxu0
        %v9050 = vadd.f32 0.0, %v9049
        %v9051 = vpop.f32.mrf.mxu0
        %v9052 = vadd.f32 0.0, %v9051
        %9053 = vmatmul.bf16.gmra.mxu0 %v8961
        %v9054 = vpop.f32.mrf.mxu0
        %v9055 = vadd.f32 0.0, %v9054
        %v9056 = vpop.f32.mrf.mxu0
        %v9057 = vadd.f32 0.0, %v9056
        %9058 = vmatmul.bf16.gmra.mxu0 %v8962
        %v9059 = vpop.f32.mrf.mxu0
        %v9060 = vadd.f32 0.0, %v9059
        %v9061 = vpop.f32.mrf.mxu0
        %v9062 = vadd.f32 0.0, %v9061
        %9063 = vmatmul.bf16.gmra.mxu0 %v8963
        %v9064 = vpop.f32.mrf.mxu0
        %v9065 = vadd.f32 0.0, %v9064
        %v9066 = vpop.f32.mrf.mxu0
        %v9067 = vadd.f32 0.0, %v9066
        %9068 = vmatmul.bf16.gmra.mxu0 %v8964
        %v9069 = vpop.f32.mrf.mxu0
        %v9070 = vadd.f32 0.0, %v9069
        %v9071 = vpop.f32.mrf.mxu0
        %v9072 = vadd.f32 0.0, %v9071
        %9073 = vmatmul.bf16.gmra.mxu0 %v8965
        %v9074 = vpop.f32.mrf.mxu0
        %v9075 = vadd.f32 0.0, %v9074
        %v9076 = vpop.f32.mrf.mxu0
        %v9077 = vadd.f32 0.0, %v9076
        %9078 = vmatmul.bf16.gmra.mxu0 %v8966
        %v9079 = vpop.f32.mrf.mxu0
        %v9080 = vadd.f32 0.0, %v9079
        %v9081 = vpop.f32.mrf.mxu0
        %v9082 = vadd.f32 0.0, %v9081
        %9083 = vmatmul.bf16.gmra.mxu0 %v8967
        %v9084 = vpop.f32.mrf.mxu0
        %v9085 = vadd.f32 0.0, %v9084
        %v9086 = vpop.f32.mrf.mxu0
        %v9087 = vadd.f32 0.0, %v9086
        %9088 = vmatmul.bf16.gmra.mxu0 %v8968
        %v9089 = vpop.f32.mrf.mxu0
        %v9090 = vadd.f32 0.0, %v9089
        %v9091 = vpop.f32.mrf.mxu0
        %v9092 = vadd.f32 0.0, %v9091
        %9093 = vmatmul.bf16.gmra.mxu0 %v8969
        %v9094 = vpop.f32.mrf.mxu0
        %v9095 = vadd.f32 0.0, %v9094
        %v9096 = vpop.f32.mrf.mxu0
        %v9097 = vadd.f32 0.0, %v9096
        %9098 = vmatmul.bf16.gmra.mxu0 %v8970
        %v9099 = vpop.f32.mrf.mxu0
        %v9100 = vadd.f32 0.0, %v9099
        %v9101 = vpop.f32.mrf.mxu0
        %v9102 = vadd.f32 0.0, %v9101
        %9103 = vmatmul.bf16.gmra.mxu0 %v8971
        %v9104 = vpop.f32.mrf.mxu0
        %v9105 = vadd.f32 0.0, %v9104
        %v9106 = vpop.f32.mrf.mxu0
        %v9107 = vadd.f32 0.0, %v9106
        %9108 = vmatmul.bf16.gmra.mxu0 %v8972
        %v9109 = vpop.f32.mrf.mxu0
        %v9110 = vadd.f32 0.0, %v9109
        %v9111 = vpop.f32.mrf.mxu0
        %v9112 = vadd.f32 0.0, %v9111
        %9113 = vmatmul.bf16.gmra.mxu0 %v8973
        %v9114 = vpop.f32.mrf.mxu0
        %v9115 = vadd.f32 0.0, %v9114
        %v9116 = vpop.f32.mrf.mxu0
        %v9117 = vadd.f32 0.0, %v9116
        %9118 = vmatmul.bf16.gmra.mxu0 %v8974
        %v9119 = vpop.f32.mrf.mxu0
        %v9120 = vadd.f32 0.0, %v9119
        %v9121 = vpop.f32.mrf.mxu0
        %v9122 = vadd.f32 0.0, %v9121
        %9123 = vmatmul.bf16.gmra.mxu0 %v8975
        %v9124 = vpop.f32.mrf.mxu0
        %v9125 = vadd.f32 0.0, %v9124
        %v9126 = vpop.f32.mrf.mxu0
        %v9127 = vadd.f32 0.0, %v9126
        %9128 = vdwg.mxu0
        %v9129 = vadd.f32 %v8477, %v9050
        %v9130 = vadd.f32 %v8478, %v9052
        %v9131 = vadd.f32 %v8479, %v9055
        %v9132 = vadd.f32 %v8480, %v9057
        %v9133 = vadd.f32 %v8481, %v9060
        %v9134 = vadd.f32 %v8482, %v9062
        %v9135 = vadd.f32 %v8483, %v9065
        %v9136 = vadd.f32 %v8484, %v9067
        %v9137 = vadd.f32 %v8485, %v9070
        %v9138 = vadd.f32 %v8486, %v9072
        %v9139 = vadd.f32 %v8487, %v9075
        %v9140 = vadd.f32 %v8488, %v9077
        %v9141 = vadd.f32 %v8489, %v9080
        %v9142 = vadd.f32 %v8490, %v9082
        %v9143 = vadd.f32 %v8491, %v9085
        %v9144 = vadd.f32 %v8492, %v9087
        %v9145 = vadd.f32 %v8493, %v9090
        %v9146 = vadd.f32 %v8494, %v9092
        %v9147 = vadd.f32 %v8495, %v9095
        %v9148 = vadd.f32 %v8496, %v9097
        %v9149 = vadd.f32 %v8497, %v9100
        %v9150 = vadd.f32 %v8498, %v9102
        %v9151 = vadd.f32 %v8499, %v9105
        %v9152 = vadd.f32 %v8500, %v9107
        %v9153 = vadd.f32 %v8501, %v9110
        %v9154 = vadd.f32 %v8502, %v9112
        %v9155 = vadd.f32 %v8503, %v9115
        %v9156 = vadd.f32 %v8504, %v9117
        %v9157 = vadd.f32 %v8505, %v9120
        %v9158 = vadd.f32 %v8506, %v9122
        %v9159 = vadd.f32 %v8507, %v9125
        %v9160 = vadd.f32 %v8508, %v9127
        %s9161 = scalar_lea.vmem [#allocation8], 448
        %v9162 = vld [vmem:[%s9161] sm:$0xf]
        %v9163 = vld [vmem:[%s9161 + $0x4] sm:$0xf]
        %v9164 = vld [vmem:[%s9161 + $0x8] sm:$0xf]
        %v9165 = vld [vmem:[%s9161 + $0xc] sm:$0xf]
        %v9166 = vld [vmem:[%s9161 + $0x10] sm:$0xf]
        %v9167 = vld [vmem:[%s9161 + $0x14] sm:$0xf]
        %v9168 = vld [vmem:[%s9161 + $0x18] sm:$0xf]
        %v9169 = vld [vmem:[%s9161 + $0x1c] sm:$0xf]
        %v9170 = vld [vmem:[%s9161 + $0x20] sm:$0xf]
        %v9171 = vld [vmem:[%s9161 + $0x24] sm:$0xf]
        %v9172 = vld [vmem:[%s9161 + $0x28] sm:$0xf]
        %v9173 = vld [vmem:[%s9161 + $0x2c] sm:$0xf]
        %v9174 = vld [vmem:[%s9161 + $0x30] sm:$0xf]
        %v9175 = vld [vmem:[%s9161 + $0x34] sm:$0xf]
        %v9176 = vld [vmem:[%s9161 + $0x38] sm:$0xf]
        %v9177 = vld [vmem:[%s9161 + $0x3c] sm:$0xf]
        %v9210 = vunpack.c.l.b16 %v8512
        %v9211 = vunpack.c.l.b16 %v8513
        %v9212 = vunpack.c.l.b16 %v8515
        %v9213 = vunpack.c.l.b16 %v8516
        %v9214 = vunpack.c.l.b16 %v8518
        %v9215 = vunpack.c.l.b16 %v8519
        %v9216 = vunpack.c.l.b16 %v8521
        %v9217 = vunpack.c.l.b16 %v8522
        %v9218 = vunpack.c.l.b16 %v8524
        %v9219 = vunpack.c.l.b16 %v8525
        %v9220 = vunpack.c.l.b16 %v8527
        %v9221 = vunpack.c.l.b16 %v8528
        %v9222 = vunpack.c.l.b16 %v8530
        %v9223 = vunpack.c.l.b16 %v8531
        %v9224 = vunpack.c.l.b16 %v8533
        %v9225 = vunpack.c.l.b16 %v8534
        %v9226 = vunpack.c.l.b16 %v8536
        %v9227 = vunpack.c.l.b16 %v8537
        %v9228 = vunpack.c.l.b16 %v8539
        %v9229 = vunpack.c.l.b16 %v8540
        %v9230 = vunpack.c.l.b16 %v8542
        %v9231 = vunpack.c.l.b16 %v8543
        %v9232 = vunpack.c.l.b16 %v8545
        %v9233 = vunpack.c.l.b16 %v8546
        %v9234 = vunpack.c.l.b16 %v8548
        %v9235 = vunpack.c.l.b16 %v8549
        %v9236 = vunpack.c.l.b16 %v8551
        %v9237 = vunpack.c.l.b16 %v8552
        %v9238 = vunpack.c.l.b16 %v8554
        %v9239 = vunpack.c.l.b16 %v8555
        %v9240 = vunpack.c.l.b16 %v8557
        %v9241 = vunpack.c.l.b16 %v8558
        %v9242 = vpack.c.b16 %v9211, %v9210
        %v9243 = vpack.c.b16 %v9213, %v9212
        %v9244 = vpack.c.b16 %v9215, %v9214
        %v9245 = vpack.c.b16 %v9217, %v9216
        %v9246 = vpack.c.b16 %v9219, %v9218
        %v9247 = vpack.c.b16 %v9221, %v9220
        %v9248 = vpack.c.b16 %v9223, %v9222
        %v9249 = vpack.c.b16 %v9225, %v9224
        %v9250 = vpack.c.b16 %v9227, %v9226
        %v9251 = vpack.c.b16 %v9229, %v9228
        %v9252 = vpack.c.b16 %v9231, %v9230
        %v9253 = vpack.c.b16 %v9233, %v9232
        %v9254 = vpack.c.b16 %v9235, %v9234
        %v9255 = vpack.c.b16 %v9237, %v9236
        %v9256 = vpack.c.b16 %v9239, %v9238
        %v9257 = vpack.c.b16 %v9241, %v9240
        %v9290 = vunpack.c.l.b16 %v9162
        %v9291 = vunpack.c.l.b16 %v9163
        %v9292 = vunpack.c.l.b16 %v9164
        %v9293 = vunpack.c.l.b16 %v9165
        %v9294 = vunpack.c.l.b16 %v9166
        %v9295 = vunpack.c.l.b16 %v9167
        %v9296 = vunpack.c.l.b16 %v9168
        %v9297 = vunpack.c.l.b16 %v9169
        %v9298 = vunpack.c.l.b16 %v9170
        %v9299 = vunpack.c.l.b16 %v9171
        %v9300 = vunpack.c.l.b16 %v9172
        %v9301 = vunpack.c.l.b16 %v9173
        %v9302 = vunpack.c.l.b16 %v9174
        %v9303 = vunpack.c.l.b16 %v9175
        %v9304 = vunpack.c.l.b16 %v9176
        %v9305 = vunpack.c.l.b16 %v9177
        %v9306 = vpack.c.b16 %v9291, %v9290
        %v9307 = vpack.c.b16 %v9293, %v9292
        %v9308 = vpack.c.b16 %v9295, %v9294
        %v9309 = vpack.c.b16 %v9297, %v9296
        %v9310 = vpack.c.b16 %v9299, %v9298
        %v9311 = vpack.c.b16 %v9301, %v9300
        %v9312 = vpack.c.b16 %v9303, %v9302
        %v9313 = vpack.c.b16 %v9305, %v9304
        %9322 = vmatpush.bf16.msra.mxu0 %v9313
        %9323 = vmatpush.bf16.msra.mxu0 %v9312
        %9324 = vmatpush.bf16.msra.mxu0 %v9311
        %9325 = vmatpush.bf16.msra.mxu0 %v9310
        %9326 = vmatpush.bf16.msra.mxu0 %v9309
        %9327 = vmatpush.bf16.msra.mxu0 %v9308
        %9328 = vmatpush.bf16.msra.mxu0 %v9307
        %9329 = vmatpush.bf16.msra.mxu0 %v9306
        %9330 = vmatmul.bf16.gmra.mxu0 %v9242
        %v9331 = vpop.f32.mrf.mxu0
        %v9332 = vadd.f32 0.0, %v9331
        %v9333 = vpop.f32.mrf.mxu0
        %v9334 = vadd.f32 0.0, %v9333
        %9335 = vmatmul.bf16.gmra.mxu0 %v9243
        %v9336 = vpop.f32.mrf.mxu0
        %v9337 = vadd.f32 0.0, %v9336
        %v9338 = vpop.f32.mrf.mxu0
        %v9339 = vadd.f32 0.0, %v9338
        %9340 = vmatmul.bf16.gmra.mxu0 %v9244
        %v9341 = vpop.f32.mrf.mxu0
        %v9342 = vadd.f32 0.0, %v9341
        %v9343 = vpop.f32.mrf.mxu0
        %v9344 = vadd.f32 0.0, %v9343
        %9345 = vmatmul.bf16.gmra.mxu0 %v9245
        %v9346 = vpop.f32.mrf.mxu0
        %v9347 = vadd.f32 0.0, %v9346
        %v9348 = vpop.f32.mrf.mxu0
        %v9349 = vadd.f32 0.0, %v9348
        %9350 = vmatmul.bf16.gmra.mxu0 %v9246
        %v9351 = vpop.f32.mrf.mxu0
        %v9352 = vadd.f32 0.0, %v9351
        %v9353 = vpop.f32.mrf.mxu0
        %v9354 = vadd.f32 0.0, %v9353
        %9355 = vmatmul.bf16.gmra.mxu0 %v9247
        %v9356 = vpop.f32.mrf.mxu0
        %v9357 = vadd.f32 0.0, %v9356
        %v9358 = vpop.f32.mrf.mxu0
        %v9359 = vadd.f32 0.0, %v9358
        %9360 = vmatmul.bf16.gmra.mxu0 %v9248
        %v9361 = vpop.f32.mrf.mxu0
        %v9362 = vadd.f32 0.0, %v9361
        %v9363 = vpop.f32.mrf.mxu0
        %v9364 = vadd.f32 0.0, %v9363
        %9365 = vmatmul.bf16.gmra.mxu0 %v9249
        %v9366 = vpop.f32.mrf.mxu0
        %v9367 = vadd.f32 0.0, %v9366
        %v9368 = vpop.f32.mrf.mxu0
        %v9369 = vadd.f32 0.0, %v9368
        %9370 = vmatmul.bf16.gmra.mxu0 %v9250
        %v9371 = vpop.f32.mrf.mxu0
        %v9372 = vadd.f32 0.0, %v9371
        %v9373 = vpop.f32.mrf.mxu0
        %v9374 = vadd.f32 0.0, %v9373
        %9375 = vmatmul.bf16.gmra.mxu0 %v9251
        %v9376 = vpop.f32.mrf.mxu0
        %v9377 = vadd.f32 0.0, %v9376
        %v9378 = vpop.f32.mrf.mxu0
        %v9379 = vadd.f32 0.0, %v9378
        %9380 = vmatmul.bf16.gmra.mxu0 %v9252
        %v9381 = vpop.f32.mrf.mxu0
        %v9382 = vadd.f32 0.0, %v9381
        %v9383 = vpop.f32.mrf.mxu0
        %v9384 = vadd.f32 0.0, %v9383
        %9385 = vmatmul.bf16.gmra.mxu0 %v9253
        %v9386 = vpop.f32.mrf.mxu0
        %v9387 = vadd.f32 0.0, %v9386
        %v9388 = vpop.f32.mrf.mxu0
        %v9389 = vadd.f32 0.0, %v9388
        %9390 = vmatmul.bf16.gmra.mxu0 %v9254
        %v9391 = vpop.f32.mrf.mxu0
        %v9392 = vadd.f32 0.0, %v9391
        %v9393 = vpop.f32.mrf.mxu0
        %v9394 = vadd.f32 0.0, %v9393
        %9395 = vmatmul.bf16.gmra.mxu0 %v9255
        %v9396 = vpop.f32.mrf.mxu0
        %v9397 = vadd.f32 0.0, %v9396
        %v9398 = vpop.f32.mrf.mxu0
        %v9399 = vadd.f32 0.0, %v9398
        %9400 = vmatmul.bf16.gmra.mxu0 %v9256
        %v9401 = vpop.f32.mrf.mxu0
        %v9402 = vadd.f32 0.0, %v9401
        %v9403 = vpop.f32.mrf.mxu0
        %v9404 = vadd.f32 0.0, %v9403
        %9405 = vmatmul.bf16.gmra.mxu0 %v9257
        %v9406 = vpop.f32.mrf.mxu0
        %v9407 = vadd.f32 0.0, %v9406
        %v9408 = vpop.f32.mrf.mxu0
        %v9409 = vadd.f32 0.0, %v9408
        %9410 = vdwg.mxu0
        %v9411 = vadd.f32 %v9129, %v9332
        %v9412 = vadd.f32 %v9130, %v9334
        %v9413 = vadd.f32 %v9131, %v9337
        %v9414 = vadd.f32 %v9132, %v9339
        %v9415 = vadd.f32 %v9133, %v9342
        %v9416 = vadd.f32 %v9134, %v9344
        %v9417 = vadd.f32 %v9135, %v9347
        %v9418 = vadd.f32 %v9136, %v9349
        %v9419 = vadd.f32 %v9137, %v9352
        %v9420 = vadd.f32 %v9138, %v9354
        %v9421 = vadd.f32 %v9139, %v9357
        %v9422 = vadd.f32 %v9140, %v9359
        %v9423 = vadd.f32 %v9141, %v9362
        %v9424 = vadd.f32 %v9142, %v9364
        %v9425 = vadd.f32 %v9143, %v9367
        %v9426 = vadd.f32 %v9144, %v9369
        %v9427 = vadd.f32 %v9145, %v9372
        %v9428 = vadd.f32 %v9146, %v9374
        %v9429 = vadd.f32 %v9147, %v9377
        %v9430 = vadd.f32 %v9148, %v9379
        %v9431 = vadd.f32 %v9149, %v9382
        %v9432 = vadd.f32 %v9150, %v9384
        %v9433 = vadd.f32 %v9151, %v9387
        %v9434 = vadd.f32 %v9152, %v9389
        %v9435 = vadd.f32 %v9153, %v9392
        %v9436 = vadd.f32 %v9154, %v9394
        %v9437 = vadd.f32 %v9155, %v9397
        %v9438 = vadd.f32 %v9156, %v9399
        %v9439 = vadd.f32 %v9157, %v9402
        %v9440 = vadd.f32 %v9158, %v9404
        %v9441 = vadd.f32 %v9159, %v9407
        %v9442 = vadd.f32 %v9160, %v9409
        %v9443 = vld [vmem:[%s8510 + $0x4] sm:$0xf]
        %v9444 = vld [vmem:[%s8510 + $0x8] sm:$0xf]
        %v9445 = vld [vmem:[%s8510 + $0xc] sm:$0x1]
        %v9446 = vld [vmem:[%s8510 + $0x14] sm:$0xf]
        %v9447 = vld [vmem:[%s8510 + $0x18] sm:$0xf]
        %v9448 = vld [vmem:[%s8510 + $0x1c] sm:$0x1]
        %v9449 = vld [vmem:[%s8510 + $0x24] sm:$0xf]
        %v9450 = vld [vmem:[%s8510 + $0x28] sm:$0xf]
        %v9451 = vld [vmem:[%s8510 + $0x2c] sm:$0x1]
        %v9452 = vld [vmem:[%s8510 + $0x34] sm:$0xf]
        %v9453 = vld [vmem:[%s8510 + $0x38] sm:$0xf]
        %v9454 = vld [vmem:[%s8510 + $0x3c] sm:$0x1]
        %v9455 = vld [vmem:[%s8510 + $0x44] sm:$0xf]
        %v9456 = vld [vmem:[%s8510 + $0x48] sm:$0xf]
        %v9457 = vld [vmem:[%s8510 + $0x4c] sm:$0x1]
        %v9458 = vld [vmem:[%s8510 + $0x54] sm:$0xf]
        %v9459 = vld [vmem:[%s8510 + $0x58] sm:$0xf]
        %v9460 = vld [vmem:[%s8510 + $0x5c] sm:$0x1]
        %v9461 = vld [vmem:[%s8510 + $0x64] sm:$0xf]
        %v9462 = vld [vmem:[%s8510 + $0x68] sm:$0xf]
        %v9463 = vld [vmem:[%s8510 + $0x6c] sm:$0x1]
        %v9464 = vld [vmem:[%s8510 + $0x74] sm:$0xf]
        %v9465 = vld [vmem:[%s8510 + $0x78] sm:$0xf]
        %v9466 = vld [vmem:[%s8510 + $0x7c] sm:$0x1]
        %v9467 = vld [vmem:[%s8510 + $0x84] sm:$0xf]
        %v9468 = vld [vmem:[%s8510 + $0x88] sm:$0xf]
        %v9469 = vld [vmem:[%s8510 + $0x8c] sm:$0x1]
        %v9470 = vld [vmem:[%s8510 + $0x94] sm:$0xf]
        %v9471 = vld [vmem:[%s8510 + $0x98] sm:$0xf]
        %v9472 = vld [vmem:[%s8510 + $0x9c] sm:$0x1]
        %v9473 = vld [vmem:[%s8510 + $0xa4] sm:$0xf]
        %v9474 = vld [vmem:[%s8510 + $0xa8] sm:$0xf]
        %v9475 = vld [vmem:[%s8510 + $0xac] sm:$0x1]
        %v9476 = vld [vmem:[%s8510 + $0xb4] sm:$0xf]
        %v9477 = vld [vmem:[%s8510 + $0xb8] sm:$0xf]
        %v9478 = vld [vmem:[%s8510 + $0xbc] sm:$0x1]
        %v9479 = vld [vmem:[%s8510 + $0xc4] sm:$0xf]
        %v9480 = vld [vmem:[%s8510 + $0xc8] sm:$0xf]
        %v9481 = vld [vmem:[%s8510 + $0xcc] sm:$0x1]
        %v9482 = vld [vmem:[%s8510 + $0xd4] sm:$0xf]
        %v9483 = vld [vmem:[%s8510 + $0xd8] sm:$0xf]
        %v9484 = vld [vmem:[%s8510 + $0xdc] sm:$0x1]
        %v9485 = vld [vmem:[%s8510 + $0xe4] sm:$0xf]
        %v9486 = vld [vmem:[%s8510 + $0xe8] sm:$0xf]
        %v9487 = vld [vmem:[%s8510 + $0xec] sm:$0x1]
        %v9488 = vld [vmem:[%s8510 + $0xf4] sm:$0xf]
        %v9489 = vld [vmem:[%s8510 + $0xf8] sm:$0xf]
        %v9490 = vld [vmem:[%s8510 + $0xfc] sm:$0x1]
        %v9492 = vshrl.u32 %v9443, 16
        %v9494 = vrot.slane %v9492, 4
        %v9495 = vshll.u32 %v9443, 16
        %v9497 = vrot.slane %v9495, 5
        %v9498 = vor.u32 %v9494, %v9497
        %v9499 = vrot.slane %v9498, 4
        %v9501 = vshll.u32 %v9444, 16
        %v9503 = vrot.slane %v9501, 5
        %v9504 = vsel %vm1305, %v9499, %v9503
        %v9505 = vshrl.u32 %v9444, 16
        %v9507 = vrot.slane %v9505, 4
        %v9508 = vor.u32 %v9507, %v9503
        %v9509 = vrot.slane %v9508, 4
        %v9511 = vshll.u32 %v9445, 16
        %v9513 = vrot.slane %v9511, 5
        %v9514 = vsel %vm1305, %v9509, %v9513
        %v9516 = vshrl.u32 %v9446, 16
        %v9518 = vrot.slane %v9516, 4
        %v9519 = vshll.u32 %v9446, 16
        %v9521 = vrot.slane %v9519, 5
        %v9522 = vor.u32 %v9518, %v9521
        %v9523 = vrot.slane %v9522, 4
        %v9525 = vshll.u32 %v9447, 16
        %v9527 = vrot.slane %v9525, 5
        %v9528 = vsel %vm1305, %v9523, %v9527
        %v9529 = vshrl.u32 %v9447, 16
        %v9531 = vrot.slane %v9529, 4
        %v9532 = vor.u32 %v9531, %v9527
        %v9533 = vrot.slane %v9532, 4
        %v9535 = vshll.u32 %v9448, 16
        %v9537 = vrot.slane %v9535, 5
        %v9538 = vsel %vm1305, %v9533, %v9537
        %v9540 = vshrl.u32 %v9449, 16
        %v9542 = vrot.slane %v9540, 4
        %v9543 = vshll.u32 %v9449, 16
        %v9545 = vrot.slane %v9543, 5
        %v9546 = vor.u32 %v9542, %v9545
        %v9547 = vrot.slane %v9546, 4
        %v9549 = vshll.u32 %v9450, 16
        %v9551 = vrot.slane %v9549, 5
        %v9552 = vsel %vm1305, %v9547, %v9551
        %v9553 = vshrl.u32 %v9450, 16
        %v9555 = vrot.slane %v9553, 4
        %v9556 = vor.u32 %v9555, %v9551
        %v9557 = vrot.slane %v9556, 4
        %v9559 = vshll.u32 %v9451, 16
        %v9561 = vrot.slane %v9559, 5
        %v9562 = vsel %vm1305, %v9557, %v9561
        %v9564 = vshrl.u32 %v9452, 16
        %v9566 = vrot.slane %v9564, 4
        %v9567 = vshll.u32 %v9452, 16
        %v9569 = vrot.slane %v9567, 5
        %v9570 = vor.u32 %v9566, %v9569
        %v9571 = vrot.slane %v9570, 4
        %v9573 = vshll.u32 %v9453, 16
        %v9575 = vrot.slane %v9573, 5
        %v9576 = vsel %vm1305, %v9571, %v9575
        %v9577 = vshrl.u32 %v9453, 16
        %v9579 = vrot.slane %v9577, 4
        %v9580 = vor.u32 %v9579, %v9575
        %v9581 = vrot.slane %v9580, 4
        %v9583 = vshll.u32 %v9454, 16
        %v9585 = vrot.slane %v9583, 5
        %v9586 = vsel %vm1305, %v9581, %v9585
        %v9588 = vshrl.u32 %v9455, 16
        %v9590 = vrot.slane %v9588, 4
        %v9591 = vshll.u32 %v9455, 16
        %v9593 = vrot.slane %v9591, 5
        %v9594 = vor.u32 %v9590, %v9593
        %v9595 = vrot.slane %v9594, 4
        %v9597 = vshll.u32 %v9456, 16
        %v9599 = vrot.slane %v9597, 5
        %v9600 = vsel %vm1305, %v9595, %v9599
        %v9601 = vshrl.u32 %v9456, 16
        %v9603 = vrot.slane %v9601, 4
        %v9604 = vor.u32 %v9603, %v9599
        %v9605 = vrot.slane %v9604, 4
        %v9607 = vshll.u32 %v9457, 16
        %v9609 = vrot.slane %v9607, 5
        %v9610 = vsel %vm1305, %v9605, %v9609
        %v9612 = vshrl.u32 %v9458, 16
        %v9614 = vrot.slane %v9612, 4
        %v9615 = vshll.u32 %v9458, 16
        %v9617 = vrot.slane %v9615, 5
        %v9618 = vor.u32 %v9614, %v9617
        %v9619 = vrot.slane %v9618, 4
        %v9621 = vshll.u32 %v9459, 16
        %v9623 = vrot.slane %v9621, 5
        %v9624 = vsel %vm1305, %v9619, %v9623
        %v9625 = vshrl.u32 %v9459, 16
        %v9627 = vrot.slane %v9625, 4
        %v9628 = vor.u32 %v9627, %v9623
        %v9629 = vrot.slane %v9628, 4
        %v9631 = vshll.u32 %v9460, 16
        %v9633 = vrot.slane %v9631, 5
        %v9634 = vsel %vm1305, %v9629, %v9633
        %v9636 = vshrl.u32 %v9461, 16
        %v9638 = vrot.slane %v9636, 4
        %v9639 = vshll.u32 %v9461, 16
        %v9641 = vrot.slane %v9639, 5
        %v9642 = vor.u32 %v9638, %v9641
        %v9643 = vrot.slane %v9642, 4
        %v9645 = vshll.u32 %v9462, 16
        %v9647 = vrot.slane %v9645, 5
        %v9648 = vsel %vm1305, %v9643, %v9647
        %v9649 = vshrl.u32 %v9462, 16
        %v9651 = vrot.slane %v9649, 4
        %v9652 = vor.u32 %v9651, %v9647
        %v9653 = vrot.slane %v9652, 4
        %v9655 = vshll.u32 %v9463, 16
        %v9657 = vrot.slane %v9655, 5
        %v9658 = vsel %vm1305, %v9653, %v9657
        %v9660 = vshrl.u32 %v9464, 16
        %v9662 = vrot.slane %v9660, 4
        %v9663 = vshll.u32 %v9464, 16
        %v9665 = vrot.slane %v9663, 5
        %v9666 = vor.u32 %v9662, %v9665
        %v9667 = vrot.slane %v9666, 4
        %v9669 = vshll.u32 %v9465, 16
        %v9671 = vrot.slane %v9669, 5
        %v9672 = vsel %vm1305, %v9667, %v9671
        %v9673 = vshrl.u32 %v9465, 16
        %v9675 = vrot.slane %v9673, 4
        %v9676 = vor.u32 %v9675, %v9671
        %v9677 = vrot.slane %v9676, 4
        %v9679 = vshll.u32 %v9466, 16
        %v9681 = vrot.slane %v9679, 5
        %v9682 = vsel %vm1305, %v9677, %v9681
        %v9684 = vshrl.u32 %v9467, 16
        %v9686 = vrot.slane %v9684, 4
        %v9687 = vshll.u32 %v9467, 16
        %v9689 = vrot.slane %v9687, 5
        %v9690 = vor.u32 %v9686, %v9689
        %v9691 = vrot.slane %v9690, 4
        %v9693 = vshll.u32 %v9468, 16
        %v9695 = vrot.slane %v9693, 5
        %v9696 = vsel %vm1305, %v9691, %v9695
        %v9697 = vshrl.u32 %v9468, 16
        %v9699 = vrot.slane %v9697, 4
        %v9700 = vor.u32 %v9699, %v9695
        %v9701 = vrot.slane %v9700, 4
        %v9703 = vshll.u32 %v9469, 16
        %v9705 = vrot.slane %v9703, 5
        %v9706 = vsel %vm1305, %v9701, %v9705
        %v9708 = vshrl.u32 %v9470, 16
        %v9710 = vrot.slane %v9708, 4
        %v9711 = vshll.u32 %v9470, 16
        %v9713 = vrot.slane %v9711, 5
        %v9714 = vor.u32 %v9710, %v9713
        %v9715 = vrot.slane %v9714, 4
        %v9717 = vshll.u32 %v9471, 16
        %v9719 = vrot.slane %v9717, 5
        %v9720 = vsel %vm1305, %v9715, %v9719
        %v9721 = vshrl.u32 %v9471, 16
        %v9723 = vrot.slane %v9721, 4
        %v9724 = vor.u32 %v9723, %v9719
        %v9725 = vrot.slane %v9724, 4
        %v9727 = vshll.u32 %v9472, 16
        %v9729 = vrot.slane %v9727, 5
        %v9730 = vsel %vm1305, %v9725, %v9729
        %v9732 = vshrl.u32 %v9473, 16
        %v9734 = vrot.slane %v9732, 4
        %v9735 = vshll.u32 %v9473, 16
        %v9737 = vrot.slane %v9735, 5
        %v9738 = vor.u32 %v9734, %v9737
        %v9739 = vrot.slane %v9738, 4
        %v9741 = vshll.u32 %v9474, 16
        %v9743 = vrot.slane %v9741, 5
        %v9744 = vsel %vm1305, %v9739, %v9743
        %v9745 = vshrl.u32 %v9474, 16
        %v9747 = vrot.slane %v9745, 4
        %v9748 = vor.u32 %v9747, %v9743
        %v9749 = vrot.slane %v9748, 4
        %v9751 = vshll.u32 %v9475, 16
        %v9753 = vrot.slane %v9751, 5
        %v9754 = vsel %vm1305, %v9749, %v9753
        %v9756 = vshrl.u32 %v9476, 16
        %v9758 = vrot.slane %v9756, 4
        %v9759 = vshll.u32 %v9476, 16
        %v9761 = vrot.slane %v9759, 5
        %v9762 = vor.u32 %v9758, %v9761
        %v9763 = vrot.slane %v9762, 4
        %v9765 = vshll.u32 %v9477, 16
        %v9767 = vrot.slane %v9765, 5
        %v9768 = vsel %vm1305, %v9763, %v9767
        %v9769 = vshrl.u32 %v9477, 16
        %v9771 = vrot.slane %v9769, 4
        %v9772 = vor.u32 %v9771, %v9767
        %v9773 = vrot.slane %v9772, 4
        %v9775 = vshll.u32 %v9478, 16
        %v9777 = vrot.slane %v9775, 5
        %v9778 = vsel %vm1305, %v9773, %v9777
        %v9780 = vshrl.u32 %v9479, 16
        %v9782 = vrot.slane %v9780, 4
        %v9783 = vshll.u32 %v9479, 16
        %v9785 = vrot.slane %v9783, 5
        %v9786 = vor.u32 %v9782, %v9785
        %v9787 = vrot.slane %v9786, 4
        %v9789 = vshll.u32 %v9480, 16
        %v9791 = vrot.slane %v9789, 5
        %v9792 = vsel %vm1305, %v9787, %v9791
        %v9793 = vshrl.u32 %v9480, 16
        %v9795 = vrot.slane %v9793, 4
        %v9796 = vor.u32 %v9795, %v9791
        %v9797 = vrot.slane %v9796, 4
        %v9799 = vshll.u32 %v9481, 16
        %v9801 = vrot.slane %v9799, 5
        %v9802 = vsel %vm1305, %v9797, %v9801
        %v9804 = vshrl.u32 %v9482, 16
        %v9806 = vrot.slane %v9804, 4
        %v9807 = vshll.u32 %v9482, 16
        %v9809 = vrot.slane %v9807, 5
        %v9810 = vor.u32 %v9806, %v9809
        %v9811 = vrot.slane %v9810, 4
        %v9813 = vshll.u32 %v9483, 16
        %v9815 = vrot.slane %v9813, 5
        %v9816 = vsel %vm1305, %v9811, %v9815
        %v9817 = vshrl.u32 %v9483, 16
        %v9819 = vrot.slane %v9817, 4
        %v9820 = vor.u32 %v9819, %v9815
        %v9821 = vrot.slane %v9820, 4
        %v9823 = vshll.u32 %v9484, 16
        %v9825 = vrot.slane %v9823, 5
        %v9826 = vsel %vm1305, %v9821, %v9825
        %v9828 = vshrl.u32 %v9485, 16
        %v9830 = vrot.slane %v9828, 4
        %v9831 = vshll.u32 %v9485, 16
        %v9833 = vrot.slane %v9831, 5
        %v9834 = vor.u32 %v9830, %v9833
        %v9835 = vrot.slane %v9834, 4
        %v9837 = vshll.u32 %v9486, 16
        %v9839 = vrot.slane %v9837, 5
        %v9840 = vsel %vm1305, %v9835, %v9839
        %v9841 = vshrl.u32 %v9486, 16
        %v9843 = vrot.slane %v9841, 4
        %v9844 = vor.u32 %v9843, %v9839
        %v9845 = vrot.slane %v9844, 4
        %v9847 = vshll.u32 %v9487, 16
        %v9849 = vrot.slane %v9847, 5
        %v9850 = vsel %vm1305, %v9845, %v9849
        %v9852 = vshrl.u32 %v9488, 16
        %v9854 = vrot.slane %v9852, 4
        %v9855 = vshll.u32 %v9488, 16
        %v9857 = vrot.slane %v9855, 5
        %v9858 = vor.u32 %v9854, %v9857
        %v9859 = vrot.slane %v9858, 4
        %v9861 = vshll.u32 %v9489, 16
        %v9863 = vrot.slane %v9861, 5
        %v9864 = vsel %vm1305, %v9859, %v9863
        %v9865 = vshrl.u32 %v9489, 16
        %v9867 = vrot.slane %v9865, 4
        %v9868 = vor.u32 %v9867, %v9863
        %v9869 = vrot.slane %v9868, 4
        %v9871 = vshll.u32 %v9490, 16
        %v9873 = vrot.slane %v9871, 5
        %v9874 = vsel %vm1305, %v9869, %v9873
        %s9875 = scalar_lea.vmem [#allocation8], 512
        %v9876 = vld [vmem:[%s9875] sm:$0xf]
        %v9877 = vld [vmem:[%s9875 + $0x4] sm:$0xf]
        %v9878 = vld [vmem:[%s9875 + $0x8] sm:$0xf]
        %v9879 = vld [vmem:[%s9875 + $0xc] sm:$0xf]
        %v9880 = vld [vmem:[%s9875 + $0x10] sm:$0xf]
        %v9881 = vld [vmem:[%s9875 + $0x14] sm:$0xf]
        %v9882 = vld [vmem:[%s9875 + $0x18] sm:$0xf]
        %v9883 = vld [vmem:[%s9875 + $0x1c] sm:$0xf]
        %v9884 = vld [vmem:[%s9875 + $0x20] sm:$0xf]
        %v9885 = vld [vmem:[%s9875 + $0x24] sm:$0xf]
        %v9886 = vld [vmem:[%s9875 + $0x28] sm:$0xf]
        %v9887 = vld [vmem:[%s9875 + $0x2c] sm:$0xf]
        %v9888 = vld [vmem:[%s9875 + $0x30] sm:$0xf]
        %v9889 = vld [vmem:[%s9875 + $0x34] sm:$0xf]
        %v9890 = vld [vmem:[%s9875 + $0x38] sm:$0xf]
        %v9891 = vld [vmem:[%s9875 + $0x3c] sm:$0xf]
        %v9892 = vunpack.c.l.b16 %v9504
        %v9893 = vunpack.c.l.b16 %v9514
        %v9894 = vunpack.c.l.b16 %v9528
        %v9895 = vunpack.c.l.b16 %v9538
        %v9896 = vunpack.c.l.b16 %v9552
        %v9897 = vunpack.c.l.b16 %v9562
        %v9898 = vunpack.c.l.b16 %v9576
        %v9899 = vunpack.c.l.b16 %v9586
        %v9900 = vunpack.c.l.b16 %v9600
        %v9901 = vunpack.c.l.b16 %v9610
        %v9902 = vunpack.c.l.b16 %v9624
        %v9903 = vunpack.c.l.b16 %v9634
        %v9904 = vunpack.c.l.b16 %v9648
        %v9905 = vunpack.c.l.b16 %v9658
        %v9906 = vunpack.c.l.b16 %v9672
        %v9907 = vunpack.c.l.b16 %v9682
        %v9908 = vunpack.c.l.b16 %v9696
        %v9909 = vunpack.c.l.b16 %v9706
        %v9910 = vunpack.c.l.b16 %v9720
        %v9911 = vunpack.c.l.b16 %v9730
        %v9912 = vunpack.c.l.b16 %v9744
        %v9913 = vunpack.c.l.b16 %v9754
        %v9914 = vunpack.c.l.b16 %v9768
        %v9915 = vunpack.c.l.b16 %v9778
        %v9916 = vunpack.c.l.b16 %v9792
        %v9917 = vunpack.c.l.b16 %v9802
        %v9918 = vunpack.c.l.b16 %v9816
        %v9919 = vunpack.c.l.b16 %v9826
        %v9920 = vunpack.c.l.b16 %v9840
        %v9921 = vunpack.c.l.b16 %v9850
        %v9922 = vunpack.c.l.b16 %v9864
        %v9923 = vunpack.c.l.b16 %v9874
        %v9924 = vpack.c.b16 %v9893, %v9892
        %v9925 = vpack.c.b16 %v9895, %v9894
        %v9926 = vpack.c.b16 %v9897, %v9896
        %v9927 = vpack.c.b16 %v9899, %v9898
        %v9928 = vpack.c.b16 %v9901, %v9900
        %v9929 = vpack.c.b16 %v9903, %v9902
        %v9930 = vpack.c.b16 %v9905, %v9904
        %v9931 = vpack.c.b16 %v9907, %v9906
        %v9932 = vpack.c.b16 %v9909, %v9908
        %v9933 = vpack.c.b16 %v9911, %v9910
        %v9934 = vpack.c.b16 %v9913, %v9912
        %v9935 = vpack.c.b16 %v9915, %v9914
        %v9936 = vpack.c.b16 %v9917, %v9916
        %v9937 = vpack.c.b16 %v9919, %v9918
        %v9938 = vpack.c.b16 %v9921, %v9920
        %v9939 = vpack.c.b16 %v9923, %v9922
        %v9972 = vunpack.c.l.b16 %v9876
        %v9973 = vunpack.c.l.b16 %v9877
        %v9974 = vunpack.c.l.b16 %v9878
        %v9975 = vunpack.c.l.b16 %v9879
        %v9976 = vunpack.c.l.b16 %v9880
        %v9977 = vunpack.c.l.b16 %v9881
        %v9978 = vunpack.c.l.b16 %v9882
        %v9979 = vunpack.c.l.b16 %v9883
        %v9980 = vunpack.c.l.b16 %v9884
        %v9981 = vunpack.c.l.b16 %v9885
        %v9982 = vunpack.c.l.b16 %v9886
        %v9983 = vunpack.c.l.b16 %v9887
        %v9984 = vunpack.c.l.b16 %v9888
        %v9985 = vunpack.c.l.b16 %v9889
        %v9986 = vunpack.c.l.b16 %v9890
        %v9987 = vunpack.c.l.b16 %v9891
        %v9988 = vpack.c.b16 %v9973, %v9972
        %v9989 = vpack.c.b16 %v9975, %v9974
        %v9990 = vpack.c.b16 %v9977, %v9976
        %v9991 = vpack.c.b16 %v9979, %v9978
        %v9992 = vpack.c.b16 %v9981, %v9980
        %v9993 = vpack.c.b16 %v9983, %v9982
        %v9994 = vpack.c.b16 %v9985, %v9984
        %v9995 = vpack.c.b16 %v9987, %v9986
        %10004 = vmatpush.bf16.msra.mxu0 %v9995
        %10005 = vmatpush.bf16.msra.mxu0 %v9994
        %10006 = vmatpush.bf16.msra.mxu0 %v9993
        %10007 = vmatpush.bf16.msra.mxu0 %v9992
        %10008 = vmatpush.bf16.msra.mxu0 %v9991
        %10009 = vmatpush.bf16.msra.mxu0 %v9990
        %10010 = vmatpush.bf16.msra.mxu0 %v9989
        %10011 = vmatpush.bf16.msra.mxu0 %v9988
        %10012 = vmatmul.bf16.gmra.mxu0 %v9924
        %v10013 = vpop.f32.mrf.mxu0
        %v10014 = vadd.f32 0.0, %v10013
        %v10015 = vpop.f32.mrf.mxu0
        %v10016 = vadd.f32 0.0, %v10015
        %10017 = vmatmul.bf16.gmra.mxu0 %v9925
        %v10018 = vpop.f32.mrf.mxu0
        %v10019 = vadd.f32 0.0, %v10018
        %v10020 = vpop.f32.mrf.mxu0
        %v10021 = vadd.f32 0.0, %v10020
        %10022 = vmatmul.bf16.gmra.mxu0 %v9926
        %v10023 = vpop.f32.mrf.mxu0
        %v10024 = vadd.f32 0.0, %v10023
        %v10025 = vpop.f32.mrf.mxu0
        %v10026 = vadd.f32 0.0, %v10025
        %10027 = vmatmul.bf16.gmra.mxu0 %v9927
        %v10028 = vpop.f32.mrf.mxu0
        %v10029 = vadd.f32 0.0, %v10028
        %v10030 = vpop.f32.mrf.mxu0
        %v10031 = vadd.f32 0.0, %v10030
        %10032 = vmatmul.bf16.gmra.mxu0 %v9928
        %v10033 = vpop.f32.mrf.mxu0
        %v10034 = vadd.f32 0.0, %v10033
        %v10035 = vpop.f32.mrf.mxu0
        %v10036 = vadd.f32 0.0, %v10035
        %10037 = vmatmul.bf16.gmra.mxu0 %v9929
        %v10038 = vpop.f32.mrf.mxu0
        %v10039 = vadd.f32 0.0, %v10038
        %v10040 = vpop.f32.mrf.mxu0
        %v10041 = vadd.f32 0.0, %v10040
        %10042 = vmatmul.bf16.gmra.mxu0 %v9930
        %v10043 = vpop.f32.mrf.mxu0
        %v10044 = vadd.f32 0.0, %v10043
        %v10045 = vpop.f32.mrf.mxu0
        %v10046 = vadd.f32 0.0, %v10045
        %10047 = vmatmul.bf16.gmra.mxu0 %v9931
        %v10048 = vpop.f32.mrf.mxu0
        %v10049 = vadd.f32 0.0, %v10048
        %v10050 = vpop.f32.mrf.mxu0
        %v10051 = vadd.f32 0.0, %v10050
        %10052 = vmatmul.bf16.gmra.mxu0 %v9932
        %v10053 = vpop.f32.mrf.mxu0
        %v10054 = vadd.f32 0.0, %v10053
        %v10055 = vpop.f32.mrf.mxu0
        %v10056 = vadd.f32 0.0, %v10055
        %10057 = vmatmul.bf16.gmra.mxu0 %v9933
        %v10058 = vpop.f32.mrf.mxu0
        %v10059 = vadd.f32 0.0, %v10058
        %v10060 = vpop.f32.mrf.mxu0
        %v10061 = vadd.f32 0.0, %v10060
        %10062 = vmatmul.bf16.gmra.mxu0 %v9934
        %v10063 = vpop.f32.mrf.mxu0
        %v10064 = vadd.f32 0.0, %v10063
        %v10065 = vpop.f32.mrf.mxu0
        %v10066 = vadd.f32 0.0, %v10065
        %10067 = vmatmul.bf16.gmra.mxu0 %v9935
        %v10068 = vpop.f32.mrf.mxu0
        %v10069 = vadd.f32 0.0, %v10068
        %v10070 = vpop.f32.mrf.mxu0
        %v10071 = vadd.f32 0.0, %v10070
        %10072 = vmatmul.bf16.gmra.mxu0 %v9936
        %v10073 = vpop.f32.mrf.mxu0
        %v10074 = vadd.f32 0.0, %v10073
        %v10075 = vpop.f32.mrf.mxu0
        %v10076 = vadd.f32 0.0, %v10075
        %10077 = vmatmul.bf16.gmra.mxu0 %v9937
        %v10078 = vpop.f32.mrf.mxu0
        %v10079 = vadd.f32 0.0, %v10078
        %v10080 = vpop.f32.mrf.mxu0
        %v10081 = vadd.f32 0.0, %v10080
        %10082 = vmatmul.bf16.gmra.mxu0 %v9938
        %v10083 = vpop.f32.mrf.mxu0
        %v10084 = vadd.f32 0.0, %v10083
        %v10085 = vpop.f32.mrf.mxu0
        %v10086 = vadd.f32 0.0, %v10085
        %10087 = vmatmul.bf16.gmra.mxu0 %v9939
        %v10088 = vpop.f32.mrf.mxu0
        %v10089 = vadd.f32 0.0, %v10088
        %v10090 = vpop.f32.mrf.mxu0
        %v10091 = vadd.f32 0.0, %v10090
        %10092 = vdwg.mxu0
        %v10093 = vadd.f32 %v9411, %v10014
        %v10094 = vadd.f32 %v9412, %v10016
        %v10095 = vadd.f32 %v9413, %v10019
        %v10096 = vadd.f32 %v9414, %v10021
        %v10097 = vadd.f32 %v9415, %v10024
        %v10098 = vadd.f32 %v9416, %v10026
        %v10099 = vadd.f32 %v9417, %v10029
        %v10100 = vadd.f32 %v9418, %v10031
        %v10101 = vadd.f32 %v9419, %v10034
        %v10102 = vadd.f32 %v9420, %v10036
        %v10103 = vadd.f32 %v9421, %v10039
        %v10104 = vadd.f32 %v9422, %v10041
        %v10105 = vadd.f32 %v9423, %v10044
        %v10106 = vadd.f32 %v9424, %v10046
        %v10107 = vadd.f32 %v9425, %v10049
        %v10108 = vadd.f32 %v9426, %v10051
        %v10109 = vadd.f32 %v9427, %v10054
        %v10110 = vadd.f32 %v9428, %v10056
        %v10111 = vadd.f32 %v9429, %v10059
        %v10112 = vadd.f32 %v9430, %v10061
        %v10113 = vadd.f32 %v9431, %v10064
        %v10114 = vadd.f32 %v9432, %v10066
        %v10115 = vadd.f32 %v9433, %v10069
        %v10116 = vadd.f32 %v9434, %v10071
        %v10117 = vadd.f32 %v9435, %v10074
        %v10118 = vadd.f32 %v9436, %v10076
        %v10119 = vadd.f32 %v9437, %v10079
        %v10120 = vadd.f32 %v9438, %v10081
        %v10121 = vadd.f32 %v9439, %v10084
        %v10122 = vadd.f32 %v9440, %v10086
        %v10123 = vadd.f32 %v9441, %v10089
        %v10124 = vadd.f32 %v9442, %v10091
        %v10125 = vld [vmem:[%s1943 + $0x4] sm:$0xf]
        %v10126 = vld [vmem:[%s1943 + $0x8] sm:$0xf]
        %v10127 = vld [vmem:[%s1943 + $0x14] sm:$0xf]
        %v10128 = vld [vmem:[%s1943 + $0x18] sm:$0xf]
        %v10129 = vld [vmem:[%s1943 + $0x24] sm:$0xf]
        %v10130 = vld [vmem:[%s1943 + $0x28] sm:$0xf]
        %v10131 = vld [vmem:[%s1943 + $0x34] sm:$0xf]
        %v10132 = vld [vmem:[%s1943 + $0x38] sm:$0xf]
        %v10133 = vld [vmem:[%s1943 + $0x44] sm:$0xf]
        %v10134 = vld [vmem:[%s1943 + $0x48] sm:$0xf]
        %v10135 = vld [vmem:[%s1943 + $0x54] sm:$0xf]
        %v10136 = vld [vmem:[%s1943 + $0x58] sm:$0xf]
        %v10137 = vld [vmem:[%s1943 + $0x64] sm:$0xf]
        %v10138 = vld [vmem:[%s1943 + $0x68] sm:$0xf]
        %v10139 = vld [vmem:[%s1943 + $0x74] sm:$0xf]
        %v10140 = vld [vmem:[%s1943 + $0x78] sm:$0xf]
        %v10141 = vld [vmem:[%s1943 + $0x84] sm:$0xf]
        %v10142 = vld [vmem:[%s1943 + $0x88] sm:$0xf]
        %v10143 = vld [vmem:[%s1943 + $0x94] sm:$0xf]
        %v10144 = vld [vmem:[%s1943 + $0x98] sm:$0xf]
        %v10145 = vld [vmem:[%s1943 + $0xa4] sm:$0xf]
        %v10146 = vld [vmem:[%s1943 + $0xa8] sm:$0xf]
        %v10147 = vld [vmem:[%s1943 + $0xb4] sm:$0xf]
        %v10148 = vld [vmem:[%s1943 + $0xb8] sm:$0xf]
        %v10149 = vld [vmem:[%s1943 + $0xc4] sm:$0xf]
        %v10150 = vld [vmem:[%s1943 + $0xc8] sm:$0xf]
        %v10151 = vld [vmem:[%s1943 + $0xd4] sm:$0xf]
        %v10152 = vld [vmem:[%s1943 + $0xd8] sm:$0xf]
        %v10153 = vld [vmem:[%s1943 + $0xe4] sm:$0xf]
        %v10154 = vld [vmem:[%s1943 + $0xe8] sm:$0xf]
        %v10155 = vld [vmem:[%s1943 + $0xf4] sm:$0xf]
        %v10156 = vld [vmem:[%s1943 + $0xf8] sm:$0xf]
        %v10157 = vunpack.c.l.bf16 %v10125
        %v10158 = vunpack.c.l.bf16 %v10126
        %v10159 = vunpack.c.l.bf16 %v10127
        %v10160 = vunpack.c.l.bf16 %v10128
        %v10161 = vunpack.c.l.bf16 %v10129
        %v10162 = vunpack.c.l.bf16 %v10130
        %v10163 = vunpack.c.l.bf16 %v10131
        %v10164 = vunpack.c.l.bf16 %v10132
        %v10165 = vunpack.c.l.bf16 %v10133
        %v10166 = vunpack.c.l.bf16 %v10134
        %v10167 = vunpack.c.l.bf16 %v10135
        %v10168 = vunpack.c.l.bf16 %v10136
        %v10169 = vunpack.c.l.bf16 %v10137
        %v10170 = vunpack.c.l.bf16 %v10138
        %v10171 = vunpack.c.l.bf16 %v10139
        %v10172 = vunpack.c.l.bf16 %v10140
        %v10173 = vunpack.c.l.bf16 %v10141
        %v10174 = vunpack.c.l.bf16 %v10142
        %v10175 = vunpack.c.l.bf16 %v10143
        %v10176 = vunpack.c.l.bf16 %v10144
        %v10177 = vunpack.c.l.bf16 %v10145
        %v10178 = vunpack.c.l.bf16 %v10146
        %v10179 = vunpack.c.l.bf16 %v10147
        %v10180 = vunpack.c.l.bf16 %v10148
        %v10181 = vunpack.c.l.bf16 %v10149
        %v10182 = vunpack.c.l.bf16 %v10150
        %v10183 = vunpack.c.l.bf16 %v10151
        %v10184 = vunpack.c.l.bf16 %v10152
        %v10185 = vunpack.c.l.bf16 %v10153
        %v10186 = vunpack.c.l.bf16 %v10154
        %v10187 = vunpack.c.l.bf16 %v10155
        %v10188 = vunpack.c.l.bf16 %v10156
        %v10190 = vperm.slane %v380, 0
        %v10192 = vmul.f32 %v10093, %v10190
        %v10193 = vmul.f32 %v10094, %v10190
        %v10194 = vmul.f32 %v10095, %v10190
        %v10195 = vmul.f32 %v10096, %v10190
        %v10196 = vmul.f32 %v10097, %v10190
        %v10197 = vmul.f32 %v10098, %v10190
        %v10198 = vmul.f32 %v10099, %v10190
        %v10199 = vmul.f32 %v10100, %v10190
        %v10200 = vmul.f32 %v10101, %v10190
        %v10201 = vmul.f32 %v10102, %v10190
        %v10202 = vmul.f32 %v10103, %v10190
        %v10203 = vmul.f32 %v10104, %v10190
        %v10204 = vmul.f32 %v10105, %v10190
        %v10205 = vmul.f32 %v10106, %v10190
        %v10206 = vmul.f32 %v10107, %v10190
        %v10207 = vmul.f32 %v10108, %v10190
        %v10208 = vmul.f32 %v10109, %v10190
        %v10209 = vmul.f32 %v10110, %v10190
        %v10210 = vmul.f32 %v10111, %v10190
        %v10211 = vmul.f32 %v10112, %v10190
        %v10212 = vmul.f32 %v10113, %v10190
        %v10213 = vmul.f32 %v10114, %v10190
        %v10214 = vmul.f32 %v10115, %v10190
        %v10215 = vmul.f32 %v10116, %v10190
        %v10216 = vmul.f32 %v10117, %v10190
        %v10217 = vmul.f32 %v10118, %v10190
        %v10218 = vmul.f32 %v10119, %v10190
        %v10219 = vmul.f32 %v10120, %v10190
        %v10220 = vmul.f32 %v10121, %v10190
        %v10221 = vmul.f32 %v10122, %v10190
        %v10222 = vmul.f32 %v10123, %v10190
        %v10223 = vmul.f32 %v10124, %v10190
        %v10225 = vperm.slane %v381, 0
        %v10227 = vadd.f32 %v10192, %v10225
        %v10228 = vadd.f32 %v10193, %v10225
        %v10229 = vadd.f32 %v10194, %v10225
        %v10230 = vadd.f32 %v10195, %v10225
        %v10231 = vadd.f32 %v10196, %v10225
        %v10232 = vadd.f32 %v10197, %v10225
        %v10233 = vadd.f32 %v10198, %v10225
        %v10234 = vadd.f32 %v10199, %v10225
        %v10235 = vadd.f32 %v10200, %v10225
        %v10236 = vadd.f32 %v10201, %v10225
        %v10237 = vadd.f32 %v10202, %v10225
        %v10238 = vadd.f32 %v10203, %v10225
        %v10239 = vadd.f32 %v10204, %v10225
        %v10240 = vadd.f32 %v10205, %v10225
        %v10241 = vadd.f32 %v10206, %v10225
        %v10242 = vadd.f32 %v10207, %v10225
        %v10243 = vadd.f32 %v10208, %v10225
        %v10244 = vadd.f32 %v10209, %v10225
        %v10245 = vadd.f32 %v10210, %v10225
        %v10246 = vadd.f32 %v10211, %v10225
        %v10247 = vadd.f32 %v10212, %v10225
        %v10248 = vadd.f32 %v10213, %v10225
        %v10249 = vadd.f32 %v10214, %v10225
        %v10250 = vadd.f32 %v10215, %v10225
        %v10251 = vadd.f32 %v10216, %v10225
        %v10252 = vadd.f32 %v10217, %v10225
        %v10253 = vadd.f32 %v10218, %v10225
        %v10254 = vadd.f32 %v10219, %v10225
        %v10255 = vadd.f32 %v10220, %v10225
        %v10256 = vadd.f32 %v10221, %v10225
        %v10257 = vadd.f32 %v10222, %v10225
        %v10258 = vadd.f32 %v10223, %v10225
        %v10259 = vadd.f32 %v10227, %v10157
        %v10260 = vadd.f32 %v10228, %v10158
        %v10261 = vadd.f32 %v10229, %v10159
        %v10262 = vadd.f32 %v10230, %v10160
        %v10263 = vadd.f32 %v10231, %v10161
        %v10264 = vadd.f32 %v10232, %v10162
        %v10265 = vadd.f32 %v10233, %v10163
        %v10266 = vadd.f32 %v10234, %v10164
        %v10267 = vadd.f32 %v10235, %v10165
        %v10268 = vadd.f32 %v10236, %v10166
        %v10269 = vadd.f32 %v10237, %v10167
        %v10270 = vadd.f32 %v10238, %v10168
        %v10271 = vadd.f32 %v10239, %v10169
        %v10272 = vadd.f32 %v10240, %v10170
        %v10273 = vadd.f32 %v10241, %v10171
        %v10274 = vadd.f32 %v10242, %v10172
        %v10275 = vadd.f32 %v10243, %v10173
        %v10276 = vadd.f32 %v10244, %v10174
        %v10277 = vadd.f32 %v10245, %v10175
        %v10278 = vadd.f32 %v10246, %v10176
        %v10279 = vadd.f32 %v10247, %v10177
        %v10280 = vadd.f32 %v10248, %v10178
        %v10281 = vadd.f32 %v10249, %v10179
        %v10282 = vadd.f32 %v10250, %v10180
        %v10283 = vadd.f32 %v10251, %v10181
        %v10284 = vadd.f32 %v10252, %v10182
        %v10285 = vadd.f32 %v10253, %v10183
        %v10286 = vadd.f32 %v10254, %v10184
        %v10287 = vadd.f32 %v10255, %v10185
        %v10288 = vadd.f32 %v10256, %v10186
        %v10289 = vadd.f32 %v10257, %v10187
        %v10290 = vadd.f32 %v10258, %v10188
        %v10291 = vmax.f32 %v10259, 0.0
        %v10292 = vmax.f32 %v10260, 0.0
        %v10293 = vmax.f32 %v10261, 0.0
        %v10294 = vmax.f32 %v10262, 0.0
        %v10295 = vmax.f32 %v10263, 0.0
        %v10296 = vmax.f32 %v10264, 0.0
        %v10297 = vmax.f32 %v10265, 0.0
        %v10298 = vmax.f32 %v10266, 0.0
        %v10299 = vmax.f32 %v10267, 0.0
        %v10300 = vmax.f32 %v10268, 0.0
        %v10301 = vmax.f32 %v10269, 0.0
        %v10302 = vmax.f32 %v10270, 0.0
        %v10303 = vmax.f32 %v10271, 0.0
        %v10304 = vmax.f32 %v10272, 0.0
        %v10305 = vmax.f32 %v10273, 0.0
        %v10306 = vmax.f32 %v10274, 0.0
        %v10307 = vmax.f32 %v10275, 0.0
        %v10308 = vmax.f32 %v10276, 0.0
        %v10309 = vmax.f32 %v10277, 0.0
        %v10310 = vmax.f32 %v10278, 0.0
        %v10311 = vmax.f32 %v10279, 0.0
        %v10312 = vmax.f32 %v10280, 0.0
        %v10313 = vmax.f32 %v10281, 0.0
        %v10314 = vmax.f32 %v10282, 0.0
        %v10315 = vmax.f32 %v10283, 0.0
        %v10316 = vmax.f32 %v10284, 0.0
        %v10317 = vmax.f32 %v10285, 0.0
        %v10318 = vmax.f32 %v10286, 0.0
        %v10319 = vmax.f32 %v10287, 0.0
        %v10320 = vmax.f32 %v10288, 0.0
        %v10321 = vmax.f32 %v10289, 0.0
        %v10322 = vmax.f32 %v10290, 0.0
        %v10323 = vpack.c.bf16 %v10291, %v10291
        %v10324 = vpack.c.bf16 %v10292, %v10292
        %v10325 = vpack.c.bf16 %v10293, %v10293
        %v10326 = vpack.c.bf16 %v10294, %v10294
        %v10327 = vpack.c.bf16 %v10295, %v10295
        %v10328 = vpack.c.bf16 %v10296, %v10296
        %v10329 = vpack.c.bf16 %v10297, %v10297
        %v10330 = vpack.c.bf16 %v10298, %v10298
        %v10331 = vpack.c.bf16 %v10299, %v10299
        %v10332 = vpack.c.bf16 %v10300, %v10300
        %v10333 = vpack.c.bf16 %v10301, %v10301
        %v10334 = vpack.c.bf16 %v10302, %v10302
        %v10335 = vpack.c.bf16 %v10303, %v10303
        %v10336 = vpack.c.bf16 %v10304, %v10304
        %v10337 = vpack.c.bf16 %v10305, %v10305
        %v10338 = vpack.c.bf16 %v10306, %v10306
        %v10339 = vpack.c.bf16 %v10307, %v10307
        %v10340 = vpack.c.bf16 %v10308, %v10308
        %v10341 = vpack.c.bf16 %v10309, %v10309
        %v10342 = vpack.c.bf16 %v10310, %v10310
        %v10343 = vpack.c.bf16 %v10311, %v10311
        %v10344 = vpack.c.bf16 %v10312, %v10312
        %v10345 = vpack.c.bf16 %v10313, %v10313
        %v10346 = vpack.c.bf16 %v10314, %v10314
        %v10347 = vpack.c.bf16 %v10315, %v10315
        %v10348 = vpack.c.bf16 %v10316, %v10316
        %v10349 = vpack.c.bf16 %v10317, %v10317
        %v10350 = vpack.c.bf16 %v10318, %v10318
        %v10351 = vpack.c.bf16 %v10319, %v10319
        %v10352 = vpack.c.bf16 %v10320, %v10320
        %v10353 = vpack.c.bf16 %v10321, %v10321
        %v10354 = vpack.c.bf16 %v10322, %v10322
        %s10355 = smul.u32 0, 2
        %s10356 = smul.addr %s10355, 4
        %s10357 = scalar_lea.vmem %s331, %s10356 [#allocation9]
        %10358 = vst [vmem:[%s10357] sm:$0xf] %v10323
        %10359 = vst [vmem:[%s10357 + $0x4] sm:$0xf] %v10324
        %10360 = vst [vmem:[%s10357 + $0x8] sm:$0xf] %v10325
        %10361 = vst [vmem:[%s10357 + $0xc] sm:$0xf] %v10326
        %10362 = vst [vmem:[%s10357 + $0x10] sm:$0xf] %v10327
        %10363 = vst [vmem:[%s10357 + $0x14] sm:$0xf] %v10328
        %10364 = vst [vmem:[%s10357 + $0x18] sm:$0xf] %v10329
        %10365 = vst [vmem:[%s10357 + $0x1c] sm:$0xf] %v10330
        %10366 = vst [vmem:[%s10357 + $0x20] sm:$0xf] %v10331
        %10367 = vst [vmem:[%s10357 + $0x24] sm:$0xf] %v10332
        %10368 = vst [vmem:[%s10357 + $0x28] sm:$0xf] %v10333
        %10369 = vst [vmem:[%s10357 + $0x2c] sm:$0xf] %v10334
        %10370 = vst [vmem:[%s10357 + $0x30] sm:$0xf] %v10335
        %10371 = vst [vmem:[%s10357 + $0x34] sm:$0xf] %v10336
        %10372 = vst [vmem:[%s10357 + $0x38] sm:$0xf] %v10337
        %10373 = vst [vmem:[%s10357 + $0x3c] sm:$0xf] %v10338
        %10374 = vst [vmem:[%s10357 + $0x40] sm:$0xf] %v10339
        %10375 = vst [vmem:[%s10357 + $0x44] sm:$0xf] %v10340
        %10376 = vst [vmem:[%s10357 + $0x48] sm:$0xf] %v10341
        %10377 = vst [vmem:[%s10357 + $0x4c] sm:$0xf] %v10342
        %10378 = vst [vmem:[%s10357 + $0x50] sm:$0xf] %v10343
        %10379 = vst [vmem:[%s10357 + $0x54] sm:$0xf] %v10344
        %10380 = vst [vmem:[%s10357 + $0x58] sm:$0xf] %v10345
        %10381 = vst [vmem:[%s10357 + $0x5c] sm:$0xf] %v10346
        %10382 = vst [vmem:[%s10357 + $0x60] sm:$0xf] %v10347
        %10383 = vst [vmem:[%s10357 + $0x64] sm:$0xf] %v10348
        %10384 = vst [vmem:[%s10357 + $0x68] sm:$0xf] %v10349
        %10385 = vst [vmem:[%s10357 + $0x6c] sm:$0xf] %v10350
        %10386 = vst [vmem:[%s10357 + $0x70] sm:$0xf] %v10351
        %10387 = vst [vmem:[%s10357 + $0x74] sm:$0xf] %v10352
        %10388 = vst [vmem:[%s10357 + $0x78] sm:$0xf] %v10353
        %10389 = vst [vmem:[%s10357 + $0x7c] sm:$0xf] %v10354
        %s10390 = sand.u32 %s185, 1
        %s10391 = scalar_lea.sflag [#allocation5], %s10390
        %s10392 = sand.u32 %s185, 1
        %s10393 = smul.addr %s10392, 128
        %s10394 = scalar_lea.vmem [#allocation9], %s10393
        // Predicated region
        $region61: #{tpu_custom_call.1} parent=47 // pred_check
          %p10395 = pneg %p195
        $region62: #{tpu_custom_call.1} parent=47 // pred_check_branch
          %10397 = sbr.rel (%p10395) target = $region64
        $region63: #{tpu_custom_call.1} parent=47 // pred_region
          %10399 = vsyncadd %s10391, 0
          %s10400 = smul.addr %s25, 32
          %s10401 = smul.addr %s10400, 4
          %s10402 = scalar_lea.hbm %s7, %s10401
          %s10403 = sshll.u32 %s10394, 4
          %s10404 = int_to_ptr.vmem [resolvable:$true] %s10403
          %s10405 = sshll.u32 %s10402, 4
          %s10406 = int_to_ptr.hbm [resolvable:$true] %s10405
          %10411 = dma.vmem_to_hbm [thread:$0]  %s10404, 2048, %s10406, %s10391, 64, 64, 4
        $region64: #{tpu_custom_call.1} parent=47 // pred_fallthru
          _
      $region48: #{tpu_custom_call.1} parent=5 // pred_fallthru
        _
      %p10412 = scmp.le.s32.totalorder 2, %s20
      // Predicated region
      $region65: #{tpu_custom_call.1} parent=5 // pred_check
        %p10413 = pneg %p10412
      $region66: #{tpu_custom_call.1} parent=5 // pred_check_branch
        %10415 = sbr.rel (%p10413) target = $region68
      $region67: #{tpu_custom_call.1} parent=5 // pred_region
        %s10416 = ssub.s32 %s20, 2
        // Predicated region
        $region69: #{tpu_custom_call.1} parent=67 // pred_check
          %p10417 = pneg %p201
        $region70: #{tpu_custom_call.1} parent=67 // pred_check_branch
          %10419 = sbr.rel (%p10417) target = $region72
        $region71: #{tpu_custom_call.1} parent=67 // pred_region
          %s10420 = sand.u32 %s186, 1
          %s10421 = scalar_lea.sflag [#allocation5], %s10420
          %s10422 = sand.u32 %s186, 1
          %s10423 = smul.addr %s10422, 128
          %s10424 = scalar_lea.vmem [#allocation9], %s10423
          %10426 = dma.done %s10421, 2048
        $region72: #{tpu_custom_call.1} parent=67 // pred_fallthru
          _
      $region68: #{tpu_custom_call.1} parent=5 // pred_fallthru
        _
    $region6: #{tpu_custom_call.1} parent=1 // loop_footer
      %s24 = sadd.s32 1, %s20
    $region7: #{tpu_custom_call.1} parent=1 // loop_footer_branch
      %19 = sbr.rel target = $region3
    $region8: #{tpu_custom_call.1} parent=1 // loop_exit
      _
    %10427 = vsyncpa [#allocation4], 1
    %s10428 = scalar_lea.sflag [#allocation4], 1
    %10429 = vsyncpa %s10428, 1
    %10430 = vsyncpa [#allocation7], 1
    %10431 = vsyncpa [#allocation5], 1
    %s10432 = scalar_lea.sflag [#allocation5], 1
    %10433 = vsyncpa %s10432, 1

</llo_original>
